<compile_context>
chip_gen: v7x
topology: tpu7x:2x2x1
jax: 0.10.0
libtpu: 0.0.40
codegen_flags: <defaults>
</compile_context>

<pallas_src>
import functools

import jax
import jax.numpy as jnp
from jax import lax
from jax.experimental import pallas as pl
from jax.experimental.pallas import tpu as pltpu

MAX_NUM_STEPS = 1000

# --- Dormand-Prince 5(4) tableau -------------------------------------------
_C2, _C3, _C4, _C5 = 1 / 5, 3 / 10, 4 / 5, 8 / 9
_A21 = 1 / 5
_A31, _A32 = 3 / 40, 9 / 40
_A41, _A42, _A43 = 44 / 45, -56 / 15, 32 / 9
_A51, _A52, _A53, _A54 = 19372 / 6561, -25360 / 2187, 64448 / 6561, -212 / 729
_A61, _A62, _A63, _A64, _A65 = (9017 / 3168, -355 / 33, 46732 / 5247,
                                49 / 176, -5103 / 18656)
_B1, _B3, _B4, _B5, _B6 = 35 / 384, 500 / 1113, 125 / 192, -2187 / 6784, 11 / 84
_BS1, _BS3, _BS4, _BS5, _BS6, _BS7 = (5179 / 57600, 7571 / 16695, 393 / 640,
                                      -92097 / 339200, 187 / 2100, 1 / 40)
_E1, _E3, _E4 = _B1 - _BS1, _B3 - _BS3, _B4 - _BS4
_E5, _E6, _E7 = _B5 - _BS5, _B6 - _BS6, -_BS7

_TAPS = [(di, dj) for di in (-1, 0, 1) for dj in (-1, 0, 1)]


def _make_border_masks(B, H, W):
    """(9, B*H*W) {0,1} masks: tap (di,dj) valid where (h+di, w+dj) in-bounds."""
    idx = jnp.arange(B * H * W, dtype=jnp.int32)
    h = (idx // W) % H
    w = idx % W
    rows = []
    for di, dj in _TAPS:
        valid = ((h + di >= 0) & (h + di < H) &
                 (w + dj >= 0) & (w + dj < W))
        rows.append(valid.astype(jnp.float32))
    return jnp.stack(rows, axis=0)


# ---------------------------------------------------------------------------
# Single-launch adaptive dopri5 kernel (whole 0 -> 1 integration in-kernel)
# ---------------------------------------------------------------------------
def make_dopri5_kernel(C, F, N, width, rtol, atol, t1):
    rtol, atol, t1 = float(rtol), float(atol), float(t1)

    def kernel(y0_ref, w1_ref, w1t_ref, b1_ref, w2v_ref, w2tmap_ref, b2_ref,
               w3_ref, w3t_ref, b3_ref, masks_ref,
               y_ref, stats_ref,
               k1_sc, acc_sc, fac_sc):

        def _pow(x, p):            # x > 0, (1,1) vector; EUP exp/log
            return jnp.exp(p * jnp.log(x))

        def _rms(v):               # full RMS, reduced to a (1,1) value
            s = jnp.sum(v * v, axis=1, keepdims=True)
            s = jnp.sum(s, axis=0, keepdims=True)
            return jnp.sqrt(s / v.size)

        def f(t, y):
            """ODEConv RHS on the (C, N) state; t is a scalar or (1,1)."""
            # conv1: 1x1 Conv2dTime (C -> F) + ReLU  (MXU, K=C)
            h1 = jnp.dot(w1_ref[...], y, preferred_element_type=jnp.float32)
            h1 = jnp.maximum(h1 + t * w1t_ref[...] + b1_ref[...], 0.0)
            # conv2: 3x3 Conv2dTime (F -> F), padding=1, "commuted" form:
            # one (9F,F)@(F,N) matmul gives all 9 tap partial products; each is
            # then lane-rotated (XLU), border-masked and summed (VPU).  Valid
            # because per-column masking/shifting commutes with the channel
            # matmul; wrap-around lanes are killed by the border masks.
            g = jnp.dot(w2v_ref[...], h1, preferred_element_type=jnp.float32)
            masks = masks_ref[...]                       # (9, N)
            h2 = g[4 * F:5 * F, :]                       # centre tap: no shift
            for tap, (di, dj) in enumerate(_TAPS):
                if di == 0 and dj == 0:
                    continue
                off = di * width + dj
                # want out[:, n] = g_tap[:, n + off]; pltpu.roll follows
                # jnp.roll semantics (out[n] = x[n - shift]) -> shift = -off.
                gt = pltpu.roll(g[tap * F:(tap + 1) * F, :],
                                shift=(-off) % N, axis=1)
                h2 = h2 + gt * masks[tap:tap + 1, :]
            h2 = jnp.maximum(h2 + t * w2tmap_ref[...] + b2_ref[...], 0.0)
            # conv3: 1x1 Conv2dTime (F -> C)  (MXU, K=F)
            # TODO(synk): evaluate VPU broadcast-FMA for the K=4/K=8 matmuls
            # (conv1/conv3) to drop two serialized MXU round-trips per eval.
            h3 = jnp.dot(w3_ref[...], h2, preferred_element_type=jnp.float32)
            return h3 + t * w3t_ref[...] + b3_ref[...]

        # --- state init + Hairer initial-step-size heuristic ----------------
        y0 = y0_ref[...]
        y_ref[...] = y0
        f0 = f(0.0, y0)
        k1_sc[...] = f0                                   # FSAL seed
        scale = atol + rtol * jnp.abs(y0)
        d0 = _rms(y0 / scale)
        d1 = _rms(f0 / scale)
        h_a = jnp.where((d0 < 1e-5) | (d1 < 1e-5), 1e-6,
                        0.01 * d0 / jnp.maximum(d1, 1e-30))
        f1 = f(h_a, y0 + h_a * f0)
        d2 = _rms((f1 - f0) / scale) / h_a
        dmax = jnp.maximum(d1, d2)
        h_b = jnp.where(dmax <= 1e-15,
                        jnp.maximum(1e-6, h_a * 1e-3),
                        _pow(0.01 / jnp.maximum(dmax, 1e-15), 1.0 / 6.0))
        fac_sc[...] = jnp.minimum(jnp.minimum(100.0 * h_a, h_b), t1)
        dt0 = fac_sc[0, 0]                                # -> scalar

        # --- adaptive dopri5: in-kernel while loop, scalar controller -------
        def cond(carry):
            t, _, n = carry
            return (t1 - t > 1e-7) & (n < MAX_NUM_STEPS)

        def body(carry):
            t, dt, n = carry
            y = y_ref[...]
            dt_c = jnp.minimum(dt, t1 - t)
            k1 = k1_sc[...]                               # FSAL
            k2 = f(t + dt_c * _C2, y + dt_c * (_A21 * k1))
            k3 = f(t + dt_c * _C3, y + dt_c * (_A31 * k1 + _A32 * k2))
            k4 = f(t + dt_c * _C4,
                   y + dt_c * (_A41 * k1 + _A42 * k2 + _A43 * k3))
            k5 = f(t + dt_c * _C5,
                   y + dt_c * (_A51 * k1 + _A52 * k2 + _A53 * k3 + _A54 * k4))
            k6 = f(t + dt_c,
                   y + dt_c * (_A61 * k1 + _A62 * k2 + _A63 * k3 +
                               _A64 * k4 + _A65 * k5))
            y5 = y + dt_c * (_B1 * k1 + _B3 * k3 + _B4 * k4 +
                             _B5 * k5 + _B6 * k6)
            k7 = f(t + dt_c, y5)
            err = dt_c * (_E1 * k1 + _E3 * k3 + _E4 * k4 +
                          _E5 * k5 + _E6 * k6 + _E7 * k7)
            sc = atol + rtol * jnp.maximum(jnp.abs(y), jnp.abs(y5))
            err_norm = _rms(err / sc)                     # (1,1), EUP sqrt
            # step factor via EUP pow + accept flag; read back as scalars
            fac_sc[...] = jnp.clip(
                0.9 * _pow(jnp.maximum(err_norm, 1e-10), -0.2), 0.2, 10.0)
            acc_sc[...] = jnp.where(err_norm <= 1.0, 1.0, 0.0)
            accept = acc_sc[0, 0] > 0.5
            factor = fac_sc[0, 0]

            @pl.when(accept)
            def _():
                y_ref[...] = y5
                k1_sc[...] = k7                           # FSAL: next k1

            t_new = jnp.where(accept, t + dt_c, t)
            # NOTE: n counts ATTEMPTED steps (as in the previous version), so
            # MAX_NUM_STEPS caps attempts, not accepted steps.
            return (t_new, dt_c * factor, n + 1.0)

        t_f, dt_f, n_f = lax.while_loop(
            cond, body, (jnp.float32(0.0), dt0, jnp.float32(0.0)))

        # packed scalar stats (t, dt, n, reached_t1) in one small SMEM output
        stats_ref[0] = t_f
        stats_ref[1] = dt_f
        stats_ref[2] = n_f
        stats_ref[3] = (t1 - t_f <= 1e-7).astype(jnp.float32)

    vmem = pltpu.MemorySpace.VMEM
    smem = pltpu.MemorySpace.SMEM
    # VMEM footprint at this size is ~1 MiB, far below every chip's scoped
    # limit; at much larger N = B*H*W, add CompilerParams(vmem_limit_bytes=...)
    # and lane-tile with +-(W+1) halos (v7x has only 64 MiB physical VMEM).
    return pl.pallas_call(
        kernel,
        out_shape=(jax.ShapeDtypeStruct((C, N), jnp.float32),   # y(t1)
                   jax.ShapeDtypeStruct((4,), jnp.float32)),    # stats
        in_specs=[pl.BlockSpec(memory_space=vmem)] * 11,
        out_specs=(pl.BlockSpec(memory_space=vmem),
                   pl.BlockSpec(memory_space=smem)),
        scratch_shapes=[pltpu.VMEM((C, N), jnp.float32),   # k1 (FSAL)
                        pltpu.VMEM((1, 1), jnp.float32),   # accept flag
                        pltpu.VMEM((1, 1), jnp.float32)],  # factor / dt0
    )


# ---------------------------------------------------------------------------
# NeuralODE forward
# ---------------------------------------------------------------------------
def neural_ode_forward(x_nchw, params, augmented_dim=0, tolerance=1e-3):
    B, Cin, H, W = x_nchw.shape
    C = Cin + augmented_dim
    N = B * H * W
    F = params['w1'].shape[0]

    # NCHW -> (C, B*H*W): channels on sublanes, flattened spatial on lanes.
    y0 = jnp.transpose(x_nchw.astype(jnp.float32), (1, 0, 2, 3)).reshape(Cin, N)
    if augmented_dim > 0:
        y0 = jnp.concatenate([y0, jnp.zeros((augmented_dim, N), jnp.float32)], 0)

    masks = _make_border_masks(B, H, W)                         # (9, N)
    # conv2 time-channel map (zero-padding-aware), hoisted out of the kernel.
    w2tmap = jnp.einsum('tf,tn->fn', params['w2t'], masks)      # (F, N)

    dopri5 = make_dopri5_kernel(C, F, N, W, tolerance, tolerance, 1.0)
    y, stats = dopri5(y0,
                      params['w1'], params['w1t'], params['b1'],
                      params['w2v'], w2tmap, params['b2'],
                      params['w3'], params['w3t'], params['b3'], masks)
    del stats
    # TODO(synk): torchdiffeq raises if max_num_steps is hit before t reaches
    # 1.0; here stats[3] == 0 flags that case but the state is returned as-is.

    # Back to NCHW and flatten exactly like torch's x.view(B, -1).
    y_flat = jnp.transpose(y.reshape(C, B, H, W), (1, 0, 2, 3)).reshape(B, -1)
    # Final Linear in plain XLA (dedicated Pallas call = launch overhead +
    # masked 10-wide stores only).
    return jnp.dot(y_flat, params['wl']) + params['bl']


# ---------------------------------------------------------------------------
# Deterministic parameter init (PyTorch-default-style uniform bounds),
# pre-packed into the kernel's layouts.
# ---------------------------------------------------------------------------
def _uniform(key, shape, bound):
    return jax.random.uniform(key, shape, jnp.float32, -bound, bound)


def init_params(key, in_channels, height, width, num_filters, out_dim,
                augmented_dim):
    C = in_channels + augmented_dim
    F = num_filters
    ks = jax.random.split(key, 8)

    fan1 = (C + 1)
    W1 = _uniform(ks[0], (F, C + 1, 1, 1), 1.0 / fan1 ** 0.5)
    b1 = _uniform(ks[1], (F,), 1.0 / fan1 ** 0.5)
    fan2 = (F + 1) * 9
    W2 = _uniform(ks[2], (F, F + 1, 3, 3), 1.0 / fan2 ** 0.5)
    b2 = _uniform(ks[3], (F,), 1.0 / fan2 ** 0.5)
    fan3 = (F + 1)
    W3 = _uniform(ks[4], (C, F + 1, 1, 1), 1.0 / fan3 ** 0.5)
    b3 = _uniform(ks[5], (C,), 1.0 / fan3 ** 0.5)
    D = C * height * width
    Wl = _uniform(ks[6], (out_dim, D), 1.0 / D ** 0.5)
    bl = _uniform(ks[7], (out_dim,), 1.0 / D ** 0.5)

    return dict(
        w1=W1[:, 1:, 0, 0],                                     # (F, C)
        w1t=W1[:, 0, 0, 0].reshape(F, 1),
        b1=b1.reshape(F, 1),
        # (9F, F), tap-major rows: w2v[tap*F + cout, cin] = W2[cout, cin+1, ki, kj]
        w2v=jnp.transpose(W2[:, 1:, :, :], (2, 3, 0, 1)).reshape(9 * F, F),
        w2t=jnp.transpose(W2[:, 0, :, :], (1, 2, 0)).reshape(9, F),
        b2=b2.reshape(F, 1),
        w3=W3[:, 1:, 0, 0],                                     # (C, F)
        w3t=W3[:, 0, 0, 0].reshape(C, 1),
        b3=b3.reshape(C, 1),
        wl=jnp.transpose(Wl),                                   # (D, out)
        bl=bl.reshape(1, out_dim),
    )


if __name__ == "__main__":
    B, Cin, H, W = 2, 4, 16, 16
    num_filters = 8
    out_dim = 10
    augmented_dim = 0
    tolerance = 1e-3

    key = jax.random.PRNGKey(0)
    pkey, xkey = jax.random.split(key)
    params = init_params(pkey, Cin, H, W, num_filters, out_dim, augmented_dim)
    x = jax.random.normal(xkey, (B, Cin, H, W), jnp.float32)

    fwd = jax.jit(functools.partial(neural_ode_forward,
                                    augmented_dim=augmented_dim,
                                    tolerance=tolerance))
    out = fwd(x, params)
    jax.block_until_ready(out)
    assert out.shape == (B, out_dim), out.shape
    assert bool(jnp.all(jnp.isfinite(out)))
    print("KERNEL_OK")
</pallas_src>

<mosaic_0001>
module attributes {stable_mosaic.version = 11 : i64} {
  func.func @kernel(%arg0: memref<4x512xf32, #tpu.memory_space<vmem>>, %arg1: memref<8x4xf32, #tpu.memory_space<vmem>>, %arg2: memref<8x1xf32, #tpu.memory_space<vmem>>, %arg3: memref<8x1xf32, #tpu.memory_space<vmem>>, %arg4: memref<72x8xf32, #tpu.memory_space<vmem>>, %arg5: memref<8x512xf32, #tpu.memory_space<vmem>>, %arg6: memref<8x1xf32, #tpu.memory_space<vmem>>, %arg7: memref<4x8xf32, #tpu.memory_space<vmem>>, %arg8: memref<4x1xf32, #tpu.memory_space<vmem>>, %arg9: memref<4x1xf32, #tpu.memory_space<vmem>>, %arg10: memref<9x512xf32, #tpu.memory_space<vmem>>, %arg11: memref<4x512xf32, #tpu.memory_space<vmem>>, %arg12: memref<4xf32, #tpu.memory_space<smem>>, %arg13: memref<4x512xf32, #tpu.memory_space<vmem>>, %arg14: memref<1x1xf32, #tpu.memory_space<vmem>>, %arg15: memref<1x1xf32, #tpu.memory_space<vmem>>) attributes {dimension_semantics = [], scalar_prefetch = 0 : i64, scratch_operands = 3 : i64, tpu.core_type = #tpu.core_type<tc>} {
    %c0 = arith.constant 0 : index
    %c0_0 = arith.constant 0 : index
    %0 = vector.load %arg0[%c0, %c0_0] : memref<4x512xf32, #tpu.memory_space<vmem>>, vector<4x512xf32>
    %c0_1 = arith.constant 0 : index
    %c0_2 = arith.constant 0 : index
    %1 = vector.load %arg11[%c0_1, %c0_2] : memref<4x512xf32, #tpu.memory_space<vmem>>, vector<4x512xf32>
    tpu.vector_store %arg11[%c0_1, %c0_2], %0 {strides = array<i32>} : memref<4x512xf32, #tpu.memory_space<vmem>>, vector<4x512xf32>,
    %c0_3 = arith.constant 0 : index
    %c0_4 = arith.constant 0 : index
    %2 = vector.load %arg1[%c0_3, %c0_4] : memref<8x4xf32, #tpu.memory_space<vmem>>, vector<8x4xf32>
    %cst = arith.constant dense<0.000000e+00> : vector<8x512xf32>
    %3 = tpu.matmul %2, %0, %cst {dimension_numbers = #tpu.dot_dimension_numbers<[1], [0], [0], [1], [0, 0, 1, 1], [], []>} : vector<8x4xf32>, vector<4x512xf32>, vector<8x512xf32> -> vector<8x512xf32>
    %c0_5 = arith.constant 0 : index
    %c0_6 = arith.constant 0 : index
    %4 = vector.load %arg2[%c0_5, %c0_6] : memref<8x1xf32, #tpu.memory_space<vmem>>, vector<8x1xf32>
    %cst_7 = arith.constant 0.000000e+00 : f32
    %5 = vector.broadcast %cst_7 : f32 to vector<8x1xf32>
    %6 = arith.mulf %5, %4 : vector<8x1xf32>
    %7 = vector.broadcast %6 : vector<8x1xf32> to vector<8x512xf32>
    %8 = arith.addf %3, %7 : vector<8x512xf32>
    %c0_8 = arith.constant 0 : index
    %c0_9 = arith.constant 0 : index
    %9 = vector.load %arg3[%c0_8, %c0_9] : memref<8x1xf32, #tpu.memory_space<vmem>>, vector<8x1xf32>
    %10 = vector.broadcast %9 : vector<8x1xf32> to vector<8x512xf32>
    %11 = arith.addf %8, %10 : vector<8x512xf32>
    %cst_10 = arith.constant 0.000000e+00 : f32
    %12 = vector.broadcast %cst_10 : f32 to vector<8x512xf32>
    %13 = arith.maximumf %11, %12 : vector<8x512xf32>
    %c0_11 = arith.constant 0 : index
    %c0_12 = arith.constant 0 : index
    %14 = vector.load %arg4[%c0_11, %c0_12] : memref<72x8xf32, #tpu.memory_space<vmem>>, vector<72x8xf32>
    %cst_13 = arith.constant dense<0.000000e+00> : vector<72x512xf32>
    %15 = tpu.matmul %14, %13, %cst_13 {dimension_numbers = #tpu.dot_dimension_numbers<[1], [0], [0], [1], [0, 0, 1, 1], [], []>} : vector<72x8xf32>, vector<8x512xf32>, vector<72x512xf32> -> vector<72x512xf32>
    %c0_14 = arith.constant 0 : index
    %c0_15 = arith.constant 0 : index
    %16 = vector.load %arg10[%c0_14, %c0_15] : memref<9x512xf32, #tpu.memory_space<vmem>>, vector<9x512xf32>
    %17 = vector.extract_strided_slice %15 {offsets = [32, 0], sizes = [8, 512], strides = [1, 1]} : vector<72x512xf32> to vector<8x512xf32>
    %18 = vector.extract_strided_slice %15 {offsets = [0, 0], sizes = [8, 512], strides = [1, 1]} : vector<72x512xf32> to vector<8x512xf32>
    %c17_i32 = arith.constant 17 : i32
    %19 = tpu.dynamic_rotate %18 by %c17_i32 dim 1 : vector<8x512xf32>, i32 -> vector<8x512xf32>
    %20 = vector.extract_strided_slice %16 {offsets = [0, 0], sizes = [1, 512], strides = [1, 1]} : vector<9x512xf32> to vector<1x512xf32>
    %21 = vector.broadcast %20 : vector<1x512xf32> to vector<8x512xf32>
    %22 = arith.mulf %19, %21 : vector<8x512xf32>
    %23 = arith.addf %17, %22 : vector<8x512xf32>
    %24 = vector.extract_strided_slice %15 {offsets = [8, 0], sizes = [8, 512], strides = [1, 1]} : vector<72x512xf32> to vector<8x512xf32>
    %c16_i32 = arith.constant 16 : i32
    %25 = tpu.dynamic_rotate %24 by %c16_i32 dim 1 : vector<8x512xf32>, i32 -> vector<8x512xf32>
    %26 = vector.extract_strided_slice %16 {offsets = [1, 0], sizes = [1, 512], strides = [1, 1]} : vector<9x512xf32> to vector<1x512xf32>
    %27 = vector.broadcast %26 : vector<1x512xf32> to vector<8x512xf32>
    %28 = arith.mulf %25, %27 : vector<8x512xf32>
    %29 = arith.addf %23, %28 : vector<8x512xf32>
    %30 = vector.extract_strided_slice %15 {offsets = [16, 0], sizes = [8, 512], strides = [1, 1]} : vector<72x512xf32> to vector<8x512xf32>
    %c15_i32 = arith.constant 15 : i32
    %31 = tpu.dynamic_rotate %30 by %c15_i32 dim 1 : vector<8x512xf32>, i32 -> vector<8x512xf32>
    %32 = vector.extract_strided_slice %16 {offsets = [2, 0], sizes = [1, 512], strides = [1, 1]} : vector<9x512xf32> to vector<1x512xf32>
    %33 = vector.broadcast %32 : vector<1x512xf32> to vector<8x512xf32>
    %34 = arith.mulf %31, %33 : vector<8x512xf32>
    %35 = arith.addf %29, %34 : vector<8x512xf32>
    %36 = vector.extract_strided_slice %15 {offsets = [24, 0], sizes = [8, 512], strides = [1, 1]} : vector<72x512xf32> to vector<8x512xf32>
    %c1_i32 = arith.constant 1 : i32
    %37 = tpu.dynamic_rotate %36 by %c1_i32 dim 1 : vector<8x512xf32>, i32 -> vector<8x512xf32>
    %38 = vector.extract_strided_slice %16 {offsets = [3, 0], sizes = [1, 512], strides = [1, 1]} : vector<9x512xf32> to vector<1x512xf32>
    %39 = vector.broadcast %38 : vector<1x512xf32> to vector<8x512xf32>
    %40 = arith.mulf %37, %39 : vector<8x512xf32>
    %41 = arith.addf %35, %40 : vector<8x512xf32>
    %42 = vector.extract_strided_slice %15 {offsets = [40, 0], sizes = [8, 512], strides = [1, 1]} : vector<72x512xf32> to vector<8x512xf32>
    %c511_i32 = arith.constant 511 : i32
    %43 = tpu.dynamic_rotate %42 by %c511_i32 dim 1 : vector<8x512xf32>, i32 -> vector<8x512xf32>
    %44 = vector.extract_strided_slice %16 {offsets = [5, 0], sizes = [1, 512], strides = [1, 1]} : vector<9x512xf32> to vector<1x512xf32>
    %45 = vector.broadcast %44 : vector<1x512xf32> to vector<8x512xf32>
    %46 = arith.mulf %43, %45 : vector<8x512xf32>
    %47 = arith.addf %41, %46 : vector<8x512xf32>
    %48 = vector.extract_strided_slice %15 {offsets = [48, 0], sizes = [8, 512], strides = [1, 1]} : vector<72x512xf32> to vector<8x512xf32>
    %c497_i32 = arith.constant 497 : i32
    %49 = tpu.dynamic_rotate %48 by %c497_i32 dim 1 : vector<8x512xf32>, i32 -> vector<8x512xf32>
    %50 = vector.extract_strided_slice %16 {offsets = [6, 0], sizes = [1, 512], strides = [1, 1]} : vector<9x512xf32> to vector<1x512xf32>
    %51 = vector.broadcast %50 : vector<1x512xf32> to vector<8x512xf32>
    %52 = arith.mulf %49, %51 : vector<8x512xf32>
    %53 = arith.addf %47, %52 : vector<8x512xf32>
    %54 = vector.extract_strided_slice %15 {offsets = [56, 0], sizes = [8, 512], strides = [1, 1]} : vector<72x512xf32> to vector<8x512xf32>
    %c496_i32 = arith.constant 496 : i32
    %55 = tpu.dynamic_rotate %54 by %c496_i32 dim 1 : vector<8x512xf32>, i32 -> vector<8x512xf32>
    %56 = vector.extract_strided_slice %16 {offsets = [7, 0], sizes = [1, 512], strides = [1, 1]} : vector<9x512xf32> to vector<1x512xf32>
    %57 = vector.broadcast %56 : vector<1x512xf32> to vector<8x512xf32>
    %58 = arith.mulf %55, %57 : vector<8x512xf32>
    %59 = arith.addf %53, %58 : vector<8x512xf32>
    %60 = vector.extract_strided_slice %15 {offsets = [64, 0], sizes = [8, 512], strides = [1, 1]} : vector<72x512xf32> to vector<8x512xf32>
    %c495_i32 = arith.constant 495 : i32
    %61 = tpu.dynamic_rotate %60 by %c495_i32 dim 1 : vector<8x512xf32>, i32 -> vector<8x512xf32>
    %62 = vector.extract_strided_slice %16 {offsets = [8, 0], sizes = [1, 512], strides = [1, 1]} : vector<9x512xf32> to vector<1x512xf32>
    %63 = vector.broadcast %62 : vector<1x512xf32> to vector<8x512xf32>
    %64 = arith.mulf %61, %63 : vector<8x512xf32>
    %65 = arith.addf %59, %64 : vector<8x512xf32>
    %c0_16 = arith.constant 0 : index
    %c0_17 = arith.constant 0 : index
    %66 = vector.load %arg5[%c0_16, %c0_17] : memref<8x512xf32, #tpu.memory_space<vmem>>, vector<8x512xf32>
    %cst_18 = arith.constant 0.000000e+00 : f32
    %67 = vector.broadcast %cst_18 : f32 to vector<8x512xf32>
    %68 = arith.mulf %67, %66 : vector<8x512xf32>
    %69 = arith.addf %65, %68 : vector<8x512xf32>
    %c0_19 = arith.constant 0 : index
    %c0_20 = arith.constant 0 : index
    %70 = vector.load %arg6[%c0_19, %c0_20] : memref<8x1xf32, #tpu.memory_space<vmem>>, vector<8x1xf32>
    %71 = vector.broadcast %70 : vector<8x1xf32> to vector<8x512xf32>
    %72 = arith.addf %69, %71 : vector<8x512xf32>
    %cst_21 = arith.constant 0.000000e+00 : f32
    %73 = vector.broadcast %cst_21 : f32 to vector<8x512xf32>
    %74 = arith.maximumf %72, %73 : vector<8x512xf32>
    %c0_22 = arith.constant 0 : index
    %c0_23 = arith.constant 0 : index
    %75 = vector.load %arg7[%c0_22, %c0_23] : memref<4x8xf32, #tpu.memory_space<vmem>>, vector<4x8xf32>
    %cst_24 = arith.constant dense<0.000000e+00> : vector<4x512xf32>
    %76 = tpu.matmul %75, %74, %cst_24 {dimension_numbers = #tpu.dot_dimension_numbers<[1], [0], [0], [1], [0, 0, 1, 1], [], []>} : vector<4x8xf32>, vector<8x512xf32>, vector<4x512xf32> -> vector<4x512xf32>
    %c0_25 = arith.constant 0 : index
    %c0_26 = arith.constant 0 : index
    %77 = vector.load %arg8[%c0_25, %c0_26] : memref<4x1xf32, #tpu.memory_space<vmem>>, vector<4x1xf32>
    %cst_27 = arith.constant 0.000000e+00 : f32
    %78 = vector.broadcast %cst_27 : f32 to vector<4x1xf32>
    %79 = arith.mulf %78, %77 : vector<4x1xf32>
    %80 = vector.broadcast %79 : vector<4x1xf32> to vector<4x512xf32>
    %81 = arith.addf %76, %80 : vector<4x512xf32>
    %c0_28 = arith.constant 0 : index
    %c0_29 = arith.constant 0 : index
    %82 = vector.load %arg9[%c0_28, %c0_29] : memref<4x1xf32, #tpu.memory_space<vmem>>, vector<4x1xf32>
    %83 = vector.broadcast %82 : vector<4x1xf32> to vector<4x512xf32>
    %84 = arith.addf %81, %83 : vector<4x512xf32>
    %c0_30 = arith.constant 0 : index
    %c0_31 = arith.constant 0 : index
    %85 = vector.load %arg13[%c0_30, %c0_31] : memref<4x512xf32, #tpu.memory_space<vmem>>, vector<4x512xf32>
    tpu.vector_store %arg13[%c0_30, %c0_31], %84 {strides = array<i32>} : memref<4x512xf32, #tpu.memory_space<vmem>>, vector<4x512xf32>,
    %86 = math.absf %0 : vector<4x512xf32>
    %cst_32 = arith.constant 1.000000e-03 : f32
    %87 = vector.broadcast %cst_32 : f32 to vector<4x512xf32>
    %88 = arith.mulf %87, %86 : vector<4x512xf32>
    %cst_33 = arith.constant 1.000000e-03 : f32
    %89 = vector.broadcast %cst_33 : f32 to vector<4x512xf32>
    %90 = arith.addf %89, %88 : vector<4x512xf32>
    %91 = arith.divf %0, %90 : vector<4x512xf32>
    %92 = arith.mulf %91, %91 : vector<4x512xf32>
    %cst_34 = arith.constant dense<0.000000e+00> : vector<4xf32>
    %93 = vector.multi_reduction <add>, %92, %cst_34 [1] : vector<4x512xf32> to vector<4xf32>
    %94 = vector.shape_cast %93 : vector<4xf32> to vector<4x1xf32>
    %cst_35 = arith.constant dense<0.000000e+00> : vector<1xf32>
    %95 = vector.multi_reduction <add>, %94, %cst_35 [0] : vector<4x1xf32> to vector<1xf32>
    %96 = vector.shape_cast %95 : vector<1xf32> to vector<1x1xf32>
    %cst_36 = arith.constant 2.048000e+03 : f32
    %97 = vector.broadcast %cst_36 : f32 to vector<1x1xf32>
    %98 = arith.divf %96, %97 : vector<1x1xf32>
    %99 = math.sqrt %98 : vector<1x1xf32>
    %100 = arith.divf %84, %90 : vector<4x512xf32>
    %101 = arith.mulf %100, %100 : vector<4x512xf32>
    %cst_37 = arith.constant dense<0.000000e+00> : vector<4xf32>
    %102 = vector.multi_reduction <add>, %101, %cst_37 [1] : vector<4x512xf32> to vector<4xf32>
    %103 = vector.shape_cast %102 : vector<4xf32> to vector<4x1xf32>
    %cst_38 = arith.constant dense<0.000000e+00> : vector<1xf32>
    %104 = vector.multi_reduction <add>, %103, %cst_38 [0] : vector<4x1xf32> to vector<1xf32>
    %105 = vector.shape_cast %104 : vector<1xf32> to vector<1x1xf32>
    %cst_39 = arith.constant 2.048000e+03 : f32
    %106 = vector.broadcast %cst_39 : f32 to vector<1x1xf32>
    %107 = arith.divf %105, %106 : vector<1x1xf32>
    %108 = math.sqrt %107 : vector<1x1xf32>
    %cst_40 = arith.constant 9.99999974E-6 : f32
    %109 = vector.broadcast %cst_40 : f32 to vector<1x1xf32>
    %110 = arith.cmpf olt, %99, %109 : vector<1x1xf32>
    %cst_41 = arith.constant 9.99999974E-6 : f32
    %111 = vector.broadcast %cst_41 : f32 to vector<1x1xf32>
    %112 = arith.cmpf olt, %108, %111 : vector<1x1xf32>
    %113 = arith.ori %110, %112 : vector<1x1xi1>
    %cst_42 = arith.constant 0.00999999977 : f32
    %114 = vector.broadcast %cst_42 : f32 to vector<1x1xf32>
    %115 = arith.mulf %114, %99 : vector<1x1xf32>
    %cst_43 = arith.constant 1.000000e-30 : f32
    %116 = vector.broadcast %cst_43 : f32 to vector<1x1xf32>
    %117 = arith.maximumf %108, %116 : vector<1x1xf32>
    %118 = arith.divf %115, %117 : vector<1x1xf32>
    %cst_44 = arith.constant 9.99999997E-7 : f32
    %119 = vector.broadcast %cst_44 : f32 to vector<1x1xf32>
    %120 = arith.select %113, %119, %118 : vector<1x1xi1>, vector<1x1xf32>
    %121 = vector.broadcast %120 : vector<1x1xf32> to vector<4x512xf32>
    %122 = arith.mulf %121, %84 : vector<4x512xf32>
    %123 = arith.addf %0, %122 : vector<4x512xf32>
    %c0_45 = arith.constant 0 : index
    %c0_46 = arith.constant 0 : index
    %124 = vector.load %arg1[%c0_45, %c0_46] : memref<8x4xf32, #tpu.memory_space<vmem>>, vector<8x4xf32>
    %cst_47 = arith.constant dense<0.000000e+00> : vector<8x512xf32>
    %125 = tpu.matmul %124, %123, %cst_47 {dimension_numbers = #tpu.dot_dimension_numbers<[1], [0], [0], [1], [0, 0, 1, 1], [], []>} : vector<8x4xf32>, vector<4x512xf32>, vector<8x512xf32> -> vector<8x512xf32>
    %c0_48 = arith.constant 0 : index
    %c0_49 = arith.constant 0 : index
    %126 = vector.load %arg2[%c0_48, %c0_49] : memref<8x1xf32, #tpu.memory_space<vmem>>, vector<8x1xf32>
    %127 = vector.broadcast %120 : vector<1x1xf32> to vector<8x1xf32>
    %128 = arith.mulf %127, %126 : vector<8x1xf32>
    %129 = vector.broadcast %128 : vector<8x1xf32> to vector<8x512xf32>
    %130 = arith.addf %125, %129 : vector<8x512xf32>
    %c0_50 = arith.constant 0 : index
    %c0_51 = arith.constant 0 : index
    %131 = vector.load %arg3[%c0_50, %c0_51] : memref<8x1xf32, #tpu.memory_space<vmem>>, vector<8x1xf32>
    %132 = vector.broadcast %131 : vector<8x1xf32> to vector<8x512xf32>
    %133 = arith.addf %130, %132 : vector<8x512xf32>
    %cst_52 = arith.constant 0.000000e+00 : f32
    %134 = vector.broadcast %cst_52 : f32 to vector<8x512xf32>
    %135 = arith.maximumf %133, %134 : vector<8x512xf32>
    %c0_53 = arith.constant 0 : index
    %c0_54 = arith.constant 0 : index
    %136 = vector.load %arg4[%c0_53, %c0_54] : memref<72x8xf32, #tpu.memory_space<vmem>>, vector<72x8xf32>
    %cst_55 = arith.constant dense<0.000000e+00> : vector<72x512xf32>
    %137 = tpu.matmul %136, %135, %cst_55 {dimension_numbers = #tpu.dot_dimension_numbers<[1], [0], [0], [1], [0, 0, 1, 1], [], []>} : vector<72x8xf32>, vector<8x512xf32>, vector<72x512xf32> -> vector<72x512xf32>
    %c0_56 = arith.constant 0 : index
    %c0_57 = arith.constant 0 : index
    %138 = vector.load %arg10[%c0_56, %c0_57] : memref<9x512xf32, #tpu.memory_space<vmem>>, vector<9x512xf32>
    %139 = vector.extract_strided_slice %137 {offsets = [32, 0], sizes = [8, 512], strides = [1, 1]} : vector<72x512xf32> to vector<8x512xf32>
    %140 = vector.extract_strided_slice %137 {offsets = [0, 0], sizes = [8, 512], strides = [1, 1]} : vector<72x512xf32> to vector<8x512xf32>
    %c17_i32_58 = arith.constant 17 : i32
    %141 = tpu.dynamic_rotate %140 by %c17_i32_58 dim 1 : vector<8x512xf32>, i32 -> vector<8x512xf32>
    %142 = vector.extract_strided_slice %138 {offsets = [0, 0], sizes = [1, 512], strides = [1, 1]} : vector<9x512xf32> to vector<1x512xf32>
    %143 = vector.broadcast %142 : vector<1x512xf32> to vector<8x512xf32>
    %144 = arith.mulf %141, %143 : vector<8x512xf32>
    %145 = arith.addf %139, %144 : vector<8x512xf32>
    %146 = vector.extract_strided_slice %137 {offsets = [8, 0], sizes = [8, 512], strides = [1, 1]} : vector<72x512xf32> to vector<8x512xf32>
    %c16_i32_59 = arith.constant 16 : i32
    %147 = tpu.dynamic_rotate %146 by %c16_i32_59 dim 1 : vector<8x512xf32>, i32 -> vector<8x512xf32>
    %148 = vector.extract_strided_slice %138 {offsets = [1, 0], sizes = [1, 512], strides = [1, 1]} : vector<9x512xf32> to vector<1x512xf32>
    %149 = vector.broadcast %148 : vector<1x512xf32> to vector<8x512xf32>
    %150 = arith.mulf %147, %149 : vector<8x512xf32>
    %151 = arith.addf %145, %150 : vector<8x512xf32>
    %152 = vector.extract_strided_slice %137 {offsets = [16, 0], sizes = [8, 512], strides = [1, 1]} : vector<72x512xf32> to vector<8x512xf32>
    %c15_i32_60 = arith.constant 15 : i32
    %153 = tpu.dynamic_rotate %152 by %c15_i32_60 dim 1 : vector<8x512xf32>, i32 -> vector<8x512xf32>
    %154 = vector.extract_strided_slice %138 {offsets = [2, 0], sizes = [1, 512], strides = [1, 1]} : vector<9x512xf32> to vector<1x512xf32>
    %155 = vector.broadcast %154 : vector<1x512xf32> to vector<8x512xf32>
    %156 = arith.mulf %153, %155 : vector<8x512xf32>
    %157 = arith.addf %151, %156 : vector<8x512xf32>
    %158 = vector.extract_strided_slice %137 {offsets = [24, 0], sizes = [8, 512], strides = [1, 1]} : vector<72x512xf32> to vector<8x512xf32>
    %c1_i32_61 = arith.constant 1 : i32
    %159 = tpu.dynamic_rotate %158 by %c1_i32_61 dim 1 : vector<8x512xf32>, i32 -> vector<8x512xf32>
    %160 = vector.extract_strided_slice %138 {offsets = [3, 0], sizes = [1, 512], strides = [1, 1]} : vector<9x512xf32> to vector<1x512xf32>
    %161 = vector.broadcast %160 : vector<1x512xf32> to vector<8x512xf32>
    %162 = arith.mulf %159, %161 : vector<8x512xf32>
    %163 = arith.addf %157, %162 : vector<8x512xf32>
    %164 = vector.extract_strided_slice %137 {offsets = [40, 0], sizes = [8, 512], strides = [1, 1]} : vector<72x512xf32> to vector<8x512xf32>
    %c511_i32_62 = arith.constant 511 : i32
    %165 = tpu.dynamic_rotate %164 by %c511_i32_62 dim 1 : vector<8x512xf32>, i32 -> vector<8x512xf32>
    %166 = vector.extract_strided_slice %138 {offsets = [5, 0], sizes = [1, 512], strides = [1, 1]} : vector<9x512xf32> to vector<1x512xf32>
    %167 = vector.broadcast %166 : vector<1x512xf32> to vector<8x512xf32>
    %168 = arith.mulf %165, %167 : vector<8x512xf32>
    %169 = arith.addf %163, %168 : vector<8x512xf32>
    %170 = vector.extract_strided_slice %137 {offsets = [48, 0], sizes = [8, 512], strides = [1, 1]} : vector<72x512xf32> to vector<8x512xf32>
    %c497_i32_63 = arith.constant 497 : i32
    %171 = tpu.dynamic_rotate %170 by %c497_i32_63 dim 1 : vector<8x512xf32>, i32 -> vector<8x512xf32>
    %172 = vector.extract_strided_slice %138 {offsets = [6, 0], sizes = [1, 512], strides = [1, 1]} : vector<9x512xf32> to vector<1x512xf32>
    %173 = vector.broadcast %172 : vector<1x512xf32> to vector<8x512xf32>
    %174 = arith.mulf %171, %173 : vector<8x512xf32>
    %175 = arith.addf %169, %174 : vector<8x512xf32>
    %176 = vector.extract_strided_slice %137 {offsets = [56, 0], sizes = [8, 512], strides = [1, 1]} : vector<72x512xf32> to vector<8x512xf32>
    %c496_i32_64 = arith.constant 496 : i32
    %177 = tpu.dynamic_rotate %176 by %c496_i32_64 dim 1 : vector<8x512xf32>, i32 -> vector<8x512xf32>
    %178 = vector.extract_strided_slice %138 {offsets = [7, 0], sizes = [1, 512], strides = [1, 1]} : vector<9x512xf32> to vector<1x512xf32>
    %179 = vector.broadcast %178 : vector<1x512xf32> to vector<8x512xf32>
    %180 = arith.mulf %177, %179 : vector<8x512xf32>
    %181 = arith.addf %175, %180 : vector<8x512xf32>
    %182 = vector.extract_strided_slice %137 {offsets = [64, 0], sizes = [8, 512], strides = [1, 1]} : vector<72x512xf32> to vector<8x512xf32>
    %c495_i32_65 = arith.constant 495 : i32
    %183 = tpu.dynamic_rotate %182 by %c495_i32_65 dim 1 : vector<8x512xf32>, i32 -> vector<8x512xf32>
    %184 = vector.extract_strided_slice %138 {offsets = [8, 0], sizes = [1, 512], strides = [1, 1]} : vector<9x512xf32> to vector<1x512xf32>
    %185 = vector.broadcast %184 : vector<1x512xf32> to vector<8x512xf32>
    %186 = arith.mulf %183, %185 : vector<8x512xf32>
    %187 = arith.addf %181, %186 : vector<8x512xf32>
    %c0_66 = arith.constant 0 : index
    %c0_67 = arith.constant 0 : index
    %188 = vector.load %arg5[%c0_66, %c0_67] : memref<8x512xf32, #tpu.memory_space<vmem>>, vector<8x512xf32>
    %189 = vector.broadcast %120 : vector<1x1xf32> to vector<8x512xf32>
    %190 = arith.mulf %189, %188 : vector<8x512xf32>
    %191 = arith.addf %187, %190 : vector<8x512xf32>
    %c0_68 = arith.constant 0 : index
    %c0_69 = arith.constant 0 : index
    %192 = vector.load %arg6[%c0_68, %c0_69] : memref<8x1xf32, #tpu.memory_space<vmem>>, vector<8x1xf32>
    %193 = vector.broadcast %192 : vector<8x1xf32> to vector<8x512xf32>
    %194 = arith.addf %191, %193 : vector<8x512xf32>
    %cst_70 = arith.constant 0.000000e+00 : f32
    %195 = vector.broadcast %cst_70 : f32 to vector<8x512xf32>
    %196 = arith.maximumf %194, %195 : vector<8x512xf32>
    %c0_71 = arith.constant 0 : index
    %c0_72 = arith.constant 0 : index
    %197 = vector.load %arg7[%c0_71, %c0_72] : memref<4x8xf32, #tpu.memory_space<vmem>>, vector<4x8xf32>
    %cst_73 = arith.constant dense<0.000000e+00> : vector<4x512xf32>
    %198 = tpu.matmul %197, %196, %cst_73 {dimension_numbers = #tpu.dot_dimension_numbers<[1], [0], [0], [1], [0, 0, 1, 1], [], []>} : vector<4x8xf32>, vector<8x512xf32>, vector<4x512xf32> -> vector<4x512xf32>
    %c0_74 = arith.constant 0 : index
    %c0_75 = arith.constant 0 : index
    %199 = vector.load %arg8[%c0_74, %c0_75] : memref<4x1xf32, #tpu.memory_space<vmem>>, vector<4x1xf32>
    %200 = vector.broadcast %120 : vector<1x1xf32> to vector<4x1xf32>
    %201 = arith.mulf %200, %199 : vector<4x1xf32>
    %202 = vector.broadcast %201 : vector<4x1xf32> to vector<4x512xf32>
    %203 = arith.addf %198, %202 : vector<4x512xf32>
    %c0_76 = arith.constant 0 : index
    %c0_77 = arith.constant 0 : index
    %204 = vector.load %arg9[%c0_76, %c0_77] : memref<4x1xf32, #tpu.memory_space<vmem>>, vector<4x1xf32>
    %205 = vector.broadcast %204 : vector<4x1xf32> to vector<4x512xf32>
    %206 = arith.addf %203, %205 : vector<4x512xf32>
    %207 = arith.subf %206, %84 : vector<4x512xf32>
    %208 = arith.divf %207, %90 : vector<4x512xf32>
    %209 = arith.mulf %208, %208 : vector<4x512xf32>
    %cst_78 = arith.constant dense<0.000000e+00> : vector<4xf32>
    %210 = vector.multi_reduction <add>, %209, %cst_78 [1] : vector<4x512xf32> to vector<4xf32>
    %211 = vector.shape_cast %210 : vector<4xf32> to vector<4x1xf32>
    %cst_79 = arith.constant dense<0.000000e+00> : vector<1xf32>
    %212 = vector.multi_reduction <add>, %211, %cst_79 [0] : vector<4x1xf32> to vector<1xf32>
    %213 = vector.shape_cast %212 : vector<1xf32> to vector<1x1xf32>
    %cst_80 = arith.constant 2.048000e+03 : f32
    %214 = vector.broadcast %cst_80 : f32 to vector<1x1xf32>
    %215 = arith.divf %213, %214 : vector<1x1xf32>
    %216 = math.sqrt %215 : vector<1x1xf32>
    %217 = arith.divf %216, %120 : vector<1x1xf32>
    %218 = arith.maximumf %108, %217 : vector<1x1xf32>
    %cst_81 = arith.constant 1.000000e-15 : f32
    %219 = vector.broadcast %cst_81 : f32 to vector<1x1xf32>
    %220 = arith.cmpf ole, %218, %219 : vector<1x1xf32>
    %cst_82 = arith.constant 1.000000e-03 : f32
    %221 = vector.broadcast %cst_82 : f32 to vector<1x1xf32>
    %222 = arith.mulf %120, %221 : vector<1x1xf32>
    %cst_83 = arith.constant 9.99999997E-7 : f32
    %223 = vector.broadcast %cst_83 : f32 to vector<1x1xf32>
    %224 = arith.maximumf %223, %222 : vector<1x1xf32>
    %cst_84 = arith.constant 1.000000e-15 : f32
    %225 = vector.broadcast %cst_84 : f32 to vector<1x1xf32>
    %226 = arith.maximumf %218, %225 : vector<1x1xf32>
    %cst_85 = arith.constant 0.00999999977 : f32
    %227 = vector.broadcast %cst_85 : f32 to vector<1x1xf32>
    %228 = arith.divf %227, %226 : vector<1x1xf32>
    %229 = math.log %228 : vector<1x1xf32>
    %cst_86 = arith.constant 0.166666672 : f32
    %230 = vector.broadcast %cst_86 : f32 to vector<1x1xf32>
    %231 = arith.mulf %230, %229 : vector<1x1xf32>
    %232 = math.exp %231 : vector<1x1xf32>
    %233 = arith.select %220, %224, %232 : vector<1x1xi1>, vector<1x1xf32>
    %cst_87 = arith.constant 1.000000e+02 : f32
    %234 = vector.broadcast %cst_87 : f32 to vector<1x1xf32>
    %235 = arith.mulf %234, %120 : vector<1x1xf32>
    %236 = arith.minimumf %235, %233 : vector<1x1xf32>
    %cst_88 = arith.constant 1.000000e+00 : f32
    %237 = vector.broadcast %cst_88 : f32 to vector<1x1xf32>
    %238 = arith.minimumf %236, %237 : vector<1x1xf32>
    %c0_89 = arith.constant 0 : index
    %c0_90 = arith.constant 0 : index
    %239 = vector.load %arg15[%c0_89, %c0_90] : memref<1x1xf32, #tpu.memory_space<vmem>>, vector<1x1xf32>
    tpu.vector_store %arg15[%c0_89, %c0_90], %238 {strides = array<i32>} : memref<1x1xf32, #tpu.memory_space<vmem>>, vector<1x1xf32>,
    %c0_91 = arith.constant 0 : index
    %c0_92 = arith.constant 0 : index
    %240 = vector.load %arg15[%c0_91, %c0_92] : memref<1x1xf32, #tpu.memory_space<vmem>>, vector<1x1xf32>
    %241 = vector.extract %240[0, 0] : f32 from vector<1x1xf32>
    %cst_93 = arith.constant 0.000000e+00 : f32
    %cst_94 = arith.constant 0.000000e+00 : f32
    %242:3 = scf.while (%arg16 = %cst_93, %arg17 = %241, %arg18 = %cst_94) : (f32, f32, f32) -> (f32, f32, f32) {
      %cst_98 = arith.constant 1.000000e+00 : f32
      %251 = arith.subf %cst_98, %arg16 : f32
      %cst_99 = arith.constant 1.000000e-07 : f32
      %252 = arith.cmpf ogt, %251, %cst_99 : f32
      %cst_100 = arith.constant 1.000000e+03 : f32
      %253 = arith.cmpf olt, %arg18, %cst_100 : f32
      %254 = arith.andi %252, %253 : i1
      scf.condition(%254) %arg16, %arg17, %arg18 : f32, f32, f32
    } do {
    ^bb0(%arg16: f32, %arg17: f32, %arg18: f32):
      %c0_98 = arith.constant 0 : index
      %c0_99 = arith.constant 0 : index
      %251 = vector.load %arg11[%c0_98, %c0_99] : memref<4x512xf32, #tpu.memory_space<vmem>>, vector<4x512xf32>
      %cst_100 = arith.constant 1.000000e+00 : f32
      %252 = arith.subf %cst_100, %arg16 : f32
      %253 = arith.minimumf %arg17, %252 : f32
      %c0_101 = arith.constant 0 : index
      %c0_102 = arith.constant 0 : index
      %254 = vector.load %arg13[%c0_101, %c0_102] : memref<4x512xf32, #tpu.memory_space<vmem>>, vector<4x512xf32>
      %cst_103 = arith.constant 2.000000e-01 : f32
      %255 = arith.mulf %253, %cst_103 : f32
      %256 = arith.addf %arg16, %255 : f32
      %cst_104 = arith.constant 2.000000e-01 : f32
      %257 = vector.broadcast %cst_104 : f32 to vector<4x512xf32>
      %258 = arith.mulf %257, %254 : vector<4x512xf32>
      %259 = vector.broadcast %253 : f32 to vector<4x512xf32>
      %260 = arith.mulf %259, %258 : vector<4x512xf32>
      %261 = arith.addf %251, %260 : vector<4x512xf32>
      %c0_105 = arith.constant 0 : index
      %c0_106 = arith.constant 0 : index
      %262 = vector.load %arg1[%c0_105, %c0_106] : memref<8x4xf32, #tpu.memory_space<vmem>>, vector<8x4xf32>
      %cst_107 = arith.constant dense<0.000000e+00> : vector<8x512xf32>
      %263 = tpu.matmul %262, %261, %cst_107 {dimension_numbers = #tpu.dot_dimension_numbers<[1], [0], [0], [1], [0, 0, 1, 1], [], []>} : vector<8x4xf32>, vector<4x512xf32>, vector<8x512xf32> -> vector<8x512xf32>
      %c0_108 = arith.constant 0 : index
      %c0_109 = arith.constant 0 : index
      %264 = vector.load %arg2[%c0_108, %c0_109] : memref<8x1xf32, #tpu.memory_space<vmem>>, vector<8x1xf32>
      %265 = vector.broadcast %256 : f32 to vector<8x1xf32>
      %266 = arith.mulf %265, %264 : vector<8x1xf32>
      %267 = vector.broadcast %266 : vector<8x1xf32> to vector<8x512xf32>
      %268 = arith.addf %263, %267 : vector<8x512xf32>
      %c0_110 = arith.constant 0 : index
      %c0_111 = arith.constant 0 : index
      %269 = vector.load %arg3[%c0_110, %c0_111] : memref<8x1xf32, #tpu.memory_space<vmem>>, vector<8x1xf32>
      %270 = vector.broadcast %269 : vector<8x1xf32> to vector<8x512xf32>
      %271 = arith.addf %268, %270 : vector<8x512xf32>
      %cst_112 = arith.constant 0.000000e+00 : f32
      %272 = vector.broadcast %cst_112 : f32 to vector<8x512xf32>
      %273 = arith.maximumf %271, %272 : vector<8x512xf32>
      %c0_113 = arith.constant 0 : index
      %c0_114 = arith.constant 0 : index
      %274 = vector.load %arg4[%c0_113, %c0_114] : memref<72x8xf32, #tpu.memory_space<vmem>>, vector<72x8xf32>
      %cst_115 = arith.constant dense<0.000000e+00> : vector<72x512xf32>
      %275 = tpu.matmul %274, %273, %cst_115 {dimension_numbers = #tpu.dot_dimension_numbers<[1], [0], [0], [1], [0, 0, 1, 1], [], []>} : vector<72x8xf32>, vector<8x512xf32>, vector<72x512xf32> -> vector<72x512xf32>
      %c0_116 = arith.constant 0 : index
      %c0_117 = arith.constant 0 : index
      %276 = vector.load %arg10[%c0_116, %c0_117] : memref<9x512xf32, #tpu.memory_space<vmem>>, vector<9x512xf32>
      %277 = vector.extract_strided_slice %275 {offsets = [32, 0], sizes = [8, 512], strides = [1, 1]} : vector<72x512xf32> to vector<8x512xf32>
      %278 = vector.extract_strided_slice %275 {offsets = [0, 0], sizes = [8, 512], strides = [1, 1]} : vector<72x512xf32> to vector<8x512xf32>
      %c17_i32_118 = arith.constant 17 : i32
      %279 = tpu.dynamic_rotate %278 by %c17_i32_118 dim 1 : vector<8x512xf32>, i32 -> vector<8x512xf32>
      %280 = vector.extract_strided_slice %276 {offsets = [0, 0], sizes = [1, 512], strides = [1, 1]} : vector<9x512xf32> to vector<1x512xf32>
      %281 = vector.broadcast %280 : vector<1x512xf32> to vector<8x512xf32>
      %282 = arith.mulf %279, %281 : vector<8x512xf32>
      %283 = arith.addf %277, %282 : vector<8x512xf32>
      %284 = vector.extract_strided_slice %275 {offsets = [8, 0], sizes = [8, 512], strides = [1, 1]} : vector<72x512xf32> to vector<8x512xf32>
      %c16_i32_119 = arith.constant 16 : i32
      %285 = tpu.dynamic_rotate %284 by %c16_i32_119 dim 1 : vector<8x512xf32>, i32 -> vector<8x512xf32>
      %286 = vector.extract_strided_slice %276 {offsets = [1, 0], sizes = [1, 512], strides = [1, 1]} : vector<9x512xf32> to vector<1x512xf32>
      %287 = vector.broadcast %286 : vector<1x512xf32> to vector<8x512xf32>
      %288 = arith.mulf %285, %287 : vector<8x512xf32>
      %289 = arith.addf %283, %288 : vector<8x512xf32>
      %290 = vector.extract_strided_slice %275 {offsets = [16, 0], sizes = [8, 512], strides = [1, 1]} : vector<72x512xf32> to vector<8x512xf32>
      %c15_i32_120 = arith.constant 15 : i32
      %291 = tpu.dynamic_rotate %290 by %c15_i32_120 dim 1 : vector<8x512xf32>, i32 -> vector<8x512xf32>
      %292 = vector.extract_strided_slice %276 {offsets = [2, 0], sizes = [1, 512], strides = [1, 1]} : vector<9x512xf32> to vector<1x512xf32>
      %293 = vector.broadcast %292 : vector<1x512xf32> to vector<8x512xf32>
      %294 = arith.mulf %291, %293 : vector<8x512xf32>
      %295 = arith.addf %289, %294 : vector<8x512xf32>
      %296 = vector.extract_strided_slice %275 {offsets = [24, 0], sizes = [8, 512], strides = [1, 1]} : vector<72x512xf32> to vector<8x512xf32>
      %c1_i32_121 = arith.constant 1 : i32
      %297 = tpu.dynamic_rotate %296 by %c1_i32_121 dim 1 : vector<8x512xf32>, i32 -> vector<8x512xf32>
      %298 = vector.extract_strided_slice %276 {offsets = [3, 0], sizes = [1, 512], strides = [1, 1]} : vector<9x512xf32> to vector<1x512xf32>
      %299 = vector.broadcast %298 : vector<1x512xf32> to vector<8x512xf32>
      %300 = arith.mulf %297, %299 : vector<8x512xf32>
      %301 = arith.addf %295, %300 : vector<8x512xf32>
      %302 = vector.extract_strided_slice %275 {offsets = [40, 0], sizes = [8, 512], strides = [1, 1]} : vector<72x512xf32> to vector<8x512xf32>
      %c511_i32_122 = arith.constant 511 : i32
      %303 = tpu.dynamic_rotate %302 by %c511_i32_122 dim 1 : vector<8x512xf32>, i32 -> vector<8x512xf32>
      %304 = vector.extract_strided_slice %276 {offsets = [5, 0], sizes = [1, 512], strides = [1, 1]} : vector<9x512xf32> to vector<1x512xf32>
      %305 = vector.broadcast %304 : vector<1x512xf32> to vector<8x512xf32>
      %306 = arith.mulf %303, %305 : vector<8x512xf32>
      %307 = arith.addf %301, %306 : vector<8x512xf32>
      %308 = vector.extract_strided_slice %275 {offsets = [48, 0], sizes = [8, 512], strides = [1, 1]} : vector<72x512xf32> to vector<8x512xf32>
      %c497_i32_123 = arith.constant 497 : i32
      %309 = tpu.dynamic_rotate %308 by %c497_i32_123 dim 1 : vector<8x512xf32>, i32 -> vector<8x512xf32>
      %310 = vector.extract_strided_slice %276 {offsets = [6, 0], sizes = [1, 512], strides = [1, 1]} : vector<9x512xf32> to vector<1x512xf32>
      %311 = vector.broadcast %310 : vector<1x512xf32> to vector<8x512xf32>
      %312 = arith.mulf %309, %311 : vector<8x512xf32>
      %313 = arith.addf %307, %312 : vector<8x512xf32>
      %314 = vector.extract_strided_slice %275 {offsets = [56, 0], sizes = [8, 512], strides = [1, 1]} : vector<72x512xf32> to vector<8x512xf32>
      %c496_i32_124 = arith.constant 496 : i32
      %315 = tpu.dynamic_rotate %314 by %c496_i32_124 dim 1 : vector<8x512xf32>, i32 -> vector<8x512xf32>
      %316 = vector.extract_strided_slice %276 {offsets = [7, 0], sizes = [1, 512], strides = [1, 1]} : vector<9x512xf32> to vector<1x512xf32>
      %317 = vector.broadcast %316 : vector<1x512xf32> to vector<8x512xf32>
      %318 = arith.mulf %315, %317 : vector<8x512xf32>
      %319 = arith.addf %313, %318 : vector<8x512xf32>
      %320 = vector.extract_strided_slice %275 {offsets = [64, 0], sizes = [8, 512], strides = [1, 1]} : vector<72x512xf32> to vector<8x512xf32>
      %c495_i32_125 = arith.constant 495 : i32
      %321 = tpu.dynamic_rotate %320 by %c495_i32_125 dim 1 : vector<8x512xf32>, i32 -> vector<8x512xf32>
      %322 = vector.extract_strided_slice %276 {offsets = [8, 0], sizes = [1, 512], strides = [1, 1]} : vector<9x512xf32> to vector<1x512xf32>
      %323 = vector.broadcast %322 : vector<1x512xf32> to vector<8x512xf32>
      %324 = arith.mulf %321, %323 : vector<8x512xf32>
      %325 = arith.addf %319, %324 : vector<8x512xf32>
      %c0_126 = arith.constant 0 : index
      %c0_127 = arith.constant 0 : index
      %326 = vector.load %arg5[%c0_126, %c0_127] : memref<8x512xf32, #tpu.memory_space<vmem>>, vector<8x512xf32>
      %327 = vector.broadcast %256 : f32 to vector<8x512xf32>
      %328 = arith.mulf %327, %326 : vector<8x512xf32>
      %329 = arith.addf %325, %328 : vector<8x512xf32>
      %c0_128 = arith.constant 0 : index
      %c0_129 = arith.constant 0 : index
      %330 = vector.load %arg6[%c0_128, %c0_129] : memref<8x1xf32, #tpu.memory_space<vmem>>, vector<8x1xf32>
      %331 = vector.broadcast %330 : vector<8x1xf32> to vector<8x512xf32>
      %332 = arith.addf %329, %331 : vector<8x512xf32>
      %cst_130 = arith.constant 0.000000e+00 : f32
      %333 = vector.broadcast %cst_130 : f32 to vector<8x512xf32>
      %334 = arith.maximumf %332, %333 : vector<8x512xf32>
      %c0_131 = arith.constant 0 : index
      %c0_132 = arith.constant 0 : index
      %335 = vector.load %arg7[%c0_131, %c0_132] : memref<4x8xf32, #tpu.memory_space<vmem>>, vector<4x8xf32>
      %cst_133 = arith.constant dense<0.000000e+00> : vector<4x512xf32>
      %336 = tpu.matmul %335, %334, %cst_133 {dimension_numbers = #tpu.dot_dimension_numbers<[1], [0], [0], [1], [0, 0, 1, 1], [], []>} : vector<4x8xf32>, vector<8x512xf32>, vector<4x512xf32> -> vector<4x512xf32>
      %c0_134 = arith.constant 0 : index
      %c0_135 = arith.constant 0 : index
      %337 = vector.load %arg8[%c0_134, %c0_135] : memref<4x1xf32, #tpu.memory_space<vmem>>, vector<4x1xf32>
      %338 = vector.broadcast %256 : f32 to vector<4x1xf32>
      %339 = arith.mulf %338, %337 : vector<4x1xf32>
      %340 = vector.broadcast %339 : vector<4x1xf32> to vector<4x512xf32>
      %341 = arith.addf %336, %340 : vector<4x512xf32>
      %c0_136 = arith.constant 0 : index
      %c0_137 = arith.constant 0 : index
      %342 = vector.load %arg9[%c0_136, %c0_137] : memref<4x1xf32, #tpu.memory_space<vmem>>, vector<4x1xf32>
      %343 = vector.broadcast %342 : vector<4x1xf32> to vector<4x512xf32>
      %344 = arith.addf %341, %343 : vector<4x512xf32>
      %cst_138 = arith.constant 3.000000e-01 : f32
      %345 = arith.mulf %253, %cst_138 : f32
      %346 = arith.addf %arg16, %345 : f32
      %cst_139 = arith.constant 7.500000e-02 : f32
      %347 = vector.broadcast %cst_139 : f32 to vector<4x512xf32>
      %348 = arith.mulf %347, %254 : vector<4x512xf32>
      %cst_140 = arith.constant 2.250000e-01 : f32
      %349 = vector.broadcast %cst_140 : f32 to vector<4x512xf32>
      %350 = arith.mulf %349, %344 : vector<4x512xf32>
      %351 = arith.addf %348, %350 : vector<4x512xf32>
      %352 = vector.broadcast %253 : f32 to vector<4x512xf32>
      %353 = arith.mulf %352, %351 : vector<4x512xf32>
      %354 = arith.addf %251, %353 : vector<4x512xf32>
      %c0_141 = arith.constant 0 : index
      %c0_142 = arith.constant 0 : index
      %355 = vector.load %arg1[%c0_141, %c0_142] : memref<8x4xf32, #tpu.memory_space<vmem>>, vector<8x4xf32>
      %cst_143 = arith.constant dense<0.000000e+00> : vector<8x512xf32>
      %356 = tpu.matmul %355, %354, %cst_143 {dimension_numbers = #tpu.dot_dimension_numbers<[1], [0], [0], [1], [0, 0, 1, 1], [], []>} : vector<8x4xf32>, vector<4x512xf32>, vector<8x512xf32> -> vector<8x512xf32>
      %c0_144 = arith.constant 0 : index
      %c0_145 = arith.constant 0 : index
      %357 = vector.load %arg2[%c0_144, %c0_145] : memref<8x1xf32, #tpu.memory_space<vmem>>, vector<8x1xf32>
      %358 = vector.broadcast %346 : f32 to vector<8x1xf32>
      %359 = arith.mulf %358, %357 : vector<8x1xf32>
      %360 = vector.broadcast %359 : vector<8x1xf32> to vector<8x512xf32>
      %361 = arith.addf %356, %360 : vector<8x512xf32>
      %c0_146 = arith.constant 0 : index
      %c0_147 = arith.constant 0 : index
      %362 = vector.load %arg3[%c0_146, %c0_147] : memref<8x1xf32, #tpu.memory_space<vmem>>, vector<8x1xf32>
      %363 = vector.broadcast %362 : vector<8x1xf32> to vector<8x512xf32>
      %364 = arith.addf %361, %363 : vector<8x512xf32>
      %cst_148 = arith.constant 0.000000e+00 : f32
      %365 = vector.broadcast %cst_148 : f32 to vector<8x512xf32>
      %366 = arith.maximumf %364, %365 : vector<8x512xf32>
      %c0_149 = arith.constant 0 : index
      %c0_150 = arith.constant 0 : index
      %367 = vector.load %arg4[%c0_149, %c0_150] : memref<72x8xf32, #tpu.memory_space<vmem>>, vector<72x8xf32>
      %cst_151 = arith.constant dense<0.000000e+00> : vector<72x512xf32>
      %368 = tpu.matmul %367, %366, %cst_151 {dimension_numbers = #tpu.dot_dimension_numbers<[1], [0], [0], [1], [0, 0, 1, 1], [], []>} : vector<72x8xf32>, vector<8x512xf32>, vector<72x512xf32> -> vector<72x512xf32>
      %c0_152 = arith.constant 0 : index
      %c0_153 = arith.constant 0 : index
      %369 = vector.load %arg10[%c0_152, %c0_153] : memref<9x512xf32, #tpu.memory_space<vmem>>, vector<9x512xf32>
      %370 = vector.extract_strided_slice %368 {offsets = [32, 0], sizes = [8, 512], strides = [1, 1]} : vector<72x512xf32> to vector<8x512xf32>
      %371 = vector.extract_strided_slice %368 {offsets = [0, 0], sizes = [8, 512], strides = [1, 1]} : vector<72x512xf32> to vector<8x512xf32>
      %c17_i32_154 = arith.constant 17 : i32
      %372 = tpu.dynamic_rotate %371 by %c17_i32_154 dim 1 : vector<8x512xf32>, i32 -> vector<8x512xf32>
      %373 = vector.extract_strided_slice %369 {offsets = [0, 0], sizes = [1, 512], strides = [1, 1]} : vector<9x512xf32> to vector<1x512xf32>
      %374 = vector.broadcast %373 : vector<1x512xf32> to vector<8x512xf32>
      %375 = arith.mulf %372, %374 : vector<8x512xf32>
      %376 = arith.addf %370, %375 : vector<8x512xf32>
      %377 = vector.extract_strided_slice %368 {offsets = [8, 0], sizes = [8, 512], strides = [1, 1]} : vector<72x512xf32> to vector<8x512xf32>
      %c16_i32_155 = arith.constant 16 : i32
      %378 = tpu.dynamic_rotate %377 by %c16_i32_155 dim 1 : vector<8x512xf32>, i32 -> vector<8x512xf32>
      %379 = vector.extract_strided_slice %369 {offsets = [1, 0], sizes = [1, 512], strides = [1, 1]} : vector<9x512xf32> to vector<1x512xf32>
      %380 = vector.broadcast %379 : vector<1x512xf32> to vector<8x512xf32>
      %381 = arith.mulf %378, %380 : vector<8x512xf32>
      %382 = arith.addf %376, %381 : vector<8x512xf32>
      %383 = vector.extract_strided_slice %368 {offsets = [16, 0], sizes = [8, 512], strides = [1, 1]} : vector<72x512xf32> to vector<8x512xf32>
      %c15_i32_156 = arith.constant 15 : i32
      %384 = tpu.dynamic_rotate %383 by %c15_i32_156 dim 1 : vector<8x512xf32>, i32 -> vector<8x512xf32>
      %385 = vector.extract_strided_slice %369 {offsets = [2, 0], sizes = [1, 512], strides = [1, 1]} : vector<9x512xf32> to vector<1x512xf32>
      %386 = vector.broadcast %385 : vector<1x512xf32> to vector<8x512xf32>
      %387 = arith.mulf %384, %386 : vector<8x512xf32>
      %388 = arith.addf %382, %387 : vector<8x512xf32>
      %389 = vector.extract_strided_slice %368 {offsets = [24, 0], sizes = [8, 512], strides = [1, 1]} : vector<72x512xf32> to vector<8x512xf32>
      %c1_i32_157 = arith.constant 1 : i32
      %390 = tpu.dynamic_rotate %389 by %c1_i32_157 dim 1 : vector<8x512xf32>, i32 -> vector<8x512xf32>
      %391 = vector.extract_strided_slice %369 {offsets = [3, 0], sizes = [1, 512], strides = [1, 1]} : vector<9x512xf32> to vector<1x512xf32>
      %392 = vector.broadcast %391 : vector<1x512xf32> to vector<8x512xf32>
      %393 = arith.mulf %390, %392 : vector<8x512xf32>
      %394 = arith.addf %388, %393 : vector<8x512xf32>
      %395 = vector.extract_strided_slice %368 {offsets = [40, 0], sizes = [8, 512], strides = [1, 1]} : vector<72x512xf32> to vector<8x512xf32>
      %c511_i32_158 = arith.constant 511 : i32
      %396 = tpu.dynamic_rotate %395 by %c511_i32_158 dim 1 : vector<8x512xf32>, i32 -> vector<8x512xf32>
      %397 = vector.extract_strided_slice %369 {offsets = [5, 0], sizes = [1, 512], strides = [1, 1]} : vector<9x512xf32> to vector<1x512xf32>
      %398 = vector.broadcast %397 : vector<1x512xf32> to vector<8x512xf32>
      %399 = arith.mulf %396, %398 : vector<8x512xf32>
      %400 = arith.addf %394, %399 : vector<8x512xf32>
      %401 = vector.extract_strided_slice %368 {offsets = [48, 0], sizes = [8, 512], strides = [1, 1]} : vector<72x512xf32> to vector<8x512xf32>
      %c497_i32_159 = arith.constant 497 : i32
      %402 = tpu.dynamic_rotate %401 by %c497_i32_159 dim 1 : vector<8x512xf32>, i32 -> vector<8x512xf32>
      %403 = vector.extract_strided_slice %369 {offsets = [6, 0], sizes = [1, 512], strides = [1, 1]} : vector<9x512xf32> to vector<1x512xf32>
      %404 = vector.broadcast %403 : vector<1x512xf32> to vector<8x512xf32>
      %405 = arith.mulf %402, %404 : vector<8x512xf32>
      %406 = arith.addf %400, %405 : vector<8x512xf32>
      %407 = vector.extract_strided_slice %368 {offsets = [56, 0], sizes = [8, 512], strides = [1, 1]} : vector<72x512xf32> to vector<8x512xf32>
      %c496_i32_160 = arith.constant 496 : i32
      %408 = tpu.dynamic_rotate %407 by %c496_i32_160 dim 1 : vector<8x512xf32>, i32 -> vector<8x512xf32>
      %409 = vector.extract_strided_slice %369 {offsets = [7, 0], sizes = [1, 512], strides = [1, 1]} : vector<9x512xf32> to vector<1x512xf32>
      %410 = vector.broadcast %409 : vector<1x512xf32> to vector<8x512xf32>
      %411 = arith.mulf %408, %410 : vector<8x512xf32>
      %412 = arith.addf %406, %411 : vector<8x512xf32>
      %413 = vector.extract_strided_slice %368 {offsets = [64, 0], sizes = [8, 512], strides = [1, 1]} : vector<72x512xf32> to vector<8x512xf32>
      %c495_i32_161 = arith.constant 495 : i32
      %414 = tpu.dynamic_rotate %413 by %c495_i32_161 dim 1 : vector<8x512xf32>, i32 -> vector<8x512xf32>
      %415 = vector.extract_strided_slice %369 {offsets = [8, 0], sizes = [1, 512], strides = [1, 1]} : vector<9x512xf32> to vector<1x512xf32>
      %416 = vector.broadcast %415 : vector<1x512xf32> to vector<8x512xf32>
      %417 = arith.mulf %414, %416 : vector<8x512xf32>
      %418 = arith.addf %412, %417 : vector<8x512xf32>
      %c0_162 = arith.constant 0 : index
      %c0_163 = arith.constant 0 : index
      %419 = vector.load %arg5[%c0_162, %c0_163] : memref<8x512xf32, #tpu.memory_space<vmem>>, vector<8x512xf32>
      %420 = vector.broadcast %346 : f32 to vector<8x512xf32>
      %421 = arith.mulf %420, %419 : vector<8x512xf32>
      %422 = arith.addf %418, %421 : vector<8x512xf32>
      %c0_164 = arith.constant 0 : index
      %c0_165 = arith.constant 0 : index
      %423 = vector.load %arg6[%c0_164, %c0_165] : memref<8x1xf32, #tpu.memory_space<vmem>>, vector<8x1xf32>
      %424 = vector.broadcast %423 : vector<8x1xf32> to vector<8x512xf32>
      %425 = arith.addf %422, %424 : vector<8x512xf32>
      %cst_166 = arith.constant 0.000000e+00 : f32
      %426 = vector.broadcast %cst_166 : f32 to vector<8x512xf32>
      %427 = arith.maximumf %425, %426 : vector<8x512xf32>
      %c0_167 = arith.constant 0 : index
      %c0_168 = arith.constant 0 : index
      %428 = vector.load %arg7[%c0_167, %c0_168] : memref<4x8xf32, #tpu.memory_space<vmem>>, vector<4x8xf32>
      %cst_169 = arith.constant dense<0.000000e+00> : vector<4x512xf32>
      %429 = tpu.matmul %428, %427, %cst_169 {dimension_numbers = #tpu.dot_dimension_numbers<[1], [0], [0], [1], [0, 0, 1, 1], [], []>} : vector<4x8xf32>, vector<8x512xf32>, vector<4x512xf32> -> vector<4x512xf32>
      %c0_170 = arith.constant 0 : index
      %c0_171 = arith.constant 0 : index
      %430 = vector.load %arg8[%c0_170, %c0_171] : memref<4x1xf32, #tpu.memory_space<vmem>>, vector<4x1xf32>
      %431 = vector.broadcast %346 : f32 to vector<4x1xf32>
      %432 = arith.mulf %431, %430 : vector<4x1xf32>
      %433 = vector.broadcast %432 : vector<4x1xf32> to vector<4x512xf32>
      %434 = arith.addf %429, %433 : vector<4x512xf32>
      %c0_172 = arith.constant 0 : index
      %c0_173 = arith.constant 0 : index
      %435 = vector.load %arg9[%c0_172, %c0_173] : memref<4x1xf32, #tpu.memory_space<vmem>>, vector<4x1xf32>
      %436 = vector.broadcast %435 : vector<4x1xf32> to vector<4x512xf32>
      %437 = arith.addf %434, %436 : vector<4x512xf32>
      %cst_174 = arith.constant 8.000000e-01 : f32
      %438 = arith.mulf %253, %cst_174 : f32
      %439 = arith.addf %arg16, %438 : f32
      %cst_175 = arith.constant 0.977777779 : f32
      %440 = vector.broadcast %cst_175 : f32 to vector<4x512xf32>
      %441 = arith.mulf %440, %254 : vector<4x512xf32>
      %cst_176 = arith.constant -3.73333335 : f32
      %442 = vector.broadcast %cst_176 : f32 to vector<4x512xf32>
      %443 = arith.mulf %442, %344 : vector<4x512xf32>
      %444 = arith.addf %441, %443 : vector<4x512xf32>
      %cst_177 = arith.constant 3.55555558 : f32
      %445 = vector.broadcast %cst_177 : f32 to vector<4x512xf32>
      %446 = arith.mulf %445, %437 : vector<4x512xf32>
      %447 = arith.addf %444, %446 : vector<4x512xf32>
      %448 = vector.broadcast %253 : f32 to vector<4x512xf32>
      %449 = arith.mulf %448, %447 : vector<4x512xf32>
      %450 = arith.addf %251, %449 : vector<4x512xf32>
      %c0_178 = arith.constant 0 : index
      %c0_179 = arith.constant 0 : index
      %451 = vector.load %arg1[%c0_178, %c0_179] : memref<8x4xf32, #tpu.memory_space<vmem>>, vector<8x4xf32>
      %cst_180 = arith.constant dense<0.000000e+00> : vector<8x512xf32>
      %452 = tpu.matmul %451, %450, %cst_180 {dimension_numbers = #tpu.dot_dimension_numbers<[1], [0], [0], [1], [0, 0, 1, 1], [], []>} : vector<8x4xf32>, vector<4x512xf32>, vector<8x512xf32> -> vector<8x512xf32>
      %c0_181 = arith.constant 0 : index
      %c0_182 = arith.constant 0 : index
      %453 = vector.load %arg2[%c0_181, %c0_182] : memref<8x1xf32, #tpu.memory_space<vmem>>, vector<8x1xf32>
      %454 = vector.broadcast %439 : f32 to vector<8x1xf32>
      %455 = arith.mulf %454, %453 : vector<8x1xf32>
      %456 = vector.broadcast %455 : vector<8x1xf32> to vector<8x512xf32>
      %457 = arith.addf %452, %456 : vector<8x512xf32>
      %c0_183 = arith.constant 0 : index
      %c0_184 = arith.constant 0 : index
      %458 = vector.load %arg3[%c0_183, %c0_184] : memref<8x1xf32, #tpu.memory_space<vmem>>, vector<8x1xf32>
      %459 = vector.broadcast %458 : vector<8x1xf32> to vector<8x512xf32>
      %460 = arith.addf %457, %459 : vector<8x512xf32>
      %cst_185 = arith.constant 0.000000e+00 : f32
      %461 = vector.broadcast %cst_185 : f32 to vector<8x512xf32>
      %462 = arith.maximumf %460, %461 : vector<8x512xf32>
      %c0_186 = arith.constant 0 : index
      %c0_187 = arith.constant 0 : index
      %463 = vector.load %arg4[%c0_186, %c0_187] : memref<72x8xf32, #tpu.memory_space<vmem>>, vector<72x8xf32>
      %cst_188 = arith.constant dense<0.000000e+00> : vector<72x512xf32>
      %464 = tpu.matmul %463, %462, %cst_188 {dimension_numbers = #tpu.dot_dimension_numbers<[1], [0], [0], [1], [0, 0, 1, 1], [], []>} : vector<72x8xf32>, vector<8x512xf32>, vector<72x512xf32> -> vector<72x512xf32>
      %c0_189 = arith.constant 0 : index
      %c0_190 = arith.constant 0 : index
      %465 = vector.load %arg10[%c0_189, %c0_190] : memref<9x512xf32, #tpu.memory_space<vmem>>, vector<9x512xf32>
      %466 = vector.extract_strided_slice %464 {offsets = [32, 0], sizes = [8, 512], strides = [1, 1]} : vector<72x512xf32> to vector<8x512xf32>
      %467 = vector.extract_strided_slice %464 {offsets = [0, 0], sizes = [8, 512], strides = [1, 1]} : vector<72x512xf32> to vector<8x512xf32>
      %c17_i32_191 = arith.constant 17 : i32
      %468 = tpu.dynamic_rotate %467 by %c17_i32_191 dim 1 : vector<8x512xf32>, i32 -> vector<8x512xf32>
      %469 = vector.extract_strided_slice %465 {offsets = [0, 0], sizes = [1, 512], strides = [1, 1]} : vector<9x512xf32> to vector<1x512xf32>
      %470 = vector.broadcast %469 : vector<1x512xf32> to vector<8x512xf32>
      %471 = arith.mulf %468, %470 : vector<8x512xf32>
      %472 = arith.addf %466, %471 : vector<8x512xf32>
      %473 = vector.extract_strided_slice %464 {offsets = [8, 0], sizes = [8, 512], strides = [1, 1]} : vector<72x512xf32> to vector<8x512xf32>
      %c16_i32_192 = arith.constant 16 : i32
      %474 = tpu.dynamic_rotate %473 by %c16_i32_192 dim 1 : vector<8x512xf32>, i32 -> vector<8x512xf32>
      %475 = vector.extract_strided_slice %465 {offsets = [1, 0], sizes = [1, 512], strides = [1, 1]} : vector<9x512xf32> to vector<1x512xf32>
      %476 = vector.broadcast %475 : vector<1x512xf32> to vector<8x512xf32>
      %477 = arith.mulf %474, %476 : vector<8x512xf32>
      %478 = arith.addf %472, %477 : vector<8x512xf32>
      %479 = vector.extract_strided_slice %464 {offsets = [16, 0], sizes = [8, 512], strides = [1, 1]} : vector<72x512xf32> to vector<8x512xf32>
      %c15_i32_193 = arith.constant 15 : i32
      %480 = tpu.dynamic_rotate %479 by %c15_i32_193 dim 1 : vector<8x512xf32>, i32 -> vector<8x512xf32>
      %481 = vector.extract_strided_slice %465 {offsets = [2, 0], sizes = [1, 512], strides = [1, 1]} : vector<9x512xf32> to vector<1x512xf32>
      %482 = vector.broadcast %481 : vector<1x512xf32> to vector<8x512xf32>
      %483 = arith.mulf %480, %482 : vector<8x512xf32>
      %484 = arith.addf %478, %483 : vector<8x512xf32>
      %485 = vector.extract_strided_slice %464 {offsets = [24, 0], sizes = [8, 512], strides = [1, 1]} : vector<72x512xf32> to vector<8x512xf32>
      %c1_i32_194 = arith.constant 1 : i32
      %486 = tpu.dynamic_rotate %485 by %c1_i32_194 dim 1 : vector<8x512xf32>, i32 -> vector<8x512xf32>
      %487 = vector.extract_strided_slice %465 {offsets = [3, 0], sizes = [1, 512], strides = [1, 1]} : vector<9x512xf32> to vector<1x512xf32>
      %488 = vector.broadcast %487 : vector<1x512xf32> to vector<8x512xf32>
      %489 = arith.mulf %486, %488 : vector<8x512xf32>
      %490 = arith.addf %484, %489 : vector<8x512xf32>
      %491 = vector.extract_strided_slice %464 {offsets = [40, 0], sizes = [8, 512], strides = [1, 1]} : vector<72x512xf32> to vector<8x512xf32>
      %c511_i32_195 = arith.constant 511 : i32
      %492 = tpu.dynamic_rotate %491 by %c511_i32_195 dim 1 : vector<8x512xf32>, i32 -> vector<8x512xf32>
      %493 = vector.extract_strided_slice %465 {offsets = [5, 0], sizes = [1, 512], strides = [1, 1]} : vector<9x512xf32> to vector<1x512xf32>
      %494 = vector.broadcast %493 : vector<1x512xf32> to vector<8x512xf32>
      %495 = arith.mulf %492, %494 : vector<8x512xf32>
      %496 = arith.addf %490, %495 : vector<8x512xf32>
      %497 = vector.extract_strided_slice %464 {offsets = [48, 0], sizes = [8, 512], strides = [1, 1]} : vector<72x512xf32> to vector<8x512xf32>
      %c497_i32_196 = arith.constant 497 : i32
      %498 = tpu.dynamic_rotate %497 by %c497_i32_196 dim 1 : vector<8x512xf32>, i32 -> vector<8x512xf32>
      %499 = vector.extract_strided_slice %465 {offsets = [6, 0], sizes = [1, 512], strides = [1, 1]} : vector<9x512xf32> to vector<1x512xf32>
      %500 = vector.broadcast %499 : vector<1x512xf32> to vector<8x512xf32>
      %501 = arith.mulf %498, %500 : vector<8x512xf32>
      %502 = arith.addf %496, %501 : vector<8x512xf32>
      %503 = vector.extract_strided_slice %464 {offsets = [56, 0], sizes = [8, 512], strides = [1, 1]} : vector<72x512xf32> to vector<8x512xf32>
      %c496_i32_197 = arith.constant 496 : i32
      %504 = tpu.dynamic_rotate %503 by %c496_i32_197 dim 1 : vector<8x512xf32>, i32 -> vector<8x512xf32>
      %505 = vector.extract_strided_slice %465 {offsets = [7, 0], sizes = [1, 512], strides = [1, 1]} : vector<9x512xf32> to vector<1x512xf32>
      %506 = vector.broadcast %505 : vector<1x512xf32> to vector<8x512xf32>
      %507 = arith.mulf %504, %506 : vector<8x512xf32>
      %508 = arith.addf %502, %507 : vector<8x512xf32>
      %509 = vector.extract_strided_slice %464 {offsets = [64, 0], sizes = [8, 512], strides = [1, 1]} : vector<72x512xf32> to vector<8x512xf32>
      %c495_i32_198 = arith.constant 495 : i32
      %510 = tpu.dynamic_rotate %509 by %c495_i32_198 dim 1 : vector<8x512xf32>, i32 -> vector<8x512xf32>
      %511 = vector.extract_strided_slice %465 {offsets = [8, 0], sizes = [1, 512], strides = [1, 1]} : vector<9x512xf32> to vector<1x512xf32>
      %512 = vector.broadcast %511 : vector<1x512xf32> to vector<8x512xf32>
      %513 = arith.mulf %510, %512 : vector<8x512xf32>
      %514 = arith.addf %508, %513 : vector<8x512xf32>
      %c0_199 = arith.constant 0 : index
      %c0_200 = arith.constant 0 : index
      %515 = vector.load %arg5[%c0_199, %c0_200] : memref<8x512xf32, #tpu.memory_space<vmem>>, vector<8x512xf32>
      %516 = vector.broadcast %439 : f32 to vector<8x512xf32>
      %517 = arith.mulf %516, %515 : vector<8x512xf32>
      %518 = arith.addf %514, %517 : vector<8x512xf32>
      %c0_201 = arith.constant 0 : index
      %c0_202 = arith.constant 0 : index
      %519 = vector.load %arg6[%c0_201, %c0_202] : memref<8x1xf32, #tpu.memory_space<vmem>>, vector<8x1xf32>
      %520 = vector.broadcast %519 : vector<8x1xf32> to vector<8x512xf32>
      %521 = arith.addf %518, %520 : vector<8x512xf32>
      %cst_203 = arith.constant 0.000000e+00 : f32
      %522 = vector.broadcast %cst_203 : f32 to vector<8x512xf32>
      %523 = arith.maximumf %521, %522 : vector<8x512xf32>
      %c0_204 = arith.constant 0 : index
      %c0_205 = arith.constant 0 : index
      %524 = vector.load %arg7[%c0_204, %c0_205] : memref<4x8xf32, #tpu.memory_space<vmem>>, vector<4x8xf32>
      %cst_206 = arith.constant dense<0.000000e+00> : vector<4x512xf32>
      %525 = tpu.matmul %524, %523, %cst_206 {dimension_numbers = #tpu.dot_dimension_numbers<[1], [0], [0], [1], [0, 0, 1, 1], [], []>} : vector<4x8xf32>, vector<8x512xf32>, vector<4x512xf32> -> vector<4x512xf32>
      %c0_207 = arith.constant 0 : index
      %c0_208 = arith.constant 0 : index
      %526 = vector.load %arg8[%c0_207, %c0_208] : memref<4x1xf32, #tpu.memory_space<vmem>>, vector<4x1xf32>
      %527 = vector.broadcast %439 : f32 to vector<4x1xf32>
      %528 = arith.mulf %527, %526 : vector<4x1xf32>
      %529 = vector.broadcast %528 : vector<4x1xf32> to vector<4x512xf32>
      %530 = arith.addf %525, %529 : vector<4x512xf32>
      %c0_209 = arith.constant 0 : index
      %c0_210 = arith.constant 0 : index
      %531 = vector.load %arg9[%c0_209, %c0_210] : memref<4x1xf32, #tpu.memory_space<vmem>>, vector<4x1xf32>
      %532 = vector.broadcast %531 : vector<4x1xf32> to vector<4x512xf32>
      %533 = arith.addf %530, %532 : vector<4x512xf32>
      %cst_211 = arith.constant 0.888888895 : f32
      %534 = arith.mulf %253, %cst_211 : f32
      %535 = arith.addf %arg16, %534 : f32
      %cst_212 = arith.constant 2.95259857 : f32
      %536 = vector.broadcast %cst_212 : f32 to vector<4x512xf32>
      %537 = arith.mulf %536, %254 : vector<4x512xf32>
      %cst_213 = arith.constant -11.5957937 : f32
      %538 = vector.broadcast %cst_213 : f32 to vector<4x512xf32>
      %539 = arith.mulf %538, %344 : vector<4x512xf32>
      %540 = arith.addf %537, %539 : vector<4x512xf32>
      %cst_214 = arith.constant 9.82289314 : f32
      %541 = vector.broadcast %cst_214 : f32 to vector<4x512xf32>
      %542 = arith.mulf %541, %437 : vector<4x512xf32>
      %543 = arith.addf %540, %542 : vector<4x512xf32>
      %cst_215 = arith.constant -0.290809333 : f32
      %544 = vector.broadcast %cst_215 : f32 to vector<4x512xf32>
      %545 = arith.mulf %544, %533 : vector<4x512xf32>
      %546 = arith.addf %543, %545 : vector<4x512xf32>
      %547 = vector.broadcast %253 : f32 to vector<4x512xf32>
      %548 = arith.mulf %547, %546 : vector<4x512xf32>
      %549 = arith.addf %251, %548 : vector<4x512xf32>
      %c0_216 = arith.constant 0 : index
      %c0_217 = arith.constant 0 : index
      %550 = vector.load %arg1[%c0_216, %c0_217] : memref<8x4xf32, #tpu.memory_space<vmem>>, vector<8x4xf32>
      %cst_218 = arith.constant dense<0.000000e+00> : vector<8x512xf32>
      %551 = tpu.matmul %550, %549, %cst_218 {dimension_numbers = #tpu.dot_dimension_numbers<[1], [0], [0], [1], [0, 0, 1, 1], [], []>} : vector<8x4xf32>, vector<4x512xf32>, vector<8x512xf32> -> vector<8x512xf32>
      %c0_219 = arith.constant 0 : index
      %c0_220 = arith.constant 0 : index
      %552 = vector.load %arg2[%c0_219, %c0_220] : memref<8x1xf32, #tpu.memory_space<vmem>>, vector<8x1xf32>
      %553 = vector.broadcast %535 : f32 to vector<8x1xf32>
      %554 = arith.mulf %553, %552 : vector<8x1xf32>
      %555 = vector.broadcast %554 : vector<8x1xf32> to vector<8x512xf32>
      %556 = arith.addf %551, %555 : vector<8x512xf32>
      %c0_221 = arith.constant 0 : index
      %c0_222 = arith.constant 0 : index
      %557 = vector.load %arg3[%c0_221, %c0_222] : memref<8x1xf32, #tpu.memory_space<vmem>>, vector<8x1xf32>
      %558 = vector.broadcast %557 : vector<8x1xf32> to vector<8x512xf32>
      %559 = arith.addf %556, %558 : vector<8x512xf32>
      %cst_223 = arith.constant 0.000000e+00 : f32
      %560 = vector.broadcast %cst_223 : f32 to vector<8x512xf32>
      %561 = arith.maximumf %559, %560 : vector<8x512xf32>
      %c0_224 = arith.constant 0 : index
      %c0_225 = arith.constant 0 : index
      %562 = vector.load %arg4[%c0_224, %c0_225] : memref<72x8xf32, #tpu.memory_space<vmem>>, vector<72x8xf32>
      %cst_226 = arith.constant dense<0.000000e+00> : vector<72x512xf32>
      %563 = tpu.matmul %562, %561, %cst_226 {dimension_numbers = #tpu.dot_dimension_numbers<[1], [0], [0], [1], [0, 0, 1, 1], [], []>} : vector<72x8xf32>, vector<8x512xf32>, vector<72x512xf32> -> vector<72x512xf32>
      %c0_227 = arith.constant 0 : index
      %c0_228 = arith.constant 0 : index
      %564 = vector.load %arg10[%c0_227, %c0_228] : memref<9x512xf32, #tpu.memory_space<vmem>>, vector<9x512xf32>
      %565 = vector.extract_strided_slice %563 {offsets = [32, 0], sizes = [8, 512], strides = [1, 1]} : vector<72x512xf32> to vector<8x512xf32>
      %566 = vector.extract_strided_slice %563 {offsets = [0, 0], sizes = [8, 512], strides = [1, 1]} : vector<72x512xf32> to vector<8x512xf32>
      %c17_i32_229 = arith.constant 17 : i32
      %567 = tpu.dynamic_rotate %566 by %c17_i32_229 dim 1 : vector<8x512xf32>, i32 -> vector<8x512xf32>
      %568 = vector.extract_strided_slice %564 {offsets = [0, 0], sizes = [1, 512], strides = [1, 1]} : vector<9x512xf32> to vector<1x512xf32>
      %569 = vector.broadcast %568 : vector<1x512xf32> to vector<8x512xf32>
      %570 = arith.mulf %567, %569 : vector<8x512xf32>
      %571 = arith.addf %565, %570 : vector<8x512xf32>
      %572 = vector.extract_strided_slice %563 {offsets = [8, 0], sizes = [8, 512], strides = [1, 1]} : vector<72x512xf32> to vector<8x512xf32>
      %c16_i32_230 = arith.constant 16 : i32
      %573 = tpu.dynamic_rotate %572 by %c16_i32_230 dim 1 : vector<8x512xf32>, i32 -> vector<8x512xf32>
      %574 = vector.extract_strided_slice %564 {offsets = [1, 0], sizes = [1, 512], strides = [1, 1]} : vector<9x512xf32> to vector<1x512xf32>
      %575 = vector.broadcast %574 : vector<1x512xf32> to vector<8x512xf32>
      %576 = arith.mulf %573, %575 : vector<8x512xf32>
      %577 = arith.addf %571, %576 : vector<8x512xf32>
      %578 = vector.extract_strided_slice %563 {offsets = [16, 0], sizes = [8, 512], strides = [1, 1]} : vector<72x512xf32> to vector<8x512xf32>
      %c15_i32_231 = arith.constant 15 : i32
      %579 = tpu.dynamic_rotate %578 by %c15_i32_231 dim 1 : vector<8x512xf32>, i32 -> vector<8x512xf32>
      %580 = vector.extract_strided_slice %564 {offsets = [2, 0], sizes = [1, 512], strides = [1, 1]} : vector<9x512xf32> to vector<1x512xf32>
      %581 = vector.broadcast %580 : vector<1x512xf32> to vector<8x512xf32>
      %582 = arith.mulf %579, %581 : vector<8x512xf32>
      %583 = arith.addf %577, %582 : vector<8x512xf32>
      %584 = vector.extract_strided_slice %563 {offsets = [24, 0], sizes = [8, 512], strides = [1, 1]} : vector<72x512xf32> to vector<8x512xf32>
      %c1_i32_232 = arith.constant 1 : i32
      %585 = tpu.dynamic_rotate %584 by %c1_i32_232 dim 1 : vector<8x512xf32>, i32 -> vector<8x512xf32>
      %586 = vector.extract_strided_slice %564 {offsets = [3, 0], sizes = [1, 512], strides = [1, 1]} : vector<9x512xf32> to vector<1x512xf32>
      %587 = vector.broadcast %586 : vector<1x512xf32> to vector<8x512xf32>
      %588 = arith.mulf %585, %587 : vector<8x512xf32>
      %589 = arith.addf %583, %588 : vector<8x512xf32>
      %590 = vector.extract_strided_slice %563 {offsets = [40, 0], sizes = [8, 512], strides = [1, 1]} : vector<72x512xf32> to vector<8x512xf32>
      %c511_i32_233 = arith.constant 511 : i32
      %591 = tpu.dynamic_rotate %590 by %c511_i32_233 dim 1 : vector<8x512xf32>, i32 -> vector<8x512xf32>
      %592 = vector.extract_strided_slice %564 {offsets = [5, 0], sizes = [1, 512], strides = [1, 1]} : vector<9x512xf32> to vector<1x512xf32>
      %593 = vector.broadcast %592 : vector<1x512xf32> to vector<8x512xf32>
      %594 = arith.mulf %591, %593 : vector<8x512xf32>
      %595 = arith.addf %589, %594 : vector<8x512xf32>
      %596 = vector.extract_strided_slice %563 {offsets = [48, 0], sizes = [8, 512], strides = [1, 1]} : vector<72x512xf32> to vector<8x512xf32>
      %c497_i32_234 = arith.constant 497 : i32
      %597 = tpu.dynamic_rotate %596 by %c497_i32_234 dim 1 : vector<8x512xf32>, i32 -> vector<8x512xf32>
      %598 = vector.extract_strided_slice %564 {offsets = [6, 0], sizes = [1, 512], strides = [1, 1]} : vector<9x512xf32> to vector<1x512xf32>
      %599 = vector.broadcast %598 : vector<1x512xf32> to vector<8x512xf32>
      %600 = arith.mulf %597, %599 : vector<8x512xf32>
      %601 = arith.addf %595, %600 : vector<8x512xf32>
      %602 = vector.extract_strided_slice %563 {offsets = [56, 0], sizes = [8, 512], strides = [1, 1]} : vector<72x512xf32> to vector<8x512xf32>
      %c496_i32_235 = arith.constant 496 : i32
      %603 = tpu.dynamic_rotate %602 by %c496_i32_235 dim 1 : vector<8x512xf32>, i32 -> vector<8x512xf32>
      %604 = vector.extract_strided_slice %564 {offsets = [7, 0], sizes = [1, 512], strides = [1, 1]} : vector<9x512xf32> to vector<1x512xf32>
      %605 = vector.broadcast %604 : vector<1x512xf32> to vector<8x512xf32>
      %606 = arith.mulf %603, %605 : vector<8x512xf32>
      %607 = arith.addf %601, %606 : vector<8x512xf32>
      %608 = vector.extract_strided_slice %563 {offsets = [64, 0], sizes = [8, 512], strides = [1, 1]} : vector<72x512xf32> to vector<8x512xf32>
      %c495_i32_236 = arith.constant 495 : i32
      %609 = tpu.dynamic_rotate %608 by %c495_i32_236 dim 1 : vector<8x512xf32>, i32 -> vector<8x512xf32>
      %610 = vector.extract_strided_slice %564 {offsets = [8, 0], sizes = [1, 512], strides = [1, 1]} : vector<9x512xf32> to vector<1x512xf32>
      %611 = vector.broadcast %610 : vector<1x512xf32> to vector<8x512xf32>
      %612 = arith.mulf %609, %611 : vector<8x512xf32>
      %613 = arith.addf %607, %612 : vector<8x512xf32>
      %c0_237 = arith.constant 0 : index
      %c0_238 = arith.constant 0 : index
      %614 = vector.load %arg5[%c0_237, %c0_238] : memref<8x512xf32, #tpu.memory_space<vmem>>, vector<8x512xf32>
      %615 = vector.broadcast %535 : f32 to vector<8x512xf32>
      %616 = arith.mulf %615, %614 : vector<8x512xf32>
      %617 = arith.addf %613, %616 : vector<8x512xf32>
      %c0_239 = arith.constant 0 : index
      %c0_240 = arith.constant 0 : index
      %618 = vector.load %arg6[%c0_239, %c0_240] : memref<8x1xf32, #tpu.memory_space<vmem>>, vector<8x1xf32>
      %619 = vector.broadcast %618 : vector<8x1xf32> to vector<8x512xf32>
      %620 = arith.addf %617, %619 : vector<8x512xf32>
      %cst_241 = arith.constant 0.000000e+00 : f32
      %621 = vector.broadcast %cst_241 : f32 to vector<8x512xf32>
      %622 = arith.maximumf %620, %621 : vector<8x512xf32>
      %c0_242 = arith.constant 0 : index
      %c0_243 = arith.constant 0 : index
      %623 = vector.load %arg7[%c0_242, %c0_243] : memref<4x8xf32, #tpu.memory_space<vmem>>, vector<4x8xf32>
      %cst_244 = arith.constant dense<0.000000e+00> : vector<4x512xf32>
      %624 = tpu.matmul %623, %622, %cst_244 {dimension_numbers = #tpu.dot_dimension_numbers<[1], [0], [0], [1], [0, 0, 1, 1], [], []>} : vector<4x8xf32>, vector<8x512xf32>, vector<4x512xf32> -> vector<4x512xf32>
      %c0_245 = arith.constant 0 : index
      %c0_246 = arith.constant 0 : index
      %625 = vector.load %arg8[%c0_245, %c0_246] : memref<4x1xf32, #tpu.memory_space<vmem>>, vector<4x1xf32>
      %626 = vector.broadcast %535 : f32 to vector<4x1xf32>
      %627 = arith.mulf %626, %625 : vector<4x1xf32>
      %628 = vector.broadcast %627 : vector<4x1xf32> to vector<4x512xf32>
      %629 = arith.addf %624, %628 : vector<4x512xf32>
      %c0_247 = arith.constant 0 : index
      %c0_248 = arith.constant 0 : index
      %630 = vector.load %arg9[%c0_247, %c0_248] : memref<4x1xf32, #tpu.memory_space<vmem>>, vector<4x1xf32>
      %631 = vector.broadcast %630 : vector<4x1xf32> to vector<4x512xf32>
      %632 = arith.addf %629, %631 : vector<4x512xf32>
      %633 = arith.addf %arg16, %253 : f32
      %cst_249 = arith.constant 2.84627533 : f32
      %634 = vector.broadcast %cst_249 : f32 to vector<4x512xf32>
      %635 = arith.mulf %634, %254 : vector<4x512xf32>
      %cst_250 = arith.constant -10.757576 : f32
      %636 = vector.broadcast %cst_250 : f32 to vector<4x512xf32>
      %637 = arith.mulf %636, %344 : vector<4x512xf32>
      %638 = arith.addf %635, %637 : vector<4x512xf32>
      %cst_251 = arith.constant 8.90642261 : f32
      %639 = vector.broadcast %cst_251 : f32 to vector<4x512xf32>
      %640 = arith.mulf %639, %437 : vector<4x512xf32>
      %641 = arith.addf %638, %640 : vector<4x512xf32>
      %cst_252 = arith.constant 0.278409094 : f32
      %642 = vector.broadcast %cst_252 : f32 to vector<4x512xf32>
      %643 = arith.mulf %642, %533 : vector<4x512xf32>
      %644 = arith.addf %641, %643 : vector<4x512xf32>
      %cst_253 = arith.constant -0.273531318 : f32
      %645 = vector.broadcast %cst_253 : f32 to vector<4x512xf32>
      %646 = arith.mulf %645, %632 : vector<4x512xf32>
      %647 = arith.addf %644, %646 : vector<4x512xf32>
      %648 = vector.broadcast %253 : f32 to vector<4x512xf32>
      %649 = arith.mulf %648, %647 : vector<4x512xf32>
      %650 = arith.addf %251, %649 : vector<4x512xf32>
      %c0_254 = arith.constant 0 : index
      %c0_255 = arith.constant 0 : index
      %651 = vector.load %arg1[%c0_254, %c0_255] : memref<8x4xf32, #tpu.memory_space<vmem>>, vector<8x4xf32>
      %cst_256 = arith.constant dense<0.000000e+00> : vector<8x512xf32>
      %652 = tpu.matmul %651, %650, %cst_256 {dimension_numbers = #tpu.dot_dimension_numbers<[1], [0], [0], [1], [0, 0, 1, 1], [], []>} : vector<8x4xf32>, vector<4x512xf32>, vector<8x512xf32> -> vector<8x512xf32>
      %c0_257 = arith.constant 0 : index
      %c0_258 = arith.constant 0 : index
      %653 = vector.load %arg2[%c0_257, %c0_258] : memref<8x1xf32, #tpu.memory_space<vmem>>, vector<8x1xf32>
      %654 = vector.broadcast %633 : f32 to vector<8x1xf32>
      %655 = arith.mulf %654, %653 : vector<8x1xf32>
      %656 = vector.broadcast %655 : vector<8x1xf32> to vector<8x512xf32>
      %657 = arith.addf %652, %656 : vector<8x512xf32>
      %c0_259 = arith.constant 0 : index
      %c0_260 = arith.constant 0 : index
      %658 = vector.load %arg3[%c0_259, %c0_260] : memref<8x1xf32, #tpu.memory_space<vmem>>, vector<8x1xf32>
      %659 = vector.broadcast %658 : vector<8x1xf32> to vector<8x512xf32>
      %660 = arith.addf %657, %659 : vector<8x512xf32>
      %cst_261 = arith.constant 0.000000e+00 : f32
      %661 = vector.broadcast %cst_261 : f32 to vector<8x512xf32>
      %662 = arith.maximumf %660, %661 : vector<8x512xf32>
      %c0_262 = arith.constant 0 : index
      %c0_263 = arith.constant 0 : index
      %663 = vector.load %arg4[%c0_262, %c0_263] : memref<72x8xf32, #tpu.memory_space<vmem>>, vector<72x8xf32>
      %cst_264 = arith.constant dense<0.000000e+00> : vector<72x512xf32>
      %664 = tpu.matmul %663, %662, %cst_264 {dimension_numbers = #tpu.dot_dimension_numbers<[1], [0], [0], [1], [0, 0, 1, 1], [], []>} : vector<72x8xf32>, vector<8x512xf32>, vector<72x512xf32> -> vector<72x512xf32>
      %c0_265 = arith.constant 0 : index
      %c0_266 = arith.constant 0 : index
      %665 = vector.load %arg10[%c0_265, %c0_266] : memref<9x512xf32, #tpu.memory_space<vmem>>, vector<9x512xf32>
      %666 = vector.extract_strided_slice %664 {offsets = [32, 0], sizes = [8, 512], strides = [1, 1]} : vector<72x512xf32> to vector<8x512xf32>
      %667 = vector.extract_strided_slice %664 {offsets = [0, 0], sizes = [8, 512], strides = [1, 1]} : vector<72x512xf32> to vector<8x512xf32>
      %c17_i32_267 = arith.constant 17 : i32
      %668 = tpu.dynamic_rotate %667 by %c17_i32_267 dim 1 : vector<8x512xf32>, i32 -> vector<8x512xf32>
      %669 = vector.extract_strided_slice %665 {offsets = [0, 0], sizes = [1, 512], strides = [1, 1]} : vector<9x512xf32> to vector<1x512xf32>
      %670 = vector.broadcast %669 : vector<1x512xf32> to vector<8x512xf32>
      %671 = arith.mulf %668, %670 : vector<8x512xf32>
      %672 = arith.addf %666, %671 : vector<8x512xf32>
      %673 = vector.extract_strided_slice %664 {offsets = [8, 0], sizes = [8, 512], strides = [1, 1]} : vector<72x512xf32> to vector<8x512xf32>
      %c16_i32_268 = arith.constant 16 : i32
      %674 = tpu.dynamic_rotate %673 by %c16_i32_268 dim 1 : vector<8x512xf32>, i32 -> vector<8x512xf32>
      %675 = vector.extract_strided_slice %665 {offsets = [1, 0], sizes = [1, 512], strides = [1, 1]} : vector<9x512xf32> to vector<1x512xf32>
      %676 = vector.broadcast %675 : vector<1x512xf32> to vector<8x512xf32>
      %677 = arith.mulf %674, %676 : vector<8x512xf32>
      %678 = arith.addf %672, %677 : vector<8x512xf32>
      %679 = vector.extract_strided_slice %664 {offsets = [16, 0], sizes = [8, 512], strides = [1, 1]} : vector<72x512xf32> to vector<8x512xf32>
      %c15_i32_269 = arith.constant 15 : i32
      %680 = tpu.dynamic_rotate %679 by %c15_i32_269 dim 1 : vector<8x512xf32>, i32 -> vector<8x512xf32>
      %681 = vector.extract_strided_slice %665 {offsets = [2, 0], sizes = [1, 512], strides = [1, 1]} : vector<9x512xf32> to vector<1x512xf32>
      %682 = vector.broadcast %681 : vector<1x512xf32> to vector<8x512xf32>
      %683 = arith.mulf %680, %682 : vector<8x512xf32>
      %684 = arith.addf %678, %683 : vector<8x512xf32>
      %685 = vector.extract_strided_slice %664 {offsets = [24, 0], sizes = [8, 512], strides = [1, 1]} : vector<72x512xf32> to vector<8x512xf32>
      %c1_i32_270 = arith.constant 1 : i32
      %686 = tpu.dynamic_rotate %685 by %c1_i32_270 dim 1 : vector<8x512xf32>, i32 -> vector<8x512xf32>
      %687 = vector.extract_strided_slice %665 {offsets = [3, 0], sizes = [1, 512], strides = [1, 1]} : vector<9x512xf32> to vector<1x512xf32>
      %688 = vector.broadcast %687 : vector<1x512xf32> to vector<8x512xf32>
      %689 = arith.mulf %686, %688 : vector<8x512xf32>
      %690 = arith.addf %684, %689 : vector<8x512xf32>
      %691 = vector.extract_strided_slice %664 {offsets = [40, 0], sizes = [8, 512], strides = [1, 1]} : vector<72x512xf32> to vector<8x512xf32>
      %c511_i32_271 = arith.constant 511 : i32
      %692 = tpu.dynamic_rotate %691 by %c511_i32_271 dim 1 : vector<8x512xf32>, i32 -> vector<8x512xf32>
      %693 = vector.extract_strided_slice %665 {offsets = [5, 0], sizes = [1, 512], strides = [1, 1]} : vector<9x512xf32> to vector<1x512xf32>
      %694 = vector.broadcast %693 : vector<1x512xf32> to vector<8x512xf32>
      %695 = arith.mulf %692, %694 : vector<8x512xf32>
      %696 = arith.addf %690, %695 : vector<8x512xf32>
      %697 = vector.extract_strided_slice %664 {offsets = [48, 0], sizes = [8, 512], strides = [1, 1]} : vector<72x512xf32> to vector<8x512xf32>
      %c497_i32_272 = arith.constant 497 : i32
      %698 = tpu.dynamic_rotate %697 by %c497_i32_272 dim 1 : vector<8x512xf32>, i32 -> vector<8x512xf32>
      %699 = vector.extract_strided_slice %665 {offsets = [6, 0], sizes = [1, 512], strides = [1, 1]} : vector<9x512xf32> to vector<1x512xf32>
      %700 = vector.broadcast %699 : vector<1x512xf32> to vector<8x512xf32>
      %701 = arith.mulf %698, %700 : vector<8x512xf32>
      %702 = arith.addf %696, %701 : vector<8x512xf32>
      %703 = vector.extract_strided_slice %664 {offsets = [56, 0], sizes = [8, 512], strides = [1, 1]} : vector<72x512xf32> to vector<8x512xf32>
      %c496_i32_273 = arith.constant 496 : i32
      %704 = tpu.dynamic_rotate %703 by %c496_i32_273 dim 1 : vector<8x512xf32>, i32 -> vector<8x512xf32>
      %705 = vector.extract_strided_slice %665 {offsets = [7, 0], sizes = [1, 512], strides = [1, 1]} : vector<9x512xf32> to vector<1x512xf32>
      %706 = vector.broadcast %705 : vector<1x512xf32> to vector<8x512xf32>
      %707 = arith.mulf %704, %706 : vector<8x512xf32>
      %708 = arith.addf %702, %707 : vector<8x512xf32>
      %709 = vector.extract_strided_slice %664 {offsets = [64, 0], sizes = [8, 512], strides = [1, 1]} : vector<72x512xf32> to vector<8x512xf32>
      %c495_i32_274 = arith.constant 495 : i32
      %710 = tpu.dynamic_rotate %709 by %c495_i32_274 dim 1 : vector<8x512xf32>, i32 -> vector<8x512xf32>
      %711 = vector.extract_strided_slice %665 {offsets = [8, 0], sizes = [1, 512], strides = [1, 1]} : vector<9x512xf32> to vector<1x512xf32>
      %712 = vector.broadcast %711 : vector<1x512xf32> to vector<8x512xf32>
      %713 = arith.mulf %710, %712 : vector<8x512xf32>
      %714 = arith.addf %708, %713 : vector<8x512xf32>
      %c0_275 = arith.constant 0 : index
      %c0_276 = arith.constant 0 : index
      %715 = vector.load %arg5[%c0_275, %c0_276] : memref<8x512xf32, #tpu.memory_space<vmem>>, vector<8x512xf32>
      %716 = vector.broadcast %633 : f32 to vector<8x512xf32>
      %717 = arith.mulf %716, %715 : vector<8x512xf32>
      %718 = arith.addf %714, %717 : vector<8x512xf32>
      %c0_277 = arith.constant 0 : index
      %c0_278 = arith.constant 0 : index
      %719 = vector.load %arg6[%c0_277, %c0_278] : memref<8x1xf32, #tpu.memory_space<vmem>>, vector<8x1xf32>
      %720 = vector.broadcast %719 : vector<8x1xf32> to vector<8x512xf32>
      %721 = arith.addf %718, %720 : vector<8x512xf32>
      %cst_279 = arith.constant 0.000000e+00 : f32
      %722 = vector.broadcast %cst_279 : f32 to vector<8x512xf32>
      %723 = arith.maximumf %721, %722 : vector<8x512xf32>
      %c0_280 = arith.constant 0 : index
      %c0_281 = arith.constant 0 : index
      %724 = vector.load %arg7[%c0_280, %c0_281] : memref<4x8xf32, #tpu.memory_space<vmem>>, vector<4x8xf32>
      %cst_282 = arith.constant dense<0.000000e+00> : vector<4x512xf32>
      %725 = tpu.matmul %724, %723, %cst_282 {dimension_numbers = #tpu.dot_dimension_numbers<[1], [0], [0], [1], [0, 0, 1, 1], [], []>} : vector<4x8xf32>, vector<8x512xf32>, vector<4x512xf32> -> vector<4x512xf32>
      %c0_283 = arith.constant 0 : index
      %c0_284 = arith.constant 0 : index
      %726 = vector.load %arg8[%c0_283, %c0_284] : memref<4x1xf32, #tpu.memory_space<vmem>>, vector<4x1xf32>
      %727 = vector.broadcast %633 : f32 to vector<4x1xf32>
      %728 = arith.mulf %727, %726 : vector<4x1xf32>
      %729 = vector.broadcast %728 : vector<4x1xf32> to vector<4x512xf32>
      %730 = arith.addf %725, %729 : vector<4x512xf32>
      %c0_285 = arith.constant 0 : index
      %c0_286 = arith.constant 0 : index
      %731 = vector.load %arg9[%c0_285, %c0_286] : memref<4x1xf32, #tpu.memory_space<vmem>>, vector<4x1xf32>
      %732 = vector.broadcast %731 : vector<4x1xf32> to vector<4x512xf32>
      %733 = arith.addf %730, %732 : vector<4x512xf32>
      %cst_287 = arith.constant 0.0911458358 : f32
      %734 = vector.broadcast %cst_287 : f32 to vector<4x512xf32>
      %735 = arith.mulf %734, %254 : vector<4x512xf32>
      %cst_288 = arith.constant 0.449236304 : f32
      %736 = vector.broadcast %cst_288 : f32 to vector<4x512xf32>
      %737 = arith.mulf %736, %437 : vector<4x512xf32>
      %738 = arith.addf %735, %737 : vector<4x512xf32>
      %cst_289 = arith.constant 0.651041686 : f32
      %739 = vector.broadcast %cst_289 : f32 to vector<4x512xf32>
      %740 = arith.mulf %739, %533 : vector<4x512xf32>
      %741 = arith.addf %738, %740 : vector<4x512xf32>
      %cst_290 = arith.constant -0.322376192 : f32
      %742 = vector.broadcast %cst_290 : f32 to vector<4x512xf32>
      %743 = arith.mulf %742, %632 : vector<4x512xf32>
      %744 = arith.addf %741, %743 : vector<4x512xf32>
      %cst_291 = arith.constant 0.130952388 : f32
      %745 = vector.broadcast %cst_291 : f32 to vector<4x512xf32>
      %746 = arith.mulf %745, %733 : vector<4x512xf32>
      %747 = arith.addf %744, %746 : vector<4x512xf32>
      %748 = vector.broadcast %253 : f32 to vector<4x512xf32>
      %749 = arith.mulf %748, %747 : vector<4x512xf32>
      %750 = arith.addf %251, %749 : vector<4x512xf32>
      %751 = arith.addf %arg16, %253 : f32
      %c0_292 = arith.constant 0 : index
      %c0_293 = arith.constant 0 : index
      %752 = vector.load %arg1[%c0_292, %c0_293] : memref<8x4xf32, #tpu.memory_space<vmem>>, vector<8x4xf32>
      %cst_294 = arith.constant dense<0.000000e+00> : vector<8x512xf32>
      %753 = tpu.matmul %752, %750, %cst_294 {dimension_numbers = #tpu.dot_dimension_numbers<[1], [0], [0], [1], [0, 0, 1, 1], [], []>} : vector<8x4xf32>, vector<4x512xf32>, vector<8x512xf32> -> vector<8x512xf32>
      %c0_295 = arith.constant 0 : index
      %c0_296 = arith.constant 0 : index
      %754 = vector.load %arg2[%c0_295, %c0_296] : memref<8x1xf32, #tpu.memory_space<vmem>>, vector<8x1xf32>
      %755 = vector.broadcast %751 : f32 to vector<8x1xf32>
      %756 = arith.mulf %755, %754 : vector<8x1xf32>
      %757 = vector.broadcast %756 : vector<8x1xf32> to vector<8x512xf32>
      %758 = arith.addf %753, %757 : vector<8x512xf32>
      %c0_297 = arith.constant 0 : index
      %c0_298 = arith.constant 0 : index
      %759 = vector.load %arg3[%c0_297, %c0_298] : memref<8x1xf32, #tpu.memory_space<vmem>>, vector<8x1xf32>
      %760 = vector.broadcast %759 : vector<8x1xf32> to vector<8x512xf32>
      %761 = arith.addf %758, %760 : vector<8x512xf32>
      %cst_299 = arith.constant 0.000000e+00 : f32
      %762 = vector.broadcast %cst_299 : f32 to vector<8x512xf32>
      %763 = arith.maximumf %761, %762 : vector<8x512xf32>
      %c0_300 = arith.constant 0 : index
      %c0_301 = arith.constant 0 : index
      %764 = vector.load %arg4[%c0_300, %c0_301] : memref<72x8xf32, #tpu.memory_space<vmem>>, vector<72x8xf32>
      %cst_302 = arith.constant dense<0.000000e+00> : vector<72x512xf32>
      %765 = tpu.matmul %764, %763, %cst_302 {dimension_numbers = #tpu.dot_dimension_numbers<[1], [0], [0], [1], [0, 0, 1, 1], [], []>} : vector<72x8xf32>, vector<8x512xf32>, vector<72x512xf32> -> vector<72x512xf32>
      %c0_303 = arith.constant 0 : index
      %c0_304 = arith.constant 0 : index
      %766 = vector.load %arg10[%c0_303, %c0_304] : memref<9x512xf32, #tpu.memory_space<vmem>>, vector<9x512xf32>
      %767 = vector.extract_strided_slice %765 {offsets = [32, 0], sizes = [8, 512], strides = [1, 1]} : vector<72x512xf32> to vector<8x512xf32>
      %768 = vector.extract_strided_slice %765 {offsets = [0, 0], sizes = [8, 512], strides = [1, 1]} : vector<72x512xf32> to vector<8x512xf32>
      %c17_i32_305 = arith.constant 17 : i32
      %769 = tpu.dynamic_rotate %768 by %c17_i32_305 dim 1 : vector<8x512xf32>, i32 -> vector<8x512xf32>
      %770 = vector.extract_strided_slice %766 {offsets = [0, 0], sizes = [1, 512], strides = [1, 1]} : vector<9x512xf32> to vector<1x512xf32>
      %771 = vector.broadcast %770 : vector<1x512xf32> to vector<8x512xf32>
      %772 = arith.mulf %769, %771 : vector<8x512xf32>
      %773 = arith.addf %767, %772 : vector<8x512xf32>
      %774 = vector.extract_strided_slice %765 {offsets = [8, 0], sizes = [8, 512], strides = [1, 1]} : vector<72x512xf32> to vector<8x512xf32>
      %c16_i32_306 = arith.constant 16 : i32
      %775 = tpu.dynamic_rotate %774 by %c16_i32_306 dim 1 : vector<8x512xf32>, i32 -> vector<8x512xf32>
      %776 = vector.extract_strided_slice %766 {offsets = [1, 0], sizes = [1, 512], strides = [1, 1]} : vector<9x512xf32> to vector<1x512xf32>
      %777 = vector.broadcast %776 : vector<1x512xf32> to vector<8x512xf32>
      %778 = arith.mulf %775, %777 : vector<8x512xf32>
      %779 = arith.addf %773, %778 : vector<8x512xf32>
      %780 = vector.extract_strided_slice %765 {offsets = [16, 0], sizes = [8, 512], strides = [1, 1]} : vector<72x512xf32> to vector<8x512xf32>
      %c15_i32_307 = arith.constant 15 : i32
      %781 = tpu.dynamic_rotate %780 by %c15_i32_307 dim 1 : vector<8x512xf32>, i32 -> vector<8x512xf32>
      %782 = vector.extract_strided_slice %766 {offsets = [2, 0], sizes = [1, 512], strides = [1, 1]} : vector<9x512xf32> to vector<1x512xf32>
      %783 = vector.broadcast %782 : vector<1x512xf32> to vector<8x512xf32>
      %784 = arith.mulf %781, %783 : vector<8x512xf32>
      %785 = arith.addf %779, %784 : vector<8x512xf32>
      %786 = vector.extract_strided_slice %765 {offsets = [24, 0], sizes = [8, 512], strides = [1, 1]} : vector<72x512xf32> to vector<8x512xf32>
      %c1_i32_308 = arith.constant 1 : i32
      %787 = tpu.dynamic_rotate %786 by %c1_i32_308 dim 1 : vector<8x512xf32>, i32 -> vector<8x512xf32>
      %788 = vector.extract_strided_slice %766 {offsets = [3, 0], sizes = [1, 512], strides = [1, 1]} : vector<9x512xf32> to vector<1x512xf32>
      %789 = vector.broadcast %788 : vector<1x512xf32> to vector<8x512xf32>
      %790 = arith.mulf %787, %789 : vector<8x512xf32>
      %791 = arith.addf %785, %790 : vector<8x512xf32>
      %792 = vector.extract_strided_slice %765 {offsets = [40, 0], sizes = [8, 512], strides = [1, 1]} : vector<72x512xf32> to vector<8x512xf32>
      %c511_i32_309 = arith.constant 511 : i32
      %793 = tpu.dynamic_rotate %792 by %c511_i32_309 dim 1 : vector<8x512xf32>, i32 -> vector<8x512xf32>
      %794 = vector.extract_strided_slice %766 {offsets = [5, 0], sizes = [1, 512], strides = [1, 1]} : vector<9x512xf32> to vector<1x512xf32>
      %795 = vector.broadcast %794 : vector<1x512xf32> to vector<8x512xf32>
      %796 = arith.mulf %793, %795 : vector<8x512xf32>
      %797 = arith.addf %791, %796 : vector<8x512xf32>
      %798 = vector.extract_strided_slice %765 {offsets = [48, 0], sizes = [8, 512], strides = [1, 1]} : vector<72x512xf32> to vector<8x512xf32>
      %c497_i32_310 = arith.constant 497 : i32
      %799 = tpu.dynamic_rotate %798 by %c497_i32_310 dim 1 : vector<8x512xf32>, i32 -> vector<8x512xf32>
      %800 = vector.extract_strided_slice %766 {offsets = [6, 0], sizes = [1, 512], strides = [1, 1]} : vector<9x512xf32> to vector<1x512xf32>
      %801 = vector.broadcast %800 : vector<1x512xf32> to vector<8x512xf32>
      %802 = arith.mulf %799, %801 : vector<8x512xf32>
      %803 = arith.addf %797, %802 : vector<8x512xf32>
      %804 = vector.extract_strided_slice %765 {offsets = [56, 0], sizes = [8, 512], strides = [1, 1]} : vector<72x512xf32> to vector<8x512xf32>
      %c496_i32_311 = arith.constant 496 : i32
      %805 = tpu.dynamic_rotate %804 by %c496_i32_311 dim 1 : vector<8x512xf32>, i32 -> vector<8x512xf32>
      %806 = vector.extract_strided_slice %766 {offsets = [7, 0], sizes = [1, 512], strides = [1, 1]} : vector<9x512xf32> to vector<1x512xf32>
      %807 = vector.broadcast %806 : vector<1x512xf32> to vector<8x512xf32>
      %808 = arith.mulf %805, %807 : vector<8x512xf32>
      %809 = arith.addf %803, %808 : vector<8x512xf32>
      %810 = vector.extract_strided_slice %765 {offsets = [64, 0], sizes = [8, 512], strides = [1, 1]} : vector<72x512xf32> to vector<8x512xf32>
      %c495_i32_312 = arith.constant 495 : i32
      %811 = tpu.dynamic_rotate %810 by %c495_i32_312 dim 1 : vector<8x512xf32>, i32 -> vector<8x512xf32>
      %812 = vector.extract_strided_slice %766 {offsets = [8, 0], sizes = [1, 512], strides = [1, 1]} : vector<9x512xf32> to vector<1x512xf32>
      %813 = vector.broadcast %812 : vector<1x512xf32> to vector<8x512xf32>
      %814 = arith.mulf %811, %813 : vector<8x512xf32>
      %815 = arith.addf %809, %814 : vector<8x512xf32>
      %c0_313 = arith.constant 0 : index
      %c0_314 = arith.constant 0 : index
      %816 = vector.load %arg5[%c0_313, %c0_314] : memref<8x512xf32, #tpu.memory_space<vmem>>, vector<8x512xf32>
      %817 = vector.broadcast %751 : f32 to vector<8x512xf32>
      %818 = arith.mulf %817, %816 : vector<8x512xf32>
      %819 = arith.addf %815, %818 : vector<8x512xf32>
      %c0_315 = arith.constant 0 : index
      %c0_316 = arith.constant 0 : index
      %820 = vector.load %arg6[%c0_315, %c0_316] : memref<8x1xf32, #tpu.memory_space<vmem>>, vector<8x1xf32>
      %821 = vector.broadcast %820 : vector<8x1xf32> to vector<8x512xf32>
      %822 = arith.addf %819, %821 : vector<8x512xf32>
      %cst_317 = arith.constant 0.000000e+00 : f32
      %823 = vector.broadcast %cst_317 : f32 to vector<8x512xf32>
      %824 = arith.maximumf %822, %823 : vector<8x512xf32>
      %c0_318 = arith.constant 0 : index
      %c0_319 = arith.constant 0 : index
      %825 = vector.load %arg7[%c0_318, %c0_319] : memref<4x8xf32, #tpu.memory_space<vmem>>, vector<4x8xf32>
      %cst_320 = arith.constant dense<0.000000e+00> : vector<4x512xf32>
      %826 = tpu.matmul %825, %824, %cst_320 {dimension_numbers = #tpu.dot_dimension_numbers<[1], [0], [0], [1], [0, 0, 1, 1], [], []>} : vector<4x8xf32>, vector<8x512xf32>, vector<4x512xf32> -> vector<4x512xf32>
      %c0_321 = arith.constant 0 : index
      %c0_322 = arith.constant 0 : index
      %827 = vector.load %arg8[%c0_321, %c0_322] : memref<4x1xf32, #tpu.memory_space<vmem>>, vector<4x1xf32>
      %828 = vector.broadcast %751 : f32 to vector<4x1xf32>
      %829 = arith.mulf %828, %827 : vector<4x1xf32>
      %830 = vector.broadcast %829 : vector<4x1xf32> to vector<4x512xf32>
      %831 = arith.addf %826, %830 : vector<4x512xf32>
      %c0_323 = arith.constant 0 : index
      %c0_324 = arith.constant 0 : index
      %832 = vector.load %arg9[%c0_323, %c0_324] : memref<4x1xf32, #tpu.memory_space<vmem>>, vector<4x1xf32>
      %833 = vector.broadcast %832 : vector<4x1xf32> to vector<4x512xf32>
      %834 = arith.addf %831, %833 : vector<4x512xf32>
      %cst_325 = arith.constant 0.00123263884 : f32
      %835 = vector.broadcast %cst_325 : f32 to vector<4x512xf32>
      %836 = arith.mulf %835, %254 : vector<4x512xf32>
      %cst_326 = arith.constant -0.00425277045 : f32
      %837 = vector.broadcast %cst_326 : f32 to vector<4x512xf32>
      %838 = arith.mulf %837, %437 : vector<4x512xf32>
      %839 = arith.addf %836, %838 : vector<4x512xf32>
      %cst_327 = arith.constant 0.0369791649 : f32
      %840 = vector.broadcast %cst_327 : f32 to vector<4x512xf32>
      %841 = arith.mulf %840, %533 : vector<4x512xf32>
      %842 = arith.addf %839, %841 : vector<4x512xf32>
      %cst_328 = arith.constant -5.086380e-02 : f32
      %843 = vector.broadcast %cst_328 : f32 to vector<4x512xf32>
      %844 = arith.mulf %843, %632 : vector<4x512xf32>
      %845 = arith.addf %842, %844 : vector<4x512xf32>
      %cst_329 = arith.constant 0.0419047624 : f32
      %846 = vector.broadcast %cst_329 : f32 to vector<4x512xf32>
      %847 = arith.mulf %846, %733 : vector<4x512xf32>
      %848 = arith.addf %845, %847 : vector<4x512xf32>
      %cst_330 = arith.constant -2.500000e-02 : f32
      %849 = vector.broadcast %cst_330 : f32 to vector<4x512xf32>
      %850 = arith.mulf %849, %834 : vector<4x512xf32>
      %851 = arith.addf %848, %850 : vector<4x512xf32>
      %852 = vector.broadcast %253 : f32 to vector<4x512xf32>
      %853 = arith.mulf %852, %851 : vector<4x512xf32>
      %854 = math.absf %251 : vector<4x512xf32>
      %855 = math.absf %750 : vector<4x512xf32>
      %856 = arith.maximumf %854, %855 : vector<4x512xf32>
      %cst_331 = arith.constant 1.000000e-03 : f32
      %857 = vector.broadcast %cst_331 : f32 to vector<4x512xf32>
      %858 = arith.mulf %857, %856 : vector<4x512xf32>
      %cst_332 = arith.constant 1.000000e-03 : f32
      %859 = vector.broadcast %cst_332 : f32 to vector<4x512xf32>
      %860 = arith.addf %859, %858 : vector<4x512xf32>
      %861 = arith.divf %853, %860 : vector<4x512xf32>
      %862 = arith.mulf %861, %861 : vector<4x512xf32>
      %cst_333 = arith.constant dense<0.000000e+00> : vector<4xf32>
      %863 = vector.multi_reduction <add>, %862, %cst_333 [1] : vector<4x512xf32> to vector<4xf32>
      %864 = vector.shape_cast %863 : vector<4xf32> to vector<4x1xf32>
      %cst_334 = arith.constant dense<0.000000e+00> : vector<1xf32>
      %865 = vector.multi_reduction <add>, %864, %cst_334 [0] : vector<4x1xf32> to vector<1xf32>
      %866 = vector.shape_cast %865 : vector<1xf32> to vector<1x1xf32>
      %cst_335 = arith.constant 2.048000e+03 : f32
      %867 = vector.broadcast %cst_335 : f32 to vector<1x1xf32>
      %868 = arith.divf %866, %867 : vector<1x1xf32>
      %869 = math.sqrt %868 : vector<1x1xf32>
      %cst_336 = arith.constant 1.000000e-10 : f32
      %870 = vector.broadcast %cst_336 : f32 to vector<1x1xf32>
      %871 = arith.maximumf %869, %870 : vector<1x1xf32>
      %872 = math.log %871 : vector<1x1xf32>
      %cst_337 = arith.constant -2.000000e-01 : f32
      %873 = vector.broadcast %cst_337 : f32 to vector<1x1xf32>
      %874 = arith.mulf %873, %872 : vector<1x1xf32>
      %875 = math.exp %874 : vector<1x1xf32>
      %cst_338 = arith.constant 0.899999976 : f32
      %876 = vector.broadcast %cst_338 : f32 to vector<1x1xf32>
      %877 = arith.mulf %876, %875 : vector<1x1xf32>
      %cst_339 = arith.constant 2.000000e-01 : f32
      %cst_340 = arith.constant 1.000000e+01 : f32
      %878 = vector.broadcast %cst_339 : f32 to vector<1x1xf32>
      %879 = arith.maximumf %878, %877 : vector<1x1xf32>
      %880 = vector.broadcast %cst_340 : f32 to vector<1x1xf32>
      %881 = arith.minimumf %880, %879 : vector<1x1xf32>
      %c0_341 = arith.constant 0 : index
      %c0_342 = arith.constant 0 : index
      %882 = vector.load %arg15[%c0_341, %c0_342] : memref<1x1xf32, #tpu.memory_space<vmem>>, vector<1x1xf32>
      tpu.vector_store %arg15[%c0_341, %c0_342], %881 {strides = array<i32>} : memref<1x1xf32, #tpu.memory_space<vmem>>, vector<1x1xf32>,
      %cst_343 = arith.constant 1.000000e+00 : f32
      %883 = vector.broadcast %cst_343 : f32 to vector<1x1xf32>
      %884 = arith.cmpf ole, %869, %883 : vector<1x1xf32>
      %cst_344 = arith.constant 1.000000e+00 : f32
      %cst_345 = arith.constant 0.000000e+00 : f32
      %885 = vector.broadcast %cst_344 : f32 to vector<1x1xf32>
      %886 = vector.broadcast %cst_345 : f32 to vector<1x1xf32>
      %887 = arith.select %884, %885, %886 : vector<1x1xi1>, vector<1x1xf32>
      %c0_346 = arith.constant 0 : index
      %c0_347 = arith.constant 0 : index
      %888 = vector.load %arg14[%c0_346, %c0_347] : memref<1x1xf32, #tpu.memory_space<vmem>>, vector<1x1xf32>
      tpu.vector_store %arg14[%c0_346, %c0_347], %887 {strides = array<i32>} : memref<1x1xf32, #tpu.memory_space<vmem>>, vector<1x1xf32>,
      %c0_348 = arith.constant 0 : index
      %c0_349 = arith.constant 0 : index
      %889 = vector.load %arg14[%c0_348, %c0_349] : memref<1x1xf32, #tpu.memory_space<vmem>>, vector<1x1xf32>
      %890 = vector.extract %889[0, 0] : f32 from vector<1x1xf32>
      %cst_350 = arith.constant 5.000000e-01 : f32
      %891 = arith.cmpf ogt, %890, %cst_350 : f32
      %c0_351 = arith.constant 0 : index
      %c0_352 = arith.constant 0 : index
      %892 = vector.load %arg15[%c0_351, %c0_352] : memref<1x1xf32, #tpu.memory_space<vmem>>, vector<1x1xf32>
      %893 = vector.extract %892[0, 0] : f32 from vector<1x1xf32>
      %894 = arith.extui %891 : i1 to i32
      %c0_i32 = arith.constant 0 : i32
      %895 = arith.cmpi ne, %894, %c0_i32 : i32
      scf.if %895 {
        %c0_354 = arith.constant 0 : index
        %c0_355 = arith.constant 0 : index
        %900 = vector.load %arg11[%c0_354, %c0_355] : memref<4x512xf32, #tpu.memory_space<vmem>>, vector<4x512xf32>
        tpu.vector_store %arg11[%c0_354, %c0_355], %750 {strides = array<i32>} : memref<4x512xf32, #tpu.memory_space<vmem>>, vector<4x512xf32>,
        %c0_356 = arith.constant 0 : index
        %c0_357 = arith.constant 0 : index
        %901 = vector.load %arg13[%c0_356, %c0_357] : memref<4x512xf32, #tpu.memory_space<vmem>>, vector<4x512xf32>
        tpu.vector_store %arg13[%c0_356, %c0_357], %834 {strides = array<i32>} : memref<4x512xf32, #tpu.memory_space<vmem>>, vector<4x512xf32>,
      } else {
      }
      %896 = arith.addf %arg16, %253 : f32
      %897 = arith.select %891, %896, %arg16 : f32
      %898 = arith.mulf %253, %893 : f32
      %cst_353 = arith.constant 1.000000e+00 : f32
      %899 = arith.addf %arg18, %cst_353 : f32
      scf.yield %897, %898, %899 : f32, f32, f32
    }
    %c0_95 = arith.constant 0 : index
    %243 = memref.load %arg12[%c0_95] : memref<4xf32, #tpu.memory_space<smem>>
    memref.store %242#0, %arg12[%c0_95] : memref<4xf32, #tpu.memory_space<smem>>
    %c1 = arith.constant 1 : index
    %244 = memref.load %arg12[%c1] : memref<4xf32, #tpu.memory_space<smem>>
    memref.store %242#1, %arg12[%c1] : memref<4xf32, #tpu.memory_space<smem>>
    %c2 = arith.constant 2 : index
    %245 = memref.load %arg12[%c2] : memref<4xf32, #tpu.memory_space<smem>>
    memref.store %242#2, %arg12[%c2] : memref<4xf32, #tpu.memory_space<smem>>
    %cst_96 = arith.constant 1.000000e+00 : f32
    %246 = arith.subf %cst_96, %242#0 : f32
    %cst_97 = arith.constant 1.000000e-07 : f32
    %247 = arith.cmpf ole, %246, %cst_97 : f32
    %248 = arith.extui %247 : i1 to i32
    %249 = arith.sitofp %248 : i32 to f32
    %c3 = arith.constant 3 : index
    %250 = memref.load %arg12[%c3] : memref<4xf32, #tpu.memory_space<smem>>
    memref.store %249, %arg12[%c3] : memref<4xf32, #tpu.memory_space<smem>>
    return
  }
}

</mosaic_0001>

<llo_original>
// kernel: neural_ode_forward.1
$region0: #{neural_ode_forward.1}
  #allocation0 [shape = 'u32[]', space=smem, size = 0x4, offset = 0x4, fixed_abs, tag = 'smem constant byte address 0x4 - core index']
  #allocation1 [shape = 'u32[144,128]{1,0:T(1,128)}', space=vmem, size = 0x12000, scoped, tag = 'internal scratch']
  #allocation2 [shape = 'f32[4,512]{1,0:T(4,128)}', space=vmem, size = 0x2000, scoped, tag = 'scratch operand']
  #allocation3 [shape = 'f32[1,1]{1,0:T(1,128)}', space=vmem, size = 0x200, scoped, tag = 'scratch operand']
  #allocation4 [shape = 'f32[1,1]{1,0:T(1,128)}', space=vmem, size = 0x200, scoped, tag = 'scratch operand']
  %s0 = inlined_call_operand.vmem [shape: f32[4,512], index: 0, kind: input, shape index: {}]
  %s1 = inlined_call_operand.vmem [shape: f32[8,4], index: 1, kind: input, shape index: {}]
  %s2 = inlined_call_operand.vmem [shape: f32[8,1], index: 2, kind: input, shape index: {}]
  %s3 = inlined_call_operand.vmem [shape: f32[8,1], index: 3, kind: input, shape index: {}]
  %s4 = inlined_call_operand.vmem [shape: f32[72,8], index: 4, kind: input, shape index: {}]
  %s5 = inlined_call_operand.vmem [shape: f32[8,512], index: 5, kind: input, shape index: {}]
  %s6 = inlined_call_operand.vmem [shape: f32[8,1], index: 6, kind: input, shape index: {}]
  %s7 = inlined_call_operand.vmem [shape: f32[4,8], index: 7, kind: input, shape index: {}]
  %s8 = inlined_call_operand.vmem [shape: f32[4,1], index: 8, kind: input, shape index: {}]
  %s9 = inlined_call_operand.vmem [shape: f32[4,1], index: 9, kind: input, shape index: {}]
  %s10 = inlined_call_operand.vmem [shape: f32[9,512], index: 10, kind: input, shape index: {}]
  %s11 = inlined_call_operand.vmem [shape: f32[4,512], index: 11, kind: output, shape index: {0}]
  %s12 = inlined_call_operand.hbm [shape: f32[4], index: 12, kind: output, shape index: {1}]
  %13 = xla_tuple %s11, %s12
  %s14 = sld [smem:[#allocation0]]
  $region73: #{neural_ode_forward.1} parent=0
    _
  %s16 = ssub.s32 1, %s14
  %s17 = scalar_select 0, %s16, %s14
  $region1: #{neural_ode_forward.1} parent=0
    #allocation5 [shape = 'u8[512]{0}', space=smem, size = 0x200, scoped, tag = 'output window, operand 1, single buffered']
    #allocation6 [shape = 's32[1]{0}', space=sflag, size = 0x4, scoped, tag = 'scoped memory for neural_ode_forward.1']
    %18 = vsyncpa [#allocation6], 0
    // Predicated region
    $region2: #{neural_ode_forward.1} parent=1 // pred_check
      _
    $region3: #{neural_ode_forward.1} parent=1 // pred_check_branch
      %20 = sbr.rel (0) target = $region5
    $region4: #{neural_ode_forward.1} parent=1 // pred_region
      _
    $region5: #{neural_ode_forward.1} parent=1 // pred_fallthru
      _
    // Predicated region
    $region6: #{neural_ode_forward.1} parent=1 // pred_check
      _
    $region7: #{neural_ode_forward.1} parent=1 // pred_check_branch
      %22 = sbr.rel (0) target = $region9
    $region8: #{neural_ode_forward.1} parent=1 // pred_region
      _
    $region9: #{neural_ode_forward.1} parent=1 // pred_fallthru
      _
    // Predicated region
    $region10: #{neural_ode_forward.1} parent=1 // pred_check
      _
    $region11: #{neural_ode_forward.1} parent=1 // pred_check_branch
      %24 = sbr.rel (0) target = $region13
    $region12: #{neural_ode_forward.1} parent=1 // pred_region
      _
    $region13: #{neural_ode_forward.1} parent=1 // pred_fallthru
      _
    // Predicated region
    $region14: #{neural_ode_forward.1} parent=1 // pred_check
      _
    $region15: #{neural_ode_forward.1} parent=1 // pred_check_branch
      %26 = sbr.rel (0) target = $region17
    $region16: #{neural_ode_forward.1} parent=1 // pred_region
      _
    $region17: #{neural_ode_forward.1} parent=1 // pred_fallthru
      _
    // Predicated region
    $region18: #{neural_ode_forward.1} parent=1 // pred_check
      _
    $region19: #{neural_ode_forward.1} parent=1 // pred_check_branch
      %28 = sbr.rel (0) target = $region21
    $region20: #{neural_ode_forward.1} parent=1 // pred_region
      _
    $region21: #{neural_ode_forward.1} parent=1 // pred_fallthru
      _
    // Predicated region
    $region22: #{neural_ode_forward.1} parent=1 // pred_check
      _
    $region23: #{neural_ode_forward.1} parent=1 // pred_check_branch
      %30 = sbr.rel (0) target = $region25
    $region24: #{neural_ode_forward.1} parent=1 // pred_region
      _
    $region25: #{neural_ode_forward.1} parent=1 // pred_fallthru
      _
    // Predicated region
    $region26: #{neural_ode_forward.1} parent=1 // pred_check
      _
    $region27: #{neural_ode_forward.1} parent=1 // pred_check_branch
      %32 = sbr.rel (0) target = $region29
    $region28: #{neural_ode_forward.1} parent=1 // pred_region
      _
    $region29: #{neural_ode_forward.1} parent=1 // pred_fallthru
      _
    // Predicated region
    $region30: #{neural_ode_forward.1} parent=1 // pred_check
      _
    $region31: #{neural_ode_forward.1} parent=1 // pred_check_branch
      %34 = sbr.rel (0) target = $region33
    $region32: #{neural_ode_forward.1} parent=1 // pred_region
      _
    $region33: #{neural_ode_forward.1} parent=1 // pred_fallthru
      _
    // Predicated region
    $region34: #{neural_ode_forward.1} parent=1 // pred_check
      _
    $region35: #{neural_ode_forward.1} parent=1 // pred_check_branch
      %36 = sbr.rel (0) target = $region37
    $region36: #{neural_ode_forward.1} parent=1 // pred_region
      _
    $region37: #{neural_ode_forward.1} parent=1 // pred_fallthru
      _
    // Predicated region
    $region38: #{neural_ode_forward.1} parent=1 // pred_check
      _
    $region39: #{neural_ode_forward.1} parent=1 // pred_check_branch
      %38 = sbr.rel (0) target = $region41
    $region40: #{neural_ode_forward.1} parent=1 // pred_region
      _
    $region41: #{neural_ode_forward.1} parent=1 // pred_fallthru
      _
    // Predicated region
    $region42: #{neural_ode_forward.1} parent=1 // pred_check
      _
    $region43: #{neural_ode_forward.1} parent=1 // pred_check_branch
      %40 = sbr.rel (0) target = $region45
    $region44: #{neural_ode_forward.1} parent=1 // pred_region
      _
    $region45: #{neural_ode_forward.1} parent=1 // pred_fallthru
      _
    %v41 = vld [vmem:[%s0] sm:$0xff]
    %v42 = vld [vmem:[%s0 + $0x8] sm:$0xff]
    %43 = vst [vmem:[%s11] sm:$0xff] %v41
    %44 = vst [vmem:[%s11 + $0x8] sm:$0xff] %v42
    %v45 = vld [vmem:[%s1] sm:$0xff]
    %v46 = vld [vmem:[%s2] sm:$0xff]
    %v47 = vmul.f32 %v46, 0.0
    %49 = vset.pattern.permute.xlu0 0
    %50 = vperm.xlu0 %49, %v47
    %v51 = vpop.permute.xlu0 %50
    %v55 = vcombine.high %v41, %v41
    %v56 = vcombine.high %v42, %v42
    %vm57 = vcmask 31744
    %v59 = vsel %vm57, %v45, 0
    %vm61 = vcmask 1043456
    %v62 = vsel %vm61, %v41, 0
    %v64 = vsel %vm61, %v55, 0
    %v66 = vsel %vm61, %v42, 0
    %v68 = vsel %vm61, %v56, 0
    %70 = vmatprep.subr.mxu0 %v64
    %71 = vmatpush1.msra.mxu0 %v62
    %72 = vmatprep.subr.mxu0 0.0
    %73 = vmatpush1.msra.mxu0 0.0
    %74 = vmatprep.subr.mxu0 0.0
    %75 = vmatpush1.msra.mxu0 0.0
    %76 = vmatprep.subr.mxu0 0.0
    %77 = vmatpush1.msra.mxu0 0.0
    %78 = vmatprep.subr.mxu0 0.0
    %79 = vmatpush1.msra.mxu0 0.0
    %80 = vmatprep.subr.mxu0 0.0
    %81 = vmatpush1.msra.mxu0 0.0
    %82 = vmatprep.subr.mxu0 0.0
    %83 = vmatpush1.msra.mxu0 0.0
    %84 = vmatprep.subr.mxu0 0.0
    %85 = vmatpush1.msra.mxu0 0.0
    %86 = vmatprep.subr.mxu0 0.0
    %87 = vmatpush1.msra.mxu0 0.0
    %88 = vmatprep.subr.mxu0 0.0
    %89 = vmatpush1.msra.mxu0 0.0
    %90 = vmatprep.subr.mxu0 0.0
    %91 = vmatpush1.msra.mxu0 0.0
    %92 = vmatprep.subr.mxu0 0.0
    %93 = vmatpush1.msra.mxu0 0.0
    %94 = vmatprep.subr.mxu0 0.0
    %95 = vmatpush1.msra.mxu0 0.0
    %96 = vmatprep.subr.mxu0 0.0
    %97 = vmatpush1.msra.mxu0 0.0
    %98 = vmatprep.subr.mxu0 0.0
    %99 = vmatpush1.msra.mxu0 0.0
    %100 = vmatprep.subr.mxu0 0.0
    %101 = vmatpush1.msra.mxu0 0.0
    %102 = vmatprep.subr.mxu0 0.0
    %103 = vmatpush1.msra.mxu0 0.0
    %104 = vmatprep.subr.mxu0 0.0
    %105 = vmatpush1.msra.mxu0 0.0
    %106 = vmatprep.subr.mxu0 0.0
    %107 = vmatpush1.msra.mxu0 0.0
    %108 = vmatprep.subr.mxu0 0.0
    %109 = vmatpush1.msra.mxu0 0.0
    %110 = vmatprep.subr.mxu0 0.0
    %111 = vmatpush1.msra.mxu0 0.0
    %112 = vmatprep.subr.mxu0 0.0
    %113 = vmatpush1.msra.mxu0 0.0
    %114 = vmatprep.subr.mxu0 0.0
    %115 = vmatpush1.msra.mxu0 0.0
    %116 = vmatprep.subr.mxu0 0.0
    %117 = vmatpush1.msra.mxu0 0.0
    %118 = vmatprep.subr.mxu0 0.0
    %119 = vmatpush1.msra.mxu0 0.0
    %120 = vmatprep.subr.mxu0 0.0
    %121 = vmatpush1.msra.mxu0 0.0
    %122 = vmatprep.subr.mxu0 0.0
    %123 = vmatpush1.msra.mxu0 0.0
    %124 = vmatprep.subr.mxu0 0.0
    %125 = vmatpush1.msra.mxu0 0.0
    %126 = vmatprep.subr.mxu0 0.0
    %127 = vmatpush1.msra.mxu0 0.0
    %128 = vmatprep.subr.mxu0 0.0
    %129 = vmatpush1.msra.mxu0 0.0
    %130 = vmatprep.subr.mxu0 0.0
    %131 = vmatpush1.msra.mxu0 0.0
    %132 = vmatprep.subr.mxu0 0.0
    %133 = vmatpush1.msra.mxu0 0.0
    %134 = vmatprep.mubr.f32.mxu0 0.0
    %135 = vmatmul.mubr.f32.gmra.mrb[0].mxu0 %v59
    %v136 = vpop.f32.mrb[0].mxu0
    %v137 = vadd.f32 %v51, %v136
    %v138 = vpop.f32.mrb[0].mxu0
    %v139 = vadd.f32 %v51, %v138
    %140 = vdwg.mxu0
    %141 = vmatprep.subr.mxu0 %v68
    %142 = vmatpush1.msra.mxu0 %v66
    %143 = vmatprep.subr.mxu0 0.0
    %144 = vmatpush1.msra.mxu0 0.0
    %145 = vmatprep.subr.mxu0 0.0
    %146 = vmatpush1.msra.mxu0 0.0
    %147 = vmatprep.subr.mxu0 0.0
    %148 = vmatpush1.msra.mxu0 0.0
    %149 = vmatprep.subr.mxu0 0.0
    %150 = vmatpush1.msra.mxu0 0.0
    %151 = vmatprep.subr.mxu0 0.0
    %152 = vmatpush1.msra.mxu0 0.0
    %153 = vmatprep.subr.mxu0 0.0
    %154 = vmatpush1.msra.mxu0 0.0
    %155 = vmatprep.subr.mxu0 0.0
    %156 = vmatpush1.msra.mxu0 0.0
    %157 = vmatprep.subr.mxu0 0.0
    %158 = vmatpush1.msra.mxu0 0.0
    %159 = vmatprep.subr.mxu0 0.0
    %160 = vmatpush1.msra.mxu0 0.0
    %161 = vmatprep.subr.mxu0 0.0
    %162 = vmatpush1.msra.mxu0 0.0
    %163 = vmatprep.subr.mxu0 0.0
    %164 = vmatpush1.msra.mxu0 0.0
    %165 = vmatprep.subr.mxu0 0.0
    %166 = vmatpush1.msra.mxu0 0.0
    %167 = vmatprep.subr.mxu0 0.0
    %168 = vmatpush1.msra.mxu0 0.0
    %169 = vmatprep.subr.mxu0 0.0
    %170 = vmatpush1.msra.mxu0 0.0
    %171 = vmatprep.subr.mxu0 0.0
    %172 = vmatpush1.msra.mxu0 0.0
    %173 = vmatprep.subr.mxu0 0.0
    %174 = vmatpush1.msra.mxu0 0.0
    %175 = vmatprep.subr.mxu0 0.0
    %176 = vmatpush1.msra.mxu0 0.0
    %177 = vmatprep.subr.mxu0 0.0
    %178 = vmatpush1.msra.mxu0 0.0
    %179 = vmatprep.subr.mxu0 0.0
    %180 = vmatpush1.msra.mxu0 0.0
    %181 = vmatprep.subr.mxu0 0.0
    %182 = vmatpush1.msra.mxu0 0.0
    %183 = vmatprep.subr.mxu0 0.0
    %184 = vmatpush1.msra.mxu0 0.0
    %185 = vmatprep.subr.mxu0 0.0
    %186 = vmatpush1.msra.mxu0 0.0
    %187 = vmatprep.subr.mxu0 0.0
    %188 = vmatpush1.msra.mxu0 0.0
    %189 = vmatprep.subr.mxu0 0.0
    %190 = vmatpush1.msra.mxu0 0.0
    %191 = vmatprep.subr.mxu0 0.0
    %192 = vmatpush1.msra.mxu0 0.0
    %193 = vmatprep.subr.mxu0 0.0
    %194 = vmatpush1.msra.mxu0 0.0
    %195 = vmatprep.subr.mxu0 0.0
    %196 = vmatpush1.msra.mxu0 0.0
    %197 = vmatprep.subr.mxu0 0.0
    %198 = vmatpush1.msra.mxu0 0.0
    %199 = vmatprep.subr.mxu0 0.0
    %200 = vmatpush1.msra.mxu0 0.0
    %201 = vmatprep.subr.mxu0 0.0
    %202 = vmatpush1.msra.mxu0 0.0
    %203 = vmatprep.subr.mxu0 0.0
    %204 = vmatpush1.msra.mxu0 0.0
    %205 = vmatprep.mubr.f32.mxu0 0.0
    %206 = vmatmul.mubr.f32.gmra.mrb[0].mxu0 %v59
    %v207 = vpop.f32.mrb[0].mxu0
    %v208 = vadd.f32 %v51, %v207
    %v209 = vpop.f32.mrb[0].mxu0
    %v210 = vadd.f32 %v51, %v209
    %211 = vdwg.mxu0
    %v212 = vld [vmem:[%s3] sm:$0xff]
    %214 = vset.pattern.permute.xlu0 0
    %215 = vperm.xlu0 %214, %v212
    %v216 = vpop.permute.xlu0 %215
    %v218 = vadd.f32 %v137, %v216
    %v219 = vadd.f32 %v139, %v216
    %v220 = vadd.f32 %v208, %v216
    %v221 = vadd.f32 %v210, %v216
    %v222 = vmax.f32 %v218, 0.0
    %v223 = vmax.f32 %v219, 0.0
    %v224 = vmax.f32 %v220, 0.0
    %v225 = vmax.f32 %v221, 0.0
    %v226 = vld [vmem:[%s4] sm:$0xff]
    %v227 = vld [vmem:[%s4 + $0x8] sm:$0xff]
    %v228 = vld [vmem:[%s4 + $0x10] sm:$0xff]
    %v229 = vld [vmem:[%s4 + $0x18] sm:$0xff]
    %v230 = vld [vmem:[%s4 + $0x20] sm:$0xff]
    %v231 = vld [vmem:[%s4 + $0x28] sm:$0xff]
    %v232 = vld [vmem:[%s4 + $0x30] sm:$0xff]
    %v233 = vld [vmem:[%s4 + $0x38] sm:$0xff]
    %v234 = vld [vmem:[%s4 + $0x40] sm:$0xff]
    %vm235 = vcmask 64512
    %v237 = vsel %vm235, %v226, 0
    %v240 = vsel %vm235, %v227, 0
    %v243 = vsel %vm235, %v228, 0
    %v246 = vsel %vm235, %v229, 0
    %v249 = vsel %vm235, %v230, 0
    %v252 = vsel %vm235, %v231, 0
    %v255 = vsel %vm235, %v232, 0
    %v258 = vsel %vm235, %v233, 0
    %v261 = vsel %vm235, %v234, 0
    %263 = vmatprep.subr.mxu0 %v223
    %264 = vmatpush1.msra.mxu0 %v222
    %265 = vmatprep.subr.mxu0 0.0
    %266 = vmatpush1.msra.mxu0 0.0
    %267 = vmatprep.subr.mxu0 0.0
    %268 = vmatpush1.msra.mxu0 0.0
    %269 = vmatprep.subr.mxu0 0.0
    %270 = vmatpush1.msra.mxu0 0.0
    %271 = vmatprep.subr.mxu0 0.0
    %272 = vmatpush1.msra.mxu0 0.0
    %273 = vmatprep.subr.mxu0 0.0
    %274 = vmatpush1.msra.mxu0 0.0
    %275 = vmatprep.subr.mxu0 0.0
    %276 = vmatpush1.msra.mxu0 0.0
    %277 = vmatprep.subr.mxu0 0.0
    %278 = vmatpush1.msra.mxu0 0.0
    %279 = vmatprep.subr.mxu0 0.0
    %280 = vmatpush1.msra.mxu0 0.0
    %281 = vmatprep.subr.mxu0 0.0
    %282 = vmatpush1.msra.mxu0 0.0
    %283 = vmatprep.subr.mxu0 0.0
    %284 = vmatpush1.msra.mxu0 0.0
    %285 = vmatprep.subr.mxu0 0.0
    %286 = vmatpush1.msra.mxu0 0.0
    %287 = vmatprep.subr.mxu0 0.0
    %288 = vmatpush1.msra.mxu0 0.0
    %289 = vmatprep.subr.mxu0 0.0
    %290 = vmatpush1.msra.mxu0 0.0
    %291 = vmatprep.subr.mxu0 0.0
    %292 = vmatpush1.msra.mxu0 0.0
    %293 = vmatprep.subr.mxu0 0.0
    %294 = vmatpush1.msra.mxu0 0.0
    %295 = vmatprep.subr.mxu0 0.0
    %296 = vmatpush1.msra.mxu0 0.0
    %297 = vmatprep.subr.mxu0 0.0
    %298 = vmatpush1.msra.mxu0 0.0
    %299 = vmatprep.subr.mxu0 0.0
    %300 = vmatpush1.msra.mxu0 0.0
    %301 = vmatprep.subr.mxu0 0.0
    %302 = vmatpush1.msra.mxu0 0.0
    %303 = vmatprep.subr.mxu0 0.0
    %304 = vmatpush1.msra.mxu0 0.0
    %305 = vmatprep.subr.mxu0 0.0
    %306 = vmatpush1.msra.mxu0 0.0
    %307 = vmatprep.subr.mxu0 0.0
    %308 = vmatpush1.msra.mxu0 0.0
    %309 = vmatprep.subr.mxu0 0.0
    %310 = vmatpush1.msra.mxu0 0.0
    %311 = vmatprep.subr.mxu0 0.0
    %312 = vmatpush1.msra.mxu0 0.0
    %313 = vmatprep.subr.mxu0 0.0
    %314 = vmatpush1.msra.mxu0 0.0
    %315 = vmatprep.subr.mxu0 0.0
    %316 = vmatpush1.msra.mxu0 0.0
    %317 = vmatprep.subr.mxu0 0.0
    %318 = vmatpush1.msra.mxu0 0.0
    %319 = vmatprep.subr.mxu0 0.0
    %320 = vmatpush1.msra.mxu0 0.0
    %321 = vmatprep.subr.mxu0 0.0
    %322 = vmatpush1.msra.mxu0 0.0
    %323 = vmatprep.subr.mxu0 0.0
    %324 = vmatpush1.msra.mxu0 0.0
    %325 = vmatprep.subr.mxu0 0.0
    %326 = vmatpush1.msra.mxu0 0.0
    %327 = vmatprep.mubr.f32.mxu0 0.0
    %328 = vmatmul.mubr.f32.gmra.mrb[0].mxu0 %v237
    %v329 = vpop.f32.mrb[0].mxu0
    %v330 = vadd.f32 0.0, %v329
    %v331 = vpop.f32.mrb[0].mxu0
    %v332 = vadd.f32 0.0, %v331
    %333 = vmatprep.mubr.f32.mxu0 0.0
    %334 = vmatmul.mubr.f32.gmra.mrb[0].mxu0 %v240
    %v335 = vpop.f32.mrb[0].mxu0
    %v336 = vadd.f32 0.0, %v335
    %v337 = vpop.f32.mrb[0].mxu0
    %v338 = vadd.f32 0.0, %v337
    %339 = vmatprep.mubr.f32.mxu0 0.0
    %340 = vmatmul.mubr.f32.gmra.mrb[0].mxu0 %v243
    %v341 = vpop.f32.mrb[0].mxu0
    %v342 = vadd.f32 0.0, %v341
    %v343 = vpop.f32.mrb[0].mxu0
    %v344 = vadd.f32 0.0, %v343
    %345 = vmatprep.mubr.f32.mxu0 0.0
    %346 = vmatmul.mubr.f32.gmra.mrb[0].mxu0 %v246
    %v347 = vpop.f32.mrb[0].mxu0
    %v348 = vadd.f32 0.0, %v347
    %v349 = vpop.f32.mrb[0].mxu0
    %v350 = vadd.f32 0.0, %v349
    %351 = vmatprep.mubr.f32.mxu0 0.0
    %352 = vmatmul.mubr.f32.gmra.mrb[0].mxu0 %v249
    %v353 = vpop.f32.mrb[0].mxu0
    %v354 = vadd.f32 0.0, %v353
    %v355 = vpop.f32.mrb[0].mxu0
    %v356 = vadd.f32 0.0, %v355
    %357 = vmatprep.mubr.f32.mxu0 0.0
    %358 = vmatmul.mubr.f32.gmra.mrb[0].mxu0 %v252
    %v359 = vpop.f32.mrb[0].mxu0
    %v360 = vadd.f32 0.0, %v359
    %v361 = vpop.f32.mrb[0].mxu0
    %v362 = vadd.f32 0.0, %v361
    %363 = vmatprep.mubr.f32.mxu0 0.0
    %364 = vmatmul.mubr.f32.gmra.mrb[0].mxu0 %v255
    %v365 = vpop.f32.mrb[0].mxu0
    %v366 = vadd.f32 0.0, %v365
    %v367 = vpop.f32.mrb[0].mxu0
    %v368 = vadd.f32 0.0, %v367
    %369 = vmatprep.mubr.f32.mxu0 0.0
    %370 = vmatmul.mubr.f32.gmra.mrb[0].mxu0 %v258
    %v371 = vpop.f32.mrb[0].mxu0
    %v372 = vadd.f32 0.0, %v371
    %v373 = vpop.f32.mrb[0].mxu0
    %v374 = vadd.f32 0.0, %v373
    %375 = vmatprep.mubr.f32.mxu0 0.0
    %376 = vmatmul.mubr.f32.gmra.mrb[0].mxu0 %v261
    %v377 = vpop.f32.mrb[0].mxu0
    %v378 = vadd.f32 0.0, %v377
    %v379 = vpop.f32.mrb[0].mxu0
    %v380 = vadd.f32 0.0, %v379
    %381 = vdwg.mxu0
    %382 = vmatprep.subr.mxu0 %v225
    %383 = vmatpush1.msra.mxu0 %v224
    %384 = vmatprep.subr.mxu0 0.0
    %385 = vmatpush1.msra.mxu0 0.0
    %386 = vmatprep.subr.mxu0 0.0
    %387 = vmatpush1.msra.mxu0 0.0
    %388 = vmatprep.subr.mxu0 0.0
    %389 = vmatpush1.msra.mxu0 0.0
    %390 = vmatprep.subr.mxu0 0.0
    %391 = vmatpush1.msra.mxu0 0.0
    %392 = vmatprep.subr.mxu0 0.0
    %393 = vmatpush1.msra.mxu0 0.0
    %394 = vmatprep.subr.mxu0 0.0
    %395 = vmatpush1.msra.mxu0 0.0
    %396 = vmatprep.subr.mxu0 0.0
    %397 = vmatpush1.msra.mxu0 0.0
    %398 = vmatprep.subr.mxu0 0.0
    %399 = vmatpush1.msra.mxu0 0.0
    %400 = vmatprep.subr.mxu0 0.0
    %401 = vmatpush1.msra.mxu0 0.0
    %402 = vmatprep.subr.mxu0 0.0
    %403 = vmatpush1.msra.mxu0 0.0
    %404 = vmatprep.subr.mxu0 0.0
    %405 = vmatpush1.msra.mxu0 0.0
    %406 = vmatprep.subr.mxu0 0.0
    %407 = vmatpush1.msra.mxu0 0.0
    %408 = vmatprep.subr.mxu0 0.0
    %409 = vmatpush1.msra.mxu0 0.0
    %410 = vmatprep.subr.mxu0 0.0
    %411 = vmatpush1.msra.mxu0 0.0
    %412 = vmatprep.subr.mxu0 0.0
    %413 = vmatpush1.msra.mxu0 0.0
    %414 = vmatprep.subr.mxu0 0.0
    %415 = vmatpush1.msra.mxu0 0.0
    %416 = vmatprep.subr.mxu0 0.0
    %417 = vmatpush1.msra.mxu0 0.0
    %418 = vmatprep.subr.mxu0 0.0
    %419 = vmatpush1.msra.mxu0 0.0
    %420 = vmatprep.subr.mxu0 0.0
    %421 = vmatpush1.msra.mxu0 0.0
    %422 = vmatprep.subr.mxu0 0.0
    %423 = vmatpush1.msra.mxu0 0.0
    %424 = vmatprep.subr.mxu0 0.0
    %425 = vmatpush1.msra.mxu0 0.0
    %426 = vmatprep.subr.mxu0 0.0
    %427 = vmatpush1.msra.mxu0 0.0
    %428 = vmatprep.subr.mxu0 0.0
    %429 = vmatpush1.msra.mxu0 0.0
    %430 = vmatprep.subr.mxu0 0.0
    %431 = vmatpush1.msra.mxu0 0.0
    %432 = vmatprep.subr.mxu0 0.0
    %433 = vmatpush1.msra.mxu0 0.0
    %434 = vmatprep.subr.mxu0 0.0
    %435 = vmatpush1.msra.mxu0 0.0
    %436 = vmatprep.subr.mxu0 0.0
    %437 = vmatpush1.msra.mxu0 0.0
    %438 = vmatprep.subr.mxu0 0.0
    %439 = vmatpush1.msra.mxu0 0.0
    %440 = vmatprep.subr.mxu0 0.0
    %441 = vmatpush1.msra.mxu0 0.0
    %442 = vmatprep.subr.mxu0 0.0
    %443 = vmatpush1.msra.mxu0 0.0
    %444 = vmatprep.subr.mxu0 0.0
    %445 = vmatpush1.msra.mxu0 0.0
    %446 = vmatprep.mubr.f32.mxu0 0.0
    %447 = vmatmul.mubr.f32.gmra.mrb[0].mxu0 %v237
    %v448 = vpop.f32.mrb[0].mxu0
    %v449 = vadd.f32 0.0, %v448
    %v450 = vpop.f32.mrb[0].mxu0
    %v451 = vadd.f32 0.0, %v450
    %452 = vmatprep.mubr.f32.mxu0 0.0
    %453 = vmatmul.mubr.f32.gmra.mrb[0].mxu0 %v240
    %v454 = vpop.f32.mrb[0].mxu0
    %v455 = vadd.f32 0.0, %v454
    %v456 = vpop.f32.mrb[0].mxu0
    %v457 = vadd.f32 0.0, %v456
    %458 = vmatprep.mubr.f32.mxu0 0.0
    %459 = vmatmul.mubr.f32.gmra.mrb[0].mxu0 %v243
    %v460 = vpop.f32.mrb[0].mxu0
    %v461 = vadd.f32 0.0, %v460
    %v462 = vpop.f32.mrb[0].mxu0
    %v463 = vadd.f32 0.0, %v462
    %464 = vmatprep.mubr.f32.mxu0 0.0
    %465 = vmatmul.mubr.f32.gmra.mrb[0].mxu0 %v246
    %v466 = vpop.f32.mrb[0].mxu0
    %v467 = vadd.f32 0.0, %v466
    %v468 = vpop.f32.mrb[0].mxu0
    %v469 = vadd.f32 0.0, %v468
    %470 = vmatprep.mubr.f32.mxu0 0.0
    %471 = vmatmul.mubr.f32.gmra.mrb[0].mxu0 %v249
    %v472 = vpop.f32.mrb[0].mxu0
    %v473 = vadd.f32 0.0, %v472
    %v474 = vpop.f32.mrb[0].mxu0
    %v475 = vadd.f32 0.0, %v474
    %476 = vmatprep.mubr.f32.mxu0 0.0
    %477 = vmatmul.mubr.f32.gmra.mrb[0].mxu0 %v252
    %v478 = vpop.f32.mrb[0].mxu0
    %v479 = vadd.f32 0.0, %v478
    %v480 = vpop.f32.mrb[0].mxu0
    %v481 = vadd.f32 0.0, %v480
    %482 = vmatprep.mubr.f32.mxu0 0.0
    %483 = vmatmul.mubr.f32.gmra.mrb[0].mxu0 %v255
    %v484 = vpop.f32.mrb[0].mxu0
    %v485 = vadd.f32 0.0, %v484
    %v486 = vpop.f32.mrb[0].mxu0
    %v487 = vadd.f32 0.0, %v486
    %488 = vmatprep.mubr.f32.mxu0 0.0
    %489 = vmatmul.mubr.f32.gmra.mrb[0].mxu0 %v258
    %v490 = vpop.f32.mrb[0].mxu0
    %v491 = vadd.f32 0.0, %v490
    %v492 = vpop.f32.mrb[0].mxu0
    %v493 = vadd.f32 0.0, %v492
    %494 = vmatprep.mubr.f32.mxu0 0.0
    %495 = vmatmul.mubr.f32.gmra.mrb[0].mxu0 %v261
    %v496 = vpop.f32.mrb[0].mxu0
    %v497 = vadd.f32 0.0, %v496
    %v498 = vpop.f32.mrb[0].mxu0
    %v499 = vadd.f32 0.0, %v498
    %500 = vdwg.mxu0
    %v501 = vld [vmem:[%s10] sm:$0xff]
    %v502 = vld [vmem:[%s10 + $0x8] sm:$0xff]
    %v503 = vld [vmem:[%s10 + $0x10] sm:$0xff]
    %v504 = vld [vmem:[%s10 + $0x18] sm:$0xff]
    %v505 = vld [vmem:[%s10 + $0x20] sm:$0x1]
    %v506 = vld [vmem:[%s10 + $0x28] sm:$0x1]
    %v507 = vld [vmem:[%s10 + $0x30] sm:$0x1]
    %v508 = vld [vmem:[%s10 + $0x38] sm:$0x1]
    %509 = vrot.lane.b32.xlu0 %v330, 17
    %v510 = vpop.permute.xlu0 %509
    %511 = vrot.lane.b32.xlu0 %v332, 17
    %v512 = vpop.permute.xlu0 %511
    %513 = vrot.lane.b32.xlu0 %v449, 17
    %v514 = vpop.permute.xlu0 %513
    %515 = vrot.lane.b32.xlu0 %v451, 17
    %v516 = vpop.permute.xlu0 %515
    %v517 = vlaneseq
    %v518 = vand.u32 %v517, 127
    %vm519 = vcmp.lt.s32.totalorder %v518, 17
    %v520 = vsel %vm519, %v514, %v516
    %v521 = vsel %vm519, %v512, %v514
    %v522 = vsel %vm519, %v510, %v512
    %v523 = vsel %vm519, %v516, %v510
    %v524 = vlaneseq
    %v525 = vshrl.u32 %v524, 7
    %v526 = vsub.s32 0, %v525
    %v527 = vrot.slane %v501, %v526
    %v528 = vlaneseq
    %v529 = vshrl.u32 %v528, 7
    %v530 = vsub.s32 0, %v529
    %v531 = vrot.slane %v502, %v530
    %v532 = vlaneseq
    %v533 = vshrl.u32 %v532, 7
    %v534 = vsub.s32 0, %v533
    %v535 = vrot.slane %v503, %v534
    %v536 = vlaneseq
    %v537 = vshrl.u32 %v536, 7
    %v538 = vsub.s32 0, %v537
    %v539 = vrot.slane %v504, %v538
    %v540 = vmul.f32 %v523, %v527
    %v541 = vmul.f32 %v522, %v531
    %v542 = vmul.f32 %v521, %v535
    %v543 = vmul.f32 %v520, %v539
    %v544 = vadd.f32 %v354, %v540
    %v545 = vadd.f32 %v356, %v541
    %v546 = vadd.f32 %v473, %v542
    %v547 = vadd.f32 %v475, %v543
    %548 = vrot.lane.b32.xlu0 %v336, 16
    %v549 = vpop.permute.xlu0 %548
    %550 = vrot.lane.b32.xlu0 %v338, 16
    %v551 = vpop.permute.xlu0 %550
    %552 = vrot.lane.b32.xlu0 %v455, 16
    %v553 = vpop.permute.xlu0 %552
    %554 = vrot.lane.b32.xlu0 %v457, 16
    %v555 = vpop.permute.xlu0 %554
    %vm556 = vcmp.lt.s32.totalorder %v518, 16
    %v557 = vsel %vm556, %v553, %v555
    %v558 = vsel %vm556, %v551, %v553
    %v559 = vsel %vm556, %v549, %v551
    %v560 = vsel %vm556, %v555, %v549
    %v561 = vlaneseq
    %v562 = vshrl.u32 %v561, 7
    %v563 = vsub.s32 1, %v562
    %v564 = vrot.slane %v501, %v563
    %v565 = vlaneseq
    %v566 = vshrl.u32 %v565, 7
    %v567 = vsub.s32 1, %v566
    %v568 = vrot.slane %v502, %v567
    %v569 = vlaneseq
    %v570 = vshrl.u32 %v569, 7
    %v571 = vsub.s32 1, %v570
    %v572 = vrot.slane %v503, %v571
    %v573 = vlaneseq
    %v574 = vshrl.u32 %v573, 7
    %v575 = vsub.s32 1, %v574
    %v576 = vrot.slane %v504, %v575
    %v577 = vmul.f32 %v560, %v564
    %v578 = vmul.f32 %v559, %v568
    %v579 = vmul.f32 %v558, %v572
    %v580 = vmul.f32 %v557, %v576
    %v581 = vadd.f32 %v544, %v577
    %v582 = vadd.f32 %v545, %v578
    %v583 = vadd.f32 %v546, %v579
    %v584 = vadd.f32 %v547, %v580
    %585 = vrot.lane.b32.xlu0 %v342, 15
    %v586 = vpop.permute.xlu0 %585
    %587 = vrot.lane.b32.xlu0 %v344, 15
    %v588 = vpop.permute.xlu0 %587
    %589 = vrot.lane.b32.xlu0 %v461, 15
    %v590 = vpop.permute.xlu0 %589
    %591 = vrot.lane.b32.xlu0 %v463, 15
    %v592 = vpop.permute.xlu0 %591
    %vm593 = vcmp.lt.s32.totalorder %v518, 15
    %v594 = vsel %vm593, %v590, %v592
    %v595 = vsel %vm593, %v588, %v590
    %v596 = vsel %vm593, %v586, %v588
    %v597 = vsel %vm593, %v592, %v586
    %v598 = vlaneseq
    %v599 = vshrl.u32 %v598, 7
    %v600 = vsub.s32 2, %v599
    %v601 = vrot.slane %v501, %v600
    %v602 = vlaneseq
    %v603 = vshrl.u32 %v602, 7
    %v604 = vsub.s32 2, %v603
    %v605 = vrot.slane %v502, %v604
    %v606 = vlaneseq
    %v607 = vshrl.u32 %v606, 7
    %v608 = vsub.s32 2, %v607
    %v609 = vrot.slane %v503, %v608
    %v610 = vlaneseq
    %v611 = vshrl.u32 %v610, 7
    %v612 = vsub.s32 2, %v611
    %v613 = vrot.slane %v504, %v612
    %v614 = vmul.f32 %v597, %v601
    %v615 = vmul.f32 %v596, %v605
    %v616 = vmul.f32 %v595, %v609
    %v617 = vmul.f32 %v594, %v613
    %v618 = vadd.f32 %v581, %v614
    %v619 = vadd.f32 %v582, %v615
    %v620 = vadd.f32 %v583, %v616
    %v621 = vadd.f32 %v584, %v617
    %622 = vrot.lane.b32.xlu0 %v348, 1
    %v623 = vpop.permute.xlu0 %622
    %624 = vrot.lane.b32.xlu0 %v350, 1
    %v625 = vpop.permute.xlu0 %624
    %626 = vrot.lane.b32.xlu0 %v467, 1
    %v627 = vpop.permute.xlu0 %626
    %628 = vrot.lane.b32.xlu0 %v469, 1
    %v629 = vpop.permute.xlu0 %628
    %vm630 = vcmp.lt.s32.totalorder %v518, 1
    %v631 = vsel %vm630, %v627, %v629
    %v632 = vsel %vm630, %v625, %v627
    %v633 = vsel %vm630, %v623, %v625
    %v634 = vsel %vm630, %v629, %v623
    %v635 = vlaneseq
    %v636 = vshrl.u32 %v635, 7
    %v637 = vsub.s32 3, %v636
    %v638 = vrot.slane %v501, %v637
    %v639 = vlaneseq
    %v640 = vshrl.u32 %v639, 7
    %v641 = vsub.s32 3, %v640
    %v642 = vrot.slane %v502, %v641
    %v643 = vlaneseq
    %v644 = vshrl.u32 %v643, 7
    %v645 = vsub.s32 3, %v644
    %v646 = vrot.slane %v503, %v645
    %v647 = vlaneseq
    %v648 = vshrl.u32 %v647, 7
    %v649 = vsub.s32 3, %v648
    %v650 = vrot.slane %v504, %v649
    %v651 = vmul.f32 %v634, %v638
    %v652 = vmul.f32 %v633, %v642
    %v653 = vmul.f32 %v632, %v646
    %v654 = vmul.f32 %v631, %v650
    %v655 = vadd.f32 %v618, %v651
    %v656 = vadd.f32 %v619, %v652
    %v657 = vadd.f32 %v620, %v653
    %v658 = vadd.f32 %v621, %v654
    %659 = vrot.lane.b32.xlu0 %v360, 127
    %v660 = vpop.permute.xlu0 %659
    %661 = vrot.lane.b32.xlu0 %v362, 127
    %v662 = vpop.permute.xlu0 %661
    %663 = vrot.lane.b32.xlu0 %v479, 127
    %v664 = vpop.permute.xlu0 %663
    %665 = vrot.lane.b32.xlu0 %v481, 127
    %v666 = vpop.permute.xlu0 %665
    %vm667 = vcmp.lt.s32.totalorder %v518, 127
    %v668 = vsel %vm667, %v664, %v666
    %v669 = vsel %vm667, %v662, %v664
    %v670 = vsel %vm667, %v660, %v662
    %v671 = vsel %vm667, %v666, %v660
    %v672 = vlaneseq
    %v673 = vshrl.u32 %v672, 7
    %v674 = vsub.s32 5, %v673
    %v675 = vrot.slane %v501, %v674
    %v676 = vlaneseq
    %v677 = vshrl.u32 %v676, 7
    %v678 = vsub.s32 5, %v677
    %v679 = vrot.slane %v502, %v678
    %v680 = vlaneseq
    %v681 = vshrl.u32 %v680, 7
    %v682 = vsub.s32 5, %v681
    %v683 = vrot.slane %v503, %v682
    %v684 = vlaneseq
    %v685 = vshrl.u32 %v684, 7
    %v686 = vsub.s32 5, %v685
    %v687 = vrot.slane %v504, %v686
    %v688 = vmul.f32 %v670, %v675
    %v689 = vmul.f32 %v669, %v679
    %v690 = vmul.f32 %v668, %v683
    %v691 = vmul.f32 %v671, %v687
    %v692 = vadd.f32 %v655, %v688
    %v693 = vadd.f32 %v656, %v689
    %v694 = vadd.f32 %v657, %v690
    %v695 = vadd.f32 %v658, %v691
    %696 = vrot.lane.b32.xlu0 %v366, 113
    %v697 = vpop.permute.xlu0 %696
    %698 = vrot.lane.b32.xlu0 %v368, 113
    %v699 = vpop.permute.xlu0 %698
    %700 = vrot.lane.b32.xlu0 %v485, 113
    %v701 = vpop.permute.xlu0 %700
    %702 = vrot.lane.b32.xlu0 %v487, 113
    %v703 = vpop.permute.xlu0 %702
    %vm704 = vcmp.lt.s32.totalorder %v518, 113
    %v705 = vsel %vm704, %v701, %v703
    %v706 = vsel %vm704, %v699, %v701
    %v707 = vsel %vm704, %v697, %v699
    %v708 = vsel %vm704, %v703, %v697
    %v709 = vlaneseq
    %v710 = vshrl.u32 %v709, 7
    %v711 = vsub.s32 6, %v710
    %v712 = vrot.slane %v501, %v711
    %v713 = vlaneseq
    %v714 = vshrl.u32 %v713, 7
    %v715 = vsub.s32 6, %v714
    %v716 = vrot.slane %v502, %v715
    %v717 = vlaneseq
    %v718 = vshrl.u32 %v717, 7
    %v719 = vsub.s32 6, %v718
    %v720 = vrot.slane %v503, %v719
    %v721 = vlaneseq
    %v722 = vshrl.u32 %v721, 7
    %v723 = vsub.s32 6, %v722
    %v724 = vrot.slane %v504, %v723
    %v725 = vmul.f32 %v707, %v712
    %v726 = vmul.f32 %v706, %v716
    %v727 = vmul.f32 %v705, %v720
    %v728 = vmul.f32 %v708, %v724
    %v729 = vadd.f32 %v692, %v725
    %v730 = vadd.f32 %v693, %v726
    %v731 = vadd.f32 %v694, %v727
    %v732 = vadd.f32 %v695, %v728
    %733 = vrot.lane.b32.xlu0 %v372, 112
    %v734 = vpop.permute.xlu0 %733
    %735 = vrot.lane.b32.xlu0 %v374, 112
    %v736 = vpop.permute.xlu0 %735
    %737 = vrot.lane.b32.xlu0 %v491, 112
    %v738 = vpop.permute.xlu0 %737
    %739 = vrot.lane.b32.xlu0 %v493, 112
    %v740 = vpop.permute.xlu0 %739
    %vm741 = vcmp.lt.s32.totalorder %v518, 112
    %v742 = vsel %vm741, %v738, %v740
    %v743 = vsel %vm741, %v736, %v738
    %v744 = vsel %vm741, %v734, %v736
    %v745 = vsel %vm741, %v740, %v734
    %v746 = vlaneseq
    %v747 = vshrl.u32 %v746, 7
    %v748 = vsub.s32 7, %v747
    %v749 = vrot.slane %v501, %v748
    %v750 = vlaneseq
    %v751 = vshrl.u32 %v750, 7
    %v752 = vsub.s32 7, %v751
    %v753 = vrot.slane %v502, %v752
    %v754 = vlaneseq
    %v755 = vshrl.u32 %v754, 7
    %v756 = vsub.s32 7, %v755
    %v757 = vrot.slane %v503, %v756
    %v758 = vlaneseq
    %v759 = vshrl.u32 %v758, 7
    %v760 = vsub.s32 7, %v759
    %v761 = vrot.slane %v504, %v760
    %v762 = vmul.f32 %v744, %v749
    %v763 = vmul.f32 %v743, %v753
    %v764 = vmul.f32 %v742, %v757
    %v765 = vmul.f32 %v745, %v761
    %v766 = vadd.f32 %v729, %v762
    %v767 = vadd.f32 %v730, %v763
    %v768 = vadd.f32 %v731, %v764
    %v769 = vadd.f32 %v732, %v765
    %770 = vrot.lane.b32.xlu0 %v378, 111
    %v771 = vpop.permute.xlu0 %770
    %772 = vrot.lane.b32.xlu0 %v380, 111
    %v773 = vpop.permute.xlu0 %772
    %774 = vrot.lane.b32.xlu0 %v497, 111
    %v775 = vpop.permute.xlu0 %774
    %776 = vrot.lane.b32.xlu0 %v499, 111
    %v777 = vpop.permute.xlu0 %776
    %vm778 = vcmp.lt.s32.totalorder %v518, 111
    %v779 = vsel %vm778, %v775, %v777
    %v780 = vsel %vm778, %v773, %v775
    %v781 = vsel %vm778, %v771, %v773
    %v782 = vsel %vm778, %v777, %v771
    %v783 = vlaneseq
    %v784 = vshrl.u32 %v783, 7
    %v785 = vsub.s32 0, %v784
    %v786 = vrot.slane %v505, %v785
    %v787 = vlaneseq
    %v788 = vshrl.u32 %v787, 7
    %v789 = vsub.s32 0, %v788
    %v790 = vrot.slane %v506, %v789
    %v791 = vlaneseq
    %v792 = vshrl.u32 %v791, 7
    %v793 = vsub.s32 0, %v792
    %v794 = vrot.slane %v507, %v793
    %v795 = vlaneseq
    %v796 = vshrl.u32 %v795, 7
    %v797 = vsub.s32 0, %v796
    %v798 = vrot.slane %v508, %v797
    %v799 = vmul.f32 %v781, %v786
    %v800 = vmul.f32 %v780, %v790
    %v801 = vmul.f32 %v779, %v794
    %v802 = vmul.f32 %v782, %v798
    %v803 = vadd.f32 %v766, %v799
    %v804 = vadd.f32 %v767, %v800
    %v805 = vadd.f32 %v768, %v801
    %v806 = vadd.f32 %v769, %v802
    %v807 = vld [vmem:[%s5] sm:$0xff]
    %v808 = vld [vmem:[%s5 + $0x8] sm:$0xff]
    %v809 = vld [vmem:[%s5 + $0x10] sm:$0xff]
    %v810 = vld [vmem:[%s5 + $0x18] sm:$0xff]
    %v811 = vmul.f32 %v807, 0.0
    %v812 = vmul.f32 %v808, 0.0
    %v813 = vmul.f32 %v809, 0.0
    %v814 = vmul.f32 %v810, 0.0
    %v815 = vadd.f32 %v803, %v811
    %v816 = vadd.f32 %v804, %v812
    %v817 = vadd.f32 %v805, %v813
    %v818 = vadd.f32 %v806, %v814
    %v819 = vld [vmem:[%s6] sm:$0xff]
    %821 = vset.pattern.permute.xlu0 0
    %822 = vperm.xlu0 %821, %v819
    %v823 = vpop.permute.xlu0 %822
    %v825 = vadd.f32 %v815, %v823
    %v826 = vadd.f32 %v816, %v823
    %v827 = vadd.f32 %v817, %v823
    %v828 = vadd.f32 %v818, %v823
    %v829 = vmax.f32 %v825, 0.0
    %v830 = vmax.f32 %v826, 0.0
    %v831 = vmax.f32 %v827, 0.0
    %v832 = vmax.f32 %v828, 0.0
    %v833 = vld [vmem:[%s7] sm:$0xf]
    %v834 = vld [vmem:[%s8] sm:$0xf]
    %v835 = vmul.f32 %v834, 0.0
    %837 = vset.pattern.permute.xlu0 0
    %838 = vperm.xlu0 %837, %v835
    %v839 = vpop.permute.xlu0 %838
    %v842 = vsel %vm235, %v833, 0
    %844 = vmatprep.subr.mxu0 %v830
    %845 = vmatpush1.msra.mxu0 %v829
    %846 = vmatprep.subr.mxu0 0.0
    %847 = vmatpush1.msra.mxu0 0.0
    %848 = vmatprep.subr.mxu0 0.0
    %849 = vmatpush1.msra.mxu0 0.0
    %850 = vmatprep.subr.mxu0 0.0
    %851 = vmatpush1.msra.mxu0 0.0
    %852 = vmatprep.subr.mxu0 0.0
    %853 = vmatpush1.msra.mxu0 0.0
    %854 = vmatprep.subr.mxu0 0.0
    %855 = vmatpush1.msra.mxu0 0.0
    %856 = vmatprep.subr.mxu0 0.0
    %857 = vmatpush1.msra.mxu0 0.0
    %858 = vmatprep.subr.mxu0 0.0
    %859 = vmatpush1.msra.mxu0 0.0
    %860 = vmatprep.subr.mxu0 0.0
    %861 = vmatpush1.msra.mxu0 0.0
    %862 = vmatprep.subr.mxu0 0.0
    %863 = vmatpush1.msra.mxu0 0.0
    %864 = vmatprep.subr.mxu0 0.0
    %865 = vmatpush1.msra.mxu0 0.0
    %866 = vmatprep.subr.mxu0 0.0
    %867 = vmatpush1.msra.mxu0 0.0
    %868 = vmatprep.subr.mxu0 0.0
    %869 = vmatpush1.msra.mxu0 0.0
    %870 = vmatprep.subr.mxu0 0.0
    %871 = vmatpush1.msra.mxu0 0.0
    %872 = vmatprep.subr.mxu0 0.0
    %873 = vmatpush1.msra.mxu0 0.0
    %874 = vmatprep.subr.mxu0 0.0
    %875 = vmatpush1.msra.mxu0 0.0
    %876 = vmatprep.subr.mxu0 0.0
    %877 = vmatpush1.msra.mxu0 0.0
    %878 = vmatprep.subr.mxu0 0.0
    %879 = vmatpush1.msra.mxu0 0.0
    %880 = vmatprep.subr.mxu0 0.0
    %881 = vmatpush1.msra.mxu0 0.0
    %882 = vmatprep.subr.mxu0 0.0
    %883 = vmatpush1.msra.mxu0 0.0
    %884 = vmatprep.subr.mxu0 0.0
    %885 = vmatpush1.msra.mxu0 0.0
    %886 = vmatprep.subr.mxu0 0.0
    %887 = vmatpush1.msra.mxu0 0.0
    %888 = vmatprep.subr.mxu0 0.0
    %889 = vmatpush1.msra.mxu0 0.0
    %890 = vmatprep.subr.mxu0 0.0
    %891 = vmatpush1.msra.mxu0 0.0
    %892 = vmatprep.subr.mxu0 0.0
    %893 = vmatpush1.msra.mxu0 0.0
    %894 = vmatprep.subr.mxu0 0.0
    %895 = vmatpush1.msra.mxu0 0.0
    %896 = vmatprep.subr.mxu0 0.0
    %897 = vmatpush1.msra.mxu0 0.0
    %898 = vmatprep.subr.mxu0 0.0
    %899 = vmatpush1.msra.mxu0 0.0
    %900 = vmatprep.subr.mxu0 0.0
    %901 = vmatpush1.msra.mxu0 0.0
    %902 = vmatprep.subr.mxu0 0.0
    %903 = vmatpush1.msra.mxu0 0.0
    %904 = vmatprep.subr.mxu0 0.0
    %905 = vmatpush1.msra.mxu0 0.0
    %906 = vmatprep.subr.mxu0 0.0
    %907 = vmatpush1.msra.mxu0 0.0
    %908 = vmatprep.mubr.f32.mxu0 0.0
    %909 = vmatmul.mubr.f32.gmra.mrb[0].mxu0 %v842
    %v910 = vpop.f32.mrb[0].mxu0
    %v911 = vadd.f32 %v839, %v910
    %v912 = vpop.f32.mrb[0].mxu0
    %v913 = vadd.f32 %v839, %v912
    %914 = vdwg.mxu0
    %915 = vmatprep.subr.mxu0 %v832
    %916 = vmatpush1.msra.mxu0 %v831
    %917 = vmatprep.subr.mxu0 0.0
    %918 = vmatpush1.msra.mxu0 0.0
    %919 = vmatprep.subr.mxu0 0.0
    %920 = vmatpush1.msra.mxu0 0.0
    %921 = vmatprep.subr.mxu0 0.0
    %922 = vmatpush1.msra.mxu0 0.0
    %923 = vmatprep.subr.mxu0 0.0
    %924 = vmatpush1.msra.mxu0 0.0
    %925 = vmatprep.subr.mxu0 0.0
    %926 = vmatpush1.msra.mxu0 0.0
    %927 = vmatprep.subr.mxu0 0.0
    %928 = vmatpush1.msra.mxu0 0.0
    %929 = vmatprep.subr.mxu0 0.0
    %930 = vmatpush1.msra.mxu0 0.0
    %931 = vmatprep.subr.mxu0 0.0
    %932 = vmatpush1.msra.mxu0 0.0
    %933 = vmatprep.subr.mxu0 0.0
    %934 = vmatpush1.msra.mxu0 0.0
    %935 = vmatprep.subr.mxu0 0.0
    %936 = vmatpush1.msra.mxu0 0.0
    %937 = vmatprep.subr.mxu0 0.0
    %938 = vmatpush1.msra.mxu0 0.0
    %939 = vmatprep.subr.mxu0 0.0
    %940 = vmatpush1.msra.mxu0 0.0
    %941 = vmatprep.subr.mxu0 0.0
    %942 = vmatpush1.msra.mxu0 0.0
    %943 = vmatprep.subr.mxu0 0.0
    %944 = vmatpush1.msra.mxu0 0.0
    %945 = vmatprep.subr.mxu0 0.0
    %946 = vmatpush1.msra.mxu0 0.0
    %947 = vmatprep.subr.mxu0 0.0
    %948 = vmatpush1.msra.mxu0 0.0
    %949 = vmatprep.subr.mxu0 0.0
    %950 = vmatpush1.msra.mxu0 0.0
    %951 = vmatprep.subr.mxu0 0.0
    %952 = vmatpush1.msra.mxu0 0.0
    %953 = vmatprep.subr.mxu0 0.0
    %954 = vmatpush1.msra.mxu0 0.0
    %955 = vmatprep.subr.mxu0 0.0
    %956 = vmatpush1.msra.mxu0 0.0
    %957 = vmatprep.subr.mxu0 0.0
    %958 = vmatpush1.msra.mxu0 0.0
    %959 = vmatprep.subr.mxu0 0.0
    %960 = vmatpush1.msra.mxu0 0.0
    %961 = vmatprep.subr.mxu0 0.0
    %962 = vmatpush1.msra.mxu0 0.0
    %963 = vmatprep.subr.mxu0 0.0
    %964 = vmatpush1.msra.mxu0 0.0
    %965 = vmatprep.subr.mxu0 0.0
    %966 = vmatpush1.msra.mxu0 0.0
    %967 = vmatprep.subr.mxu0 0.0
    %968 = vmatpush1.msra.mxu0 0.0
    %969 = vmatprep.subr.mxu0 0.0
    %970 = vmatpush1.msra.mxu0 0.0
    %971 = vmatprep.subr.mxu0 0.0
    %972 = vmatpush1.msra.mxu0 0.0
    %973 = vmatprep.subr.mxu0 0.0
    %974 = vmatpush1.msra.mxu0 0.0
    %975 = vmatprep.subr.mxu0 0.0
    %976 = vmatpush1.msra.mxu0 0.0
    %977 = vmatprep.subr.mxu0 0.0
    %978 = vmatpush1.msra.mxu0 0.0
    %979 = vmatprep.mubr.f32.mxu0 0.0
    %980 = vmatmul.mubr.f32.gmra.mrb[0].mxu0 %v842
    %v981 = vpop.f32.mrb[0].mxu0
    %v982 = vadd.f32 %v839, %v981
    %v983 = vpop.f32.mrb[0].mxu0
    %v984 = vadd.f32 %v839, %v983
    %985 = vdwg.mxu0
    %v986 = vld [vmem:[%s9] sm:$0xf]
    %988 = vset.pattern.permute.xlu0 0
    %989 = vperm.xlu0 %988, %v986
    %v990 = vpop.permute.xlu0 %989
    %v992 = vadd.f32 %v911, %v990
    %v993 = vadd.f32 %v913, %v990
    %v994 = vadd.f32 %v982, %v990
    %v995 = vadd.f32 %v984, %v990
    %v1000 = vcombine.low %v992, %v993
    %v1001 = vcombine.low %v994, %v995
    %1004 = vst [vmem:[#allocation2] sm:$0xff] %v1000
    %1005 = vst [vmem:[#allocation2 + $0x8] sm:$0xff] %v1001
    %v1006 = vand.u32 2147483647, %v41
    %v1007 = vand.u32 2147483647, %v42
    %v1008 = vmul.f32 %v1006, 0.001
    %v1009 = vmul.f32 %v1007, 0.001
    %v1010 = vadd.f32 %v1008, 0.001
    %v1011 = vadd.f32 %v1009, 0.001
    %v1012 = vrcp.pop %v1010
    %v1013 = vmul.f32 %v41, %v1012
    %v1014 = vrcp.pop %v1011
    %v1015 = vmul.f32 %v42, %v1014
    %v1016 = vmul.f32 %v1013, %v1013
    %v1017 = vmul.f32 %v1015, %v1015
    %v1020 = vcombine.high %v1016, %v1016
    %v1021 = vcombine.high %v1017, %v1017
    %v1024 = vsel %vm61, %v1016, 0.0
    %v1025 = vsel %vm61, %v1020, 0.0
    %v1026 = vadd.f32 %v1024, %v1025
    %v1027 = vsel %vm61, %v1017, 0.0
    %v1028 = vadd.f32 %v1026, %v1027
    %v1029 = vsel %vm61, %v1021, 0.0
    %v1030 = vadd.f32 %v1028, %v1029
    %1031 = vadd.xlane.f32.xlu0 %v1030
    %v1032 = vpop.xlane.xlu0 %1031
    %v1033 = vsel %vm61, %v1032, 0.0
    %v1034 = vrot.slane %v1033, 4
    %v1035 = vadd.f32 %v1033, %v1034
    %v1036 = vrot.slane %v1035, 2
    %v1037 = vadd.f32 %v1035, %v1036
    %v1038 = vrot.slane %v1037, 1
    %v1039 = vadd.f32 %v1037, %v1038
    %v1040 = vrcp.pop 2048.0
    %v1041 = vmul.f32 %v1039, %v1040
    %v1042 = vrsqrt.pop %v1041
    %v1043 = vmul.f32 %v1041, %v1042
    %vm1044 = vcmp.eq.f32.partialorder %v1041, inf
    %v1045 = vsel %vm1044, %v1041, %v1043
    %vm1046 = vcmp.eq.f32.partialorder %v1041, 0.0
    %v1047 = vand.u32 %v1041, 2147483648
    %v1048 = vsel %vm1046, %v1047, %v1045
    %v1051 = vcombine.high %v1010, %v1010
    %v1052 = vcombine.high %v1011, %v1011
    %v1055 = vmul.f32 %v992, %v1012
    %v1056 = vrcp.pop %v1051
    %v1057 = vmul.f32 %v993, %v1056
    %v1058 = vmul.f32 %v994, %v1014
    %v1059 = vrcp.pop %v1052
    %v1060 = vmul.f32 %v995, %v1059
    %v1061 = vmul.f32 %v1055, %v1055
    %v1062 = vmul.f32 %v1057, %v1057
    %v1063 = vmul.f32 %v1058, %v1058
    %v1064 = vmul.f32 %v1060, %v1060
    %v1065 = vsel %vm61, %v1061, 0.0
    %v1066 = vsel %vm61, %v1062, 0.0
    %v1067 = vadd.f32 %v1065, %v1066
    %v1068 = vsel %vm61, %v1063, 0.0
    %v1069 = vadd.f32 %v1067, %v1068
    %v1070 = vsel %vm61, %v1064, 0.0
    %v1071 = vadd.f32 %v1069, %v1070
    %1072 = vadd.xlane.f32.xlu0 %v1071
    %v1073 = vpop.xlane.xlu0 %1072
    %v1074 = vsel %vm61, %v1073, 0.0
    %v1075 = vrot.slane %v1074, 4
    %v1076 = vadd.f32 %v1074, %v1075
    %v1077 = vrot.slane %v1076, 2
    %v1078 = vadd.f32 %v1076, %v1077
    %v1079 = vrot.slane %v1078, 1
    %v1080 = vadd.f32 %v1078, %v1079
    %v1081 = vmul.f32 %v1080, %v1040
    %v1082 = vrsqrt.pop %v1081
    %v1083 = vmul.f32 %v1081, %v1082
    %vm1084 = vcmp.eq.f32.partialorder %v1081, inf
    %v1085 = vsel %vm1084, %v1081, %v1083
    %vm1086 = vcmp.eq.f32.partialorder %v1081, 0.0
    %v1087 = vand.u32 %v1081, 2147483648
    %v1088 = vsel %vm1086, %v1087, %v1085
    %vm1089 = vcmp.lt.f32.partialorder %v1048, 1e-05
    %vm1090 = vcmp.lt.f32.partialorder %v1088, 1e-05
    %vm1091 = vmor %vm1089, %vm1090
    %v1092 = vmul.f32 %v1048, 0.01
    %v1093 = vmax.f32 %v1088, 1e-30
    %v1094 = vrcp.pop %v1093
    %v1095 = vmul.f32 %v1092, %v1094
    %v1096 = vsel %vm1091, 1e-06, %v1095
    %v1097 = vmul.f32 %v1096, %v992
    %v1098 = vmul.f32 %v1096, %v993
    %v1099 = vmul.f32 %v1096, %v994
    %v1100 = vmul.f32 %v1096, %v995
    %v1105 = vcombine.low %v1097, %v1098
    %v1106 = vcombine.low %v1099, %v1100
    %v1109 = vadd.f32 %v41, %v1105
    %v1110 = vadd.f32 %v42, %v1106
    %v1111 = vld [vmem:[%s1] sm:$0xff]
    %v1112 = vld [vmem:[%s2] sm:$0xff]
    %v1113 = vmul.f32 %v1096, %v1112
    %1115 = vset.pattern.permute.xlu0 0
    %1116 = vperm.xlu0 %1115, %v1113
    %v1117 = vpop.permute.xlu0 %1116
    %v1121 = vcombine.high %v1109, %v1109
    %v1122 = vcombine.high %v1110, %v1110
    %v1124 = vsel %vm57, %v1111, 0
    %v1126 = vsel %vm61, %v1109, 0
    %v1128 = vsel %vm61, %v1121, 0
    %v1130 = vsel %vm61, %v1110, 0
    %v1132 = vsel %vm61, %v1122, 0
    %1134 = vmatprep.subr.mxu0 %v1128
    %1135 = vmatpush1.msra.mxu0 %v1126
    %1136 = vmatprep.subr.mxu0 0.0
    %1137 = vmatpush1.msra.mxu0 0.0
    %1138 = vmatprep.subr.mxu0 0.0
    %1139 = vmatpush1.msra.mxu0 0.0
    %1140 = vmatprep.subr.mxu0 0.0
    %1141 = vmatpush1.msra.mxu0 0.0
    %1142 = vmatprep.subr.mxu0 0.0
    %1143 = vmatpush1.msra.mxu0 0.0
    %1144 = vmatprep.subr.mxu0 0.0
    %1145 = vmatpush1.msra.mxu0 0.0
    %1146 = vmatprep.subr.mxu0 0.0
    %1147 = vmatpush1.msra.mxu0 0.0
    %1148 = vmatprep.subr.mxu0 0.0
    %1149 = vmatpush1.msra.mxu0 0.0
    %1150 = vmatprep.subr.mxu0 0.0
    %1151 = vmatpush1.msra.mxu0 0.0
    %1152 = vmatprep.subr.mxu0 0.0
    %1153 = vmatpush1.msra.mxu0 0.0
    %1154 = vmatprep.subr.mxu0 0.0
    %1155 = vmatpush1.msra.mxu0 0.0
    %1156 = vmatprep.subr.mxu0 0.0
    %1157 = vmatpush1.msra.mxu0 0.0
    %1158 = vmatprep.subr.mxu0 0.0
    %1159 = vmatpush1.msra.mxu0 0.0
    %1160 = vmatprep.subr.mxu0 0.0
    %1161 = vmatpush1.msra.mxu0 0.0
    %1162 = vmatprep.subr.mxu0 0.0
    %1163 = vmatpush1.msra.mxu0 0.0
    %1164 = vmatprep.subr.mxu0 0.0
    %1165 = vmatpush1.msra.mxu0 0.0
    %1166 = vmatprep.subr.mxu0 0.0
    %1167 = vmatpush1.msra.mxu0 0.0
    %1168 = vmatprep.subr.mxu0 0.0
    %1169 = vmatpush1.msra.mxu0 0.0
    %1170 = vmatprep.subr.mxu0 0.0
    %1171 = vmatpush1.msra.mxu0 0.0
    %1172 = vmatprep.subr.mxu0 0.0
    %1173 = vmatpush1.msra.mxu0 0.0
    %1174 = vmatprep.subr.mxu0 0.0
    %1175 = vmatpush1.msra.mxu0 0.0
    %1176 = vmatprep.subr.mxu0 0.0
    %1177 = vmatpush1.msra.mxu0 0.0
    %1178 = vmatprep.subr.mxu0 0.0
    %1179 = vmatpush1.msra.mxu0 0.0
    %1180 = vmatprep.subr.mxu0 0.0
    %1181 = vmatpush1.msra.mxu0 0.0
    %1182 = vmatprep.subr.mxu0 0.0
    %1183 = vmatpush1.msra.mxu0 0.0
    %1184 = vmatprep.subr.mxu0 0.0
    %1185 = vmatpush1.msra.mxu0 0.0
    %1186 = vmatprep.subr.mxu0 0.0
    %1187 = vmatpush1.msra.mxu0 0.0
    %1188 = vmatprep.subr.mxu0 0.0
    %1189 = vmatpush1.msra.mxu0 0.0
    %1190 = vmatprep.subr.mxu0 0.0
    %1191 = vmatpush1.msra.mxu0 0.0
    %1192 = vmatprep.subr.mxu0 0.0
    %1193 = vmatpush1.msra.mxu0 0.0
    %1194 = vmatprep.subr.mxu0 0.0
    %1195 = vmatpush1.msra.mxu0 0.0
    %1196 = vmatprep.subr.mxu0 0.0
    %1197 = vmatpush1.msra.mxu0 0.0
    %1198 = vmatprep.mubr.f32.mxu0 0.0
    %1199 = vmatmul.mubr.f32.gmra.mrb[0].mxu0 %v1124
    %v1200 = vpop.f32.mrb[0].mxu0
    %v1201 = vadd.f32 %v1117, %v1200
    %v1202 = vpop.f32.mrb[0].mxu0
    %v1203 = vadd.f32 %v1117, %v1202
    %1204 = vdwg.mxu0
    %1205 = vmatprep.subr.mxu0 %v1132
    %1206 = vmatpush1.msra.mxu0 %v1130
    %1207 = vmatprep.subr.mxu0 0.0
    %1208 = vmatpush1.msra.mxu0 0.0
    %1209 = vmatprep.subr.mxu0 0.0
    %1210 = vmatpush1.msra.mxu0 0.0
    %1211 = vmatprep.subr.mxu0 0.0
    %1212 = vmatpush1.msra.mxu0 0.0
    %1213 = vmatprep.subr.mxu0 0.0
    %1214 = vmatpush1.msra.mxu0 0.0
    %1215 = vmatprep.subr.mxu0 0.0
    %1216 = vmatpush1.msra.mxu0 0.0
    %1217 = vmatprep.subr.mxu0 0.0
    %1218 = vmatpush1.msra.mxu0 0.0
    %1219 = vmatprep.subr.mxu0 0.0
    %1220 = vmatpush1.msra.mxu0 0.0
    %1221 = vmatprep.subr.mxu0 0.0
    %1222 = vmatpush1.msra.mxu0 0.0
    %1223 = vmatprep.subr.mxu0 0.0
    %1224 = vmatpush1.msra.mxu0 0.0
    %1225 = vmatprep.subr.mxu0 0.0
    %1226 = vmatpush1.msra.mxu0 0.0
    %1227 = vmatprep.subr.mxu0 0.0
    %1228 = vmatpush1.msra.mxu0 0.0
    %1229 = vmatprep.subr.mxu0 0.0
    %1230 = vmatpush1.msra.mxu0 0.0
    %1231 = vmatprep.subr.mxu0 0.0
    %1232 = vmatpush1.msra.mxu0 0.0
    %1233 = vmatprep.subr.mxu0 0.0
    %1234 = vmatpush1.msra.mxu0 0.0
    %1235 = vmatprep.subr.mxu0 0.0
    %1236 = vmatpush1.msra.mxu0 0.0
    %1237 = vmatprep.subr.mxu0 0.0
    %1238 = vmatpush1.msra.mxu0 0.0
    %1239 = vmatprep.subr.mxu0 0.0
    %1240 = vmatpush1.msra.mxu0 0.0
    %1241 = vmatprep.subr.mxu0 0.0
    %1242 = vmatpush1.msra.mxu0 0.0
    %1243 = vmatprep.subr.mxu0 0.0
    %1244 = vmatpush1.msra.mxu0 0.0
    %1245 = vmatprep.subr.mxu0 0.0
    %1246 = vmatpush1.msra.mxu0 0.0
    %1247 = vmatprep.subr.mxu0 0.0
    %1248 = vmatpush1.msra.mxu0 0.0
    %1249 = vmatprep.subr.mxu0 0.0
    %1250 = vmatpush1.msra.mxu0 0.0
    %1251 = vmatprep.subr.mxu0 0.0
    %1252 = vmatpush1.msra.mxu0 0.0
    %1253 = vmatprep.subr.mxu0 0.0
    %1254 = vmatpush1.msra.mxu0 0.0
    %1255 = vmatprep.subr.mxu0 0.0
    %1256 = vmatpush1.msra.mxu0 0.0
    %1257 = vmatprep.subr.mxu0 0.0
    %1258 = vmatpush1.msra.mxu0 0.0
    %1259 = vmatprep.subr.mxu0 0.0
    %1260 = vmatpush1.msra.mxu0 0.0
    %1261 = vmatprep.subr.mxu0 0.0
    %1262 = vmatpush1.msra.mxu0 0.0
    %1263 = vmatprep.subr.mxu0 0.0
    %1264 = vmatpush1.msra.mxu0 0.0
    %1265 = vmatprep.subr.mxu0 0.0
    %1266 = vmatpush1.msra.mxu0 0.0
    %1267 = vmatprep.subr.mxu0 0.0
    %1268 = vmatpush1.msra.mxu0 0.0
    %1269 = vmatprep.mubr.f32.mxu0 0.0
    %1270 = vmatmul.mubr.f32.gmra.mrb[0].mxu0 %v1124
    %v1271 = vpop.f32.mrb[0].mxu0
    %v1272 = vadd.f32 %v1117, %v1271
    %v1273 = vpop.f32.mrb[0].mxu0
    %v1274 = vadd.f32 %v1117, %v1273
    %1275 = vdwg.mxu0
    %v1276 = vld [vmem:[%s3] sm:$0xff]
    %1278 = vset.pattern.permute.xlu0 0
    %1279 = vperm.xlu0 %1278, %v1276
    %v1280 = vpop.permute.xlu0 %1279
    %v1282 = vadd.f32 %v1201, %v1280
    %v1283 = vadd.f32 %v1203, %v1280
    %v1284 = vadd.f32 %v1272, %v1280
    %v1285 = vadd.f32 %v1274, %v1280
    %v1286 = vmax.f32 %v1282, 0.0
    %v1287 = vmax.f32 %v1283, 0.0
    %v1288 = vmax.f32 %v1284, 0.0
    %v1289 = vmax.f32 %v1285, 0.0
    %v1290 = vld [vmem:[%s4] sm:$0xff]
    %v1291 = vld [vmem:[%s4 + $0x8] sm:$0xff]
    %v1292 = vld [vmem:[%s4 + $0x10] sm:$0xff]
    %v1293 = vld [vmem:[%s4 + $0x18] sm:$0xff]
    %v1294 = vld [vmem:[%s4 + $0x20] sm:$0xff]
    %v1295 = vld [vmem:[%s4 + $0x28] sm:$0xff]
    %v1296 = vld [vmem:[%s4 + $0x30] sm:$0xff]
    %v1297 = vld [vmem:[%s4 + $0x38] sm:$0xff]
    %v1298 = vld [vmem:[%s4 + $0x40] sm:$0xff]
    %v1300 = vsel %vm235, %v1290, 0
    %v1303 = vsel %vm235, %v1291, 0
    %v1306 = vsel %vm235, %v1292, 0
    %v1309 = vsel %vm235, %v1293, 0
    %v1312 = vsel %vm235, %v1294, 0
    %v1315 = vsel %vm235, %v1295, 0
    %v1318 = vsel %vm235, %v1296, 0
    %v1321 = vsel %vm235, %v1297, 0
    %v1324 = vsel %vm235, %v1298, 0
    %1326 = vmatprep.subr.mxu0 %v1287
    %1327 = vmatpush1.msra.mxu0 %v1286
    %1328 = vmatprep.subr.mxu0 0.0
    %1329 = vmatpush1.msra.mxu0 0.0
    %1330 = vmatprep.subr.mxu0 0.0
    %1331 = vmatpush1.msra.mxu0 0.0
    %1332 = vmatprep.subr.mxu0 0.0
    %1333 = vmatpush1.msra.mxu0 0.0
    %1334 = vmatprep.subr.mxu0 0.0
    %1335 = vmatpush1.msra.mxu0 0.0
    %1336 = vmatprep.subr.mxu0 0.0
    %1337 = vmatpush1.msra.mxu0 0.0
    %1338 = vmatprep.subr.mxu0 0.0
    %1339 = vmatpush1.msra.mxu0 0.0
    %1340 = vmatprep.subr.mxu0 0.0
    %1341 = vmatpush1.msra.mxu0 0.0
    %1342 = vmatprep.subr.mxu0 0.0
    %1343 = vmatpush1.msra.mxu0 0.0
    %1344 = vmatprep.subr.mxu0 0.0
    %1345 = vmatpush1.msra.mxu0 0.0
    %1346 = vmatprep.subr.mxu0 0.0
    %1347 = vmatpush1.msra.mxu0 0.0
    %1348 = vmatprep.subr.mxu0 0.0
    %1349 = vmatpush1.msra.mxu0 0.0
    %1350 = vmatprep.subr.mxu0 0.0
    %1351 = vmatpush1.msra.mxu0 0.0
    %1352 = vmatprep.subr.mxu0 0.0
    %1353 = vmatpush1.msra.mxu0 0.0
    %1354 = vmatprep.subr.mxu0 0.0
    %1355 = vmatpush1.msra.mxu0 0.0
    %1356 = vmatprep.subr.mxu0 0.0
    %1357 = vmatpush1.msra.mxu0 0.0
    %1358 = vmatprep.subr.mxu0 0.0
    %1359 = vmatpush1.msra.mxu0 0.0
    %1360 = vmatprep.subr.mxu0 0.0
    %1361 = vmatpush1.msra.mxu0 0.0
    %1362 = vmatprep.subr.mxu0 0.0
    %1363 = vmatpush1.msra.mxu0 0.0
    %1364 = vmatprep.subr.mxu0 0.0
    %1365 = vmatpush1.msra.mxu0 0.0
    %1366 = vmatprep.subr.mxu0 0.0
    %1367 = vmatpush1.msra.mxu0 0.0
    %1368 = vmatprep.subr.mxu0 0.0
    %1369 = vmatpush1.msra.mxu0 0.0
    %1370 = vmatprep.subr.mxu0 0.0
    %1371 = vmatpush1.msra.mxu0 0.0
    %1372 = vmatprep.subr.mxu0 0.0
    %1373 = vmatpush1.msra.mxu0 0.0
    %1374 = vmatprep.subr.mxu0 0.0
    %1375 = vmatpush1.msra.mxu0 0.0
    %1376 = vmatprep.subr.mxu0 0.0
    %1377 = vmatpush1.msra.mxu0 0.0
    %1378 = vmatprep.subr.mxu0 0.0
    %1379 = vmatpush1.msra.mxu0 0.0
    %1380 = vmatprep.subr.mxu0 0.0
    %1381 = vmatpush1.msra.mxu0 0.0
    %1382 = vmatprep.subr.mxu0 0.0
    %1383 = vmatpush1.msra.mxu0 0.0
    %1384 = vmatprep.subr.mxu0 0.0
    %1385 = vmatpush1.msra.mxu0 0.0
    %1386 = vmatprep.subr.mxu0 0.0
    %1387 = vmatpush1.msra.mxu0 0.0
    %1388 = vmatprep.subr.mxu0 0.0
    %1389 = vmatpush1.msra.mxu0 0.0
    %1390 = vmatprep.mubr.f32.mxu0 0.0
    %1391 = vmatmul.mubr.f32.gmra.mrb[0].mxu0 %v1300
    %v1392 = vpop.f32.mrb[0].mxu0
    %v1393 = vadd.f32 0.0, %v1392
    %v1394 = vpop.f32.mrb[0].mxu0
    %v1395 = vadd.f32 0.0, %v1394
    %1396 = vmatprep.mubr.f32.mxu0 0.0
    %1397 = vmatmul.mubr.f32.gmra.mrb[0].mxu0 %v1303
    %v1398 = vpop.f32.mrb[0].mxu0
    %v1399 = vadd.f32 0.0, %v1398
    %v1400 = vpop.f32.mrb[0].mxu0
    %v1401 = vadd.f32 0.0, %v1400
    %1402 = vmatprep.mubr.f32.mxu0 0.0
    %1403 = vmatmul.mubr.f32.gmra.mrb[0].mxu0 %v1306
    %v1404 = vpop.f32.mrb[0].mxu0
    %v1405 = vadd.f32 0.0, %v1404
    %v1406 = vpop.f32.mrb[0].mxu0
    %v1407 = vadd.f32 0.0, %v1406
    %1408 = vmatprep.mubr.f32.mxu0 0.0
    %1409 = vmatmul.mubr.f32.gmra.mrb[0].mxu0 %v1309
    %v1410 = vpop.f32.mrb[0].mxu0
    %v1411 = vadd.f32 0.0, %v1410
    %v1412 = vpop.f32.mrb[0].mxu0
    %v1413 = vadd.f32 0.0, %v1412
    %1414 = vmatprep.mubr.f32.mxu0 0.0
    %1415 = vmatmul.mubr.f32.gmra.mrb[0].mxu0 %v1312
    %v1416 = vpop.f32.mrb[0].mxu0
    %v1417 = vadd.f32 0.0, %v1416
    %v1418 = vpop.f32.mrb[0].mxu0
    %v1419 = vadd.f32 0.0, %v1418
    %1420 = vmatprep.mubr.f32.mxu0 0.0
    %1421 = vmatmul.mubr.f32.gmra.mrb[0].mxu0 %v1315
    %v1422 = vpop.f32.mrb[0].mxu0
    %v1423 = vadd.f32 0.0, %v1422
    %v1424 = vpop.f32.mrb[0].mxu0
    %v1425 = vadd.f32 0.0, %v1424
    %1426 = vmatprep.mubr.f32.mxu0 0.0
    %1427 = vmatmul.mubr.f32.gmra.mrb[0].mxu0 %v1318
    %v1428 = vpop.f32.mrb[0].mxu0
    %v1429 = vadd.f32 0.0, %v1428
    %v1430 = vpop.f32.mrb[0].mxu0
    %v1431 = vadd.f32 0.0, %v1430
    %1432 = vmatprep.mubr.f32.mxu0 0.0
    %1433 = vmatmul.mubr.f32.gmra.mrb[0].mxu0 %v1321
    %v1434 = vpop.f32.mrb[0].mxu0
    %v1435 = vadd.f32 0.0, %v1434
    %v1436 = vpop.f32.mrb[0].mxu0
    %v1437 = vadd.f32 0.0, %v1436
    %1438 = vmatprep.mubr.f32.mxu0 0.0
    %1439 = vmatmul.mubr.f32.gmra.mrb[0].mxu0 %v1324
    %v1440 = vpop.f32.mrb[0].mxu0
    %v1441 = vadd.f32 0.0, %v1440
    %v1442 = vpop.f32.mrb[0].mxu0
    %v1443 = vadd.f32 0.0, %v1442
    %1444 = vdwg.mxu0
    %1445 = vmatprep.subr.mxu0 %v1289
    %1446 = vmatpush1.msra.mxu0 %v1288
    %1447 = vmatprep.subr.mxu0 0.0
    %1448 = vmatpush1.msra.mxu0 0.0
    %1449 = vmatprep.subr.mxu0 0.0
    %1450 = vmatpush1.msra.mxu0 0.0
    %1451 = vmatprep.subr.mxu0 0.0
    %1452 = vmatpush1.msra.mxu0 0.0
    %1453 = vmatprep.subr.mxu0 0.0
    %1454 = vmatpush1.msra.mxu0 0.0
    %1455 = vmatprep.subr.mxu0 0.0
    %1456 = vmatpush1.msra.mxu0 0.0
    %1457 = vmatprep.subr.mxu0 0.0
    %1458 = vmatpush1.msra.mxu0 0.0
    %1459 = vmatprep.subr.mxu0 0.0
    %1460 = vmatpush1.msra.mxu0 0.0
    %1461 = vmatprep.subr.mxu0 0.0
    %1462 = vmatpush1.msra.mxu0 0.0
    %1463 = vmatprep.subr.mxu0 0.0
    %1464 = vmatpush1.msra.mxu0 0.0
    %1465 = vmatprep.subr.mxu0 0.0
    %1466 = vmatpush1.msra.mxu0 0.0
    %1467 = vmatprep.subr.mxu0 0.0
    %1468 = vmatpush1.msra.mxu0 0.0
    %1469 = vmatprep.subr.mxu0 0.0
    %1470 = vmatpush1.msra.mxu0 0.0
    %1471 = vmatprep.subr.mxu0 0.0
    %1472 = vmatpush1.msra.mxu0 0.0
    %1473 = vmatprep.subr.mxu0 0.0
    %1474 = vmatpush1.msra.mxu0 0.0
    %1475 = vmatprep.subr.mxu0 0.0
    %1476 = vmatpush1.msra.mxu0 0.0
    %1477 = vmatprep.subr.mxu0 0.0
    %1478 = vmatpush1.msra.mxu0 0.0
    %1479 = vmatprep.subr.mxu0 0.0
    %1480 = vmatpush1.msra.mxu0 0.0
    %1481 = vmatprep.subr.mxu0 0.0
    %1482 = vmatpush1.msra.mxu0 0.0
    %1483 = vmatprep.subr.mxu0 0.0
    %1484 = vmatpush1.msra.mxu0 0.0
    %1485 = vmatprep.subr.mxu0 0.0
    %1486 = vmatpush1.msra.mxu0 0.0
    %1487 = vmatprep.subr.mxu0 0.0
    %1488 = vmatpush1.msra.mxu0 0.0
    %1489 = vmatprep.subr.mxu0 0.0
    %1490 = vmatpush1.msra.mxu0 0.0
    %1491 = vmatprep.subr.mxu0 0.0
    %1492 = vmatpush1.msra.mxu0 0.0
    %1493 = vmatprep.subr.mxu0 0.0
    %1494 = vmatpush1.msra.mxu0 0.0
    %1495 = vmatprep.subr.mxu0 0.0
    %1496 = vmatpush1.msra.mxu0 0.0
    %1497 = vmatprep.subr.mxu0 0.0
    %1498 = vmatpush1.msra.mxu0 0.0
    %1499 = vmatprep.subr.mxu0 0.0
    %1500 = vmatpush1.msra.mxu0 0.0
    %1501 = vmatprep.subr.mxu0 0.0
    %1502 = vmatpush1.msra.mxu0 0.0
    %1503 = vmatprep.subr.mxu0 0.0
    %1504 = vmatpush1.msra.mxu0 0.0
    %1505 = vmatprep.subr.mxu0 0.0
    %1506 = vmatpush1.msra.mxu0 0.0
    %1507 = vmatprep.subr.mxu0 0.0
    %1508 = vmatpush1.msra.mxu0 0.0
    %1509 = vmatprep.mubr.f32.mxu0 0.0
    %1510 = vmatmul.mubr.f32.gmra.mrb[0].mxu0 %v1300
    %v1511 = vpop.f32.mrb[0].mxu0
    %v1512 = vadd.f32 0.0, %v1511
    %v1513 = vpop.f32.mrb[0].mxu0
    %v1514 = vadd.f32 0.0, %v1513
    %1515 = vmatprep.mubr.f32.mxu0 0.0
    %1516 = vmatmul.mubr.f32.gmra.mrb[0].mxu0 %v1303
    %v1517 = vpop.f32.mrb[0].mxu0
    %v1518 = vadd.f32 0.0, %v1517
    %v1519 = vpop.f32.mrb[0].mxu0
    %v1520 = vadd.f32 0.0, %v1519
    %1521 = vmatprep.mubr.f32.mxu0 0.0
    %1522 = vmatmul.mubr.f32.gmra.mrb[0].mxu0 %v1306
    %v1523 = vpop.f32.mrb[0].mxu0
    %v1524 = vadd.f32 0.0, %v1523
    %v1525 = vpop.f32.mrb[0].mxu0
    %v1526 = vadd.f32 0.0, %v1525
    %1527 = vmatprep.mubr.f32.mxu0 0.0
    %1528 = vmatmul.mubr.f32.gmra.mrb[0].mxu0 %v1309
    %v1529 = vpop.f32.mrb[0].mxu0
    %v1530 = vadd.f32 0.0, %v1529
    %v1531 = vpop.f32.mrb[0].mxu0
    %v1532 = vadd.f32 0.0, %v1531
    %1533 = vmatprep.mubr.f32.mxu0 0.0
    %1534 = vmatmul.mubr.f32.gmra.mrb[0].mxu0 %v1312
    %v1535 = vpop.f32.mrb[0].mxu0
    %v1536 = vadd.f32 0.0, %v1535
    %v1537 = vpop.f32.mrb[0].mxu0
    %v1538 = vadd.f32 0.0, %v1537
    %1539 = vmatprep.mubr.f32.mxu0 0.0
    %1540 = vmatmul.mubr.f32.gmra.mrb[0].mxu0 %v1315
    %v1541 = vpop.f32.mrb[0].mxu0
    %v1542 = vadd.f32 0.0, %v1541
    %v1543 = vpop.f32.mrb[0].mxu0
    %v1544 = vadd.f32 0.0, %v1543
    %1545 = vmatprep.mubr.f32.mxu0 0.0
    %1546 = vmatmul.mubr.f32.gmra.mrb[0].mxu0 %v1318
    %v1547 = vpop.f32.mrb[0].mxu0
    %v1548 = vadd.f32 0.0, %v1547
    %v1549 = vpop.f32.mrb[0].mxu0
    %v1550 = vadd.f32 0.0, %v1549
    %1551 = vmatprep.mubr.f32.mxu0 0.0
    %1552 = vmatmul.mubr.f32.gmra.mrb[0].mxu0 %v1321
    %v1553 = vpop.f32.mrb[0].mxu0
    %v1554 = vadd.f32 0.0, %v1553
    %v1555 = vpop.f32.mrb[0].mxu0
    %v1556 = vadd.f32 0.0, %v1555
    %1557 = vmatprep.mubr.f32.mxu0 0.0
    %1558 = vmatmul.mubr.f32.gmra.mrb[0].mxu0 %v1324
    %v1559 = vpop.f32.mrb[0].mxu0
    %v1560 = vadd.f32 0.0, %v1559
    %v1561 = vpop.f32.mrb[0].mxu0
    %v1562 = vadd.f32 0.0, %v1561
    %1563 = vdwg.mxu0
    %v1564 = vld [vmem:[%s10] sm:$0xff]
    %v1565 = vld [vmem:[%s10 + $0x8] sm:$0xff]
    %v1566 = vld [vmem:[%s10 + $0x10] sm:$0xff]
    %v1567 = vld [vmem:[%s10 + $0x18] sm:$0xff]
    %v1568 = vld [vmem:[%s10 + $0x20] sm:$0x1]
    %v1569 = vld [vmem:[%s10 + $0x28] sm:$0x1]
    %v1570 = vld [vmem:[%s10 + $0x30] sm:$0x1]
    %v1571 = vld [vmem:[%s10 + $0x38] sm:$0x1]
    %1572 = vrot.lane.b32.xlu0 %v1393, 17
    %v1573 = vpop.permute.xlu0 %1572
    %1574 = vrot.lane.b32.xlu0 %v1395, 17
    %v1575 = vpop.permute.xlu0 %1574
    %1576 = vrot.lane.b32.xlu0 %v1512, 17
    %v1577 = vpop.permute.xlu0 %1576
    %1578 = vrot.lane.b32.xlu0 %v1514, 17
    %v1579 = vpop.permute.xlu0 %1578
    %v1580 = vsel %vm519, %v1577, %v1579
    %v1581 = vsel %vm519, %v1575, %v1577
    %v1582 = vsel %vm519, %v1573, %v1575
    %v1583 = vsel %vm519, %v1579, %v1573
    %v1584 = vlaneseq
    %v1585 = vshrl.u32 %v1584, 7
    %v1586 = vsub.s32 0, %v1585
    %v1587 = vrot.slane %v1564, %v1586
    %v1588 = vlaneseq
    %v1589 = vshrl.u32 %v1588, 7
    %v1590 = vsub.s32 0, %v1589
    %v1591 = vrot.slane %v1565, %v1590
    %v1592 = vlaneseq
    %v1593 = vshrl.u32 %v1592, 7
    %v1594 = vsub.s32 0, %v1593
    %v1595 = vrot.slane %v1566, %v1594
    %v1596 = vlaneseq
    %v1597 = vshrl.u32 %v1596, 7
    %v1598 = vsub.s32 0, %v1597
    %v1599 = vrot.slane %v1567, %v1598
    %v1600 = vmul.f32 %v1583, %v1587
    %v1601 = vmul.f32 %v1582, %v1591
    %v1602 = vmul.f32 %v1581, %v1595
    %v1603 = vmul.f32 %v1580, %v1599
    %v1604 = vadd.f32 %v1417, %v1600
    %v1605 = vadd.f32 %v1419, %v1601
    %v1606 = vadd.f32 %v1536, %v1602
    %v1607 = vadd.f32 %v1538, %v1603
    %1608 = vrot.lane.b32.xlu0 %v1399, 16
    %v1609 = vpop.permute.xlu0 %1608
    %1610 = vrot.lane.b32.xlu0 %v1401, 16
    %v1611 = vpop.permute.xlu0 %1610
    %1612 = vrot.lane.b32.xlu0 %v1518, 16
    %v1613 = vpop.permute.xlu0 %1612
    %1614 = vrot.lane.b32.xlu0 %v1520, 16
    %v1615 = vpop.permute.xlu0 %1614
    %v1616 = vsel %vm556, %v1613, %v1615
    %v1617 = vsel %vm556, %v1611, %v1613
    %v1618 = vsel %vm556, %v1609, %v1611
    %v1619 = vsel %vm556, %v1615, %v1609
    %v1620 = vlaneseq
    %v1621 = vshrl.u32 %v1620, 7
    %v1622 = vsub.s32 1, %v1621
    %v1623 = vrot.slane %v1564, %v1622
    %v1624 = vlaneseq
    %v1625 = vshrl.u32 %v1624, 7
    %v1626 = vsub.s32 1, %v1625
    %v1627 = vrot.slane %v1565, %v1626
    %v1628 = vlaneseq
    %v1629 = vshrl.u32 %v1628, 7
    %v1630 = vsub.s32 1, %v1629
    %v1631 = vrot.slane %v1566, %v1630
    %v1632 = vlaneseq
    %v1633 = vshrl.u32 %v1632, 7
    %v1634 = vsub.s32 1, %v1633
    %v1635 = vrot.slane %v1567, %v1634
    %v1636 = vmul.f32 %v1619, %v1623
    %v1637 = vmul.f32 %v1618, %v1627
    %v1638 = vmul.f32 %v1617, %v1631
    %v1639 = vmul.f32 %v1616, %v1635
    %v1640 = vadd.f32 %v1604, %v1636
    %v1641 = vadd.f32 %v1605, %v1637
    %v1642 = vadd.f32 %v1606, %v1638
    %v1643 = vadd.f32 %v1607, %v1639
    %1644 = vrot.lane.b32.xlu0 %v1405, 15
    %v1645 = vpop.permute.xlu0 %1644
    %1646 = vrot.lane.b32.xlu0 %v1407, 15
    %v1647 = vpop.permute.xlu0 %1646
    %1648 = vrot.lane.b32.xlu0 %v1524, 15
    %v1649 = vpop.permute.xlu0 %1648
    %1650 = vrot.lane.b32.xlu0 %v1526, 15
    %v1651 = vpop.permute.xlu0 %1650
    %v1652 = vsel %vm593, %v1649, %v1651
    %v1653 = vsel %vm593, %v1647, %v1649
    %v1654 = vsel %vm593, %v1645, %v1647
    %v1655 = vsel %vm593, %v1651, %v1645
    %v1656 = vlaneseq
    %v1657 = vshrl.u32 %v1656, 7
    %v1658 = vsub.s32 2, %v1657
    %v1659 = vrot.slane %v1564, %v1658
    %v1660 = vlaneseq
    %v1661 = vshrl.u32 %v1660, 7
    %v1662 = vsub.s32 2, %v1661
    %v1663 = vrot.slane %v1565, %v1662
    %v1664 = vlaneseq
    %v1665 = vshrl.u32 %v1664, 7
    %v1666 = vsub.s32 2, %v1665
    %v1667 = vrot.slane %v1566, %v1666
    %v1668 = vlaneseq
    %v1669 = vshrl.u32 %v1668, 7
    %v1670 = vsub.s32 2, %v1669
    %v1671 = vrot.slane %v1567, %v1670
    %v1672 = vmul.f32 %v1655, %v1659
    %v1673 = vmul.f32 %v1654, %v1663
    %v1674 = vmul.f32 %v1653, %v1667
    %v1675 = vmul.f32 %v1652, %v1671
    %v1676 = vadd.f32 %v1640, %v1672
    %v1677 = vadd.f32 %v1641, %v1673
    %v1678 = vadd.f32 %v1642, %v1674
    %v1679 = vadd.f32 %v1643, %v1675
    %1680 = vrot.lane.b32.xlu0 %v1411, 1
    %v1681 = vpop.permute.xlu0 %1680
    %1682 = vrot.lane.b32.xlu0 %v1413, 1
    %v1683 = vpop.permute.xlu0 %1682
    %1684 = vrot.lane.b32.xlu0 %v1530, 1
    %v1685 = vpop.permute.xlu0 %1684
    %1686 = vrot.lane.b32.xlu0 %v1532, 1
    %v1687 = vpop.permute.xlu0 %1686
    %v1688 = vsel %vm630, %v1685, %v1687
    %v1689 = vsel %vm630, %v1683, %v1685
    %v1690 = vsel %vm630, %v1681, %v1683
    %v1691 = vsel %vm630, %v1687, %v1681
    %v1692 = vlaneseq
    %v1693 = vshrl.u32 %v1692, 7
    %v1694 = vsub.s32 3, %v1693
    %v1695 = vrot.slane %v1564, %v1694
    %v1696 = vlaneseq
    %v1697 = vshrl.u32 %v1696, 7
    %v1698 = vsub.s32 3, %v1697
    %v1699 = vrot.slane %v1565, %v1698
    %v1700 = vlaneseq
    %v1701 = vshrl.u32 %v1700, 7
    %v1702 = vsub.s32 3, %v1701
    %v1703 = vrot.slane %v1566, %v1702
    %v1704 = vlaneseq
    %v1705 = vshrl.u32 %v1704, 7
    %v1706 = vsub.s32 3, %v1705
    %v1707 = vrot.slane %v1567, %v1706
    %v1708 = vmul.f32 %v1691, %v1695
    %v1709 = vmul.f32 %v1690, %v1699
    %v1710 = vmul.f32 %v1689, %v1703
    %v1711 = vmul.f32 %v1688, %v1707
    %v1712 = vadd.f32 %v1676, %v1708
    %v1713 = vadd.f32 %v1677, %v1709
    %v1714 = vadd.f32 %v1678, %v1710
    %v1715 = vadd.f32 %v1679, %v1711
    %1716 = vrot.lane.b32.xlu0 %v1423, 127
    %v1717 = vpop.permute.xlu0 %1716
    %1718 = vrot.lane.b32.xlu0 %v1425, 127
    %v1719 = vpop.permute.xlu0 %1718
    %1720 = vrot.lane.b32.xlu0 %v1542, 127
    %v1721 = vpop.permute.xlu0 %1720
    %1722 = vrot.lane.b32.xlu0 %v1544, 127
    %v1723 = vpop.permute.xlu0 %1722
    %v1724 = vsel %vm667, %v1721, %v1723
    %v1725 = vsel %vm667, %v1719, %v1721
    %v1726 = vsel %vm667, %v1717, %v1719
    %v1727 = vsel %vm667, %v1723, %v1717
    %v1728 = vlaneseq
    %v1729 = vshrl.u32 %v1728, 7
    %v1730 = vsub.s32 5, %v1729
    %v1731 = vrot.slane %v1564, %v1730
    %v1732 = vlaneseq
    %v1733 = vshrl.u32 %v1732, 7
    %v1734 = vsub.s32 5, %v1733
    %v1735 = vrot.slane %v1565, %v1734
    %v1736 = vlaneseq
    %v1737 = vshrl.u32 %v1736, 7
    %v1738 = vsub.s32 5, %v1737
    %v1739 = vrot.slane %v1566, %v1738
    %v1740 = vlaneseq
    %v1741 = vshrl.u32 %v1740, 7
    %v1742 = vsub.s32 5, %v1741
    %v1743 = vrot.slane %v1567, %v1742
    %v1744 = vmul.f32 %v1726, %v1731
    %v1745 = vmul.f32 %v1725, %v1735
    %v1746 = vmul.f32 %v1724, %v1739
    %v1747 = vmul.f32 %v1727, %v1743
    %v1748 = vadd.f32 %v1712, %v1744
    %v1749 = vadd.f32 %v1713, %v1745
    %v1750 = vadd.f32 %v1714, %v1746
    %v1751 = vadd.f32 %v1715, %v1747
    %1752 = vrot.lane.b32.xlu0 %v1429, 113
    %v1753 = vpop.permute.xlu0 %1752
    %1754 = vrot.lane.b32.xlu0 %v1431, 113
    %v1755 = vpop.permute.xlu0 %1754
    %1756 = vrot.lane.b32.xlu0 %v1548, 113
    %v1757 = vpop.permute.xlu0 %1756
    %1758 = vrot.lane.b32.xlu0 %v1550, 113
    %v1759 = vpop.permute.xlu0 %1758
    %v1760 = vsel %vm704, %v1757, %v1759
    %v1761 = vsel %vm704, %v1755, %v1757
    %v1762 = vsel %vm704, %v1753, %v1755
    %v1763 = vsel %vm704, %v1759, %v1753
    %v1764 = vlaneseq
    %v1765 = vshrl.u32 %v1764, 7
    %v1766 = vsub.s32 6, %v1765
    %v1767 = vrot.slane %v1564, %v1766
    %v1768 = vlaneseq
    %v1769 = vshrl.u32 %v1768, 7
    %v1770 = vsub.s32 6, %v1769
    %v1771 = vrot.slane %v1565, %v1770
    %v1772 = vlaneseq
    %v1773 = vshrl.u32 %v1772, 7
    %v1774 = vsub.s32 6, %v1773
    %v1775 = vrot.slane %v1566, %v1774
    %v1776 = vlaneseq
    %v1777 = vshrl.u32 %v1776, 7
    %v1778 = vsub.s32 6, %v1777
    %v1779 = vrot.slane %v1567, %v1778
    %v1780 = vmul.f32 %v1762, %v1767
    %v1781 = vmul.f32 %v1761, %v1771
    %v1782 = vmul.f32 %v1760, %v1775
    %v1783 = vmul.f32 %v1763, %v1779
    %v1784 = vadd.f32 %v1748, %v1780
    %v1785 = vadd.f32 %v1749, %v1781
    %v1786 = vadd.f32 %v1750, %v1782
    %v1787 = vadd.f32 %v1751, %v1783
    %1788 = vrot.lane.b32.xlu0 %v1435, 112
    %v1789 = vpop.permute.xlu0 %1788
    %1790 = vrot.lane.b32.xlu0 %v1437, 112
    %v1791 = vpop.permute.xlu0 %1790
    %1792 = vrot.lane.b32.xlu0 %v1554, 112
    %v1793 = vpop.permute.xlu0 %1792
    %1794 = vrot.lane.b32.xlu0 %v1556, 112
    %v1795 = vpop.permute.xlu0 %1794
    %v1796 = vsel %vm741, %v1793, %v1795
    %v1797 = vsel %vm741, %v1791, %v1793
    %v1798 = vsel %vm741, %v1789, %v1791
    %v1799 = vsel %vm741, %v1795, %v1789
    %v1800 = vlaneseq
    %v1801 = vshrl.u32 %v1800, 7
    %v1802 = vsub.s32 7, %v1801
    %v1803 = vrot.slane %v1564, %v1802
    %v1804 = vlaneseq
    %v1805 = vshrl.u32 %v1804, 7
    %v1806 = vsub.s32 7, %v1805
    %v1807 = vrot.slane %v1565, %v1806
    %v1808 = vlaneseq
    %v1809 = vshrl.u32 %v1808, 7
    %v1810 = vsub.s32 7, %v1809
    %v1811 = vrot.slane %v1566, %v1810
    %v1812 = vlaneseq
    %v1813 = vshrl.u32 %v1812, 7
    %v1814 = vsub.s32 7, %v1813
    %v1815 = vrot.slane %v1567, %v1814
    %v1816 = vmul.f32 %v1798, %v1803
    %v1817 = vmul.f32 %v1797, %v1807
    %v1818 = vmul.f32 %v1796, %v1811
    %v1819 = vmul.f32 %v1799, %v1815
    %v1820 = vadd.f32 %v1784, %v1816
    %v1821 = vadd.f32 %v1785, %v1817
    %v1822 = vadd.f32 %v1786, %v1818
    %v1823 = vadd.f32 %v1787, %v1819
    %1824 = vrot.lane.b32.xlu0 %v1441, 111
    %v1825 = vpop.permute.xlu0 %1824
    %1826 = vrot.lane.b32.xlu0 %v1443, 111
    %v1827 = vpop.permute.xlu0 %1826
    %1828 = vrot.lane.b32.xlu0 %v1560, 111
    %v1829 = vpop.permute.xlu0 %1828
    %1830 = vrot.lane.b32.xlu0 %v1562, 111
    %v1831 = vpop.permute.xlu0 %1830
    %v1832 = vsel %vm778, %v1829, %v1831
    %v1833 = vsel %vm778, %v1827, %v1829
    %v1834 = vsel %vm778, %v1825, %v1827
    %v1835 = vsel %vm778, %v1831, %v1825
    %v1836 = vlaneseq
    %v1837 = vshrl.u32 %v1836, 7
    %v1838 = vsub.s32 0, %v1837
    %v1839 = vrot.slane %v1568, %v1838
    %v1840 = vlaneseq
    %v1841 = vshrl.u32 %v1840, 7
    %v1842 = vsub.s32 0, %v1841
    %v1843 = vrot.slane %v1569, %v1842
    %v1844 = vlaneseq
    %v1845 = vshrl.u32 %v1844, 7
    %v1846 = vsub.s32 0, %v1845
    %v1847 = vrot.slane %v1570, %v1846
    %v1848 = vlaneseq
    %v1849 = vshrl.u32 %v1848, 7
    %v1850 = vsub.s32 0, %v1849
    %v1851 = vrot.slane %v1571, %v1850
    %v1852 = vmul.f32 %v1834, %v1839
    %v1853 = vmul.f32 %v1833, %v1843
    %v1854 = vmul.f32 %v1832, %v1847
    %v1855 = vmul.f32 %v1835, %v1851
    %v1856 = vadd.f32 %v1820, %v1852
    %v1857 = vadd.f32 %v1821, %v1853
    %v1858 = vadd.f32 %v1822, %v1854
    %v1859 = vadd.f32 %v1823, %v1855
    %v1860 = vld [vmem:[%s5] sm:$0xff]
    %v1861 = vld [vmem:[%s5 + $0x8] sm:$0xff]
    %v1862 = vld [vmem:[%s5 + $0x10] sm:$0xff]
    %v1863 = vld [vmem:[%s5 + $0x18] sm:$0xff]
    %v1864 = vmul.f32 %v1096, %v1860
    %v1865 = vmul.f32 %v1096, %v1861
    %v1866 = vmul.f32 %v1096, %v1862
    %v1867 = vmul.f32 %v1096, %v1863
    %v1868 = vadd.f32 %v1856, %v1864
    %v1869 = vadd.f32 %v1857, %v1865
    %v1870 = vadd.f32 %v1858, %v1866
    %v1871 = vadd.f32 %v1859, %v1867
    %v1872 = vld [vmem:[%s6] sm:$0xff]
    %1874 = vset.pattern.permute.xlu0 0
    %1875 = vperm.xlu0 %1874, %v1872
    %v1876 = vpop.permute.xlu0 %1875
    %v1878 = vadd.f32 %v1868, %v1876
    %v1879 = vadd.f32 %v1869, %v1876
    %v1880 = vadd.f32 %v1870, %v1876
    %v1881 = vadd.f32 %v1871, %v1876
    %v1882 = vmax.f32 %v1878, 0.0
    %v1883 = vmax.f32 %v1879, 0.0
    %v1884 = vmax.f32 %v1880, 0.0
    %v1885 = vmax.f32 %v1881, 0.0
    %v1886 = vld [vmem:[%s7] sm:$0xf]
    %v1887 = vld [vmem:[%s8] sm:$0xf]
    %v1888 = vmul.f32 %v1096, %v1887
    %1890 = vset.pattern.permute.xlu0 0
    %1891 = vperm.xlu0 %1890, %v1888
    %v1892 = vpop.permute.xlu0 %1891
    %v1895 = vsel %vm235, %v1886, 0
    %1897 = vmatprep.subr.mxu0 %v1883
    %1898 = vmatpush1.msra.mxu0 %v1882
    %1899 = vmatprep.subr.mxu0 0.0
    %1900 = vmatpush1.msra.mxu0 0.0
    %1901 = vmatprep.subr.mxu0 0.0
    %1902 = vmatpush1.msra.mxu0 0.0
    %1903 = vmatprep.subr.mxu0 0.0
    %1904 = vmatpush1.msra.mxu0 0.0
    %1905 = vmatprep.subr.mxu0 0.0
    %1906 = vmatpush1.msra.mxu0 0.0
    %1907 = vmatprep.subr.mxu0 0.0
    %1908 = vmatpush1.msra.mxu0 0.0
    %1909 = vmatprep.subr.mxu0 0.0
    %1910 = vmatpush1.msra.mxu0 0.0
    %1911 = vmatprep.subr.mxu0 0.0
    %1912 = vmatpush1.msra.mxu0 0.0
    %1913 = vmatprep.subr.mxu0 0.0
    %1914 = vmatpush1.msra.mxu0 0.0
    %1915 = vmatprep.subr.mxu0 0.0
    %1916 = vmatpush1.msra.mxu0 0.0
    %1917 = vmatprep.subr.mxu0 0.0
    %1918 = vmatpush1.msra.mxu0 0.0
    %1919 = vmatprep.subr.mxu0 0.0
    %1920 = vmatpush1.msra.mxu0 0.0
    %1921 = vmatprep.subr.mxu0 0.0
    %1922 = vmatpush1.msra.mxu0 0.0
    %1923 = vmatprep.subr.mxu0 0.0
    %1924 = vmatpush1.msra.mxu0 0.0
    %1925 = vmatprep.subr.mxu0 0.0
    %1926 = vmatpush1.msra.mxu0 0.0
    %1927 = vmatprep.subr.mxu0 0.0
    %1928 = vmatpush1.msra.mxu0 0.0
    %1929 = vmatprep.subr.mxu0 0.0
    %1930 = vmatpush1.msra.mxu0 0.0
    %1931 = vmatprep.subr.mxu0 0.0
    %1932 = vmatpush1.msra.mxu0 0.0
    %1933 = vmatprep.subr.mxu0 0.0
    %1934 = vmatpush1.msra.mxu0 0.0
    %1935 = vmatprep.subr.mxu0 0.0
    %1936 = vmatpush1.msra.mxu0 0.0
    %1937 = vmatprep.subr.mxu0 0.0
    %1938 = vmatpush1.msra.mxu0 0.0
    %1939 = vmatprep.subr.mxu0 0.0
    %1940 = vmatpush1.msra.mxu0 0.0
    %1941 = vmatprep.subr.mxu0 0.0
    %1942 = vmatpush1.msra.mxu0 0.0
    %1943 = vmatprep.subr.mxu0 0.0
    %1944 = vmatpush1.msra.mxu0 0.0
    %1945 = vmatprep.subr.mxu0 0.0
    %1946 = vmatpush1.msra.mxu0 0.0
    %1947 = vmatprep.subr.mxu0 0.0
    %1948 = vmatpush1.msra.mxu0 0.0
    %1949 = vmatprep.subr.mxu0 0.0
    %1950 = vmatpush1.msra.mxu0 0.0
    %1951 = vmatprep.subr.mxu0 0.0
    %1952 = vmatpush1.msra.mxu0 0.0
    %1953 = vmatprep.subr.mxu0 0.0
    %1954 = vmatpush1.msra.mxu0 0.0
    %1955 = vmatprep.subr.mxu0 0.0
    %1956 = vmatpush1.msra.mxu0 0.0
    %1957 = vmatprep.subr.mxu0 0.0
    %1958 = vmatpush1.msra.mxu0 0.0
    %1959 = vmatprep.subr.mxu0 0.0
    %1960 = vmatpush1.msra.mxu0 0.0
    %1961 = vmatprep.mubr.f32.mxu0 0.0
    %1962 = vmatmul.mubr.f32.gmra.mrb[0].mxu0 %v1895
    %v1963 = vpop.f32.mrb[0].mxu0
    %v1964 = vadd.f32 %v1892, %v1963
    %v1965 = vpop.f32.mrb[0].mxu0
    %v1966 = vadd.f32 %v1892, %v1965
    %1967 = vdwg.mxu0
    %1968 = vmatprep.subr.mxu0 %v1885
    %1969 = vmatpush1.msra.mxu0 %v1884
    %1970 = vmatprep.subr.mxu0 0.0
    %1971 = vmatpush1.msra.mxu0 0.0
    %1972 = vmatprep.subr.mxu0 0.0
    %1973 = vmatpush1.msra.mxu0 0.0
    %1974 = vmatprep.subr.mxu0 0.0
    %1975 = vmatpush1.msra.mxu0 0.0
    %1976 = vmatprep.subr.mxu0 0.0
    %1977 = vmatpush1.msra.mxu0 0.0
    %1978 = vmatprep.subr.mxu0 0.0
    %1979 = vmatpush1.msra.mxu0 0.0
    %1980 = vmatprep.subr.mxu0 0.0
    %1981 = vmatpush1.msra.mxu0 0.0
    %1982 = vmatprep.subr.mxu0 0.0
    %1983 = vmatpush1.msra.mxu0 0.0
    %1984 = vmatprep.subr.mxu0 0.0
    %1985 = vmatpush1.msra.mxu0 0.0
    %1986 = vmatprep.subr.mxu0 0.0
    %1987 = vmatpush1.msra.mxu0 0.0
    %1988 = vmatprep.subr.mxu0 0.0
    %1989 = vmatpush1.msra.mxu0 0.0
    %1990 = vmatprep.subr.mxu0 0.0
    %1991 = vmatpush1.msra.mxu0 0.0
    %1992 = vmatprep.subr.mxu0 0.0
    %1993 = vmatpush1.msra.mxu0 0.0
    %1994 = vmatprep.subr.mxu0 0.0
    %1995 = vmatpush1.msra.mxu0 0.0
    %1996 = vmatprep.subr.mxu0 0.0
    %1997 = vmatpush1.msra.mxu0 0.0
    %1998 = vmatprep.subr.mxu0 0.0
    %1999 = vmatpush1.msra.mxu0 0.0
    %2000 = vmatprep.subr.mxu0 0.0
    %2001 = vmatpush1.msra.mxu0 0.0
    %2002 = vmatprep.subr.mxu0 0.0
    %2003 = vmatpush1.msra.mxu0 0.0
    %2004 = vmatprep.subr.mxu0 0.0
    %2005 = vmatpush1.msra.mxu0 0.0
    %2006 = vmatprep.subr.mxu0 0.0
    %2007 = vmatpush1.msra.mxu0 0.0
    %2008 = vmatprep.subr.mxu0 0.0
    %2009 = vmatpush1.msra.mxu0 0.0
    %2010 = vmatprep.subr.mxu0 0.0
    %2011 = vmatpush1.msra.mxu0 0.0
    %2012 = vmatprep.subr.mxu0 0.0
    %2013 = vmatpush1.msra.mxu0 0.0
    %2014 = vmatprep.subr.mxu0 0.0
    %2015 = vmatpush1.msra.mxu0 0.0
    %2016 = vmatprep.subr.mxu0 0.0
    %2017 = vmatpush1.msra.mxu0 0.0
    %2018 = vmatprep.subr.mxu0 0.0
    %2019 = vmatpush1.msra.mxu0 0.0
    %2020 = vmatprep.subr.mxu0 0.0
    %2021 = vmatpush1.msra.mxu0 0.0
    %2022 = vmatprep.subr.mxu0 0.0
    %2023 = vmatpush1.msra.mxu0 0.0
    %2024 = vmatprep.subr.mxu0 0.0
    %2025 = vmatpush1.msra.mxu0 0.0
    %2026 = vmatprep.subr.mxu0 0.0
    %2027 = vmatpush1.msra.mxu0 0.0
    %2028 = vmatprep.subr.mxu0 0.0
    %2029 = vmatpush1.msra.mxu0 0.0
    %2030 = vmatprep.subr.mxu0 0.0
    %2031 = vmatpush1.msra.mxu0 0.0
    %2032 = vmatprep.mubr.f32.mxu0 0.0
    %2033 = vmatmul.mubr.f32.gmra.mrb[0].mxu0 %v1895
    %v2034 = vpop.f32.mrb[0].mxu0
    %v2035 = vadd.f32 %v1892, %v2034
    %v2036 = vpop.f32.mrb[0].mxu0
    %v2037 = vadd.f32 %v1892, %v2036
    %2038 = vdwg.mxu0
    %v2039 = vld [vmem:[%s9] sm:$0xf]
    %2041 = vset.pattern.permute.xlu0 0
    %2042 = vperm.xlu0 %2041, %v2039
    %v2043 = vpop.permute.xlu0 %2042
    %v2045 = vadd.f32 %v1964, %v2043
    %v2046 = vadd.f32 %v1966, %v2043
    %v2047 = vadd.f32 %v2035, %v2043
    %v2048 = vadd.f32 %v2037, %v2043
    %v2049 = vsub.f32 %v2045, %v992
    %v2050 = vsub.f32 %v2046, %v993
    %v2051 = vsub.f32 %v2047, %v994
    %v2052 = vsub.f32 %v2048, %v995
    %v2053 = vmul.f32 %v2049, %v1012
    %v2054 = vmul.f32 %v2050, %v1056
    %v2055 = vmul.f32 %v2051, %v1014
    %v2056 = vmul.f32 %v2052, %v1059
    %v2057 = vmul.f32 %v2053, %v2053
    %v2058 = vmul.f32 %v2054, %v2054
    %v2059 = vmul.f32 %v2055, %v2055
    %v2060 = vmul.f32 %v2056, %v2056
    %v2061 = vsel %vm61, %v2057, 0.0
    %v2062 = vsel %vm61, %v2058, 0.0
    %v2063 = vadd.f32 %v2061, %v2062
    %v2064 = vsel %vm61, %v2059, 0.0
    %v2065 = vadd.f32 %v2063, %v2064
    %v2066 = vsel %vm61, %v2060, 0.0
    %v2067 = vadd.f32 %v2065, %v2066
    %2068 = vadd.xlane.f32.xlu0 %v2067
    %v2069 = vpop.xlane.xlu0 %2068
    %v2070 = vsel %vm61, %v2069, 0.0
    %v2071 = vrot.slane %v2070, 4
    %v2072 = vadd.f32 %v2070, %v2071
    %v2073 = vrot.slane %v2072, 2
    %v2074 = vadd.f32 %v2072, %v2073
    %v2075 = vrot.slane %v2074, 1
    %v2076 = vadd.f32 %v2074, %v2075
    %v2077 = vmul.f32 %v2076, %v1040
    %v2078 = vrsqrt.pop %v2077
    %v2079 = vmul.f32 %v2077, %v2078
    %vm2080 = vcmp.eq.f32.partialorder %v2077, inf
    %v2081 = vsel %vm2080, %v2077, %v2079
    %vm2082 = vcmp.eq.f32.partialorder %v2077, 0.0
    %v2083 = vand.u32 %v2077, 2147483648
    %v2084 = vsel %vm2082, %v2083, %v2081
    %v2085 = vrcp.pop %v1096
    %v2086 = vmul.f32 %v2084, %v2085
    %v2087 = vmax.f32 %v1088, %v2086
    %vm2088 = vcmp.le.f32.partialorder %v2087, 1e-15
    %v2089 = vmul.f32 %v1096, 0.001
    %v2090 = vmax.f32 %v2089, 1e-06
    %v2091 = vmax.f32 %v2087, 1e-15
    %v2092 = vrcp.pop %v2091
    %v2093 = vmul.f32 0.01, %v2092
    %v2094 = vlog2.pop %v2093
    %v2095 = vmul.f32 %v2094, 0.6931472
    %v2096 = vmul.f32 %v2095, 0.16666667
    %v2097 = vmul.f32 %v2096, 1.442695
    %v2098 = vpow.pop %v2097
    %v2099 = vsel %vm2088, %v2090, %v2098
    %v2100 = vmul.f32 %v1096, 100.0
    %v2101 = vmin.f32 %v2100, %v2099
    %v2102 = vmin.f32 %v2101, 1.0
    %vm2103 = vcmask 0
    %2104 = vst.msk [vmem:[#allocation4] sm:$0x1] %vm2103, %v2102
    %v2105 = vld [vmem:[#allocation4] sm:$0x1]
    %s2106 = vtos %v2105
    // While loop
    $region46: #{neural_ode_forward.1} parent=1 // loop_pre_header
      _
    $region47: #{neural_ode_forward.1} parent=1 // loop_header
      %s2108 = sphi 0.0, %s7116
      %s2109 = sphi %s2106, %s7117
      %s2110 = sphi 0.0, %s7118
      %s2111 = ssub.f32 1.0, %s2108
      %p2112 = scmp.gt.f32.partialorder %s2111, 1e-07
      %p2113 = scmp.lt.f32.partialorder %s2110, 1000.0
      %p2114 = pnand %p2112, %p2113
      %p2115 = pneg %p2114
    $region48: #{neural_ode_forward.1} parent=1 // loop_header_branch
      %2117 = sbr.rel (%p2114) target = $region52
    $region49: #{neural_ode_forward.1} parent=1 // loop_body
      %v2118 = vld [vmem:[%s11] sm:$0xff]
      %v2119 = vld [vmem:[%s11 + $0x8] sm:$0xff]
      %s2120 = ssub.f32 1.0, %s2108
      %s2121 = smin.f32 %s2109, %s2120
      %v2122 = vld [vmem:[#allocation2] sm:$0xff]
      %v2123 = vld [vmem:[#allocation2 + $0x8] sm:$0xff]
      %s2124 = smul.f32 %s2121, 0.2
      %s2125 = sadd.f32 %s2108, %s2124
      %v2126 = vmul.f32 %v2122, 0.2
      %v2127 = vmul.f32 %v2123, 0.2
      %v2128 = vstv %s2121
      %v2129 = vmul.f32 %v2128, %v2126
      %v2130 = vmul.f32 %v2128, %v2127
      %v2131 = vadd.f32 %v2118, %v2129
      %v2132 = vadd.f32 %v2119, %v2130
      %v2133 = vld [vmem:[%s1] sm:$0xff]
      %v2134 = vld [vmem:[%s2] sm:$0xff]
      %v2135 = vstv %s2125
      %v2136 = vmul.f32 %v2135, %v2134
      %2138 = vset.pattern.permute.xlu0 0
      %2139 = vperm.xlu0 %2138, %v2136
      %v2140 = vpop.permute.xlu0 %2139
      %v2144 = vcombine.high %v2131, %v2131
      %v2145 = vcombine.high %v2132, %v2132
      %v2147 = vsel %vm57, %v2133, 0
      %v2149 = vsel %vm61, %v2131, 0
      %v2151 = vsel %vm61, %v2144, 0
      %v2153 = vsel %vm61, %v2132, 0
      %v2155 = vsel %vm61, %v2145, 0
      %2157 = vmatprep.subr.mxu0 %v2151
      %2158 = vmatpush1.msra.mxu0 %v2149
      %2159 = vmatprep.subr.mxu0 0.0
      %2160 = vmatpush1.msra.mxu0 0.0
      %2161 = vmatprep.subr.mxu0 0.0
      %2162 = vmatpush1.msra.mxu0 0.0
      %2163 = vmatprep.subr.mxu0 0.0
      %2164 = vmatpush1.msra.mxu0 0.0
      %2165 = vmatprep.subr.mxu0 0.0
      %2166 = vmatpush1.msra.mxu0 0.0
      %2167 = vmatprep.subr.mxu0 0.0
      %2168 = vmatpush1.msra.mxu0 0.0
      %2169 = vmatprep.subr.mxu0 0.0
      %2170 = vmatpush1.msra.mxu0 0.0
      %2171 = vmatprep.subr.mxu0 0.0
      %2172 = vmatpush1.msra.mxu0 0.0
      %2173 = vmatprep.subr.mxu0 0.0
      %2174 = vmatpush1.msra.mxu0 0.0
      %2175 = vmatprep.subr.mxu0 0.0
      %2176 = vmatpush1.msra.mxu0 0.0
      %2177 = vmatprep.subr.mxu0 0.0
      %2178 = vmatpush1.msra.mxu0 0.0
      %2179 = vmatprep.subr.mxu0 0.0
      %2180 = vmatpush1.msra.mxu0 0.0
      %2181 = vmatprep.subr.mxu0 0.0
      %2182 = vmatpush1.msra.mxu0 0.0
      %2183 = vmatprep.subr.mxu0 0.0
      %2184 = vmatpush1.msra.mxu0 0.0
      %2185 = vmatprep.subr.mxu0 0.0
      %2186 = vmatpush1.msra.mxu0 0.0
      %2187 = vmatprep.subr.mxu0 0.0
      %2188 = vmatpush1.msra.mxu0 0.0
      %2189 = vmatprep.subr.mxu0 0.0
      %2190 = vmatpush1.msra.mxu0 0.0
      %2191 = vmatprep.subr.mxu0 0.0
      %2192 = vmatpush1.msra.mxu0 0.0
      %2193 = vmatprep.subr.mxu0 0.0
      %2194 = vmatpush1.msra.mxu0 0.0
      %2195 = vmatprep.subr.mxu0 0.0
      %2196 = vmatpush1.msra.mxu0 0.0
      %2197 = vmatprep.subr.mxu0 0.0
      %2198 = vmatpush1.msra.mxu0 0.0
      %2199 = vmatprep.subr.mxu0 0.0
      %2200 = vmatpush1.msra.mxu0 0.0
      %2201 = vmatprep.subr.mxu0 0.0
      %2202 = vmatpush1.msra.mxu0 0.0
      %2203 = vmatprep.subr.mxu0 0.0
      %2204 = vmatpush1.msra.mxu0 0.0
      %2205 = vmatprep.subr.mxu0 0.0
      %2206 = vmatpush1.msra.mxu0 0.0
      %2207 = vmatprep.subr.mxu0 0.0
      %2208 = vmatpush1.msra.mxu0 0.0
      %2209 = vmatprep.subr.mxu0 0.0
      %2210 = vmatpush1.msra.mxu0 0.0
      %2211 = vmatprep.subr.mxu0 0.0
      %2212 = vmatpush1.msra.mxu0 0.0
      %2213 = vmatprep.subr.mxu0 0.0
      %2214 = vmatpush1.msra.mxu0 0.0
      %2215 = vmatprep.subr.mxu0 0.0
      %2216 = vmatpush1.msra.mxu0 0.0
      %2217 = vmatprep.subr.mxu0 0.0
      %2218 = vmatpush1.msra.mxu0 0.0
      %2219 = vmatprep.subr.mxu0 0.0
      %2220 = vmatpush1.msra.mxu0 0.0
      %2221 = vmatprep.mubr.f32.mxu0 0.0
      %2222 = vmatmul.mubr.f32.gmra.mrb[0].mxu0 %v2147
      %v2223 = vpop.f32.mrb[0].mxu0
      %v2224 = vadd.f32 %v2140, %v2223
      %v2225 = vpop.f32.mrb[0].mxu0
      %v2226 = vadd.f32 %v2140, %v2225
      %2227 = vdwg.mxu0
      %2228 = vmatprep.subr.mxu0 %v2155
      %2229 = vmatpush1.msra.mxu0 %v2153
      %2230 = vmatprep.subr.mxu0 0.0
      %2231 = vmatpush1.msra.mxu0 0.0
      %2232 = vmatprep.subr.mxu0 0.0
      %2233 = vmatpush1.msra.mxu0 0.0
      %2234 = vmatprep.subr.mxu0 0.0
      %2235 = vmatpush1.msra.mxu0 0.0
      %2236 = vmatprep.subr.mxu0 0.0
      %2237 = vmatpush1.msra.mxu0 0.0
      %2238 = vmatprep.subr.mxu0 0.0
      %2239 = vmatpush1.msra.mxu0 0.0
      %2240 = vmatprep.subr.mxu0 0.0
      %2241 = vmatpush1.msra.mxu0 0.0
      %2242 = vmatprep.subr.mxu0 0.0
      %2243 = vmatpush1.msra.mxu0 0.0
      %2244 = vmatprep.subr.mxu0 0.0
      %2245 = vmatpush1.msra.mxu0 0.0
      %2246 = vmatprep.subr.mxu0 0.0
      %2247 = vmatpush1.msra.mxu0 0.0
      %2248 = vmatprep.subr.mxu0 0.0
      %2249 = vmatpush1.msra.mxu0 0.0
      %2250 = vmatprep.subr.mxu0 0.0
      %2251 = vmatpush1.msra.mxu0 0.0
      %2252 = vmatprep.subr.mxu0 0.0
      %2253 = vmatpush1.msra.mxu0 0.0
      %2254 = vmatprep.subr.mxu0 0.0
      %2255 = vmatpush1.msra.mxu0 0.0
      %2256 = vmatprep.subr.mxu0 0.0
      %2257 = vmatpush1.msra.mxu0 0.0
      %2258 = vmatprep.subr.mxu0 0.0
      %2259 = vmatpush1.msra.mxu0 0.0
      %2260 = vmatprep.subr.mxu0 0.0
      %2261 = vmatpush1.msra.mxu0 0.0
      %2262 = vmatprep.subr.mxu0 0.0
      %2263 = vmatpush1.msra.mxu0 0.0
      %2264 = vmatprep.subr.mxu0 0.0
      %2265 = vmatpush1.msra.mxu0 0.0
      %2266 = vmatprep.subr.mxu0 0.0
      %2267 = vmatpush1.msra.mxu0 0.0
      %2268 = vmatprep.subr.mxu0 0.0
      %2269 = vmatpush1.msra.mxu0 0.0
      %2270 = vmatprep.subr.mxu0 0.0
      %2271 = vmatpush1.msra.mxu0 0.0
      %2272 = vmatprep.subr.mxu0 0.0
      %2273 = vmatpush1.msra.mxu0 0.0
      %2274 = vmatprep.subr.mxu0 0.0
      %2275 = vmatpush1.msra.mxu0 0.0
      %2276 = vmatprep.subr.mxu0 0.0
      %2277 = vmatpush1.msra.mxu0 0.0
      %2278 = vmatprep.subr.mxu0 0.0
      %2279 = vmatpush1.msra.mxu0 0.0
      %2280 = vmatprep.subr.mxu0 0.0
      %2281 = vmatpush1.msra.mxu0 0.0
      %2282 = vmatprep.subr.mxu0 0.0
      %2283 = vmatpush1.msra.mxu0 0.0
      %2284 = vmatprep.subr.mxu0 0.0
      %2285 = vmatpush1.msra.mxu0 0.0
      %2286 = vmatprep.subr.mxu0 0.0
      %2287 = vmatpush1.msra.mxu0 0.0
      %2288 = vmatprep.subr.mxu0 0.0
      %2289 = vmatpush1.msra.mxu0 0.0
      %2290 = vmatprep.subr.mxu0 0.0
      %2291 = vmatpush1.msra.mxu0 0.0
      %2292 = vmatprep.mubr.f32.mxu0 0.0
      %2293 = vmatmul.mubr.f32.gmra.mrb[0].mxu0 %v2147
      %v2294 = vpop.f32.mrb[0].mxu0
      %v2295 = vadd.f32 %v2140, %v2294
      %v2296 = vpop.f32.mrb[0].mxu0
      %v2297 = vadd.f32 %v2140, %v2296
      %2298 = vdwg.mxu0
      %v2299 = vld [vmem:[%s3] sm:$0xff]
      %2301 = vset.pattern.permute.xlu0 0
      %2302 = vperm.xlu0 %2301, %v2299
      %v2303 = vpop.permute.xlu0 %2302
      %v2305 = vadd.f32 %v2224, %v2303
      %v2306 = vadd.f32 %v2226, %v2303
      %v2307 = vadd.f32 %v2295, %v2303
      %v2308 = vadd.f32 %v2297, %v2303
      %v2309 = vmax.f32 %v2305, 0.0
      %v2310 = vmax.f32 %v2306, 0.0
      %v2311 = vmax.f32 %v2307, 0.0
      %v2312 = vmax.f32 %v2308, 0.0
      %v2313 = vld [vmem:[%s4] sm:$0xff]
      %v2314 = vld [vmem:[%s4 + $0x8] sm:$0xff]
      %v2315 = vld [vmem:[%s4 + $0x10] sm:$0xff]
      %v2316 = vld [vmem:[%s4 + $0x18] sm:$0xff]
      %v2317 = vld [vmem:[%s4 + $0x20] sm:$0xff]
      %v2318 = vld [vmem:[%s4 + $0x28] sm:$0xff]
      %v2319 = vld [vmem:[%s4 + $0x30] sm:$0xff]
      %v2320 = vld [vmem:[%s4 + $0x38] sm:$0xff]
      %v2321 = vld [vmem:[%s4 + $0x40] sm:$0xff]
      %v2323 = vsel %vm235, %v2313, 0
      %v2326 = vsel %vm235, %v2314, 0
      %v2329 = vsel %vm235, %v2315, 0
      %v2332 = vsel %vm235, %v2316, 0
      %v2335 = vsel %vm235, %v2317, 0
      %v2338 = vsel %vm235, %v2318, 0
      %v2341 = vsel %vm235, %v2319, 0
      %v2344 = vsel %vm235, %v2320, 0
      %v2347 = vsel %vm235, %v2321, 0
      %2349 = vmatprep.subr.mxu0 %v2310
      %2350 = vmatpush1.msra.mxu0 %v2309
      %2351 = vmatprep.subr.mxu0 0.0
      %2352 = vmatpush1.msra.mxu0 0.0
      %2353 = vmatprep.subr.mxu0 0.0
      %2354 = vmatpush1.msra.mxu0 0.0
      %2355 = vmatprep.subr.mxu0 0.0
      %2356 = vmatpush1.msra.mxu0 0.0
      %2357 = vmatprep.subr.mxu0 0.0
      %2358 = vmatpush1.msra.mxu0 0.0
      %2359 = vmatprep.subr.mxu0 0.0
      %2360 = vmatpush1.msra.mxu0 0.0
      %2361 = vmatprep.subr.mxu0 0.0
      %2362 = vmatpush1.msra.mxu0 0.0
      %2363 = vmatprep.subr.mxu0 0.0
      %2364 = vmatpush1.msra.mxu0 0.0
      %2365 = vmatprep.subr.mxu0 0.0
      %2366 = vmatpush1.msra.mxu0 0.0
      %2367 = vmatprep.subr.mxu0 0.0
      %2368 = vmatpush1.msra.mxu0 0.0
      %2369 = vmatprep.subr.mxu0 0.0
      %2370 = vmatpush1.msra.mxu0 0.0
      %2371 = vmatprep.subr.mxu0 0.0
      %2372 = vmatpush1.msra.mxu0 0.0
      %2373 = vmatprep.subr.mxu0 0.0
      %2374 = vmatpush1.msra.mxu0 0.0
      %2375 = vmatprep.subr.mxu0 0.0
      %2376 = vmatpush1.msra.mxu0 0.0
      %2377 = vmatprep.subr.mxu0 0.0
      %2378 = vmatpush1.msra.mxu0 0.0
      %2379 = vmatprep.subr.mxu0 0.0
      %2380 = vmatpush1.msra.mxu0 0.0
      %2381 = vmatprep.subr.mxu0 0.0
      %2382 = vmatpush1.msra.mxu0 0.0
      %2383 = vmatprep.subr.mxu0 0.0
      %2384 = vmatpush1.msra.mxu0 0.0
      %2385 = vmatprep.subr.mxu0 0.0
      %2386 = vmatpush1.msra.mxu0 0.0
      %2387 = vmatprep.subr.mxu0 0.0
      %2388 = vmatpush1.msra.mxu0 0.0
      %2389 = vmatprep.subr.mxu0 0.0
      %2390 = vmatpush1.msra.mxu0 0.0
      %2391 = vmatprep.subr.mxu0 0.0
      %2392 = vmatpush1.msra.mxu0 0.0
      %2393 = vmatprep.subr.mxu0 0.0
      %2394 = vmatpush1.msra.mxu0 0.0
      %2395 = vmatprep.subr.mxu0 0.0
      %2396 = vmatpush1.msra.mxu0 0.0
      %2397 = vmatprep.subr.mxu0 0.0
      %2398 = vmatpush1.msra.mxu0 0.0
      %2399 = vmatprep.subr.mxu0 0.0
      %2400 = vmatpush1.msra.mxu0 0.0
      %2401 = vmatprep.subr.mxu0 0.0
      %2402 = vmatpush1.msra.mxu0 0.0
      %2403 = vmatprep.subr.mxu0 0.0
      %2404 = vmatpush1.msra.mxu0 0.0
      %2405 = vmatprep.subr.mxu0 0.0
      %2406 = vmatpush1.msra.mxu0 0.0
      %2407 = vmatprep.subr.mxu0 0.0
      %2408 = vmatpush1.msra.mxu0 0.0
      %2409 = vmatprep.subr.mxu0 0.0
      %2410 = vmatpush1.msra.mxu0 0.0
      %2411 = vmatprep.subr.mxu0 0.0
      %2412 = vmatpush1.msra.mxu0 0.0
      %2413 = vmatprep.mubr.f32.mxu0 0.0
      %2414 = vmatmul.mubr.f32.gmra.mrb[0].mxu0 %v2323
      %v2415 = vpop.f32.mrb[0].mxu0
      %v2416 = vadd.f32 0.0, %v2415
      %v2417 = vpop.f32.mrb[0].mxu0
      %v2418 = vadd.f32 0.0, %v2417
      %2419 = vmatprep.mubr.f32.mxu0 0.0
      %2420 = vmatmul.mubr.f32.gmra.mrb[0].mxu0 %v2326
      %v2421 = vpop.f32.mrb[0].mxu0
      %v2422 = vadd.f32 0.0, %v2421
      %v2423 = vpop.f32.mrb[0].mxu0
      %v2424 = vadd.f32 0.0, %v2423
      %2425 = vmatprep.mubr.f32.mxu0 0.0
      %2426 = vmatmul.mubr.f32.gmra.mrb[0].mxu0 %v2329
      %v2427 = vpop.f32.mrb[0].mxu0
      %v2428 = vadd.f32 0.0, %v2427
      %v2429 = vpop.f32.mrb[0].mxu0
      %v2430 = vadd.f32 0.0, %v2429
      %2431 = vmatprep.mubr.f32.mxu0 0.0
      %2432 = vmatmul.mubr.f32.gmra.mrb[0].mxu0 %v2332
      %v2433 = vpop.f32.mrb[0].mxu0
      %v2434 = vadd.f32 0.0, %v2433
      %v2435 = vpop.f32.mrb[0].mxu0
      %v2436 = vadd.f32 0.0, %v2435
      %2437 = vmatprep.mubr.f32.mxu0 0.0
      %2438 = vmatmul.mubr.f32.gmra.mrb[0].mxu0 %v2335
      %v2439 = vpop.f32.mrb[0].mxu0
      %v2440 = vadd.f32 0.0, %v2439
      %v2441 = vpop.f32.mrb[0].mxu0
      %v2442 = vadd.f32 0.0, %v2441
      %2443 = vmatprep.mubr.f32.mxu0 0.0
      %2444 = vmatmul.mubr.f32.gmra.mrb[0].mxu0 %v2338
      %v2445 = vpop.f32.mrb[0].mxu0
      %v2446 = vadd.f32 0.0, %v2445
      %v2447 = vpop.f32.mrb[0].mxu0
      %v2448 = vadd.f32 0.0, %v2447
      %2449 = vmatprep.mubr.f32.mxu0 0.0
      %2450 = vmatmul.mubr.f32.gmra.mrb[0].mxu0 %v2341
      %v2451 = vpop.f32.mrb[0].mxu0
      %v2452 = vadd.f32 0.0, %v2451
      %v2453 = vpop.f32.mrb[0].mxu0
      %v2454 = vadd.f32 0.0, %v2453
      %2455 = vmatprep.mubr.f32.mxu0 0.0
      %2456 = vmatmul.mubr.f32.gmra.mrb[0].mxu0 %v2344
      %v2457 = vpop.f32.mrb[0].mxu0
      %v2458 = vadd.f32 0.0, %v2457
      %v2459 = vpop.f32.mrb[0].mxu0
      %v2460 = vadd.f32 0.0, %v2459
      %2461 = vmatprep.mubr.f32.mxu0 0.0
      %2462 = vmatmul.mubr.f32.gmra.mrb[0].mxu0 %v2347
      %v2463 = vpop.f32.mrb[0].mxu0
      %v2464 = vadd.f32 0.0, %v2463
      %v2465 = vpop.f32.mrb[0].mxu0
      %v2466 = vadd.f32 0.0, %v2465
      %2467 = vdwg.mxu0
      %2468 = vmatprep.subr.mxu0 %v2312
      %2469 = vmatpush1.msra.mxu0 %v2311
      %2470 = vmatprep.subr.mxu0 0.0
      %2471 = vmatpush1.msra.mxu0 0.0
      %2472 = vmatprep.subr.mxu0 0.0
      %2473 = vmatpush1.msra.mxu0 0.0
      %2474 = vmatprep.subr.mxu0 0.0
      %2475 = vmatpush1.msra.mxu0 0.0
      %2476 = vmatprep.subr.mxu0 0.0
      %2477 = vmatpush1.msra.mxu0 0.0
      %2478 = vmatprep.subr.mxu0 0.0
      %2479 = vmatpush1.msra.mxu0 0.0
      %2480 = vmatprep.subr.mxu0 0.0
      %2481 = vmatpush1.msra.mxu0 0.0
      %2482 = vmatprep.subr.mxu0 0.0
      %2483 = vmatpush1.msra.mxu0 0.0
      %2484 = vmatprep.subr.mxu0 0.0
      %2485 = vmatpush1.msra.mxu0 0.0
      %2486 = vmatprep.subr.mxu0 0.0
      %2487 = vmatpush1.msra.mxu0 0.0
      %2488 = vmatprep.subr.mxu0 0.0
      %2489 = vmatpush1.msra.mxu0 0.0
      %2490 = vmatprep.subr.mxu0 0.0
      %2491 = vmatpush1.msra.mxu0 0.0
      %2492 = vmatprep.subr.mxu0 0.0
      %2493 = vmatpush1.msra.mxu0 0.0
      %2494 = vmatprep.subr.mxu0 0.0
      %2495 = vmatpush1.msra.mxu0 0.0
      %2496 = vmatprep.subr.mxu0 0.0
      %2497 = vmatpush1.msra.mxu0 0.0
      %2498 = vmatprep.subr.mxu0 0.0
      %2499 = vmatpush1.msra.mxu0 0.0
      %2500 = vmatprep.subr.mxu0 0.0
      %2501 = vmatpush1.msra.mxu0 0.0
      %2502 = vmatprep.subr.mxu0 0.0
      %2503 = vmatpush1.msra.mxu0 0.0
      %2504 = vmatprep.subr.mxu0 0.0
      %2505 = vmatpush1.msra.mxu0 0.0
      %2506 = vmatprep.subr.mxu0 0.0
      %2507 = vmatpush1.msra.mxu0 0.0
      %2508 = vmatprep.subr.mxu0 0.0
      %2509 = vmatpush1.msra.mxu0 0.0
      %2510 = vmatprep.subr.mxu0 0.0
      %2511 = vmatpush1.msra.mxu0 0.0
      %2512 = vmatprep.subr.mxu0 0.0
      %2513 = vmatpush1.msra.mxu0 0.0
      %2514 = vmatprep.subr.mxu0 0.0
      %2515 = vmatpush1.msra.mxu0 0.0
      %2516 = vmatprep.subr.mxu0 0.0
      %2517 = vmatpush1.msra.mxu0 0.0
      %2518 = vmatprep.subr.mxu0 0.0
      %2519 = vmatpush1.msra.mxu0 0.0
      %2520 = vmatprep.subr.mxu0 0.0
      %2521 = vmatpush1.msra.mxu0 0.0
      %2522 = vmatprep.subr.mxu0 0.0
      %2523 = vmatpush1.msra.mxu0 0.0
      %2524 = vmatprep.subr.mxu0 0.0
      %2525 = vmatpush1.msra.mxu0 0.0
      %2526 = vmatprep.subr.mxu0 0.0
      %2527 = vmatpush1.msra.mxu0 0.0
      %2528 = vmatprep.subr.mxu0 0.0
      %2529 = vmatpush1.msra.mxu0 0.0
      %2530 = vmatprep.subr.mxu0 0.0
      %2531 = vmatpush1.msra.mxu0 0.0
      %2532 = vmatprep.mubr.f32.mxu0 0.0
      %2533 = vmatmul.mubr.f32.gmra.mrb[0].mxu0 %v2323
      %v2534 = vpop.f32.mrb[0].mxu0
      %v2535 = vadd.f32 0.0, %v2534
      %v2536 = vpop.f32.mrb[0].mxu0
      %v2537 = vadd.f32 0.0, %v2536
      %2538 = vmatprep.mubr.f32.mxu0 0.0
      %2539 = vmatmul.mubr.f32.gmra.mrb[0].mxu0 %v2326
      %v2540 = vpop.f32.mrb[0].mxu0
      %v2541 = vadd.f32 0.0, %v2540
      %v2542 = vpop.f32.mrb[0].mxu0
      %v2543 = vadd.f32 0.0, %v2542
      %2544 = vmatprep.mubr.f32.mxu0 0.0
      %2545 = vmatmul.mubr.f32.gmra.mrb[0].mxu0 %v2329
      %v2546 = vpop.f32.mrb[0].mxu0
      %v2547 = vadd.f32 0.0, %v2546
      %v2548 = vpop.f32.mrb[0].mxu0
      %v2549 = vadd.f32 0.0, %v2548
      %2550 = vmatprep.mubr.f32.mxu0 0.0
      %2551 = vmatmul.mubr.f32.gmra.mrb[0].mxu0 %v2332
      %v2552 = vpop.f32.mrb[0].mxu0
      %v2553 = vadd.f32 0.0, %v2552
      %v2554 = vpop.f32.mrb[0].mxu0
      %v2555 = vadd.f32 0.0, %v2554
      %2556 = vmatprep.mubr.f32.mxu0 0.0
      %2557 = vmatmul.mubr.f32.gmra.mrb[0].mxu0 %v2335
      %v2558 = vpop.f32.mrb[0].mxu0
      %v2559 = vadd.f32 0.0, %v2558
      %v2560 = vpop.f32.mrb[0].mxu0
      %v2561 = vadd.f32 0.0, %v2560
      %2562 = vmatprep.mubr.f32.mxu0 0.0
      %2563 = vmatmul.mubr.f32.gmra.mrb[0].mxu0 %v2338
      %v2564 = vpop.f32.mrb[0].mxu0
      %v2565 = vadd.f32 0.0, %v2564
      %v2566 = vpop.f32.mrb[0].mxu0
      %v2567 = vadd.f32 0.0, %v2566
      %2568 = vmatprep.mubr.f32.mxu0 0.0
      %2569 = vmatmul.mubr.f32.gmra.mrb[0].mxu0 %v2341
      %v2570 = vpop.f32.mrb[0].mxu0
      %v2571 = vadd.f32 0.0, %v2570
      %v2572 = vpop.f32.mrb[0].mxu0
      %v2573 = vadd.f32 0.0, %v2572
      %2574 = vmatprep.mubr.f32.mxu0 0.0
      %2575 = vmatmul.mubr.f32.gmra.mrb[0].mxu0 %v2344
      %v2576 = vpop.f32.mrb[0].mxu0
      %v2577 = vadd.f32 0.0, %v2576
      %v2578 = vpop.f32.mrb[0].mxu0
      %v2579 = vadd.f32 0.0, %v2578
      %2580 = vmatprep.mubr.f32.mxu0 0.0
      %2581 = vmatmul.mubr.f32.gmra.mrb[0].mxu0 %v2347
      %v2582 = vpop.f32.mrb[0].mxu0
      %v2583 = vadd.f32 0.0, %v2582
      %v2584 = vpop.f32.mrb[0].mxu0
      %v2585 = vadd.f32 0.0, %v2584
      %2586 = vdwg.mxu0
      %v2587 = vld [vmem:[%s10] sm:$0xff]
      %v2588 = vld [vmem:[%s10 + $0x8] sm:$0xff]
      %v2589 = vld [vmem:[%s10 + $0x10] sm:$0xff]
      %v2590 = vld [vmem:[%s10 + $0x18] sm:$0xff]
      %v2591 = vld [vmem:[%s10 + $0x20] sm:$0x1]
      %v2592 = vld [vmem:[%s10 + $0x28] sm:$0x1]
      %v2593 = vld [vmem:[%s10 + $0x30] sm:$0x1]
      %v2594 = vld [vmem:[%s10 + $0x38] sm:$0x1]
      %2595 = vrot.lane.b32.xlu0 %v2416, 17
      %v2596 = vpop.permute.xlu0 %2595
      %2597 = vrot.lane.b32.xlu0 %v2418, 17
      %v2598 = vpop.permute.xlu0 %2597
      %2599 = vrot.lane.b32.xlu0 %v2535, 17
      %v2600 = vpop.permute.xlu0 %2599
      %2601 = vrot.lane.b32.xlu0 %v2537, 17
      %v2602 = vpop.permute.xlu0 %2601
      %v2603 = vsel %vm519, %v2600, %v2602
      %v2604 = vsel %vm519, %v2598, %v2600
      %v2605 = vsel %vm519, %v2596, %v2598
      %v2606 = vsel %vm519, %v2602, %v2596
      %v2607 = vlaneseq
      %v2608 = vshrl.u32 %v2607, 7
      %v2609 = vsub.s32 0, %v2608
      %v2610 = vrot.slane %v2587, %v2609
      %v2611 = vlaneseq
      %v2612 = vshrl.u32 %v2611, 7
      %v2613 = vsub.s32 0, %v2612
      %v2614 = vrot.slane %v2588, %v2613
      %v2615 = vlaneseq
      %v2616 = vshrl.u32 %v2615, 7
      %v2617 = vsub.s32 0, %v2616
      %v2618 = vrot.slane %v2589, %v2617
      %v2619 = vlaneseq
      %v2620 = vshrl.u32 %v2619, 7
      %v2621 = vsub.s32 0, %v2620
      %v2622 = vrot.slane %v2590, %v2621
      %v2623 = vmul.f32 %v2606, %v2610
      %v2624 = vmul.f32 %v2605, %v2614
      %v2625 = vmul.f32 %v2604, %v2618
      %v2626 = vmul.f32 %v2603, %v2622
      %v2627 = vadd.f32 %v2440, %v2623
      %v2628 = vadd.f32 %v2442, %v2624
      %v2629 = vadd.f32 %v2559, %v2625
      %v2630 = vadd.f32 %v2561, %v2626
      %2631 = vrot.lane.b32.xlu0 %v2422, 16
      %v2632 = vpop.permute.xlu0 %2631
      %2633 = vrot.lane.b32.xlu0 %v2424, 16
      %v2634 = vpop.permute.xlu0 %2633
      %2635 = vrot.lane.b32.xlu0 %v2541, 16
      %v2636 = vpop.permute.xlu0 %2635
      %2637 = vrot.lane.b32.xlu0 %v2543, 16
      %v2638 = vpop.permute.xlu0 %2637
      %v2639 = vsel %vm556, %v2636, %v2638
      %v2640 = vsel %vm556, %v2634, %v2636
      %v2641 = vsel %vm556, %v2632, %v2634
      %v2642 = vsel %vm556, %v2638, %v2632
      %v2643 = vlaneseq
      %v2644 = vshrl.u32 %v2643, 7
      %v2645 = vsub.s32 1, %v2644
      %v2646 = vrot.slane %v2587, %v2645
      %v2647 = vlaneseq
      %v2648 = vshrl.u32 %v2647, 7
      %v2649 = vsub.s32 1, %v2648
      %v2650 = vrot.slane %v2588, %v2649
      %v2651 = vlaneseq
      %v2652 = vshrl.u32 %v2651, 7
      %v2653 = vsub.s32 1, %v2652
      %v2654 = vrot.slane %v2589, %v2653
      %v2655 = vlaneseq
      %v2656 = vshrl.u32 %v2655, 7
      %v2657 = vsub.s32 1, %v2656
      %v2658 = vrot.slane %v2590, %v2657
      %v2659 = vmul.f32 %v2642, %v2646
      %v2660 = vmul.f32 %v2641, %v2650
      %v2661 = vmul.f32 %v2640, %v2654
      %v2662 = vmul.f32 %v2639, %v2658
      %v2663 = vadd.f32 %v2627, %v2659
      %v2664 = vadd.f32 %v2628, %v2660
      %v2665 = vadd.f32 %v2629, %v2661
      %v2666 = vadd.f32 %v2630, %v2662
      %2667 = vrot.lane.b32.xlu0 %v2428, 15
      %v2668 = vpop.permute.xlu0 %2667
      %2669 = vrot.lane.b32.xlu0 %v2430, 15
      %v2670 = vpop.permute.xlu0 %2669
      %2671 = vrot.lane.b32.xlu0 %v2547, 15
      %v2672 = vpop.permute.xlu0 %2671
      %2673 = vrot.lane.b32.xlu0 %v2549, 15
      %v2674 = vpop.permute.xlu0 %2673
      %v2675 = vsel %vm593, %v2672, %v2674
      %v2676 = vsel %vm593, %v2670, %v2672
      %v2677 = vsel %vm593, %v2668, %v2670
      %v2678 = vsel %vm593, %v2674, %v2668
      %v2679 = vlaneseq
      %v2680 = vshrl.u32 %v2679, 7
      %v2681 = vsub.s32 2, %v2680
      %v2682 = vrot.slane %v2587, %v2681
      %v2683 = vlaneseq
      %v2684 = vshrl.u32 %v2683, 7
      %v2685 = vsub.s32 2, %v2684
      %v2686 = vrot.slane %v2588, %v2685
      %v2687 = vlaneseq
      %v2688 = vshrl.u32 %v2687, 7
      %v2689 = vsub.s32 2, %v2688
      %v2690 = vrot.slane %v2589, %v2689
      %v2691 = vlaneseq
      %v2692 = vshrl.u32 %v2691, 7
      %v2693 = vsub.s32 2, %v2692
      %v2694 = vrot.slane %v2590, %v2693
      %v2695 = vmul.f32 %v2678, %v2682
      %v2696 = vmul.f32 %v2677, %v2686
      %v2697 = vmul.f32 %v2676, %v2690
      %v2698 = vmul.f32 %v2675, %v2694
      %v2699 = vadd.f32 %v2663, %v2695
      %v2700 = vadd.f32 %v2664, %v2696
      %v2701 = vadd.f32 %v2665, %v2697
      %v2702 = vadd.f32 %v2666, %v2698
      %2703 = vrot.lane.b32.xlu0 %v2434, 1
      %v2704 = vpop.permute.xlu0 %2703
      %2705 = vrot.lane.b32.xlu0 %v2436, 1
      %v2706 = vpop.permute.xlu0 %2705
      %2707 = vrot.lane.b32.xlu0 %v2553, 1
      %v2708 = vpop.permute.xlu0 %2707
      %2709 = vrot.lane.b32.xlu0 %v2555, 1
      %v2710 = vpop.permute.xlu0 %2709
      %v2711 = vsel %vm630, %v2708, %v2710
      %v2712 = vsel %vm630, %v2706, %v2708
      %v2713 = vsel %vm630, %v2704, %v2706
      %v2714 = vsel %vm630, %v2710, %v2704
      %v2715 = vlaneseq
      %v2716 = vshrl.u32 %v2715, 7
      %v2717 = vsub.s32 3, %v2716
      %v2718 = vrot.slane %v2587, %v2717
      %v2719 = vlaneseq
      %v2720 = vshrl.u32 %v2719, 7
      %v2721 = vsub.s32 3, %v2720
      %v2722 = vrot.slane %v2588, %v2721
      %v2723 = vlaneseq
      %v2724 = vshrl.u32 %v2723, 7
      %v2725 = vsub.s32 3, %v2724
      %v2726 = vrot.slane %v2589, %v2725
      %v2727 = vlaneseq
      %v2728 = vshrl.u32 %v2727, 7
      %v2729 = vsub.s32 3, %v2728
      %v2730 = vrot.slane %v2590, %v2729
      %v2731 = vmul.f32 %v2714, %v2718
      %v2732 = vmul.f32 %v2713, %v2722
      %v2733 = vmul.f32 %v2712, %v2726
      %v2734 = vmul.f32 %v2711, %v2730
      %v2735 = vadd.f32 %v2699, %v2731
      %v2736 = vadd.f32 %v2700, %v2732
      %v2737 = vadd.f32 %v2701, %v2733
      %v2738 = vadd.f32 %v2702, %v2734
      %2739 = vrot.lane.b32.xlu0 %v2446, 127
      %v2740 = vpop.permute.xlu0 %2739
      %2741 = vrot.lane.b32.xlu0 %v2448, 127
      %v2742 = vpop.permute.xlu0 %2741
      %2743 = vrot.lane.b32.xlu0 %v2565, 127
      %v2744 = vpop.permute.xlu0 %2743
      %2745 = vrot.lane.b32.xlu0 %v2567, 127
      %v2746 = vpop.permute.xlu0 %2745
      %v2747 = vsel %vm667, %v2744, %v2746
      %v2748 = vsel %vm667, %v2742, %v2744
      %v2749 = vsel %vm667, %v2740, %v2742
      %v2750 = vsel %vm667, %v2746, %v2740
      %v2751 = vlaneseq
      %v2752 = vshrl.u32 %v2751, 7
      %v2753 = vsub.s32 5, %v2752
      %v2754 = vrot.slane %v2587, %v2753
      %v2755 = vlaneseq
      %v2756 = vshrl.u32 %v2755, 7
      %v2757 = vsub.s32 5, %v2756
      %v2758 = vrot.slane %v2588, %v2757
      %v2759 = vlaneseq
      %v2760 = vshrl.u32 %v2759, 7
      %v2761 = vsub.s32 5, %v2760
      %v2762 = vrot.slane %v2589, %v2761
      %v2763 = vlaneseq
      %v2764 = vshrl.u32 %v2763, 7
      %v2765 = vsub.s32 5, %v2764
      %v2766 = vrot.slane %v2590, %v2765
      %v2767 = vmul.f32 %v2749, %v2754
      %v2768 = vmul.f32 %v2748, %v2758
      %v2769 = vmul.f32 %v2747, %v2762
      %v2770 = vmul.f32 %v2750, %v2766
      %v2771 = vadd.f32 %v2735, %v2767
      %v2772 = vadd.f32 %v2736, %v2768
      %v2773 = vadd.f32 %v2737, %v2769
      %v2774 = vadd.f32 %v2738, %v2770
      %2775 = vrot.lane.b32.xlu0 %v2452, 113
      %v2776 = vpop.permute.xlu0 %2775
      %2777 = vrot.lane.b32.xlu0 %v2454, 113
      %v2778 = vpop.permute.xlu0 %2777
      %2779 = vrot.lane.b32.xlu0 %v2571, 113
      %v2780 = vpop.permute.xlu0 %2779
      %2781 = vrot.lane.b32.xlu0 %v2573, 113
      %v2782 = vpop.permute.xlu0 %2781
      %v2783 = vsel %vm704, %v2780, %v2782
      %v2784 = vsel %vm704, %v2778, %v2780
      %v2785 = vsel %vm704, %v2776, %v2778
      %v2786 = vsel %vm704, %v2782, %v2776
      %v2787 = vlaneseq
      %v2788 = vshrl.u32 %v2787, 7
      %v2789 = vsub.s32 6, %v2788
      %v2790 = vrot.slane %v2587, %v2789
      %v2791 = vlaneseq
      %v2792 = vshrl.u32 %v2791, 7
      %v2793 = vsub.s32 6, %v2792
      %v2794 = vrot.slane %v2588, %v2793
      %v2795 = vlaneseq
      %v2796 = vshrl.u32 %v2795, 7
      %v2797 = vsub.s32 6, %v2796
      %v2798 = vrot.slane %v2589, %v2797
      %v2799 = vlaneseq
      %v2800 = vshrl.u32 %v2799, 7
      %v2801 = vsub.s32 6, %v2800
      %v2802 = vrot.slane %v2590, %v2801
      %v2803 = vmul.f32 %v2785, %v2790
      %v2804 = vmul.f32 %v2784, %v2794
      %v2805 = vmul.f32 %v2783, %v2798
      %v2806 = vmul.f32 %v2786, %v2802
      %v2807 = vadd.f32 %v2771, %v2803
      %v2808 = vadd.f32 %v2772, %v2804
      %v2809 = vadd.f32 %v2773, %v2805
      %v2810 = vadd.f32 %v2774, %v2806
      %2811 = vrot.lane.b32.xlu0 %v2458, 112
      %v2812 = vpop.permute.xlu0 %2811
      %2813 = vrot.lane.b32.xlu0 %v2460, 112
      %v2814 = vpop.permute.xlu0 %2813
      %2815 = vrot.lane.b32.xlu0 %v2577, 112
      %v2816 = vpop.permute.xlu0 %2815
      %2817 = vrot.lane.b32.xlu0 %v2579, 112
      %v2818 = vpop.permute.xlu0 %2817
      %v2819 = vsel %vm741, %v2816, %v2818
      %v2820 = vsel %vm741, %v2814, %v2816
      %v2821 = vsel %vm741, %v2812, %v2814
      %v2822 = vsel %vm741, %v2818, %v2812
      %v2823 = vlaneseq
      %v2824 = vshrl.u32 %v2823, 7
      %v2825 = vsub.s32 7, %v2824
      %v2826 = vrot.slane %v2587, %v2825
      %v2827 = vlaneseq
      %v2828 = vshrl.u32 %v2827, 7
      %v2829 = vsub.s32 7, %v2828
      %v2830 = vrot.slane %v2588, %v2829
      %v2831 = vlaneseq
      %v2832 = vshrl.u32 %v2831, 7
      %v2833 = vsub.s32 7, %v2832
      %v2834 = vrot.slane %v2589, %v2833
      %v2835 = vlaneseq
      %v2836 = vshrl.u32 %v2835, 7
      %v2837 = vsub.s32 7, %v2836
      %v2838 = vrot.slane %v2590, %v2837
      %v2839 = vmul.f32 %v2821, %v2826
      %v2840 = vmul.f32 %v2820, %v2830
      %v2841 = vmul.f32 %v2819, %v2834
      %v2842 = vmul.f32 %v2822, %v2838
      %v2843 = vadd.f32 %v2807, %v2839
      %v2844 = vadd.f32 %v2808, %v2840
      %v2845 = vadd.f32 %v2809, %v2841
      %v2846 = vadd.f32 %v2810, %v2842
      %2847 = vrot.lane.b32.xlu0 %v2464, 111
      %v2848 = vpop.permute.xlu0 %2847
      %2849 = vrot.lane.b32.xlu0 %v2466, 111
      %v2850 = vpop.permute.xlu0 %2849
      %2851 = vrot.lane.b32.xlu0 %v2583, 111
      %v2852 = vpop.permute.xlu0 %2851
      %2853 = vrot.lane.b32.xlu0 %v2585, 111
      %v2854 = vpop.permute.xlu0 %2853
      %v2855 = vsel %vm778, %v2852, %v2854
      %v2856 = vsel %vm778, %v2850, %v2852
      %v2857 = vsel %vm778, %v2848, %v2850
      %v2858 = vsel %vm778, %v2854, %v2848
      %v2859 = vlaneseq
      %v2860 = vshrl.u32 %v2859, 7
      %v2861 = vsub.s32 0, %v2860
      %v2862 = vrot.slane %v2591, %v2861
      %v2863 = vlaneseq
      %v2864 = vshrl.u32 %v2863, 7
      %v2865 = vsub.s32 0, %v2864
      %v2866 = vrot.slane %v2592, %v2865
      %v2867 = vlaneseq
      %v2868 = vshrl.u32 %v2867, 7
      %v2869 = vsub.s32 0, %v2868
      %v2870 = vrot.slane %v2593, %v2869
      %v2871 = vlaneseq
      %v2872 = vshrl.u32 %v2871, 7
      %v2873 = vsub.s32 0, %v2872
      %v2874 = vrot.slane %v2594, %v2873
      %v2875 = vmul.f32 %v2857, %v2862
      %v2876 = vmul.f32 %v2856, %v2866
      %v2877 = vmul.f32 %v2855, %v2870
      %v2878 = vmul.f32 %v2858, %v2874
      %v2879 = vadd.f32 %v2843, %v2875
      %v2880 = vadd.f32 %v2844, %v2876
      %v2881 = vadd.f32 %v2845, %v2877
      %v2882 = vadd.f32 %v2846, %v2878
      %v2883 = vld [vmem:[%s5] sm:$0xff]
      %v2884 = vld [vmem:[%s5 + $0x8] sm:$0xff]
      %v2885 = vld [vmem:[%s5 + $0x10] sm:$0xff]
      %v2886 = vld [vmem:[%s5 + $0x18] sm:$0xff]
      %v2887 = vmul.f32 %v2135, %v2883
      %v2888 = vmul.f32 %v2135, %v2884
      %v2889 = vmul.f32 %v2135, %v2885
      %v2890 = vmul.f32 %v2135, %v2886
      %v2891 = vadd.f32 %v2879, %v2887
      %v2892 = vadd.f32 %v2880, %v2888
      %v2893 = vadd.f32 %v2881, %v2889
      %v2894 = vadd.f32 %v2882, %v2890
      %v2895 = vld [vmem:[%s6] sm:$0xff]
      %2897 = vset.pattern.permute.xlu0 0
      %2898 = vperm.xlu0 %2897, %v2895
      %v2899 = vpop.permute.xlu0 %2898
      %v2901 = vadd.f32 %v2891, %v2899
      %v2902 = vadd.f32 %v2892, %v2899
      %v2903 = vadd.f32 %v2893, %v2899
      %v2904 = vadd.f32 %v2894, %v2899
      %v2905 = vmax.f32 %v2901, 0.0
      %v2906 = vmax.f32 %v2902, 0.0
      %v2907 = vmax.f32 %v2903, 0.0
      %v2908 = vmax.f32 %v2904, 0.0
      %v2909 = vld [vmem:[%s7] sm:$0xf]
      %v2910 = vld [vmem:[%s8] sm:$0xf]
      %v2911 = vmul.f32 %v2135, %v2910
      %2913 = vset.pattern.permute.xlu0 0
      %2914 = vperm.xlu0 %2913, %v2911
      %v2915 = vpop.permute.xlu0 %2914
      %v2918 = vsel %vm235, %v2909, 0
      %2920 = vmatprep.subr.mxu0 %v2906
      %2921 = vmatpush1.msra.mxu0 %v2905
      %2922 = vmatprep.subr.mxu0 0.0
      %2923 = vmatpush1.msra.mxu0 0.0
      %2924 = vmatprep.subr.mxu0 0.0
      %2925 = vmatpush1.msra.mxu0 0.0
      %2926 = vmatprep.subr.mxu0 0.0
      %2927 = vmatpush1.msra.mxu0 0.0
      %2928 = vmatprep.subr.mxu0 0.0
      %2929 = vmatpush1.msra.mxu0 0.0
      %2930 = vmatprep.subr.mxu0 0.0
      %2931 = vmatpush1.msra.mxu0 0.0
      %2932 = vmatprep.subr.mxu0 0.0
      %2933 = vmatpush1.msra.mxu0 0.0
      %2934 = vmatprep.subr.mxu0 0.0
      %2935 = vmatpush1.msra.mxu0 0.0
      %2936 = vmatprep.subr.mxu0 0.0
      %2937 = vmatpush1.msra.mxu0 0.0
      %2938 = vmatprep.subr.mxu0 0.0
      %2939 = vmatpush1.msra.mxu0 0.0
      %2940 = vmatprep.subr.mxu0 0.0
      %2941 = vmatpush1.msra.mxu0 0.0
      %2942 = vmatprep.subr.mxu0 0.0
      %2943 = vmatpush1.msra.mxu0 0.0
      %2944 = vmatprep.subr.mxu0 0.0
      %2945 = vmatpush1.msra.mxu0 0.0
      %2946 = vmatprep.subr.mxu0 0.0
      %2947 = vmatpush1.msra.mxu0 0.0
      %2948 = vmatprep.subr.mxu0 0.0
      %2949 = vmatpush1.msra.mxu0 0.0
      %2950 = vmatprep.subr.mxu0 0.0
      %2951 = vmatpush1.msra.mxu0 0.0
      %2952 = vmatprep.subr.mxu0 0.0
      %2953 = vmatpush1.msra.mxu0 0.0
      %2954 = vmatprep.subr.mxu0 0.0
      %2955 = vmatpush1.msra.mxu0 0.0
      %2956 = vmatprep.subr.mxu0 0.0
      %2957 = vmatpush1.msra.mxu0 0.0
      %2958 = vmatprep.subr.mxu0 0.0
      %2959 = vmatpush1.msra.mxu0 0.0
      %2960 = vmatprep.subr.mxu0 0.0
      %2961 = vmatpush1.msra.mxu0 0.0
      %2962 = vmatprep.subr.mxu0 0.0
      %2963 = vmatpush1.msra.mxu0 0.0
      %2964 = vmatprep.subr.mxu0 0.0
      %2965 = vmatpush1.msra.mxu0 0.0
      %2966 = vmatprep.subr.mxu0 0.0
      %2967 = vmatpush1.msra.mxu0 0.0
      %2968 = vmatprep.subr.mxu0 0.0
      %2969 = vmatpush1.msra.mxu0 0.0
      %2970 = vmatprep.subr.mxu0 0.0
      %2971 = vmatpush1.msra.mxu0 0.0
      %2972 = vmatprep.subr.mxu0 0.0
      %2973 = vmatpush1.msra.mxu0 0.0
      %2974 = vmatprep.subr.mxu0 0.0
      %2975 = vmatpush1.msra.mxu0 0.0
      %2976 = vmatprep.subr.mxu0 0.0
      %2977 = vmatpush1.msra.mxu0 0.0
      %2978 = vmatprep.subr.mxu0 0.0
      %2979 = vmatpush1.msra.mxu0 0.0
      %2980 = vmatprep.subr.mxu0 0.0
      %2981 = vmatpush1.msra.mxu0 0.0
      %2982 = vmatprep.subr.mxu0 0.0
      %2983 = vmatpush1.msra.mxu0 0.0
      %2984 = vmatprep.mubr.f32.mxu0 0.0
      %2985 = vmatmul.mubr.f32.gmra.mrb[0].mxu0 %v2918
      %v2986 = vpop.f32.mrb[0].mxu0
      %v2987 = vadd.f32 %v2915, %v2986
      %v2988 = vpop.f32.mrb[0].mxu0
      %v2989 = vadd.f32 %v2915, %v2988
      %2990 = vdwg.mxu0
      %2991 = vmatprep.subr.mxu0 %v2908
      %2992 = vmatpush1.msra.mxu0 %v2907
      %2993 = vmatprep.subr.mxu0 0.0
      %2994 = vmatpush1.msra.mxu0 0.0
      %2995 = vmatprep.subr.mxu0 0.0
      %2996 = vmatpush1.msra.mxu0 0.0
      %2997 = vmatprep.subr.mxu0 0.0
      %2998 = vmatpush1.msra.mxu0 0.0
      %2999 = vmatprep.subr.mxu0 0.0
      %3000 = vmatpush1.msra.mxu0 0.0
      %3001 = vmatprep.subr.mxu0 0.0
      %3002 = vmatpush1.msra.mxu0 0.0
      %3003 = vmatprep.subr.mxu0 0.0
      %3004 = vmatpush1.msra.mxu0 0.0
      %3005 = vmatprep.subr.mxu0 0.0
      %3006 = vmatpush1.msra.mxu0 0.0
      %3007 = vmatprep.subr.mxu0 0.0
      %3008 = vmatpush1.msra.mxu0 0.0
      %3009 = vmatprep.subr.mxu0 0.0
      %3010 = vmatpush1.msra.mxu0 0.0
      %3011 = vmatprep.subr.mxu0 0.0
      %3012 = vmatpush1.msra.mxu0 0.0
      %3013 = vmatprep.subr.mxu0 0.0
      %3014 = vmatpush1.msra.mxu0 0.0
      %3015 = vmatprep.subr.mxu0 0.0
      %3016 = vmatpush1.msra.mxu0 0.0
      %3017 = vmatprep.subr.mxu0 0.0
      %3018 = vmatpush1.msra.mxu0 0.0
      %3019 = vmatprep.subr.mxu0 0.0
      %3020 = vmatpush1.msra.mxu0 0.0
      %3021 = vmatprep.subr.mxu0 0.0
      %3022 = vmatpush1.msra.mxu0 0.0
      %3023 = vmatprep.subr.mxu0 0.0
      %3024 = vmatpush1.msra.mxu0 0.0
      %3025 = vmatprep.subr.mxu0 0.0
      %3026 = vmatpush1.msra.mxu0 0.0
      %3027 = vmatprep.subr.mxu0 0.0
      %3028 = vmatpush1.msra.mxu0 0.0
      %3029 = vmatprep.subr.mxu0 0.0
      %3030 = vmatpush1.msra.mxu0 0.0
      %3031 = vmatprep.subr.mxu0 0.0
      %3032 = vmatpush1.msra.mxu0 0.0
      %3033 = vmatprep.subr.mxu0 0.0
      %3034 = vmatpush1.msra.mxu0 0.0
      %3035 = vmatprep.subr.mxu0 0.0
      %3036 = vmatpush1.msra.mxu0 0.0
      %3037 = vmatprep.subr.mxu0 0.0
      %3038 = vmatpush1.msra.mxu0 0.0
      %3039 = vmatprep.subr.mxu0 0.0
      %3040 = vmatpush1.msra.mxu0 0.0
      %3041 = vmatprep.subr.mxu0 0.0
      %3042 = vmatpush1.msra.mxu0 0.0
      %3043 = vmatprep.subr.mxu0 0.0
      %3044 = vmatpush1.msra.mxu0 0.0
      %3045 = vmatprep.subr.mxu0 0.0
      %3046 = vmatpush1.msra.mxu0 0.0
      %3047 = vmatprep.subr.mxu0 0.0
      %3048 = vmatpush1.msra.mxu0 0.0
      %3049 = vmatprep.subr.mxu0 0.0
      %3050 = vmatpush1.msra.mxu0 0.0
      %3051 = vmatprep.subr.mxu0 0.0
      %3052 = vmatpush1.msra.mxu0 0.0
      %3053 = vmatprep.subr.mxu0 0.0
      %3054 = vmatpush1.msra.mxu0 0.0
      %3055 = vmatprep.mubr.f32.mxu0 0.0
      %3056 = vmatmul.mubr.f32.gmra.mrb[0].mxu0 %v2918
      %v3057 = vpop.f32.mrb[0].mxu0
      %v3058 = vadd.f32 %v2915, %v3057
      %v3059 = vpop.f32.mrb[0].mxu0
      %v3060 = vadd.f32 %v2915, %v3059
      %3061 = vdwg.mxu0
      %v3062 = vld [vmem:[%s9] sm:$0xf]
      %3064 = vset.pattern.permute.xlu0 0
      %3065 = vperm.xlu0 %3064, %v3062
      %v3066 = vpop.permute.xlu0 %3065
      %v3068 = vadd.f32 %v2987, %v3066
      %v3069 = vadd.f32 %v2989, %v3066
      %v3070 = vadd.f32 %v3058, %v3066
      %v3071 = vadd.f32 %v3060, %v3066
      %s3072 = smul.f32 %s2121, 0.3
      %s3073 = sadd.f32 %s2108, %s3072
      %v3074 = vmul.f32 %v2122, 0.075
      %v3075 = vmul.f32 %v2123, 0.075
      %v3076 = vmul.f32 %v3068, 0.225
      %v3077 = vmul.f32 %v3069, 0.225
      %v3078 = vmul.f32 %v3070, 0.225
      %v3079 = vmul.f32 %v3071, 0.225
      %v3084 = vcombine.low %v3076, %v3077
      %v3085 = vcombine.low %v3078, %v3079
      %v3088 = vadd.f32 %v3074, %v3084
      %v3089 = vadd.f32 %v3075, %v3085
      %v3090 = vmul.f32 %v2128, %v3088
      %v3091 = vmul.f32 %v2128, %v3089
      %v3092 = vadd.f32 %v2118, %v3090
      %v3093 = vadd.f32 %v2119, %v3091
      %v3094 = vstv %s3073
      %v3095 = vmul.f32 %v3094, %v2134
      %3097 = vset.pattern.permute.xlu0 0
      %3098 = vperm.xlu0 %3097, %v3095
      %v3099 = vpop.permute.xlu0 %3098
      %v3103 = vcombine.high %v3092, %v3092
      %v3104 = vcombine.high %v3093, %v3093
      %v3105 = vsel %vm61, %v3092, 0
      %v3107 = vsel %vm61, %v3103, 0
      %v3109 = vsel %vm61, %v3093, 0
      %v3111 = vsel %vm61, %v3104, 0
      %3113 = vmatprep.subr.mxu0 %v3107
      %3114 = vmatpush1.msra.mxu0 %v3105
      %3115 = vmatprep.subr.mxu0 0.0
      %3116 = vmatpush1.msra.mxu0 0.0
      %3117 = vmatprep.subr.mxu0 0.0
      %3118 = vmatpush1.msra.mxu0 0.0
      %3119 = vmatprep.subr.mxu0 0.0
      %3120 = vmatpush1.msra.mxu0 0.0
      %3121 = vmatprep.subr.mxu0 0.0
      %3122 = vmatpush1.msra.mxu0 0.0
      %3123 = vmatprep.subr.mxu0 0.0
      %3124 = vmatpush1.msra.mxu0 0.0
      %3125 = vmatprep.subr.mxu0 0.0
      %3126 = vmatpush1.msra.mxu0 0.0
      %3127 = vmatprep.subr.mxu0 0.0
      %3128 = vmatpush1.msra.mxu0 0.0
      %3129 = vmatprep.subr.mxu0 0.0
      %3130 = vmatpush1.msra.mxu0 0.0
      %3131 = vmatprep.subr.mxu0 0.0
      %3132 = vmatpush1.msra.mxu0 0.0
      %3133 = vmatprep.subr.mxu0 0.0
      %3134 = vmatpush1.msra.mxu0 0.0
      %3135 = vmatprep.subr.mxu0 0.0
      %3136 = vmatpush1.msra.mxu0 0.0
      %3137 = vmatprep.subr.mxu0 0.0
      %3138 = vmatpush1.msra.mxu0 0.0
      %3139 = vmatprep.subr.mxu0 0.0
      %3140 = vmatpush1.msra.mxu0 0.0
      %3141 = vmatprep.subr.mxu0 0.0
      %3142 = vmatpush1.msra.mxu0 0.0
      %3143 = vmatprep.subr.mxu0 0.0
      %3144 = vmatpush1.msra.mxu0 0.0
      %3145 = vmatprep.subr.mxu0 0.0
      %3146 = vmatpush1.msra.mxu0 0.0
      %3147 = vmatprep.subr.mxu0 0.0
      %3148 = vmatpush1.msra.mxu0 0.0
      %3149 = vmatprep.subr.mxu0 0.0
      %3150 = vmatpush1.msra.mxu0 0.0
      %3151 = vmatprep.subr.mxu0 0.0
      %3152 = vmatpush1.msra.mxu0 0.0
      %3153 = vmatprep.subr.mxu0 0.0
      %3154 = vmatpush1.msra.mxu0 0.0
      %3155 = vmatprep.subr.mxu0 0.0
      %3156 = vmatpush1.msra.mxu0 0.0
      %3157 = vmatprep.subr.mxu0 0.0
      %3158 = vmatpush1.msra.mxu0 0.0
      %3159 = vmatprep.subr.mxu0 0.0
      %3160 = vmatpush1.msra.mxu0 0.0
      %3161 = vmatprep.subr.mxu0 0.0
      %3162 = vmatpush1.msra.mxu0 0.0
      %3163 = vmatprep.subr.mxu0 0.0
      %3164 = vmatpush1.msra.mxu0 0.0
      %3165 = vmatprep.subr.mxu0 0.0
      %3166 = vmatpush1.msra.mxu0 0.0
      %3167 = vmatprep.subr.mxu0 0.0
      %3168 = vmatpush1.msra.mxu0 0.0
      %3169 = vmatprep.subr.mxu0 0.0
      %3170 = vmatpush1.msra.mxu0 0.0
      %3171 = vmatprep.subr.mxu0 0.0
      %3172 = vmatpush1.msra.mxu0 0.0
      %3173 = vmatprep.subr.mxu0 0.0
      %3174 = vmatpush1.msra.mxu0 0.0
      %3175 = vmatprep.subr.mxu0 0.0
      %3176 = vmatpush1.msra.mxu0 0.0
      %3177 = vmatprep.mubr.f32.mxu0 0.0
      %3178 = vmatmul.mubr.f32.gmra.mrb[0].mxu0 %v2147
      %v3179 = vpop.f32.mrb[0].mxu0
      %v3180 = vadd.f32 %v3099, %v3179
      %v3181 = vpop.f32.mrb[0].mxu0
      %v3182 = vadd.f32 %v3099, %v3181
      %3183 = vdwg.mxu0
      %3184 = vmatprep.subr.mxu0 %v3111
      %3185 = vmatpush1.msra.mxu0 %v3109
      %3186 = vmatprep.subr.mxu0 0.0
      %3187 = vmatpush1.msra.mxu0 0.0
      %3188 = vmatprep.subr.mxu0 0.0
      %3189 = vmatpush1.msra.mxu0 0.0
      %3190 = vmatprep.subr.mxu0 0.0
      %3191 = vmatpush1.msra.mxu0 0.0
      %3192 = vmatprep.subr.mxu0 0.0
      %3193 = vmatpush1.msra.mxu0 0.0
      %3194 = vmatprep.subr.mxu0 0.0
      %3195 = vmatpush1.msra.mxu0 0.0
      %3196 = vmatprep.subr.mxu0 0.0
      %3197 = vmatpush1.msra.mxu0 0.0
      %3198 = vmatprep.subr.mxu0 0.0
      %3199 = vmatpush1.msra.mxu0 0.0
      %3200 = vmatprep.subr.mxu0 0.0
      %3201 = vmatpush1.msra.mxu0 0.0
      %3202 = vmatprep.subr.mxu0 0.0
      %3203 = vmatpush1.msra.mxu0 0.0
      %3204 = vmatprep.subr.mxu0 0.0
      %3205 = vmatpush1.msra.mxu0 0.0
      %3206 = vmatprep.subr.mxu0 0.0
      %3207 = vmatpush1.msra.mxu0 0.0
      %3208 = vmatprep.subr.mxu0 0.0
      %3209 = vmatpush1.msra.mxu0 0.0
      %3210 = vmatprep.subr.mxu0 0.0
      %3211 = vmatpush1.msra.mxu0 0.0
      %3212 = vmatprep.subr.mxu0 0.0
      %3213 = vmatpush1.msra.mxu0 0.0
      %3214 = vmatprep.subr.mxu0 0.0
      %3215 = vmatpush1.msra.mxu0 0.0
      %3216 = vmatprep.subr.mxu0 0.0
      %3217 = vmatpush1.msra.mxu0 0.0
      %3218 = vmatprep.subr.mxu0 0.0
      %3219 = vmatpush1.msra.mxu0 0.0
      %3220 = vmatprep.subr.mxu0 0.0
      %3221 = vmatpush1.msra.mxu0 0.0
      %3222 = vmatprep.subr.mxu0 0.0
      %3223 = vmatpush1.msra.mxu0 0.0
      %3224 = vmatprep.subr.mxu0 0.0
      %3225 = vmatpush1.msra.mxu0 0.0
      %3226 = vmatprep.subr.mxu0 0.0
      %3227 = vmatpush1.msra.mxu0 0.0
      %3228 = vmatprep.subr.mxu0 0.0
      %3229 = vmatpush1.msra.mxu0 0.0
      %3230 = vmatprep.subr.mxu0 0.0
      %3231 = vmatpush1.msra.mxu0 0.0
      %3232 = vmatprep.subr.mxu0 0.0
      %3233 = vmatpush1.msra.mxu0 0.0
      %3234 = vmatprep.subr.mxu0 0.0
      %3235 = vmatpush1.msra.mxu0 0.0
      %3236 = vmatprep.subr.mxu0 0.0
      %3237 = vmatpush1.msra.mxu0 0.0
      %3238 = vmatprep.subr.mxu0 0.0
      %3239 = vmatpush1.msra.mxu0 0.0
      %3240 = vmatprep.subr.mxu0 0.0
      %3241 = vmatpush1.msra.mxu0 0.0
      %3242 = vmatprep.subr.mxu0 0.0
      %3243 = vmatpush1.msra.mxu0 0.0
      %3244 = vmatprep.subr.mxu0 0.0
      %3245 = vmatpush1.msra.mxu0 0.0
      %3246 = vmatprep.subr.mxu0 0.0
      %3247 = vmatpush1.msra.mxu0 0.0
      %3248 = vmatprep.mubr.f32.mxu0 0.0
      %3249 = vmatmul.mubr.f32.gmra.mrb[0].mxu0 %v2147
      %v3250 = vpop.f32.mrb[0].mxu0
      %v3251 = vadd.f32 %v3099, %v3250
      %v3252 = vpop.f32.mrb[0].mxu0
      %v3253 = vadd.f32 %v3099, %v3252
      %3254 = vdwg.mxu0
      %v3255 = vadd.f32 %v3180, %v2303
      %v3256 = vadd.f32 %v3182, %v2303
      %v3257 = vadd.f32 %v3251, %v2303
      %v3258 = vadd.f32 %v3253, %v2303
      %v3259 = vmax.f32 %v3255, 0.0
      %v3260 = vmax.f32 %v3256, 0.0
      %v3261 = vmax.f32 %v3257, 0.0
      %v3262 = vmax.f32 %v3258, 0.0
      %3263 = vmatprep.subr.mxu0 %v3260
      %3264 = vmatpush1.msra.mxu0 %v3259
      %3265 = vmatprep.subr.mxu0 0.0
      %3266 = vmatpush1.msra.mxu0 0.0
      %3267 = vmatprep.subr.mxu0 0.0
      %3268 = vmatpush1.msra.mxu0 0.0
      %3269 = vmatprep.subr.mxu0 0.0
      %3270 = vmatpush1.msra.mxu0 0.0
      %3271 = vmatprep.subr.mxu0 0.0
      %3272 = vmatpush1.msra.mxu0 0.0
      %3273 = vmatprep.subr.mxu0 0.0
      %3274 = vmatpush1.msra.mxu0 0.0
      %3275 = vmatprep.subr.mxu0 0.0
      %3276 = vmatpush1.msra.mxu0 0.0
      %3277 = vmatprep.subr.mxu0 0.0
      %3278 = vmatpush1.msra.mxu0 0.0
      %3279 = vmatprep.subr.mxu0 0.0
      %3280 = vmatpush1.msra.mxu0 0.0
      %3281 = vmatprep.subr.mxu0 0.0
      %3282 = vmatpush1.msra.mxu0 0.0
      %3283 = vmatprep.subr.mxu0 0.0
      %3284 = vmatpush1.msra.mxu0 0.0
      %3285 = vmatprep.subr.mxu0 0.0
      %3286 = vmatpush1.msra.mxu0 0.0
      %3287 = vmatprep.subr.mxu0 0.0
      %3288 = vmatpush1.msra.mxu0 0.0
      %3289 = vmatprep.subr.mxu0 0.0
      %3290 = vmatpush1.msra.mxu0 0.0
      %3291 = vmatprep.subr.mxu0 0.0
      %3292 = vmatpush1.msra.mxu0 0.0
      %3293 = vmatprep.subr.mxu0 0.0
      %3294 = vmatpush1.msra.mxu0 0.0
      %3295 = vmatprep.subr.mxu0 0.0
      %3296 = vmatpush1.msra.mxu0 0.0
      %3297 = vmatprep.subr.mxu0 0.0
      %3298 = vmatpush1.msra.mxu0 0.0
      %3299 = vmatprep.subr.mxu0 0.0
      %3300 = vmatpush1.msra.mxu0 0.0
      %3301 = vmatprep.subr.mxu0 0.0
      %3302 = vmatpush1.msra.mxu0 0.0
      %3303 = vmatprep.subr.mxu0 0.0
      %3304 = vmatpush1.msra.mxu0 0.0
      %3305 = vmatprep.subr.mxu0 0.0
      %3306 = vmatpush1.msra.mxu0 0.0
      %3307 = vmatprep.subr.mxu0 0.0
      %3308 = vmatpush1.msra.mxu0 0.0
      %3309 = vmatprep.subr.mxu0 0.0
      %3310 = vmatpush1.msra.mxu0 0.0
      %3311 = vmatprep.subr.mxu0 0.0
      %3312 = vmatpush1.msra.mxu0 0.0
      %3313 = vmatprep.subr.mxu0 0.0
      %3314 = vmatpush1.msra.mxu0 0.0
      %3315 = vmatprep.subr.mxu0 0.0
      %3316 = vmatpush1.msra.mxu0 0.0
      %3317 = vmatprep.subr.mxu0 0.0
      %3318 = vmatpush1.msra.mxu0 0.0
      %3319 = vmatprep.subr.mxu0 0.0
      %3320 = vmatpush1.msra.mxu0 0.0
      %3321 = vmatprep.subr.mxu0 0.0
      %3322 = vmatpush1.msra.mxu0 0.0
      %3323 = vmatprep.subr.mxu0 0.0
      %3324 = vmatpush1.msra.mxu0 0.0
      %3325 = vmatprep.subr.mxu0 0.0
      %3326 = vmatpush1.msra.mxu0 0.0
      %3327 = vmatprep.mubr.f32.mxu0 0.0
      %3328 = vmatmul.mubr.f32.gmra.mrb[0].mxu0 %v2323
      %v3329 = vpop.f32.mrb[0].mxu0
      %v3330 = vadd.f32 0.0, %v3329
      %v3331 = vpop.f32.mrb[0].mxu0
      %v3332 = vadd.f32 0.0, %v3331
      %3333 = vmatprep.mubr.f32.mxu0 0.0
      %3334 = vmatmul.mubr.f32.gmra.mrb[0].mxu0 %v2326
      %v3335 = vpop.f32.mrb[0].mxu0
      %v3336 = vadd.f32 0.0, %v3335
      %v3337 = vpop.f32.mrb[0].mxu0
      %v3338 = vadd.f32 0.0, %v3337
      %3339 = vmatprep.mubr.f32.mxu0 0.0
      %3340 = vmatmul.mubr.f32.gmra.mrb[0].mxu0 %v2329
      %v3341 = vpop.f32.mrb[0].mxu0
      %v3342 = vadd.f32 0.0, %v3341
      %v3343 = vpop.f32.mrb[0].mxu0
      %v3344 = vadd.f32 0.0, %v3343
      %3345 = vmatprep.mubr.f32.mxu0 0.0
      %3346 = vmatmul.mubr.f32.gmra.mrb[0].mxu0 %v2332
      %v3347 = vpop.f32.mrb[0].mxu0
      %v3348 = vadd.f32 0.0, %v3347
      %v3349 = vpop.f32.mrb[0].mxu0
      %v3350 = vadd.f32 0.0, %v3349
      %3351 = vmatprep.mubr.f32.mxu0 0.0
      %3352 = vmatmul.mubr.f32.gmra.mrb[0].mxu0 %v2335
      %v3353 = vpop.f32.mrb[0].mxu0
      %v3354 = vadd.f32 0.0, %v3353
      %v3355 = vpop.f32.mrb[0].mxu0
      %v3356 = vadd.f32 0.0, %v3355
      %3357 = vmatprep.mubr.f32.mxu0 0.0
      %3358 = vmatmul.mubr.f32.gmra.mrb[0].mxu0 %v2338
      %v3359 = vpop.f32.mrb[0].mxu0
      %v3360 = vadd.f32 0.0, %v3359
      %v3361 = vpop.f32.mrb[0].mxu0
      %v3362 = vadd.f32 0.0, %v3361
      %3363 = vmatprep.mubr.f32.mxu0 0.0
      %3364 = vmatmul.mubr.f32.gmra.mrb[0].mxu0 %v2341
      %v3365 = vpop.f32.mrb[0].mxu0
      %v3366 = vadd.f32 0.0, %v3365
      %v3367 = vpop.f32.mrb[0].mxu0
      %v3368 = vadd.f32 0.0, %v3367
      %3369 = vmatprep.mubr.f32.mxu0 0.0
      %3370 = vmatmul.mubr.f32.gmra.mrb[0].mxu0 %v2344
      %v3371 = vpop.f32.mrb[0].mxu0
      %v3372 = vadd.f32 0.0, %v3371
      %v3373 = vpop.f32.mrb[0].mxu0
      %v3374 = vadd.f32 0.0, %v3373
      %3375 = vmatprep.mubr.f32.mxu0 0.0
      %3376 = vmatmul.mubr.f32.gmra.mrb[0].mxu0 %v2347
      %v3377 = vpop.f32.mrb[0].mxu0
      %v3378 = vadd.f32 0.0, %v3377
      %v3379 = vpop.f32.mrb[0].mxu0
      %v3380 = vadd.f32 0.0, %v3379
      %3381 = vdwg.mxu0
      %3382 = vmatprep.subr.mxu0 %v3262
      %3383 = vmatpush1.msra.mxu0 %v3261
      %3384 = vmatprep.subr.mxu0 0.0
      %3385 = vmatpush1.msra.mxu0 0.0
      %3386 = vmatprep.subr.mxu0 0.0
      %3387 = vmatpush1.msra.mxu0 0.0
      %3388 = vmatprep.subr.mxu0 0.0
      %3389 = vmatpush1.msra.mxu0 0.0
      %3390 = vmatprep.subr.mxu0 0.0
      %3391 = vmatpush1.msra.mxu0 0.0
      %3392 = vmatprep.subr.mxu0 0.0
      %3393 = vmatpush1.msra.mxu0 0.0
      %3394 = vmatprep.subr.mxu0 0.0
      %3395 = vmatpush1.msra.mxu0 0.0
      %3396 = vmatprep.subr.mxu0 0.0
      %3397 = vmatpush1.msra.mxu0 0.0
      %3398 = vmatprep.subr.mxu0 0.0
      %3399 = vmatpush1.msra.mxu0 0.0
      %3400 = vmatprep.subr.mxu0 0.0
      %3401 = vmatpush1.msra.mxu0 0.0
      %3402 = vmatprep.subr.mxu0 0.0
      %3403 = vmatpush1.msra.mxu0 0.0
      %3404 = vmatprep.subr.mxu0 0.0
      %3405 = vmatpush1.msra.mxu0 0.0
      %3406 = vmatprep.subr.mxu0 0.0
      %3407 = vmatpush1.msra.mxu0 0.0
      %3408 = vmatprep.subr.mxu0 0.0
      %3409 = vmatpush1.msra.mxu0 0.0
      %3410 = vmatprep.subr.mxu0 0.0
      %3411 = vmatpush1.msra.mxu0 0.0
      %3412 = vmatprep.subr.mxu0 0.0
      %3413 = vmatpush1.msra.mxu0 0.0
      %3414 = vmatprep.subr.mxu0 0.0
      %3415 = vmatpush1.msra.mxu0 0.0
      %3416 = vmatprep.subr.mxu0 0.0
      %3417 = vmatpush1.msra.mxu0 0.0
      %3418 = vmatprep.subr.mxu0 0.0
      %3419 = vmatpush1.msra.mxu0 0.0
      %3420 = vmatprep.subr.mxu0 0.0
      %3421 = vmatpush1.msra.mxu0 0.0
      %3422 = vmatprep.subr.mxu0 0.0
      %3423 = vmatpush1.msra.mxu0 0.0
      %3424 = vmatprep.subr.mxu0 0.0
      %3425 = vmatpush1.msra.mxu0 0.0
      %3426 = vmatprep.subr.mxu0 0.0
      %3427 = vmatpush1.msra.mxu0 0.0
      %3428 = vmatprep.subr.mxu0 0.0
      %3429 = vmatpush1.msra.mxu0 0.0
      %3430 = vmatprep.subr.mxu0 0.0
      %3431 = vmatpush1.msra.mxu0 0.0
      %3432 = vmatprep.subr.mxu0 0.0
      %3433 = vmatpush1.msra.mxu0 0.0
      %3434 = vmatprep.subr.mxu0 0.0
      %3435 = vmatpush1.msra.mxu0 0.0
      %3436 = vmatprep.subr.mxu0 0.0
      %3437 = vmatpush1.msra.mxu0 0.0
      %3438 = vmatprep.subr.mxu0 0.0
      %3439 = vmatpush1.msra.mxu0 0.0
      %3440 = vmatprep.subr.mxu0 0.0
      %3441 = vmatpush1.msra.mxu0 0.0
      %3442 = vmatprep.subr.mxu0 0.0
      %3443 = vmatpush1.msra.mxu0 0.0
      %3444 = vmatprep.subr.mxu0 0.0
      %3445 = vmatpush1.msra.mxu0 0.0
      %3446 = vmatprep.mubr.f32.mxu0 0.0
      %3447 = vmatmul.mubr.f32.gmra.mrb[0].mxu0 %v2323
      %v3448 = vpop.f32.mrb[0].mxu0
      %v3449 = vadd.f32 0.0, %v3448
      %v3450 = vpop.f32.mrb[0].mxu0
      %v3451 = vadd.f32 0.0, %v3450
      %3452 = vmatprep.mubr.f32.mxu0 0.0
      %3453 = vmatmul.mubr.f32.gmra.mrb[0].mxu0 %v2326
      %v3454 = vpop.f32.mrb[0].mxu0
      %v3455 = vadd.f32 0.0, %v3454
      %v3456 = vpop.f32.mrb[0].mxu0
      %v3457 = vadd.f32 0.0, %v3456
      %3458 = vmatprep.mubr.f32.mxu0 0.0
      %3459 = vmatmul.mubr.f32.gmra.mrb[0].mxu0 %v2329
      %v3460 = vpop.f32.mrb[0].mxu0
      %v3461 = vadd.f32 0.0, %v3460
      %v3462 = vpop.f32.mrb[0].mxu0
      %v3463 = vadd.f32 0.0, %v3462
      %3464 = vmatprep.mubr.f32.mxu0 0.0
      %3465 = vmatmul.mubr.f32.gmra.mrb[0].mxu0 %v2332
      %v3466 = vpop.f32.mrb[0].mxu0
      %v3467 = vadd.f32 0.0, %v3466
      %v3468 = vpop.f32.mrb[0].mxu0
      %v3469 = vadd.f32 0.0, %v3468
      %3470 = vmatprep.mubr.f32.mxu0 0.0
      %3471 = vmatmul.mubr.f32.gmra.mrb[0].mxu0 %v2335
      %v3472 = vpop.f32.mrb[0].mxu0
      %v3473 = vadd.f32 0.0, %v3472
      %v3474 = vpop.f32.mrb[0].mxu0
      %v3475 = vadd.f32 0.0, %v3474
      %3476 = vmatprep.mubr.f32.mxu0 0.0
      %3477 = vmatmul.mubr.f32.gmra.mrb[0].mxu0 %v2338
      %v3478 = vpop.f32.mrb[0].mxu0
      %v3479 = vadd.f32 0.0, %v3478
      %v3480 = vpop.f32.mrb[0].mxu0
      %v3481 = vadd.f32 0.0, %v3480
      %3482 = vmatprep.mubr.f32.mxu0 0.0
      %3483 = vmatmul.mubr.f32.gmra.mrb[0].mxu0 %v2341
      %v3484 = vpop.f32.mrb[0].mxu0
      %v3485 = vadd.f32 0.0, %v3484
      %v3486 = vpop.f32.mrb[0].mxu0
      %v3487 = vadd.f32 0.0, %v3486
      %3488 = vmatprep.mubr.f32.mxu0 0.0
      %3489 = vmatmul.mubr.f32.gmra.mrb[0].mxu0 %v2344
      %v3490 = vpop.f32.mrb[0].mxu0
      %v3491 = vadd.f32 0.0, %v3490
      %v3492 = vpop.f32.mrb[0].mxu0
      %v3493 = vadd.f32 0.0, %v3492
      %3494 = vmatprep.mubr.f32.mxu0 0.0
      %3495 = vmatmul.mubr.f32.gmra.mrb[0].mxu0 %v2347
      %v3496 = vpop.f32.mrb[0].mxu0
      %v3497 = vadd.f32 0.0, %v3496
      %v3498 = vpop.f32.mrb[0].mxu0
      %v3499 = vadd.f32 0.0, %v3498
      %3500 = vdwg.mxu0
      %3501 = vrot.lane.b32.xlu0 %v3330, 17
      %v3502 = vpop.permute.xlu0 %3501
      %3503 = vrot.lane.b32.xlu0 %v3332, 17
      %v3504 = vpop.permute.xlu0 %3503
      %3505 = vrot.lane.b32.xlu0 %v3449, 17
      %v3506 = vpop.permute.xlu0 %3505
      %3507 = vrot.lane.b32.xlu0 %v3451, 17
      %v3508 = vpop.permute.xlu0 %3507
      %v3509 = vsel %vm519, %v3506, %v3508
      %v3510 = vsel %vm519, %v3504, %v3506
      %v3511 = vsel %vm519, %v3502, %v3504
      %v3512 = vsel %vm519, %v3508, %v3502
      %v3513 = vmul.f32 %v3512, %v2610
      %v3514 = vmul.f32 %v3511, %v2614
      %v3515 = vmul.f32 %v3510, %v2618
      %v3516 = vmul.f32 %v3509, %v2622
      %v3517 = vadd.f32 %v3354, %v3513
      %v3518 = vadd.f32 %v3356, %v3514
      %v3519 = vadd.f32 %v3473, %v3515
      %v3520 = vadd.f32 %v3475, %v3516
      %3521 = vrot.lane.b32.xlu0 %v3336, 16
      %v3522 = vpop.permute.xlu0 %3521
      %3523 = vrot.lane.b32.xlu0 %v3338, 16
      %v3524 = vpop.permute.xlu0 %3523
      %3525 = vrot.lane.b32.xlu0 %v3455, 16
      %v3526 = vpop.permute.xlu0 %3525
      %3527 = vrot.lane.b32.xlu0 %v3457, 16
      %v3528 = vpop.permute.xlu0 %3527
      %v3529 = vsel %vm556, %v3526, %v3528
      %v3530 = vsel %vm556, %v3524, %v3526
      %v3531 = vsel %vm556, %v3522, %v3524
      %v3532 = vsel %vm556, %v3528, %v3522
      %v3533 = vmul.f32 %v3532, %v2646
      %v3534 = vmul.f32 %v3531, %v2650
      %v3535 = vmul.f32 %v3530, %v2654
      %v3536 = vmul.f32 %v3529, %v2658
      %v3537 = vadd.f32 %v3517, %v3533
      %v3538 = vadd.f32 %v3518, %v3534
      %v3539 = vadd.f32 %v3519, %v3535
      %v3540 = vadd.f32 %v3520, %v3536
      %3541 = vrot.lane.b32.xlu0 %v3342, 15
      %v3542 = vpop.permute.xlu0 %3541
      %3543 = vrot.lane.b32.xlu0 %v3344, 15
      %v3544 = vpop.permute.xlu0 %3543
      %3545 = vrot.lane.b32.xlu0 %v3461, 15
      %v3546 = vpop.permute.xlu0 %3545
      %3547 = vrot.lane.b32.xlu0 %v3463, 15
      %v3548 = vpop.permute.xlu0 %3547
      %v3549 = vsel %vm593, %v3546, %v3548
      %v3550 = vsel %vm593, %v3544, %v3546
      %v3551 = vsel %vm593, %v3542, %v3544
      %v3552 = vsel %vm593, %v3548, %v3542
      %v3553 = vmul.f32 %v3552, %v2682
      %v3554 = vmul.f32 %v3551, %v2686
      %v3555 = vmul.f32 %v3550, %v2690
      %v3556 = vmul.f32 %v3549, %v2694
      %v3557 = vadd.f32 %v3537, %v3553
      %v3558 = vadd.f32 %v3538, %v3554
      %v3559 = vadd.f32 %v3539, %v3555
      %v3560 = vadd.f32 %v3540, %v3556
      %3561 = vrot.lane.b32.xlu0 %v3348, 1
      %v3562 = vpop.permute.xlu0 %3561
      %3563 = vrot.lane.b32.xlu0 %v3350, 1
      %v3564 = vpop.permute.xlu0 %3563
      %3565 = vrot.lane.b32.xlu0 %v3467, 1
      %v3566 = vpop.permute.xlu0 %3565
      %3567 = vrot.lane.b32.xlu0 %v3469, 1
      %v3568 = vpop.permute.xlu0 %3567
      %v3569 = vsel %vm630, %v3566, %v3568
      %v3570 = vsel %vm630, %v3564, %v3566
      %v3571 = vsel %vm630, %v3562, %v3564
      %v3572 = vsel %vm630, %v3568, %v3562
      %v3573 = vmul.f32 %v3572, %v2718
      %v3574 = vmul.f32 %v3571, %v2722
      %v3575 = vmul.f32 %v3570, %v2726
      %v3576 = vmul.f32 %v3569, %v2730
      %v3577 = vadd.f32 %v3557, %v3573
      %v3578 = vadd.f32 %v3558, %v3574
      %v3579 = vadd.f32 %v3559, %v3575
      %v3580 = vadd.f32 %v3560, %v3576
      %3581 = vrot.lane.b32.xlu0 %v3360, 127
      %v3582 = vpop.permute.xlu0 %3581
      %3583 = vrot.lane.b32.xlu0 %v3362, 127
      %v3584 = vpop.permute.xlu0 %3583
      %3585 = vrot.lane.b32.xlu0 %v3479, 127
      %v3586 = vpop.permute.xlu0 %3585
      %3587 = vrot.lane.b32.xlu0 %v3481, 127
      %v3588 = vpop.permute.xlu0 %3587
      %v3589 = vsel %vm667, %v3586, %v3588
      %v3590 = vsel %vm667, %v3584, %v3586
      %v3591 = vsel %vm667, %v3582, %v3584
      %v3592 = vsel %vm667, %v3588, %v3582
      %v3593 = vmul.f32 %v3591, %v2754
      %v3594 = vmul.f32 %v3590, %v2758
      %v3595 = vmul.f32 %v3589, %v2762
      %v3596 = vmul.f32 %v3592, %v2766
      %v3597 = vadd.f32 %v3577, %v3593
      %v3598 = vadd.f32 %v3578, %v3594
      %v3599 = vadd.f32 %v3579, %v3595
      %v3600 = vadd.f32 %v3580, %v3596
      %3601 = vrot.lane.b32.xlu0 %v3366, 113
      %v3602 = vpop.permute.xlu0 %3601
      %3603 = vrot.lane.b32.xlu0 %v3368, 113
      %v3604 = vpop.permute.xlu0 %3603
      %3605 = vrot.lane.b32.xlu0 %v3485, 113
      %v3606 = vpop.permute.xlu0 %3605
      %3607 = vrot.lane.b32.xlu0 %v3487, 113
      %v3608 = vpop.permute.xlu0 %3607
      %v3609 = vsel %vm704, %v3606, %v3608
      %v3610 = vsel %vm704, %v3604, %v3606
      %v3611 = vsel %vm704, %v3602, %v3604
      %v3612 = vsel %vm704, %v3608, %v3602
      %v3613 = vmul.f32 %v3611, %v2790
      %v3614 = vmul.f32 %v3610, %v2794
      %v3615 = vmul.f32 %v3609, %v2798
      %v3616 = vmul.f32 %v3612, %v2802
      %v3617 = vadd.f32 %v3597, %v3613
      %v3618 = vadd.f32 %v3598, %v3614
      %v3619 = vadd.f32 %v3599, %v3615
      %v3620 = vadd.f32 %v3600, %v3616
      %3621 = vrot.lane.b32.xlu0 %v3372, 112
      %v3622 = vpop.permute.xlu0 %3621
      %3623 = vrot.lane.b32.xlu0 %v3374, 112
      %v3624 = vpop.permute.xlu0 %3623
      %3625 = vrot.lane.b32.xlu0 %v3491, 112
      %v3626 = vpop.permute.xlu0 %3625
      %3627 = vrot.lane.b32.xlu0 %v3493, 112
      %v3628 = vpop.permute.xlu0 %3627
      %v3629 = vsel %vm741, %v3626, %v3628
      %v3630 = vsel %vm741, %v3624, %v3626
      %v3631 = vsel %vm741, %v3622, %v3624
      %v3632 = vsel %vm741, %v3628, %v3622
      %v3633 = vmul.f32 %v3631, %v2826
      %v3634 = vmul.f32 %v3630, %v2830
      %v3635 = vmul.f32 %v3629, %v2834
      %v3636 = vmul.f32 %v3632, %v2838
      %v3637 = vadd.f32 %v3617, %v3633
      %v3638 = vadd.f32 %v3618, %v3634
      %v3639 = vadd.f32 %v3619, %v3635
      %v3640 = vadd.f32 %v3620, %v3636
      %3641 = vrot.lane.b32.xlu0 %v3378, 111
      %v3642 = vpop.permute.xlu0 %3641
      %3643 = vrot.lane.b32.xlu0 %v3380, 111
      %v3644 = vpop.permute.xlu0 %3643
      %3645 = vrot.lane.b32.xlu0 %v3497, 111
      %v3646 = vpop.permute.xlu0 %3645
      %3647 = vrot.lane.b32.xlu0 %v3499, 111
      %v3648 = vpop.permute.xlu0 %3647
      %v3649 = vsel %vm778, %v3646, %v3648
      %v3650 = vsel %vm778, %v3644, %v3646
      %v3651 = vsel %vm778, %v3642, %v3644
      %v3652 = vsel %vm778, %v3648, %v3642
      %v3653 = vmul.f32 %v3651, %v2862
      %v3654 = vmul.f32 %v3650, %v2866
      %v3655 = vmul.f32 %v3649, %v2870
      %v3656 = vmul.f32 %v3652, %v2874
      %v3657 = vadd.f32 %v3637, %v3653
      %v3658 = vadd.f32 %v3638, %v3654
      %v3659 = vadd.f32 %v3639, %v3655
      %v3660 = vadd.f32 %v3640, %v3656
      %v3661 = vmul.f32 %v3094, %v2883
      %v3662 = vmul.f32 %v3094, %v2884
      %v3663 = vmul.f32 %v3094, %v2885
      %v3664 = vmul.f32 %v3094, %v2886
      %v3665 = vadd.f32 %v3657, %v3661
      %v3666 = vadd.f32 %v3658, %v3662
      %v3667 = vadd.f32 %v3659, %v3663
      %v3668 = vadd.f32 %v3660, %v3664
      %v3669 = vadd.f32 %v3665, %v2899
      %v3670 = vadd.f32 %v3666, %v2899
      %v3671 = vadd.f32 %v3667, %v2899
      %v3672 = vadd.f32 %v3668, %v2899
      %v3673 = vmax.f32 %v3669, 0.0
      %v3674 = vmax.f32 %v3670, 0.0
      %v3675 = vmax.f32 %v3671, 0.0
      %v3676 = vmax.f32 %v3672, 0.0
      %v3677 = vmul.f32 %v3094, %v2910
      %3679 = vset.pattern.permute.xlu0 0
      %3680 = vperm.xlu0 %3679, %v3677
      %v3681 = vpop.permute.xlu0 %3680
      %3683 = vmatprep.subr.mxu0 %v3674
      %3684 = vmatpush1.msra.mxu0 %v3673
      %3685 = vmatprep.subr.mxu0 0.0
      %3686 = vmatpush1.msra.mxu0 0.0
      %3687 = vmatprep.subr.mxu0 0.0
      %3688 = vmatpush1.msra.mxu0 0.0
      %3689 = vmatprep.subr.mxu0 0.0
      %3690 = vmatpush1.msra.mxu0 0.0
      %3691 = vmatprep.subr.mxu0 0.0
      %3692 = vmatpush1.msra.mxu0 0.0
      %3693 = vmatprep.subr.mxu0 0.0
      %3694 = vmatpush1.msra.mxu0 0.0
      %3695 = vmatprep.subr.mxu0 0.0
      %3696 = vmatpush1.msra.mxu0 0.0
      %3697 = vmatprep.subr.mxu0 0.0
      %3698 = vmatpush1.msra.mxu0 0.0
      %3699 = vmatprep.subr.mxu0 0.0
      %3700 = vmatpush1.msra.mxu0 0.0
      %3701 = vmatprep.subr.mxu0 0.0
      %3702 = vmatpush1.msra.mxu0 0.0
      %3703 = vmatprep.subr.mxu0 0.0
      %3704 = vmatpush1.msra.mxu0 0.0
      %3705 = vmatprep.subr.mxu0 0.0
      %3706 = vmatpush1.msra.mxu0 0.0
      %3707 = vmatprep.subr.mxu0 0.0
      %3708 = vmatpush1.msra.mxu0 0.0
      %3709 = vmatprep.subr.mxu0 0.0
      %3710 = vmatpush1.msra.mxu0 0.0
      %3711 = vmatprep.subr.mxu0 0.0
      %3712 = vmatpush1.msra.mxu0 0.0
      %3713 = vmatprep.subr.mxu0 0.0
      %3714 = vmatpush1.msra.mxu0 0.0
      %3715 = vmatprep.subr.mxu0 0.0
      %3716 = vmatpush1.msra.mxu0 0.0
      %3717 = vmatprep.subr.mxu0 0.0
      %3718 = vmatpush1.msra.mxu0 0.0
      %3719 = vmatprep.subr.mxu0 0.0
      %3720 = vmatpush1.msra.mxu0 0.0
      %3721 = vmatprep.subr.mxu0 0.0
      %3722 = vmatpush1.msra.mxu0 0.0
      %3723 = vmatprep.subr.mxu0 0.0
      %3724 = vmatpush1.msra.mxu0 0.0
      %3725 = vmatprep.subr.mxu0 0.0
      %3726 = vmatpush1.msra.mxu0 0.0
      %3727 = vmatprep.subr.mxu0 0.0
      %3728 = vmatpush1.msra.mxu0 0.0
      %3729 = vmatprep.subr.mxu0 0.0
      %3730 = vmatpush1.msra.mxu0 0.0
      %3731 = vmatprep.subr.mxu0 0.0
      %3732 = vmatpush1.msra.mxu0 0.0
      %3733 = vmatprep.subr.mxu0 0.0
      %3734 = vmatpush1.msra.mxu0 0.0
      %3735 = vmatprep.subr.mxu0 0.0
      %3736 = vmatpush1.msra.mxu0 0.0
      %3737 = vmatprep.subr.mxu0 0.0
      %3738 = vmatpush1.msra.mxu0 0.0
      %3739 = vmatprep.subr.mxu0 0.0
      %3740 = vmatpush1.msra.mxu0 0.0
      %3741 = vmatprep.subr.mxu0 0.0
      %3742 = vmatpush1.msra.mxu0 0.0
      %3743 = vmatprep.subr.mxu0 0.0
      %3744 = vmatpush1.msra.mxu0 0.0
      %3745 = vmatprep.subr.mxu0 0.0
      %3746 = vmatpush1.msra.mxu0 0.0
      %3747 = vmatprep.mubr.f32.mxu0 0.0
      %3748 = vmatmul.mubr.f32.gmra.mrb[0].mxu0 %v2918
      %v3749 = vpop.f32.mrb[0].mxu0
      %v3750 = vadd.f32 %v3681, %v3749
      %v3751 = vpop.f32.mrb[0].mxu0
      %v3752 = vadd.f32 %v3681, %v3751
      %3753 = vdwg.mxu0
      %3754 = vmatprep.subr.mxu0 %v3676
      %3755 = vmatpush1.msra.mxu0 %v3675
      %3756 = vmatprep.subr.mxu0 0.0
      %3757 = vmatpush1.msra.mxu0 0.0
      %3758 = vmatprep.subr.mxu0 0.0
      %3759 = vmatpush1.msra.mxu0 0.0
      %3760 = vmatprep.subr.mxu0 0.0
      %3761 = vmatpush1.msra.mxu0 0.0
      %3762 = vmatprep.subr.mxu0 0.0
      %3763 = vmatpush1.msra.mxu0 0.0
      %3764 = vmatprep.subr.mxu0 0.0
      %3765 = vmatpush1.msra.mxu0 0.0
      %3766 = vmatprep.subr.mxu0 0.0
      %3767 = vmatpush1.msra.mxu0 0.0
      %3768 = vmatprep.subr.mxu0 0.0
      %3769 = vmatpush1.msra.mxu0 0.0
      %3770 = vmatprep.subr.mxu0 0.0
      %3771 = vmatpush1.msra.mxu0 0.0
      %3772 = vmatprep.subr.mxu0 0.0
      %3773 = vmatpush1.msra.mxu0 0.0
      %3774 = vmatprep.subr.mxu0 0.0
      %3775 = vmatpush1.msra.mxu0 0.0
      %3776 = vmatprep.subr.mxu0 0.0
      %3777 = vmatpush1.msra.mxu0 0.0
      %3778 = vmatprep.subr.mxu0 0.0
      %3779 = vmatpush1.msra.mxu0 0.0
      %3780 = vmatprep.subr.mxu0 0.0
      %3781 = vmatpush1.msra.mxu0 0.0
      %3782 = vmatprep.subr.mxu0 0.0
      %3783 = vmatpush1.msra.mxu0 0.0
      %3784 = vmatprep.subr.mxu0 0.0
      %3785 = vmatpush1.msra.mxu0 0.0
      %3786 = vmatprep.subr.mxu0 0.0
      %3787 = vmatpush1.msra.mxu0 0.0
      %3788 = vmatprep.subr.mxu0 0.0
      %3789 = vmatpush1.msra.mxu0 0.0
      %3790 = vmatprep.subr.mxu0 0.0
      %3791 = vmatpush1.msra.mxu0 0.0
      %3792 = vmatprep.subr.mxu0 0.0
      %3793 = vmatpush1.msra.mxu0 0.0
      %3794 = vmatprep.subr.mxu0 0.0
      %3795 = vmatpush1.msra.mxu0 0.0
      %3796 = vmatprep.subr.mxu0 0.0
      %3797 = vmatpush1.msra.mxu0 0.0
      %3798 = vmatprep.subr.mxu0 0.0
      %3799 = vmatpush1.msra.mxu0 0.0
      %3800 = vmatprep.subr.mxu0 0.0
      %3801 = vmatpush1.msra.mxu0 0.0
      %3802 = vmatprep.subr.mxu0 0.0
      %3803 = vmatpush1.msra.mxu0 0.0
      %3804 = vmatprep.subr.mxu0 0.0
      %3805 = vmatpush1.msra.mxu0 0.0
      %3806 = vmatprep.subr.mxu0 0.0
      %3807 = vmatpush1.msra.mxu0 0.0
      %3808 = vmatprep.subr.mxu0 0.0
      %3809 = vmatpush1.msra.mxu0 0.0
      %3810 = vmatprep.subr.mxu0 0.0
      %3811 = vmatpush1.msra.mxu0 0.0
      %3812 = vmatprep.subr.mxu0 0.0
      %3813 = vmatpush1.msra.mxu0 0.0
      %3814 = vmatprep.subr.mxu0 0.0
      %3815 = vmatpush1.msra.mxu0 0.0
      %3816 = vmatprep.subr.mxu0 0.0
      %3817 = vmatpush1.msra.mxu0 0.0
      %3818 = vmatprep.mubr.f32.mxu0 0.0
      %3819 = vmatmul.mubr.f32.gmra.mrb[0].mxu0 %v2918
      %v3820 = vpop.f32.mrb[0].mxu0
      %v3821 = vadd.f32 %v3681, %v3820
      %v3822 = vpop.f32.mrb[0].mxu0
      %v3823 = vadd.f32 %v3681, %v3822
      %3824 = vdwg.mxu0
      %v3825 = vadd.f32 %v3750, %v3066
      %v3826 = vadd.f32 %v3752, %v3066
      %v3827 = vadd.f32 %v3821, %v3066
      %v3828 = vadd.f32 %v3823, %v3066
      %s3829 = smul.f32 %s2121, 0.8
      %s3830 = sadd.f32 %s2108, %s3829
      %v3831 = vmul.f32 %v2122, 0.9777778
      %v3832 = vmul.f32 %v2123, 0.9777778
      %v3833 = vmul.f32 %v3068, -3.7333333
      %v3834 = vmul.f32 %v3069, -3.7333333
      %v3835 = vmul.f32 %v3070, -3.7333333
      %v3836 = vmul.f32 %v3071, -3.7333333
      %v3841 = vcombine.low %v3833, %v3834
      %v3842 = vcombine.low %v3835, %v3836
      %v3845 = vadd.f32 %v3831, %v3841
      %v3846 = vadd.f32 %v3832, %v3842
      %v3847 = vmul.f32 %v3825, 3.5555556
      %v3848 = vmul.f32 %v3826, 3.5555556
      %v3849 = vmul.f32 %v3827, 3.5555556
      %v3850 = vmul.f32 %v3828, 3.5555556
      %v3855 = vcombine.low %v3847, %v3848
      %v3856 = vcombine.low %v3849, %v3850
      %v3859 = vadd.f32 %v3845, %v3855
      %v3860 = vadd.f32 %v3846, %v3856
      %v3861 = vmul.f32 %v2128, %v3859
      %v3862 = vmul.f32 %v2128, %v3860
      %v3863 = vadd.f32 %v2118, %v3861
      %v3864 = vadd.f32 %v2119, %v3862
      %v3865 = vstv %s3830
      %v3866 = vmul.f32 %v3865, %v2134
      %3868 = vset.pattern.permute.xlu0 0
      %3869 = vperm.xlu0 %3868, %v3866
      %v3870 = vpop.permute.xlu0 %3869
      %v3874 = vcombine.high %v3863, %v3863
      %v3875 = vcombine.high %v3864, %v3864
      %v3876 = vsel %vm61, %v3863, 0
      %v3878 = vsel %vm61, %v3874, 0
      %v3880 = vsel %vm61, %v3864, 0
      %v3882 = vsel %vm61, %v3875, 0
      %3884 = vmatprep.subr.mxu0 %v3878
      %3885 = vmatpush1.msra.mxu0 %v3876
      %3886 = vmatprep.subr.mxu0 0.0
      %3887 = vmatpush1.msra.mxu0 0.0
      %3888 = vmatprep.subr.mxu0 0.0
      %3889 = vmatpush1.msra.mxu0 0.0
      %3890 = vmatprep.subr.mxu0 0.0
      %3891 = vmatpush1.msra.mxu0 0.0
      %3892 = vmatprep.subr.mxu0 0.0
      %3893 = vmatpush1.msra.mxu0 0.0
      %3894 = vmatprep.subr.mxu0 0.0
      %3895 = vmatpush1.msra.mxu0 0.0
      %3896 = vmatprep.subr.mxu0 0.0
      %3897 = vmatpush1.msra.mxu0 0.0
      %3898 = vmatprep.subr.mxu0 0.0
      %3899 = vmatpush1.msra.mxu0 0.0
      %3900 = vmatprep.subr.mxu0 0.0
      %3901 = vmatpush1.msra.mxu0 0.0
      %3902 = vmatprep.subr.mxu0 0.0
      %3903 = vmatpush1.msra.mxu0 0.0
      %3904 = vmatprep.subr.mxu0 0.0
      %3905 = vmatpush1.msra.mxu0 0.0
      %3906 = vmatprep.subr.mxu0 0.0
      %3907 = vmatpush1.msra.mxu0 0.0
      %3908 = vmatprep.subr.mxu0 0.0
      %3909 = vmatpush1.msra.mxu0 0.0
      %3910 = vmatprep.subr.mxu0 0.0
      %3911 = vmatpush1.msra.mxu0 0.0
      %3912 = vmatprep.subr.mxu0 0.0
      %3913 = vmatpush1.msra.mxu0 0.0
      %3914 = vmatprep.subr.mxu0 0.0
      %3915 = vmatpush1.msra.mxu0 0.0
      %3916 = vmatprep.subr.mxu0 0.0
      %3917 = vmatpush1.msra.mxu0 0.0
      %3918 = vmatprep.subr.mxu0 0.0
      %3919 = vmatpush1.msra.mxu0 0.0
      %3920 = vmatprep.subr.mxu0 0.0
      %3921 = vmatpush1.msra.mxu0 0.0
      %3922 = vmatprep.subr.mxu0 0.0
      %3923 = vmatpush1.msra.mxu0 0.0
      %3924 = vmatprep.subr.mxu0 0.0
      %3925 = vmatpush1.msra.mxu0 0.0
      %3926 = vmatprep.subr.mxu0 0.0
      %3927 = vmatpush1.msra.mxu0 0.0
      %3928 = vmatprep.subr.mxu0 0.0
      %3929 = vmatpush1.msra.mxu0 0.0
      %3930 = vmatprep.subr.mxu0 0.0
      %3931 = vmatpush1.msra.mxu0 0.0
      %3932 = vmatprep.subr.mxu0 0.0
      %3933 = vmatpush1.msra.mxu0 0.0
      %3934 = vmatprep.subr.mxu0 0.0
      %3935 = vmatpush1.msra.mxu0 0.0
      %3936 = vmatprep.subr.mxu0 0.0
      %3937 = vmatpush1.msra.mxu0 0.0
      %3938 = vmatprep.subr.mxu0 0.0
      %3939 = vmatpush1.msra.mxu0 0.0
      %3940 = vmatprep.subr.mxu0 0.0
      %3941 = vmatpush1.msra.mxu0 0.0
      %3942 = vmatprep.subr.mxu0 0.0
      %3943 = vmatpush1.msra.mxu0 0.0
      %3944 = vmatprep.subr.mxu0 0.0
      %3945 = vmatpush1.msra.mxu0 0.0
      %3946 = vmatprep.subr.mxu0 0.0
      %3947 = vmatpush1.msra.mxu0 0.0
      %3948 = vmatprep.mubr.f32.mxu0 0.0
      %3949 = vmatmul.mubr.f32.gmra.mrb[0].mxu0 %v2147
      %v3950 = vpop.f32.mrb[0].mxu0
      %v3951 = vadd.f32 %v3870, %v3950
      %v3952 = vpop.f32.mrb[0].mxu0
      %v3953 = vadd.f32 %v3870, %v3952
      %3954 = vdwg.mxu0
      %3955 = vmatprep.subr.mxu0 %v3882
      %3956 = vmatpush1.msra.mxu0 %v3880
      %3957 = vmatprep.subr.mxu0 0.0
      %3958 = vmatpush1.msra.mxu0 0.0
      %3959 = vmatprep.subr.mxu0 0.0
      %3960 = vmatpush1.msra.mxu0 0.0
      %3961 = vmatprep.subr.mxu0 0.0
      %3962 = vmatpush1.msra.mxu0 0.0
      %3963 = vmatprep.subr.mxu0 0.0
      %3964 = vmatpush1.msra.mxu0 0.0
      %3965 = vmatprep.subr.mxu0 0.0
      %3966 = vmatpush1.msra.mxu0 0.0
      %3967 = vmatprep.subr.mxu0 0.0
      %3968 = vmatpush1.msra.mxu0 0.0
      %3969 = vmatprep.subr.mxu0 0.0
      %3970 = vmatpush1.msra.mxu0 0.0
      %3971 = vmatprep.subr.mxu0 0.0
      %3972 = vmatpush1.msra.mxu0 0.0
      %3973 = vmatprep.subr.mxu0 0.0
      %3974 = vmatpush1.msra.mxu0 0.0
      %3975 = vmatprep.subr.mxu0 0.0
      %3976 = vmatpush1.msra.mxu0 0.0
      %3977 = vmatprep.subr.mxu0 0.0
      %3978 = vmatpush1.msra.mxu0 0.0
      %3979 = vmatprep.subr.mxu0 0.0
      %3980 = vmatpush1.msra.mxu0 0.0
      %3981 = vmatprep.subr.mxu0 0.0
      %3982 = vmatpush1.msra.mxu0 0.0
      %3983 = vmatprep.subr.mxu0 0.0
      %3984 = vmatpush1.msra.mxu0 0.0
      %3985 = vmatprep.subr.mxu0 0.0
      %3986 = vmatpush1.msra.mxu0 0.0
      %3987 = vmatprep.subr.mxu0 0.0
      %3988 = vmatpush1.msra.mxu0 0.0
      %3989 = vmatprep.subr.mxu0 0.0
      %3990 = vmatpush1.msra.mxu0 0.0
      %3991 = vmatprep.subr.mxu0 0.0
      %3992 = vmatpush1.msra.mxu0 0.0
      %3993 = vmatprep.subr.mxu0 0.0
      %3994 = vmatpush1.msra.mxu0 0.0
      %3995 = vmatprep.subr.mxu0 0.0
      %3996 = vmatpush1.msra.mxu0 0.0
      %3997 = vmatprep.subr.mxu0 0.0
      %3998 = vmatpush1.msra.mxu0 0.0
      %3999 = vmatprep.subr.mxu0 0.0
      %4000 = vmatpush1.msra.mxu0 0.0
      %4001 = vmatprep.subr.mxu0 0.0
      %4002 = vmatpush1.msra.mxu0 0.0
      %4003 = vmatprep.subr.mxu0 0.0
      %4004 = vmatpush1.msra.mxu0 0.0
      %4005 = vmatprep.subr.mxu0 0.0
      %4006 = vmatpush1.msra.mxu0 0.0
      %4007 = vmatprep.subr.mxu0 0.0
      %4008 = vmatpush1.msra.mxu0 0.0
      %4009 = vmatprep.subr.mxu0 0.0
      %4010 = vmatpush1.msra.mxu0 0.0
      %4011 = vmatprep.subr.mxu0 0.0
      %4012 = vmatpush1.msra.mxu0 0.0
      %4013 = vmatprep.subr.mxu0 0.0
      %4014 = vmatpush1.msra.mxu0 0.0
      %4015 = vmatprep.subr.mxu0 0.0
      %4016 = vmatpush1.msra.mxu0 0.0
      %4017 = vmatprep.subr.mxu0 0.0
      %4018 = vmatpush1.msra.mxu0 0.0
      %4019 = vmatprep.mubr.f32.mxu0 0.0
      %4020 = vmatmul.mubr.f32.gmra.mrb[0].mxu0 %v2147
      %v4021 = vpop.f32.mrb[0].mxu0
      %v4022 = vadd.f32 %v3870, %v4021
      %v4023 = vpop.f32.mrb[0].mxu0
      %v4024 = vadd.f32 %v3870, %v4023
      %4025 = vdwg.mxu0
      %v4026 = vadd.f32 %v3951, %v2303
      %v4027 = vadd.f32 %v3953, %v2303
      %v4028 = vadd.f32 %v4022, %v2303
      %v4029 = vadd.f32 %v4024, %v2303
      %v4030 = vmax.f32 %v4026, 0.0
      %v4031 = vmax.f32 %v4027, 0.0
      %v4032 = vmax.f32 %v4028, 0.0
      %v4033 = vmax.f32 %v4029, 0.0
      %4034 = vmatprep.subr.mxu0 %v4031
      %4035 = vmatpush1.msra.mxu0 %v4030
      %4036 = vmatprep.subr.mxu0 0.0
      %4037 = vmatpush1.msra.mxu0 0.0
      %4038 = vmatprep.subr.mxu0 0.0
      %4039 = vmatpush1.msra.mxu0 0.0
      %4040 = vmatprep.subr.mxu0 0.0
      %4041 = vmatpush1.msra.mxu0 0.0
      %4042 = vmatprep.subr.mxu0 0.0
      %4043 = vmatpush1.msra.mxu0 0.0
      %4044 = vmatprep.subr.mxu0 0.0
      %4045 = vmatpush1.msra.mxu0 0.0
      %4046 = vmatprep.subr.mxu0 0.0
      %4047 = vmatpush1.msra.mxu0 0.0
      %4048 = vmatprep.subr.mxu0 0.0
      %4049 = vmatpush1.msra.mxu0 0.0
      %4050 = vmatprep.subr.mxu0 0.0
      %4051 = vmatpush1.msra.mxu0 0.0
      %4052 = vmatprep.subr.mxu0 0.0
      %4053 = vmatpush1.msra.mxu0 0.0
      %4054 = vmatprep.subr.mxu0 0.0
      %4055 = vmatpush1.msra.mxu0 0.0
      %4056 = vmatprep.subr.mxu0 0.0
      %4057 = vmatpush1.msra.mxu0 0.0
      %4058 = vmatprep.subr.mxu0 0.0
      %4059 = vmatpush1.msra.mxu0 0.0
      %4060 = vmatprep.subr.mxu0 0.0
      %4061 = vmatpush1.msra.mxu0 0.0
      %4062 = vmatprep.subr.mxu0 0.0
      %4063 = vmatpush1.msra.mxu0 0.0
      %4064 = vmatprep.subr.mxu0 0.0
      %4065 = vmatpush1.msra.mxu0 0.0
      %4066 = vmatprep.subr.mxu0 0.0
      %4067 = vmatpush1.msra.mxu0 0.0
      %4068 = vmatprep.subr.mxu0 0.0
      %4069 = vmatpush1.msra.mxu0 0.0
      %4070 = vmatprep.subr.mxu0 0.0
      %4071 = vmatpush1.msra.mxu0 0.0
      %4072 = vmatprep.subr.mxu0 0.0
      %4073 = vmatpush1.msra.mxu0 0.0
      %4074 = vmatprep.subr.mxu0 0.0
      %4075 = vmatpush1.msra.mxu0 0.0
      %4076 = vmatprep.subr.mxu0 0.0
      %4077 = vmatpush1.msra.mxu0 0.0
      %4078 = vmatprep.subr.mxu0 0.0
      %4079 = vmatpush1.msra.mxu0 0.0
      %4080 = vmatprep.subr.mxu0 0.0
      %4081 = vmatpush1.msra.mxu0 0.0
      %4082 = vmatprep.subr.mxu0 0.0
      %4083 = vmatpush1.msra.mxu0 0.0
      %4084 = vmatprep.subr.mxu0 0.0
      %4085 = vmatpush1.msra.mxu0 0.0
      %4086 = vmatprep.subr.mxu0 0.0
      %4087 = vmatpush1.msra.mxu0 0.0
      %4088 = vmatprep.subr.mxu0 0.0
      %4089 = vmatpush1.msra.mxu0 0.0
      %4090 = vmatprep.subr.mxu0 0.0
      %4091 = vmatpush1.msra.mxu0 0.0
      %4092 = vmatprep.subr.mxu0 0.0
      %4093 = vmatpush1.msra.mxu0 0.0
      %4094 = vmatprep.subr.mxu0 0.0
      %4095 = vmatpush1.msra.mxu0 0.0
      %4096 = vmatprep.subr.mxu0 0.0
      %4097 = vmatpush1.msra.mxu0 0.0
      %4098 = vmatprep.mubr.f32.mxu0 0.0
      %4099 = vmatmul.mubr.f32.gmra.mrb[0].mxu0 %v2323
      %v4100 = vpop.f32.mrb[0].mxu0
      %v4101 = vadd.f32 0.0, %v4100
      %v4102 = vpop.f32.mrb[0].mxu0
      %v4103 = vadd.f32 0.0, %v4102
      %4104 = vmatprep.mubr.f32.mxu0 0.0
      %4105 = vmatmul.mubr.f32.gmra.mrb[0].mxu0 %v2326
      %v4106 = vpop.f32.mrb[0].mxu0
      %v4107 = vadd.f32 0.0, %v4106
      %v4108 = vpop.f32.mrb[0].mxu0
      %v4109 = vadd.f32 0.0, %v4108
      %4110 = vmatprep.mubr.f32.mxu0 0.0
      %4111 = vmatmul.mubr.f32.gmra.mrb[0].mxu0 %v2329
      %v4112 = vpop.f32.mrb[0].mxu0
      %v4113 = vadd.f32 0.0, %v4112
      %v4114 = vpop.f32.mrb[0].mxu0
      %v4115 = vadd.f32 0.0, %v4114
      %4116 = vmatprep.mubr.f32.mxu0 0.0
      %4117 = vmatmul.mubr.f32.gmra.mrb[0].mxu0 %v2332
      %v4118 = vpop.f32.mrb[0].mxu0
      %v4119 = vadd.f32 0.0, %v4118
      %v4120 = vpop.f32.mrb[0].mxu0
      %v4121 = vadd.f32 0.0, %v4120
      %4122 = vmatprep.mubr.f32.mxu0 0.0
      %4123 = vmatmul.mubr.f32.gmra.mrb[0].mxu0 %v2335
      %v4124 = vpop.f32.mrb[0].mxu0
      %v4125 = vadd.f32 0.0, %v4124
      %v4126 = vpop.f32.mrb[0].mxu0
      %v4127 = vadd.f32 0.0, %v4126
      %4128 = vmatprep.mubr.f32.mxu0 0.0
      %4129 = vmatmul.mubr.f32.gmra.mrb[0].mxu0 %v2338
      %v4130 = vpop.f32.mrb[0].mxu0
      %v4131 = vadd.f32 0.0, %v4130
      %v4132 = vpop.f32.mrb[0].mxu0
      %v4133 = vadd.f32 0.0, %v4132
      %4134 = vmatprep.mubr.f32.mxu0 0.0
      %4135 = vmatmul.mubr.f32.gmra.mrb[0].mxu0 %v2341
      %v4136 = vpop.f32.mrb[0].mxu0
      %v4137 = vadd.f32 0.0, %v4136
      %v4138 = vpop.f32.mrb[0].mxu0
      %v4139 = vadd.f32 0.0, %v4138
      %4140 = vmatprep.mubr.f32.mxu0 0.0
      %4141 = vmatmul.mubr.f32.gmra.mrb[0].mxu0 %v2344
      %v4142 = vpop.f32.mrb[0].mxu0
      %v4143 = vadd.f32 0.0, %v4142
      %v4144 = vpop.f32.mrb[0].mxu0
      %v4145 = vadd.f32 0.0, %v4144
      %4146 = vmatprep.mubr.f32.mxu0 0.0
      %4147 = vmatmul.mubr.f32.gmra.mrb[0].mxu0 %v2347
      %v4148 = vpop.f32.mrb[0].mxu0
      %v4149 = vadd.f32 0.0, %v4148
      %v4150 = vpop.f32.mrb[0].mxu0
      %v4151 = vadd.f32 0.0, %v4150
      %4152 = vdwg.mxu0
      %4153 = vmatprep.subr.mxu0 %v4033
      %4154 = vmatpush1.msra.mxu0 %v4032
      %4155 = vmatprep.subr.mxu0 0.0
      %4156 = vmatpush1.msra.mxu0 0.0
      %4157 = vmatprep.subr.mxu0 0.0
      %4158 = vmatpush1.msra.mxu0 0.0
      %4159 = vmatprep.subr.mxu0 0.0
      %4160 = vmatpush1.msra.mxu0 0.0
      %4161 = vmatprep.subr.mxu0 0.0
      %4162 = vmatpush1.msra.mxu0 0.0
      %4163 = vmatprep.subr.mxu0 0.0
      %4164 = vmatpush1.msra.mxu0 0.0
      %4165 = vmatprep.subr.mxu0 0.0
      %4166 = vmatpush1.msra.mxu0 0.0
      %4167 = vmatprep.subr.mxu0 0.0
      %4168 = vmatpush1.msra.mxu0 0.0
      %4169 = vmatprep.subr.mxu0 0.0
      %4170 = vmatpush1.msra.mxu0 0.0
      %4171 = vmatprep.subr.mxu0 0.0
      %4172 = vmatpush1.msra.mxu0 0.0
      %4173 = vmatprep.subr.mxu0 0.0
      %4174 = vmatpush1.msra.mxu0 0.0
      %4175 = vmatprep.subr.mxu0 0.0
      %4176 = vmatpush1.msra.mxu0 0.0
      %4177 = vmatprep.subr.mxu0 0.0
      %4178 = vmatpush1.msra.mxu0 0.0
      %4179 = vmatprep.subr.mxu0 0.0
      %4180 = vmatpush1.msra.mxu0 0.0
      %4181 = vmatprep.subr.mxu0 0.0
      %4182 = vmatpush1.msra.mxu0 0.0
      %4183 = vmatprep.subr.mxu0 0.0
      %4184 = vmatpush1.msra.mxu0 0.0
      %4185 = vmatprep.subr.mxu0 0.0
      %4186 = vmatpush1.msra.mxu0 0.0
      %4187 = vmatprep.subr.mxu0 0.0
      %4188 = vmatpush1.msra.mxu0 0.0
      %4189 = vmatprep.subr.mxu0 0.0
      %4190 = vmatpush1.msra.mxu0 0.0
      %4191 = vmatprep.subr.mxu0 0.0
      %4192 = vmatpush1.msra.mxu0 0.0
      %4193 = vmatprep.subr.mxu0 0.0
      %4194 = vmatpush1.msra.mxu0 0.0
      %4195 = vmatprep.subr.mxu0 0.0
      %4196 = vmatpush1.msra.mxu0 0.0
      %4197 = vmatprep.subr.mxu0 0.0
      %4198 = vmatpush1.msra.mxu0 0.0
      %4199 = vmatprep.subr.mxu0 0.0
      %4200 = vmatpush1.msra.mxu0 0.0
      %4201 = vmatprep.subr.mxu0 0.0
      %4202 = vmatpush1.msra.mxu0 0.0
      %4203 = vmatprep.subr.mxu0 0.0
      %4204 = vmatpush1.msra.mxu0 0.0
      %4205 = vmatprep.subr.mxu0 0.0
      %4206 = vmatpush1.msra.mxu0 0.0
      %4207 = vmatprep.subr.mxu0 0.0
      %4208 = vmatpush1.msra.mxu0 0.0
      %4209 = vmatprep.subr.mxu0 0.0
      %4210 = vmatpush1.msra.mxu0 0.0
      %4211 = vmatprep.subr.mxu0 0.0
      %4212 = vmatpush1.msra.mxu0 0.0
      %4213 = vmatprep.subr.mxu0 0.0
      %4214 = vmatpush1.msra.mxu0 0.0
      %4215 = vmatprep.subr.mxu0 0.0
      %4216 = vmatpush1.msra.mxu0 0.0
      %4217 = vmatprep.mubr.f32.mxu0 0.0
      %4218 = vmatmul.mubr.f32.gmra.mrb[0].mxu0 %v2323
      %v4219 = vpop.f32.mrb[0].mxu0
      %v4220 = vadd.f32 0.0, %v4219
      %v4221 = vpop.f32.mrb[0].mxu0
      %v4222 = vadd.f32 0.0, %v4221
      %4223 = vmatprep.mubr.f32.mxu0 0.0
      %4224 = vmatmul.mubr.f32.gmra.mrb[0].mxu0 %v2326
      %v4225 = vpop.f32.mrb[0].mxu0
      %v4226 = vadd.f32 0.0, %v4225
      %v4227 = vpop.f32.mrb[0].mxu0
      %v4228 = vadd.f32 0.0, %v4227
      %4229 = vmatprep.mubr.f32.mxu0 0.0
      %4230 = vmatmul.mubr.f32.gmra.mrb[0].mxu0 %v2329
      %v4231 = vpop.f32.mrb[0].mxu0
      %v4232 = vadd.f32 0.0, %v4231
      %v4233 = vpop.f32.mrb[0].mxu0
      %v4234 = vadd.f32 0.0, %v4233
      %4235 = vmatprep.mubr.f32.mxu0 0.0
      %4236 = vmatmul.mubr.f32.gmra.mrb[0].mxu0 %v2332
      %v4237 = vpop.f32.mrb[0].mxu0
      %v4238 = vadd.f32 0.0, %v4237
      %v4239 = vpop.f32.mrb[0].mxu0
      %v4240 = vadd.f32 0.0, %v4239
      %4241 = vmatprep.mubr.f32.mxu0 0.0
      %4242 = vmatmul.mubr.f32.gmra.mrb[0].mxu0 %v2335
      %v4243 = vpop.f32.mrb[0].mxu0
      %v4244 = vadd.f32 0.0, %v4243
      %v4245 = vpop.f32.mrb[0].mxu0
      %v4246 = vadd.f32 0.0, %v4245
      %4247 = vmatprep.mubr.f32.mxu0 0.0
      %4248 = vmatmul.mubr.f32.gmra.mrb[0].mxu0 %v2338
      %v4249 = vpop.f32.mrb[0].mxu0
      %v4250 = vadd.f32 0.0, %v4249
      %v4251 = vpop.f32.mrb[0].mxu0
      %v4252 = vadd.f32 0.0, %v4251
      %4253 = vmatprep.mubr.f32.mxu0 0.0
      %4254 = vmatmul.mubr.f32.gmra.mrb[0].mxu0 %v2341
      %v4255 = vpop.f32.mrb[0].mxu0
      %v4256 = vadd.f32 0.0, %v4255
      %v4257 = vpop.f32.mrb[0].mxu0
      %v4258 = vadd.f32 0.0, %v4257
      %4259 = vmatprep.mubr.f32.mxu0 0.0
      %4260 = vmatmul.mubr.f32.gmra.mrb[0].mxu0 %v2344
      %v4261 = vpop.f32.mrb[0].mxu0
      %v4262 = vadd.f32 0.0, %v4261
      %v4263 = vpop.f32.mrb[0].mxu0
      %v4264 = vadd.f32 0.0, %v4263
      %4265 = vmatprep.mubr.f32.mxu0 0.0
      %4266 = vmatmul.mubr.f32.gmra.mrb[0].mxu0 %v2347
      %v4267 = vpop.f32.mrb[0].mxu0
      %v4268 = vadd.f32 0.0, %v4267
      %v4269 = vpop.f32.mrb[0].mxu0
      %v4270 = vadd.f32 0.0, %v4269
      %4271 = vdwg.mxu0
      %4272 = vrot.lane.b32.xlu0 %v4101, 17
      %v4273 = vpop.permute.xlu0 %4272
      %4274 = vrot.lane.b32.xlu0 %v4103, 17
      %v4275 = vpop.permute.xlu0 %4274
      %4276 = vrot.lane.b32.xlu0 %v4220, 17
      %v4277 = vpop.permute.xlu0 %4276
      %4278 = vrot.lane.b32.xlu0 %v4222, 17
      %v4279 = vpop.permute.xlu0 %4278
      %v4280 = vsel %vm519, %v4277, %v4279
      %v4281 = vsel %vm519, %v4275, %v4277
      %v4282 = vsel %vm519, %v4273, %v4275
      %v4283 = vsel %vm519, %v4279, %v4273
      %v4284 = vmul.f32 %v4283, %v2610
      %v4285 = vmul.f32 %v4282, %v2614
      %v4286 = vmul.f32 %v4281, %v2618
      %v4287 = vmul.f32 %v4280, %v2622
      %v4288 = vadd.f32 %v4125, %v4284
      %v4289 = vadd.f32 %v4127, %v4285
      %v4290 = vadd.f32 %v4244, %v4286
      %v4291 = vadd.f32 %v4246, %v4287
      %4292 = vrot.lane.b32.xlu0 %v4107, 16
      %v4293 = vpop.permute.xlu0 %4292
      %4294 = vrot.lane.b32.xlu0 %v4109, 16
      %v4295 = vpop.permute.xlu0 %4294
      %4296 = vrot.lane.b32.xlu0 %v4226, 16
      %v4297 = vpop.permute.xlu0 %4296
      %4298 = vrot.lane.b32.xlu0 %v4228, 16
      %v4299 = vpop.permute.xlu0 %4298
      %v4300 = vsel %vm556, %v4297, %v4299
      %v4301 = vsel %vm556, %v4295, %v4297
      %v4302 = vsel %vm556, %v4293, %v4295
      %v4303 = vsel %vm556, %v4299, %v4293
      %v4304 = vmul.f32 %v4303, %v2646
      %v4305 = vmul.f32 %v4302, %v2650
      %v4306 = vmul.f32 %v4301, %v2654
      %v4307 = vmul.f32 %v4300, %v2658
      %v4308 = vadd.f32 %v4288, %v4304
      %v4309 = vadd.f32 %v4289, %v4305
      %v4310 = vadd.f32 %v4290, %v4306
      %v4311 = vadd.f32 %v4291, %v4307
      %4312 = vrot.lane.b32.xlu0 %v4113, 15
      %v4313 = vpop.permute.xlu0 %4312
      %4314 = vrot.lane.b32.xlu0 %v4115, 15
      %v4315 = vpop.permute.xlu0 %4314
      %4316 = vrot.lane.b32.xlu0 %v4232, 15
      %v4317 = vpop.permute.xlu0 %4316
      %4318 = vrot.lane.b32.xlu0 %v4234, 15
      %v4319 = vpop.permute.xlu0 %4318
      %v4320 = vsel %vm593, %v4317, %v4319
      %v4321 = vsel %vm593, %v4315, %v4317
      %v4322 = vsel %vm593, %v4313, %v4315
      %v4323 = vsel %vm593, %v4319, %v4313
      %v4324 = vmul.f32 %v4323, %v2682
      %v4325 = vmul.f32 %v4322, %v2686
      %v4326 = vmul.f32 %v4321, %v2690
      %v4327 = vmul.f32 %v4320, %v2694
      %v4328 = vadd.f32 %v4308, %v4324
      %v4329 = vadd.f32 %v4309, %v4325
      %v4330 = vadd.f32 %v4310, %v4326
      %v4331 = vadd.f32 %v4311, %v4327
      %4332 = vrot.lane.b32.xlu0 %v4119, 1
      %v4333 = vpop.permute.xlu0 %4332
      %4334 = vrot.lane.b32.xlu0 %v4121, 1
      %v4335 = vpop.permute.xlu0 %4334
      %4336 = vrot.lane.b32.xlu0 %v4238, 1
      %v4337 = vpop.permute.xlu0 %4336
      %4338 = vrot.lane.b32.xlu0 %v4240, 1
      %v4339 = vpop.permute.xlu0 %4338
      %v4340 = vsel %vm630, %v4337, %v4339
      %v4341 = vsel %vm630, %v4335, %v4337
      %v4342 = vsel %vm630, %v4333, %v4335
      %v4343 = vsel %vm630, %v4339, %v4333
      %v4344 = vmul.f32 %v4343, %v2718
      %v4345 = vmul.f32 %v4342, %v2722
      %v4346 = vmul.f32 %v4341, %v2726
      %v4347 = vmul.f32 %v4340, %v2730
      %v4348 = vadd.f32 %v4328, %v4344
      %v4349 = vadd.f32 %v4329, %v4345
      %v4350 = vadd.f32 %v4330, %v4346
      %v4351 = vadd.f32 %v4331, %v4347
      %4352 = vrot.lane.b32.xlu0 %v4131, 127
      %v4353 = vpop.permute.xlu0 %4352
      %4354 = vrot.lane.b32.xlu0 %v4133, 127
      %v4355 = vpop.permute.xlu0 %4354
      %4356 = vrot.lane.b32.xlu0 %v4250, 127
      %v4357 = vpop.permute.xlu0 %4356
      %4358 = vrot.lane.b32.xlu0 %v4252, 127
      %v4359 = vpop.permute.xlu0 %4358
      %v4360 = vsel %vm667, %v4357, %v4359
      %v4361 = vsel %vm667, %v4355, %v4357
      %v4362 = vsel %vm667, %v4353, %v4355
      %v4363 = vsel %vm667, %v4359, %v4353
      %v4364 = vmul.f32 %v4362, %v2754
      %v4365 = vmul.f32 %v4361, %v2758
      %v4366 = vmul.f32 %v4360, %v2762
      %v4367 = vmul.f32 %v4363, %v2766
      %v4368 = vadd.f32 %v4348, %v4364
      %v4369 = vadd.f32 %v4349, %v4365
      %v4370 = vadd.f32 %v4350, %v4366
      %v4371 = vadd.f32 %v4351, %v4367
      %4372 = vrot.lane.b32.xlu0 %v4137, 113
      %v4373 = vpop.permute.xlu0 %4372
      %4374 = vrot.lane.b32.xlu0 %v4139, 113
      %v4375 = vpop.permute.xlu0 %4374
      %4376 = vrot.lane.b32.xlu0 %v4256, 113
      %v4377 = vpop.permute.xlu0 %4376
      %4378 = vrot.lane.b32.xlu0 %v4258, 113
      %v4379 = vpop.permute.xlu0 %4378
      %v4380 = vsel %vm704, %v4377, %v4379
      %v4381 = vsel %vm704, %v4375, %v4377
      %v4382 = vsel %vm704, %v4373, %v4375
      %v4383 = vsel %vm704, %v4379, %v4373
      %v4384 = vmul.f32 %v4382, %v2790
      %v4385 = vmul.f32 %v4381, %v2794
      %v4386 = vmul.f32 %v4380, %v2798
      %v4387 = vmul.f32 %v4383, %v2802
      %v4388 = vadd.f32 %v4368, %v4384
      %v4389 = vadd.f32 %v4369, %v4385
      %v4390 = vadd.f32 %v4370, %v4386
      %v4391 = vadd.f32 %v4371, %v4387
      %4392 = vrot.lane.b32.xlu0 %v4143, 112
      %v4393 = vpop.permute.xlu0 %4392
      %4394 = vrot.lane.b32.xlu0 %v4145, 112
      %v4395 = vpop.permute.xlu0 %4394
      %4396 = vrot.lane.b32.xlu0 %v4262, 112
      %v4397 = vpop.permute.xlu0 %4396
      %4398 = vrot.lane.b32.xlu0 %v4264, 112
      %v4399 = vpop.permute.xlu0 %4398
      %v4400 = vsel %vm741, %v4397, %v4399
      %v4401 = vsel %vm741, %v4395, %v4397
      %v4402 = vsel %vm741, %v4393, %v4395
      %v4403 = vsel %vm741, %v4399, %v4393
      %v4404 = vmul.f32 %v4402, %v2826
      %v4405 = vmul.f32 %v4401, %v2830
      %v4406 = vmul.f32 %v4400, %v2834
      %v4407 = vmul.f32 %v4403, %v2838
      %v4408 = vadd.f32 %v4388, %v4404
      %v4409 = vadd.f32 %v4389, %v4405
      %v4410 = vadd.f32 %v4390, %v4406
      %v4411 = vadd.f32 %v4391, %v4407
      %4412 = vrot.lane.b32.xlu0 %v4149, 111
      %v4413 = vpop.permute.xlu0 %4412
      %4414 = vrot.lane.b32.xlu0 %v4151, 111
      %v4415 = vpop.permute.xlu0 %4414
      %4416 = vrot.lane.b32.xlu0 %v4268, 111
      %v4417 = vpop.permute.xlu0 %4416
      %4418 = vrot.lane.b32.xlu0 %v4270, 111
      %v4419 = vpop.permute.xlu0 %4418
      %v4420 = vsel %vm778, %v4417, %v4419
      %v4421 = vsel %vm778, %v4415, %v4417
      %v4422 = vsel %vm778, %v4413, %v4415
      %v4423 = vsel %vm778, %v4419, %v4413
      %v4424 = vmul.f32 %v4422, %v2862
      %v4425 = vmul.f32 %v4421, %v2866
      %v4426 = vmul.f32 %v4420, %v2870
      %v4427 = vmul.f32 %v4423, %v2874
      %v4428 = vadd.f32 %v4408, %v4424
      %v4429 = vadd.f32 %v4409, %v4425
      %v4430 = vadd.f32 %v4410, %v4426
      %v4431 = vadd.f32 %v4411, %v4427
      %v4432 = vmul.f32 %v3865, %v2883
      %v4433 = vmul.f32 %v3865, %v2884
      %v4434 = vmul.f32 %v3865, %v2885
      %v4435 = vmul.f32 %v3865, %v2886
      %v4436 = vadd.f32 %v4428, %v4432
      %v4437 = vadd.f32 %v4429, %v4433
      %v4438 = vadd.f32 %v4430, %v4434
      %v4439 = vadd.f32 %v4431, %v4435
      %v4440 = vadd.f32 %v4436, %v2899
      %v4441 = vadd.f32 %v4437, %v2899
      %v4442 = vadd.f32 %v4438, %v2899
      %v4443 = vadd.f32 %v4439, %v2899
      %v4444 = vmax.f32 %v4440, 0.0
      %v4445 = vmax.f32 %v4441, 0.0
      %v4446 = vmax.f32 %v4442, 0.0
      %v4447 = vmax.f32 %v4443, 0.0
      %v4448 = vmul.f32 %v3865, %v2910
      %4450 = vset.pattern.permute.xlu0 0
      %4451 = vperm.xlu0 %4450, %v4448
      %v4452 = vpop.permute.xlu0 %4451
      %4454 = vmatprep.subr.mxu0 %v4445
      %4455 = vmatpush1.msra.mxu0 %v4444
      %4456 = vmatprep.subr.mxu0 0.0
      %4457 = vmatpush1.msra.mxu0 0.0
      %4458 = vmatprep.subr.mxu0 0.0
      %4459 = vmatpush1.msra.mxu0 0.0
      %4460 = vmatprep.subr.mxu0 0.0
      %4461 = vmatpush1.msra.mxu0 0.0
      %4462 = vmatprep.subr.mxu0 0.0
      %4463 = vmatpush1.msra.mxu0 0.0
      %4464 = vmatprep.subr.mxu0 0.0
      %4465 = vmatpush1.msra.mxu0 0.0
      %4466 = vmatprep.subr.mxu0 0.0
      %4467 = vmatpush1.msra.mxu0 0.0
      %4468 = vmatprep.subr.mxu0 0.0
      %4469 = vmatpush1.msra.mxu0 0.0
      %4470 = vmatprep.subr.mxu0 0.0
      %4471 = vmatpush1.msra.mxu0 0.0
      %4472 = vmatprep.subr.mxu0 0.0
      %4473 = vmatpush1.msra.mxu0 0.0
      %4474 = vmatprep.subr.mxu0 0.0
      %4475 = vmatpush1.msra.mxu0 0.0
      %4476 = vmatprep.subr.mxu0 0.0
      %4477 = vmatpush1.msra.mxu0 0.0
      %4478 = vmatprep.subr.mxu0 0.0
      %4479 = vmatpush1.msra.mxu0 0.0
      %4480 = vmatprep.subr.mxu0 0.0
      %4481 = vmatpush1.msra.mxu0 0.0
      %4482 = vmatprep.subr.mxu0 0.0
      %4483 = vmatpush1.msra.mxu0 0.0
      %4484 = vmatprep.subr.mxu0 0.0
      %4485 = vmatpush1.msra.mxu0 0.0
      %4486 = vmatprep.subr.mxu0 0.0
      %4487 = vmatpush1.msra.mxu0 0.0
      %4488 = vmatprep.subr.mxu0 0.0
      %4489 = vmatpush1.msra.mxu0 0.0
      %4490 = vmatprep.subr.mxu0 0.0
      %4491 = vmatpush1.msra.mxu0 0.0
      %4492 = vmatprep.subr.mxu0 0.0
      %4493 = vmatpush1.msra.mxu0 0.0
      %4494 = vmatprep.subr.mxu0 0.0
      %4495 = vmatpush1.msra.mxu0 0.0
      %4496 = vmatprep.subr.mxu0 0.0
      %4497 = vmatpush1.msra.mxu0 0.0
      %4498 = vmatprep.subr.mxu0 0.0
      %4499 = vmatpush1.msra.mxu0 0.0
      %4500 = vmatprep.subr.mxu0 0.0
      %4501 = vmatpush1.msra.mxu0 0.0
      %4502 = vmatprep.subr.mxu0 0.0
      %4503 = vmatpush1.msra.mxu0 0.0
      %4504 = vmatprep.subr.mxu0 0.0
      %4505 = vmatpush1.msra.mxu0 0.0
      %4506 = vmatprep.subr.mxu0 0.0
      %4507 = vmatpush1.msra.mxu0 0.0
      %4508 = vmatprep.subr.mxu0 0.0
      %4509 = vmatpush1.msra.mxu0 0.0
      %4510 = vmatprep.subr.mxu0 0.0
      %4511 = vmatpush1.msra.mxu0 0.0
      %4512 = vmatprep.subr.mxu0 0.0
      %4513 = vmatpush1.msra.mxu0 0.0
      %4514 = vmatprep.subr.mxu0 0.0
      %4515 = vmatpush1.msra.mxu0 0.0
      %4516 = vmatprep.subr.mxu0 0.0
      %4517 = vmatpush1.msra.mxu0 0.0
      %4518 = vmatprep.mubr.f32.mxu0 0.0
      %4519 = vmatmul.mubr.f32.gmra.mrb[0].mxu0 %v2918
      %v4520 = vpop.f32.mrb[0].mxu0
      %v4521 = vadd.f32 %v4452, %v4520
      %v4522 = vpop.f32.mrb[0].mxu0
      %v4523 = vadd.f32 %v4452, %v4522
      %4524 = vdwg.mxu0
      %4525 = vmatprep.subr.mxu0 %v4447
      %4526 = vmatpush1.msra.mxu0 %v4446
      %4527 = vmatprep.subr.mxu0 0.0
      %4528 = vmatpush1.msra.mxu0 0.0
      %4529 = vmatprep.subr.mxu0 0.0
      %4530 = vmatpush1.msra.mxu0 0.0
      %4531 = vmatprep.subr.mxu0 0.0
      %4532 = vmatpush1.msra.mxu0 0.0
      %4533 = vmatprep.subr.mxu0 0.0
      %4534 = vmatpush1.msra.mxu0 0.0
      %4535 = vmatprep.subr.mxu0 0.0
      %4536 = vmatpush1.msra.mxu0 0.0
      %4537 = vmatprep.subr.mxu0 0.0
      %4538 = vmatpush1.msra.mxu0 0.0
      %4539 = vmatprep.subr.mxu0 0.0
      %4540 = vmatpush1.msra.mxu0 0.0
      %4541 = vmatprep.subr.mxu0 0.0
      %4542 = vmatpush1.msra.mxu0 0.0
      %4543 = vmatprep.subr.mxu0 0.0
      %4544 = vmatpush1.msra.mxu0 0.0
      %4545 = vmatprep.subr.mxu0 0.0
      %4546 = vmatpush1.msra.mxu0 0.0
      %4547 = vmatprep.subr.mxu0 0.0
      %4548 = vmatpush1.msra.mxu0 0.0
      %4549 = vmatprep.subr.mxu0 0.0
      %4550 = vmatpush1.msra.mxu0 0.0
      %4551 = vmatprep.subr.mxu0 0.0
      %4552 = vmatpush1.msra.mxu0 0.0
      %4553 = vmatprep.subr.mxu0 0.0
      %4554 = vmatpush1.msra.mxu0 0.0
      %4555 = vmatprep.subr.mxu0 0.0
      %4556 = vmatpush1.msra.mxu0 0.0
      %4557 = vmatprep.subr.mxu0 0.0
      %4558 = vmatpush1.msra.mxu0 0.0
      %4559 = vmatprep.subr.mxu0 0.0
      %4560 = vmatpush1.msra.mxu0 0.0
      %4561 = vmatprep.subr.mxu0 0.0
      %4562 = vmatpush1.msra.mxu0 0.0
      %4563 = vmatprep.subr.mxu0 0.0
      %4564 = vmatpush1.msra.mxu0 0.0
      %4565 = vmatprep.subr.mxu0 0.0
      %4566 = vmatpush1.msra.mxu0 0.0
      %4567 = vmatprep.subr.mxu0 0.0
      %4568 = vmatpush1.msra.mxu0 0.0
      %4569 = vmatprep.subr.mxu0 0.0
      %4570 = vmatpush1.msra.mxu0 0.0
      %4571 = vmatprep.subr.mxu0 0.0
      %4572 = vmatpush1.msra.mxu0 0.0
      %4573 = vmatprep.subr.mxu0 0.0
      %4574 = vmatpush1.msra.mxu0 0.0
      %4575 = vmatprep.subr.mxu0 0.0
      %4576 = vmatpush1.msra.mxu0 0.0
      %4577 = vmatprep.subr.mxu0 0.0
      %4578 = vmatpush1.msra.mxu0 0.0
      %4579 = vmatprep.subr.mxu0 0.0
      %4580 = vmatpush1.msra.mxu0 0.0
      %4581 = vmatprep.subr.mxu0 0.0
      %4582 = vmatpush1.msra.mxu0 0.0
      %4583 = vmatprep.subr.mxu0 0.0
      %4584 = vmatpush1.msra.mxu0 0.0
      %4585 = vmatprep.subr.mxu0 0.0
      %4586 = vmatpush1.msra.mxu0 0.0
      %4587 = vmatprep.subr.mxu0 0.0
      %4588 = vmatpush1.msra.mxu0 0.0
      %4589 = vmatprep.mubr.f32.mxu0 0.0
      %4590 = vmatmul.mubr.f32.gmra.mrb[0].mxu0 %v2918
      %v4591 = vpop.f32.mrb[0].mxu0
      %v4592 = vadd.f32 %v4452, %v4591
      %v4593 = vpop.f32.mrb[0].mxu0
      %v4594 = vadd.f32 %v4452, %v4593
      %4595 = vdwg.mxu0
      %v4596 = vadd.f32 %v4521, %v3066
      %v4597 = vadd.f32 %v4523, %v3066
      %v4598 = vadd.f32 %v4592, %v3066
      %v4599 = vadd.f32 %v4594, %v3066
      %s4600 = smul.f32 %s2121, 0.8888889
      %s4601 = sadd.f32 %s2108, %s4600
      %v4602 = vmul.f32 %v2122, 2.9525986
      %v4603 = vmul.f32 %v2123, 2.9525986
      %v4604 = vmul.f32 %v3068, -11.595794
      %v4605 = vmul.f32 %v3069, -11.595794
      %v4606 = vmul.f32 %v3070, -11.595794
      %v4607 = vmul.f32 %v3071, -11.595794
      %v4612 = vcombine.low %v4604, %v4605
      %v4613 = vcombine.low %v4606, %v4607
      %v4616 = vadd.f32 %v4602, %v4612
      %v4617 = vadd.f32 %v4603, %v4613
      %v4618 = vmul.f32 %v3825, 9.822893
      %v4619 = vmul.f32 %v3826, 9.822893
      %v4620 = vmul.f32 %v3827, 9.822893
      %v4621 = vmul.f32 %v3828, 9.822893
      %v4626 = vcombine.low %v4618, %v4619
      %v4627 = vcombine.low %v4620, %v4621
      %v4630 = vadd.f32 %v4616, %v4626
      %v4631 = vadd.f32 %v4617, %v4627
      %v4632 = vmul.f32 %v4596, -0.29080933
      %v4633 = vmul.f32 %v4597, -0.29080933
      %v4634 = vmul.f32 %v4598, -0.29080933
      %v4635 = vmul.f32 %v4599, -0.29080933
      %v4640 = vcombine.low %v4632, %v4633
      %v4641 = vcombine.low %v4634, %v4635
      %v4644 = vadd.f32 %v4630, %v4640
      %v4645 = vadd.f32 %v4631, %v4641
      %v4646 = vmul.f32 %v2128, %v4644
      %v4647 = vmul.f32 %v2128, %v4645
      %v4648 = vadd.f32 %v2118, %v4646
      %v4649 = vadd.f32 %v2119, %v4647
      %v4650 = vstv %s4601
      %v4651 = vmul.f32 %v4650, %v2134
      %4653 = vset.pattern.permute.xlu0 0
      %4654 = vperm.xlu0 %4653, %v4651
      %v4655 = vpop.permute.xlu0 %4654
      %v4659 = vcombine.high %v4648, %v4648
      %v4660 = vcombine.high %v4649, %v4649
      %v4661 = vsel %vm61, %v4648, 0
      %v4663 = vsel %vm61, %v4659, 0
      %v4665 = vsel %vm61, %v4649, 0
      %v4667 = vsel %vm61, %v4660, 0
      %4669 = vmatprep.subr.mxu0 %v4663
      %4670 = vmatpush1.msra.mxu0 %v4661
      %4671 = vmatprep.subr.mxu0 0.0
      %4672 = vmatpush1.msra.mxu0 0.0
      %4673 = vmatprep.subr.mxu0 0.0
      %4674 = vmatpush1.msra.mxu0 0.0
      %4675 = vmatprep.subr.mxu0 0.0
      %4676 = vmatpush1.msra.mxu0 0.0
      %4677 = vmatprep.subr.mxu0 0.0
      %4678 = vmatpush1.msra.mxu0 0.0
      %4679 = vmatprep.subr.mxu0 0.0
      %4680 = vmatpush1.msra.mxu0 0.0
      %4681 = vmatprep.subr.mxu0 0.0
      %4682 = vmatpush1.msra.mxu0 0.0
      %4683 = vmatprep.subr.mxu0 0.0
      %4684 = vmatpush1.msra.mxu0 0.0
      %4685 = vmatprep.subr.mxu0 0.0
      %4686 = vmatpush1.msra.mxu0 0.0
      %4687 = vmatprep.subr.mxu0 0.0
      %4688 = vmatpush1.msra.mxu0 0.0
      %4689 = vmatprep.subr.mxu0 0.0
      %4690 = vmatpush1.msra.mxu0 0.0
      %4691 = vmatprep.subr.mxu0 0.0
      %4692 = vmatpush1.msra.mxu0 0.0
      %4693 = vmatprep.subr.mxu0 0.0
      %4694 = vmatpush1.msra.mxu0 0.0
      %4695 = vmatprep.subr.mxu0 0.0
      %4696 = vmatpush1.msra.mxu0 0.0
      %4697 = vmatprep.subr.mxu0 0.0
      %4698 = vmatpush1.msra.mxu0 0.0
      %4699 = vmatprep.subr.mxu0 0.0
      %4700 = vmatpush1.msra.mxu0 0.0
      %4701 = vmatprep.subr.mxu0 0.0
      %4702 = vmatpush1.msra.mxu0 0.0
      %4703 = vmatprep.subr.mxu0 0.0
      %4704 = vmatpush1.msra.mxu0 0.0
      %4705 = vmatprep.subr.mxu0 0.0
      %4706 = vmatpush1.msra.mxu0 0.0
      %4707 = vmatprep.subr.mxu0 0.0
      %4708 = vmatpush1.msra.mxu0 0.0
      %4709 = vmatprep.subr.mxu0 0.0
      %4710 = vmatpush1.msra.mxu0 0.0
      %4711 = vmatprep.subr.mxu0 0.0
      %4712 = vmatpush1.msra.mxu0 0.0
      %4713 = vmatprep.subr.mxu0 0.0
      %4714 = vmatpush1.msra.mxu0 0.0
      %4715 = vmatprep.subr.mxu0 0.0
      %4716 = vmatpush1.msra.mxu0 0.0
      %4717 = vmatprep.subr.mxu0 0.0
      %4718 = vmatpush1.msra.mxu0 0.0
      %4719 = vmatprep.subr.mxu0 0.0
      %4720 = vmatpush1.msra.mxu0 0.0
      %4721 = vmatprep.subr.mxu0 0.0
      %4722 = vmatpush1.msra.mxu0 0.0
      %4723 = vmatprep.subr.mxu0 0.0
      %4724 = vmatpush1.msra.mxu0 0.0
      %4725 = vmatprep.subr.mxu0 0.0
      %4726 = vmatpush1.msra.mxu0 0.0
      %4727 = vmatprep.subr.mxu0 0.0
      %4728 = vmatpush1.msra.mxu0 0.0
      %4729 = vmatprep.subr.mxu0 0.0
      %4730 = vmatpush1.msra.mxu0 0.0
      %4731 = vmatprep.subr.mxu0 0.0
      %4732 = vmatpush1.msra.mxu0 0.0
      %4733 = vmatprep.mubr.f32.mxu0 0.0
      %4734 = vmatmul.mubr.f32.gmra.mrb[0].mxu0 %v2147
      %v4735 = vpop.f32.mrb[0].mxu0
      %v4736 = vadd.f32 %v4655, %v4735
      %v4737 = vpop.f32.mrb[0].mxu0
      %v4738 = vadd.f32 %v4655, %v4737
      %4739 = vdwg.mxu0
      %4740 = vmatprep.subr.mxu0 %v4667
      %4741 = vmatpush1.msra.mxu0 %v4665
      %4742 = vmatprep.subr.mxu0 0.0
      %4743 = vmatpush1.msra.mxu0 0.0
      %4744 = vmatprep.subr.mxu0 0.0
      %4745 = vmatpush1.msra.mxu0 0.0
      %4746 = vmatprep.subr.mxu0 0.0
      %4747 = vmatpush1.msra.mxu0 0.0
      %4748 = vmatprep.subr.mxu0 0.0
      %4749 = vmatpush1.msra.mxu0 0.0
      %4750 = vmatprep.subr.mxu0 0.0
      %4751 = vmatpush1.msra.mxu0 0.0
      %4752 = vmatprep.subr.mxu0 0.0
      %4753 = vmatpush1.msra.mxu0 0.0
      %4754 = vmatprep.subr.mxu0 0.0
      %4755 = vmatpush1.msra.mxu0 0.0
      %4756 = vmatprep.subr.mxu0 0.0
      %4757 = vmatpush1.msra.mxu0 0.0
      %4758 = vmatprep.subr.mxu0 0.0
      %4759 = vmatpush1.msra.mxu0 0.0
      %4760 = vmatprep.subr.mxu0 0.0
      %4761 = vmatpush1.msra.mxu0 0.0
      %4762 = vmatprep.subr.mxu0 0.0
      %4763 = vmatpush1.msra.mxu0 0.0
      %4764 = vmatprep.subr.mxu0 0.0
      %4765 = vmatpush1.msra.mxu0 0.0
      %4766 = vmatprep.subr.mxu0 0.0
      %4767 = vmatpush1.msra.mxu0 0.0
      %4768 = vmatprep.subr.mxu0 0.0
      %4769 = vmatpush1.msra.mxu0 0.0
      %4770 = vmatprep.subr.mxu0 0.0
      %4771 = vmatpush1.msra.mxu0 0.0
      %4772 = vmatprep.subr.mxu0 0.0
      %4773 = vmatpush1.msra.mxu0 0.0
      %4774 = vmatprep.subr.mxu0 0.0
      %4775 = vmatpush1.msra.mxu0 0.0
      %4776 = vmatprep.subr.mxu0 0.0
      %4777 = vmatpush1.msra.mxu0 0.0
      %4778 = vmatprep.subr.mxu0 0.0
      %4779 = vmatpush1.msra.mxu0 0.0
      %4780 = vmatprep.subr.mxu0 0.0
      %4781 = vmatpush1.msra.mxu0 0.0
      %4782 = vmatprep.subr.mxu0 0.0
      %4783 = vmatpush1.msra.mxu0 0.0
      %4784 = vmatprep.subr.mxu0 0.0
      %4785 = vmatpush1.msra.mxu0 0.0
      %4786 = vmatprep.subr.mxu0 0.0
      %4787 = vmatpush1.msra.mxu0 0.0
      %4788 = vmatprep.subr.mxu0 0.0
      %4789 = vmatpush1.msra.mxu0 0.0
      %4790 = vmatprep.subr.mxu0 0.0
      %4791 = vmatpush1.msra.mxu0 0.0
      %4792 = vmatprep.subr.mxu0 0.0
      %4793 = vmatpush1.msra.mxu0 0.0
      %4794 = vmatprep.subr.mxu0 0.0
      %4795 = vmatpush1.msra.mxu0 0.0
      %4796 = vmatprep.subr.mxu0 0.0
      %4797 = vmatpush1.msra.mxu0 0.0
      %4798 = vmatprep.subr.mxu0 0.0
      %4799 = vmatpush1.msra.mxu0 0.0
      %4800 = vmatprep.subr.mxu0 0.0
      %4801 = vmatpush1.msra.mxu0 0.0
      %4802 = vmatprep.subr.mxu0 0.0
      %4803 = vmatpush1.msra.mxu0 0.0
      %4804 = vmatprep.mubr.f32.mxu0 0.0
      %4805 = vmatmul.mubr.f32.gmra.mrb[0].mxu0 %v2147
      %v4806 = vpop.f32.mrb[0].mxu0
      %v4807 = vadd.f32 %v4655, %v4806
      %v4808 = vpop.f32.mrb[0].mxu0
      %v4809 = vadd.f32 %v4655, %v4808
      %4810 = vdwg.mxu0
      %v4811 = vadd.f32 %v4736, %v2303
      %v4812 = vadd.f32 %v4738, %v2303
      %v4813 = vadd.f32 %v4807, %v2303
      %v4814 = vadd.f32 %v4809, %v2303
      %v4815 = vmax.f32 %v4811, 0.0
      %v4816 = vmax.f32 %v4812, 0.0
      %v4817 = vmax.f32 %v4813, 0.0
      %v4818 = vmax.f32 %v4814, 0.0
      %4819 = vmatprep.subr.mxu0 %v4816
      %4820 = vmatpush1.msra.mxu0 %v4815
      %4821 = vmatprep.subr.mxu0 0.0
      %4822 = vmatpush1.msra.mxu0 0.0
      %4823 = vmatprep.subr.mxu0 0.0
      %4824 = vmatpush1.msra.mxu0 0.0
      %4825 = vmatprep.subr.mxu0 0.0
      %4826 = vmatpush1.msra.mxu0 0.0
      %4827 = vmatprep.subr.mxu0 0.0
      %4828 = vmatpush1.msra.mxu0 0.0
      %4829 = vmatprep.subr.mxu0 0.0
      %4830 = vmatpush1.msra.mxu0 0.0
      %4831 = vmatprep.subr.mxu0 0.0
      %4832 = vmatpush1.msra.mxu0 0.0
      %4833 = vmatprep.subr.mxu0 0.0
      %4834 = vmatpush1.msra.mxu0 0.0
      %4835 = vmatprep.subr.mxu0 0.0
      %4836 = vmatpush1.msra.mxu0 0.0
      %4837 = vmatprep.subr.mxu0 0.0
      %4838 = vmatpush1.msra.mxu0 0.0
      %4839 = vmatprep.subr.mxu0 0.0
      %4840 = vmatpush1.msra.mxu0 0.0
      %4841 = vmatprep.subr.mxu0 0.0
      %4842 = vmatpush1.msra.mxu0 0.0
      %4843 = vmatprep.subr.mxu0 0.0
      %4844 = vmatpush1.msra.mxu0 0.0
      %4845 = vmatprep.subr.mxu0 0.0
      %4846 = vmatpush1.msra.mxu0 0.0
      %4847 = vmatprep.subr.mxu0 0.0
      %4848 = vmatpush1.msra.mxu0 0.0
      %4849 = vmatprep.subr.mxu0 0.0
      %4850 = vmatpush1.msra.mxu0 0.0
      %4851 = vmatprep.subr.mxu0 0.0
      %4852 = vmatpush1.msra.mxu0 0.0
      %4853 = vmatprep.subr.mxu0 0.0
      %4854 = vmatpush1.msra.mxu0 0.0
      %4855 = vmatprep.subr.mxu0 0.0
      %4856 = vmatpush1.msra.mxu0 0.0
      %4857 = vmatprep.subr.mxu0 0.0
      %4858 = vmatpush1.msra.mxu0 0.0
      %4859 = vmatprep.subr.mxu0 0.0
      %4860 = vmatpush1.msra.mxu0 0.0
      %4861 = vmatprep.subr.mxu0 0.0
      %4862 = vmatpush1.msra.mxu0 0.0
      %4863 = vmatprep.subr.mxu0 0.0
      %4864 = vmatpush1.msra.mxu0 0.0
      %4865 = vmatprep.subr.mxu0 0.0
      %4866 = vmatpush1.msra.mxu0 0.0
      %4867 = vmatprep.subr.mxu0 0.0
      %4868 = vmatpush1.msra.mxu0 0.0
      %4869 = vmatprep.subr.mxu0 0.0
      %4870 = vmatpush1.msra.mxu0 0.0
      %4871 = vmatprep.subr.mxu0 0.0
      %4872 = vmatpush1.msra.mxu0 0.0
      %4873 = vmatprep.subr.mxu0 0.0
      %4874 = vmatpush1.msra.mxu0 0.0
      %4875 = vmatprep.subr.mxu0 0.0
      %4876 = vmatpush1.msra.mxu0 0.0
      %4877 = vmatprep.subr.mxu0 0.0
      %4878 = vmatpush1.msra.mxu0 0.0
      %4879 = vmatprep.subr.mxu0 0.0
      %4880 = vmatpush1.msra.mxu0 0.0
      %4881 = vmatprep.subr.mxu0 0.0
      %4882 = vmatpush1.msra.mxu0 0.0
      %4883 = vmatprep.mubr.f32.mxu0 0.0
      %4884 = vmatmul.mubr.f32.gmra.mrb[0].mxu0 %v2323
      %v4885 = vpop.f32.mrb[0].mxu0
      %v4886 = vadd.f32 0.0, %v4885
      %v4887 = vpop.f32.mrb[0].mxu0
      %v4888 = vadd.f32 0.0, %v4887
      %4889 = vmatprep.mubr.f32.mxu0 0.0
      %4890 = vmatmul.mubr.f32.gmra.mrb[0].mxu0 %v2326
      %v4891 = vpop.f32.mrb[0].mxu0
      %v4892 = vadd.f32 0.0, %v4891
      %v4893 = vpop.f32.mrb[0].mxu0
      %v4894 = vadd.f32 0.0, %v4893
      %4895 = vmatprep.mubr.f32.mxu0 0.0
      %4896 = vmatmul.mubr.f32.gmra.mrb[0].mxu0 %v2329
      %v4897 = vpop.f32.mrb[0].mxu0
      %v4898 = vadd.f32 0.0, %v4897
      %v4899 = vpop.f32.mrb[0].mxu0
      %v4900 = vadd.f32 0.0, %v4899
      %4901 = vmatprep.mubr.f32.mxu0 0.0
      %4902 = vmatmul.mubr.f32.gmra.mrb[0].mxu0 %v2332
      %v4903 = vpop.f32.mrb[0].mxu0
      %v4904 = vadd.f32 0.0, %v4903
      %v4905 = vpop.f32.mrb[0].mxu0
      %v4906 = vadd.f32 0.0, %v4905
      %4907 = vmatprep.mubr.f32.mxu0 0.0
      %4908 = vmatmul.mubr.f32.gmra.mrb[0].mxu0 %v2335
      %v4909 = vpop.f32.mrb[0].mxu0
      %v4910 = vadd.f32 0.0, %v4909
      %v4911 = vpop.f32.mrb[0].mxu0
      %v4912 = vadd.f32 0.0, %v4911
      %4913 = vmatprep.mubr.f32.mxu0 0.0
      %4914 = vmatmul.mubr.f32.gmra.mrb[0].mxu0 %v2338
      %v4915 = vpop.f32.mrb[0].mxu0
      %v4916 = vadd.f32 0.0, %v4915
      %v4917 = vpop.f32.mrb[0].mxu0
      %v4918 = vadd.f32 0.0, %v4917
      %4919 = vmatprep.mubr.f32.mxu0 0.0
      %4920 = vmatmul.mubr.f32.gmra.mrb[0].mxu0 %v2341
      %v4921 = vpop.f32.mrb[0].mxu0
      %v4922 = vadd.f32 0.0, %v4921
      %v4923 = vpop.f32.mrb[0].mxu0
      %v4924 = vadd.f32 0.0, %v4923
      %4925 = vmatprep.mubr.f32.mxu0 0.0
      %4926 = vmatmul.mubr.f32.gmra.mrb[0].mxu0 %v2344
      %v4927 = vpop.f32.mrb[0].mxu0
      %v4928 = vadd.f32 0.0, %v4927
      %v4929 = vpop.f32.mrb[0].mxu0
      %v4930 = vadd.f32 0.0, %v4929
      %4931 = vmatprep.mubr.f32.mxu0 0.0
      %4932 = vmatmul.mubr.f32.gmra.mrb[0].mxu0 %v2347
      %v4933 = vpop.f32.mrb[0].mxu0
      %v4934 = vadd.f32 0.0, %v4933
      %v4935 = vpop.f32.mrb[0].mxu0
      %v4936 = vadd.f32 0.0, %v4935
      %4937 = vdwg.mxu0
      %4938 = vmatprep.subr.mxu0 %v4818
      %4939 = vmatpush1.msra.mxu0 %v4817
      %4940 = vmatprep.subr.mxu0 0.0
      %4941 = vmatpush1.msra.mxu0 0.0
      %4942 = vmatprep.subr.mxu0 0.0
      %4943 = vmatpush1.msra.mxu0 0.0
      %4944 = vmatprep.subr.mxu0 0.0
      %4945 = vmatpush1.msra.mxu0 0.0
      %4946 = vmatprep.subr.mxu0 0.0
      %4947 = vmatpush1.msra.mxu0 0.0
      %4948 = vmatprep.subr.mxu0 0.0
      %4949 = vmatpush1.msra.mxu0 0.0
      %4950 = vmatprep.subr.mxu0 0.0
      %4951 = vmatpush1.msra.mxu0 0.0
      %4952 = vmatprep.subr.mxu0 0.0
      %4953 = vmatpush1.msra.mxu0 0.0
      %4954 = vmatprep.subr.mxu0 0.0
      %4955 = vmatpush1.msra.mxu0 0.0
      %4956 = vmatprep.subr.mxu0 0.0
      %4957 = vmatpush1.msra.mxu0 0.0
      %4958 = vmatprep.subr.mxu0 0.0
      %4959 = vmatpush1.msra.mxu0 0.0
      %4960 = vmatprep.subr.mxu0 0.0
      %4961 = vmatpush1.msra.mxu0 0.0
      %4962 = vmatprep.subr.mxu0 0.0
      %4963 = vmatpush1.msra.mxu0 0.0
      %4964 = vmatprep.subr.mxu0 0.0
      %4965 = vmatpush1.msra.mxu0 0.0
      %4966 = vmatprep.subr.mxu0 0.0
      %4967 = vmatpush1.msra.mxu0 0.0
      %4968 = vmatprep.subr.mxu0 0.0
      %4969 = vmatpush1.msra.mxu0 0.0
      %4970 = vmatprep.subr.mxu0 0.0
      %4971 = vmatpush1.msra.mxu0 0.0
      %4972 = vmatprep.subr.mxu0 0.0
      %4973 = vmatpush1.msra.mxu0 0.0
      %4974 = vmatprep.subr.mxu0 0.0
      %4975 = vmatpush1.msra.mxu0 0.0
      %4976 = vmatprep.subr.mxu0 0.0
      %4977 = vmatpush1.msra.mxu0 0.0
      %4978 = vmatprep.subr.mxu0 0.0
      %4979 = vmatpush1.msra.mxu0 0.0
      %4980 = vmatprep.subr.mxu0 0.0
      %4981 = vmatpush1.msra.mxu0 0.0
      %4982 = vmatprep.subr.mxu0 0.0
      %4983 = vmatpush1.msra.mxu0 0.0
      %4984 = vmatprep.subr.mxu0 0.0
      %4985 = vmatpush1.msra.mxu0 0.0
      %4986 = vmatprep.subr.mxu0 0.0
      %4987 = vmatpush1.msra.mxu0 0.0
      %4988 = vmatprep.subr.mxu0 0.0
      %4989 = vmatpush1.msra.mxu0 0.0
      %4990 = vmatprep.subr.mxu0 0.0
      %4991 = vmatpush1.msra.mxu0 0.0
      %4992 = vmatprep.subr.mxu0 0.0
      %4993 = vmatpush1.msra.mxu0 0.0
      %4994 = vmatprep.subr.mxu0 0.0
      %4995 = vmatpush1.msra.mxu0 0.0
      %4996 = vmatprep.subr.mxu0 0.0
      %4997 = vmatpush1.msra.mxu0 0.0
      %4998 = vmatprep.subr.mxu0 0.0
      %4999 = vmatpush1.msra.mxu0 0.0
      %5000 = vmatprep.subr.mxu0 0.0
      %5001 = vmatpush1.msra.mxu0 0.0
      %5002 = vmatprep.mubr.f32.mxu0 0.0
      %5003 = vmatmul.mubr.f32.gmra.mrb[0].mxu0 %v2323
      %v5004 = vpop.f32.mrb[0].mxu0
      %v5005 = vadd.f32 0.0, %v5004
      %v5006 = vpop.f32.mrb[0].mxu0
      %v5007 = vadd.f32 0.0, %v5006
      %5008 = vmatprep.mubr.f32.mxu0 0.0
      %5009 = vmatmul.mubr.f32.gmra.mrb[0].mxu0 %v2326
      %v5010 = vpop.f32.mrb[0].mxu0
      %v5011 = vadd.f32 0.0, %v5010
      %v5012 = vpop.f32.mrb[0].mxu0
      %v5013 = vadd.f32 0.0, %v5012
      %5014 = vmatprep.mubr.f32.mxu0 0.0
      %5015 = vmatmul.mubr.f32.gmra.mrb[0].mxu0 %v2329
      %v5016 = vpop.f32.mrb[0].mxu0
      %v5017 = vadd.f32 0.0, %v5016
      %v5018 = vpop.f32.mrb[0].mxu0
      %v5019 = vadd.f32 0.0, %v5018
      %5020 = vmatprep.mubr.f32.mxu0 0.0
      %5021 = vmatmul.mubr.f32.gmra.mrb[0].mxu0 %v2332
      %v5022 = vpop.f32.mrb[0].mxu0
      %v5023 = vadd.f32 0.0, %v5022
      %v5024 = vpop.f32.mrb[0].mxu0
      %v5025 = vadd.f32 0.0, %v5024
      %5026 = vmatprep.mubr.f32.mxu0 0.0
      %5027 = vmatmul.mubr.f32.gmra.mrb[0].mxu0 %v2335
      %v5028 = vpop.f32.mrb[0].mxu0
      %v5029 = vadd.f32 0.0, %v5028
      %v5030 = vpop.f32.mrb[0].mxu0
      %v5031 = vadd.f32 0.0, %v5030
      %5032 = vmatprep.mubr.f32.mxu0 0.0
      %5033 = vmatmul.mubr.f32.gmra.mrb[0].mxu0 %v2338
      %v5034 = vpop.f32.mrb[0].mxu0
      %v5035 = vadd.f32 0.0, %v5034
      %v5036 = vpop.f32.mrb[0].mxu0
      %v5037 = vadd.f32 0.0, %v5036
      %5038 = vmatprep.mubr.f32.mxu0 0.0
      %5039 = vmatmul.mubr.f32.gmra.mrb[0].mxu0 %v2341
      %v5040 = vpop.f32.mrb[0].mxu0
      %v5041 = vadd.f32 0.0, %v5040
      %v5042 = vpop.f32.mrb[0].mxu0
      %v5043 = vadd.f32 0.0, %v5042
      %5044 = vmatprep.mubr.f32.mxu0 0.0
      %5045 = vmatmul.mubr.f32.gmra.mrb[0].mxu0 %v2344
      %v5046 = vpop.f32.mrb[0].mxu0
      %v5047 = vadd.f32 0.0, %v5046
      %v5048 = vpop.f32.mrb[0].mxu0
      %v5049 = vadd.f32 0.0, %v5048
      %5050 = vmatprep.mubr.f32.mxu0 0.0
      %5051 = vmatmul.mubr.f32.gmra.mrb[0].mxu0 %v2347
      %v5052 = vpop.f32.mrb[0].mxu0
      %v5053 = vadd.f32 0.0, %v5052
      %v5054 = vpop.f32.mrb[0].mxu0
      %v5055 = vadd.f32 0.0, %v5054
      %5056 = vdwg.mxu0
      %5057 = vrot.lane.b32.xlu0 %v4886, 17
      %v5058 = vpop.permute.xlu0 %5057
      %5059 = vrot.lane.b32.xlu0 %v4888, 17
      %v5060 = vpop.permute.xlu0 %5059
      %5061 = vrot.lane.b32.xlu0 %v5005, 17
      %v5062 = vpop.permute.xlu0 %5061
      %5063 = vrot.lane.b32.xlu0 %v5007, 17
      %v5064 = vpop.permute.xlu0 %5063
      %v5065 = vsel %vm519, %v5062, %v5064
      %v5066 = vsel %vm519, %v5060, %v5062
      %v5067 = vsel %vm519, %v5058, %v5060
      %v5068 = vsel %vm519, %v5064, %v5058
      %v5069 = vmul.f32 %v5068, %v2610
      %v5070 = vmul.f32 %v5067, %v2614
      %v5071 = vmul.f32 %v5066, %v2618
      %v5072 = vmul.f32 %v5065, %v2622
      %v5073 = vadd.f32 %v4910, %v5069
      %v5074 = vadd.f32 %v4912, %v5070
      %v5075 = vadd.f32 %v5029, %v5071
      %v5076 = vadd.f32 %v5031, %v5072
      %5077 = vrot.lane.b32.xlu0 %v4892, 16
      %v5078 = vpop.permute.xlu0 %5077
      %5079 = vrot.lane.b32.xlu0 %v4894, 16
      %v5080 = vpop.permute.xlu0 %5079
      %5081 = vrot.lane.b32.xlu0 %v5011, 16
      %v5082 = vpop.permute.xlu0 %5081
      %5083 = vrot.lane.b32.xlu0 %v5013, 16
      %v5084 = vpop.permute.xlu0 %5083
      %v5085 = vsel %vm556, %v5082, %v5084
      %v5086 = vsel %vm556, %v5080, %v5082
      %v5087 = vsel %vm556, %v5078, %v5080
      %v5088 = vsel %vm556, %v5084, %v5078
      %v5089 = vmul.f32 %v5088, %v2646
      %v5090 = vmul.f32 %v5087, %v2650
      %v5091 = vmul.f32 %v5086, %v2654
      %v5092 = vmul.f32 %v5085, %v2658
      %v5093 = vadd.f32 %v5073, %v5089
      %v5094 = vadd.f32 %v5074, %v5090
      %v5095 = vadd.f32 %v5075, %v5091
      %v5096 = vadd.f32 %v5076, %v5092
      %5097 = vrot.lane.b32.xlu0 %v4898, 15
      %v5098 = vpop.permute.xlu0 %5097
      %5099 = vrot.lane.b32.xlu0 %v4900, 15
      %v5100 = vpop.permute.xlu0 %5099
      %5101 = vrot.lane.b32.xlu0 %v5017, 15
      %v5102 = vpop.permute.xlu0 %5101
      %5103 = vrot.lane.b32.xlu0 %v5019, 15
      %v5104 = vpop.permute.xlu0 %5103
      %v5105 = vsel %vm593, %v5102, %v5104
      %v5106 = vsel %vm593, %v5100, %v5102
      %v5107 = vsel %vm593, %v5098, %v5100
      %v5108 = vsel %vm593, %v5104, %v5098
      %v5109 = vmul.f32 %v5108, %v2682
      %v5110 = vmul.f32 %v5107, %v2686
      %v5111 = vmul.f32 %v5106, %v2690
      %v5112 = vmul.f32 %v5105, %v2694
      %v5113 = vadd.f32 %v5093, %v5109
      %v5114 = vadd.f32 %v5094, %v5110
      %v5115 = vadd.f32 %v5095, %v5111
      %v5116 = vadd.f32 %v5096, %v5112
      %5117 = vrot.lane.b32.xlu0 %v4904, 1
      %v5118 = vpop.permute.xlu0 %5117
      %5119 = vrot.lane.b32.xlu0 %v4906, 1
      %v5120 = vpop.permute.xlu0 %5119
      %5121 = vrot.lane.b32.xlu0 %v5023, 1
      %v5122 = vpop.permute.xlu0 %5121
      %5123 = vrot.lane.b32.xlu0 %v5025, 1
      %v5124 = vpop.permute.xlu0 %5123
      %v5125 = vsel %vm630, %v5122, %v5124
      %v5126 = vsel %vm630, %v5120, %v5122
      %v5127 = vsel %vm630, %v5118, %v5120
      %v5128 = vsel %vm630, %v5124, %v5118
      %v5129 = vmul.f32 %v5128, %v2718
      %v5130 = vmul.f32 %v5127, %v2722
      %v5131 = vmul.f32 %v5126, %v2726
      %v5132 = vmul.f32 %v5125, %v2730
      %v5133 = vadd.f32 %v5113, %v5129
      %v5134 = vadd.f32 %v5114, %v5130
      %v5135 = vadd.f32 %v5115, %v5131
      %v5136 = vadd.f32 %v5116, %v5132
      %5137 = vrot.lane.b32.xlu0 %v4916, 127
      %v5138 = vpop.permute.xlu0 %5137
      %5139 = vrot.lane.b32.xlu0 %v4918, 127
      %v5140 = vpop.permute.xlu0 %5139
      %5141 = vrot.lane.b32.xlu0 %v5035, 127
      %v5142 = vpop.permute.xlu0 %5141
      %5143 = vrot.lane.b32.xlu0 %v5037, 127
      %v5144 = vpop.permute.xlu0 %5143
      %v5145 = vsel %vm667, %v5142, %v5144
      %v5146 = vsel %vm667, %v5140, %v5142
      %v5147 = vsel %vm667, %v5138, %v5140
      %v5148 = vsel %vm667, %v5144, %v5138
      %v5149 = vmul.f32 %v5147, %v2754
      %v5150 = vmul.f32 %v5146, %v2758
      %v5151 = vmul.f32 %v5145, %v2762
      %v5152 = vmul.f32 %v5148, %v2766
      %v5153 = vadd.f32 %v5133, %v5149
      %v5154 = vadd.f32 %v5134, %v5150
      %v5155 = vadd.f32 %v5135, %v5151
      %v5156 = vadd.f32 %v5136, %v5152
      %5157 = vrot.lane.b32.xlu0 %v4922, 113
      %v5158 = vpop.permute.xlu0 %5157
      %5159 = vrot.lane.b32.xlu0 %v4924, 113
      %v5160 = vpop.permute.xlu0 %5159
      %5161 = vrot.lane.b32.xlu0 %v5041, 113
      %v5162 = vpop.permute.xlu0 %5161
      %5163 = vrot.lane.b32.xlu0 %v5043, 113
      %v5164 = vpop.permute.xlu0 %5163
      %v5165 = vsel %vm704, %v5162, %v5164
      %v5166 = vsel %vm704, %v5160, %v5162
      %v5167 = vsel %vm704, %v5158, %v5160
      %v5168 = vsel %vm704, %v5164, %v5158
      %v5169 = vmul.f32 %v5167, %v2790
      %v5170 = vmul.f32 %v5166, %v2794
      %v5171 = vmul.f32 %v5165, %v2798
      %v5172 = vmul.f32 %v5168, %v2802
      %v5173 = vadd.f32 %v5153, %v5169
      %v5174 = vadd.f32 %v5154, %v5170
      %v5175 = vadd.f32 %v5155, %v5171
      %v5176 = vadd.f32 %v5156, %v5172
      %5177 = vrot.lane.b32.xlu0 %v4928, 112
      %v5178 = vpop.permute.xlu0 %5177
      %5179 = vrot.lane.b32.xlu0 %v4930, 112
      %v5180 = vpop.permute.xlu0 %5179
      %5181 = vrot.lane.b32.xlu0 %v5047, 112
      %v5182 = vpop.permute.xlu0 %5181
      %5183 = vrot.lane.b32.xlu0 %v5049, 112
      %v5184 = vpop.permute.xlu0 %5183
      %v5185 = vsel %vm741, %v5182, %v5184
      %v5186 = vsel %vm741, %v5180, %v5182
      %v5187 = vsel %vm741, %v5178, %v5180
      %v5188 = vsel %vm741, %v5184, %v5178
      %v5189 = vmul.f32 %v5187, %v2826
      %v5190 = vmul.f32 %v5186, %v2830
      %v5191 = vmul.f32 %v5185, %v2834
      %v5192 = vmul.f32 %v5188, %v2838
      %v5193 = vadd.f32 %v5173, %v5189
      %v5194 = vadd.f32 %v5174, %v5190
      %v5195 = vadd.f32 %v5175, %v5191
      %v5196 = vadd.f32 %v5176, %v5192
      %5197 = vrot.lane.b32.xlu0 %v4934, 111
      %v5198 = vpop.permute.xlu0 %5197
      %5199 = vrot.lane.b32.xlu0 %v4936, 111
      %v5200 = vpop.permute.xlu0 %5199
      %5201 = vrot.lane.b32.xlu0 %v5053, 111
      %v5202 = vpop.permute.xlu0 %5201
      %5203 = vrot.lane.b32.xlu0 %v5055, 111
      %v5204 = vpop.permute.xlu0 %5203
      %v5205 = vsel %vm778, %v5202, %v5204
      %v5206 = vsel %vm778, %v5200, %v5202
      %v5207 = vsel %vm778, %v5198, %v5200
      %v5208 = vsel %vm778, %v5204, %v5198
      %v5209 = vmul.f32 %v5207, %v2862
      %v5210 = vmul.f32 %v5206, %v2866
      %v5211 = vmul.f32 %v5205, %v2870
      %v5212 = vmul.f32 %v5208, %v2874
      %v5213 = vadd.f32 %v5193, %v5209
      %v5214 = vadd.f32 %v5194, %v5210
      %v5215 = vadd.f32 %v5195, %v5211
      %v5216 = vadd.f32 %v5196, %v5212
      %v5217 = vmul.f32 %v4650, %v2883
      %v5218 = vmul.f32 %v4650, %v2884
      %v5219 = vmul.f32 %v4650, %v2885
      %v5220 = vmul.f32 %v4650, %v2886
      %v5221 = vadd.f32 %v5213, %v5217
      %v5222 = vadd.f32 %v5214, %v5218
      %v5223 = vadd.f32 %v5215, %v5219
      %v5224 = vadd.f32 %v5216, %v5220
      %v5225 = vadd.f32 %v5221, %v2899
      %v5226 = vadd.f32 %v5222, %v2899
      %v5227 = vadd.f32 %v5223, %v2899
      %v5228 = vadd.f32 %v5224, %v2899
      %v5229 = vmax.f32 %v5225, 0.0
      %v5230 = vmax.f32 %v5226, 0.0
      %v5231 = vmax.f32 %v5227, 0.0
      %v5232 = vmax.f32 %v5228, 0.0
      %v5233 = vmul.f32 %v4650, %v2910
      %5235 = vset.pattern.permute.xlu0 0
      %5236 = vperm.xlu0 %5235, %v5233
      %v5237 = vpop.permute.xlu0 %5236
      %5239 = vmatprep.subr.mxu0 %v5230
      %5240 = vmatpush1.msra.mxu0 %v5229
      %5241 = vmatprep.subr.mxu0 0.0
      %5242 = vmatpush1.msra.mxu0 0.0
      %5243 = vmatprep.subr.mxu0 0.0
      %5244 = vmatpush1.msra.mxu0 0.0
      %5245 = vmatprep.subr.mxu0 0.0
      %5246 = vmatpush1.msra.mxu0 0.0
      %5247 = vmatprep.subr.mxu0 0.0
      %5248 = vmatpush1.msra.mxu0 0.0
      %5249 = vmatprep.subr.mxu0 0.0
      %5250 = vmatpush1.msra.mxu0 0.0
      %5251 = vmatprep.subr.mxu0 0.0
      %5252 = vmatpush1.msra.mxu0 0.0
      %5253 = vmatprep.subr.mxu0 0.0
      %5254 = vmatpush1.msra.mxu0 0.0
      %5255 = vmatprep.subr.mxu0 0.0
      %5256 = vmatpush1.msra.mxu0 0.0
      %5257 = vmatprep.subr.mxu0 0.0
      %5258 = vmatpush1.msra.mxu0 0.0
      %5259 = vmatprep.subr.mxu0 0.0
      %5260 = vmatpush1.msra.mxu0 0.0
      %5261 = vmatprep.subr.mxu0 0.0
      %5262 = vmatpush1.msra.mxu0 0.0
      %5263 = vmatprep.subr.mxu0 0.0
      %5264 = vmatpush1.msra.mxu0 0.0
      %5265 = vmatprep.subr.mxu0 0.0
      %5266 = vmatpush1.msra.mxu0 0.0
      %5267 = vmatprep.subr.mxu0 0.0
      %5268 = vmatpush1.msra.mxu0 0.0
      %5269 = vmatprep.subr.mxu0 0.0
      %5270 = vmatpush1.msra.mxu0 0.0
      %5271 = vmatprep.subr.mxu0 0.0
      %5272 = vmatpush1.msra.mxu0 0.0
      %5273 = vmatprep.subr.mxu0 0.0
      %5274 = vmatpush1.msra.mxu0 0.0
      %5275 = vmatprep.subr.mxu0 0.0
      %5276 = vmatpush1.msra.mxu0 0.0
      %5277 = vmatprep.subr.mxu0 0.0
      %5278 = vmatpush1.msra.mxu0 0.0
      %5279 = vmatprep.subr.mxu0 0.0
      %5280 = vmatpush1.msra.mxu0 0.0
      %5281 = vmatprep.subr.mxu0 0.0
      %5282 = vmatpush1.msra.mxu0 0.0
      %5283 = vmatprep.subr.mxu0 0.0
      %5284 = vmatpush1.msra.mxu0 0.0
      %5285 = vmatprep.subr.mxu0 0.0
      %5286 = vmatpush1.msra.mxu0 0.0
      %5287 = vmatprep.subr.mxu0 0.0
      %5288 = vmatpush1.msra.mxu0 0.0
      %5289 = vmatprep.subr.mxu0 0.0
      %5290 = vmatpush1.msra.mxu0 0.0
      %5291 = vmatprep.subr.mxu0 0.0
      %5292 = vmatpush1.msra.mxu0 0.0
      %5293 = vmatprep.subr.mxu0 0.0
      %5294 = vmatpush1.msra.mxu0 0.0
      %5295 = vmatprep.subr.mxu0 0.0
      %5296 = vmatpush1.msra.mxu0 0.0
      %5297 = vmatprep.subr.mxu0 0.0
      %5298 = vmatpush1.msra.mxu0 0.0
      %5299 = vmatprep.subr.mxu0 0.0
      %5300 = vmatpush1.msra.mxu0 0.0
      %5301 = vmatprep.subr.mxu0 0.0
      %5302 = vmatpush1.msra.mxu0 0.0
      %5303 = vmatprep.mubr.f32.mxu0 0.0
      %5304 = vmatmul.mubr.f32.gmra.mrb[0].mxu0 %v2918
      %v5305 = vpop.f32.mrb[0].mxu0
      %v5306 = vadd.f32 %v5237, %v5305
      %v5307 = vpop.f32.mrb[0].mxu0
      %v5308 = vadd.f32 %v5237, %v5307
      %5309 = vdwg.mxu0
      %5310 = vmatprep.subr.mxu0 %v5232
      %5311 = vmatpush1.msra.mxu0 %v5231
      %5312 = vmatprep.subr.mxu0 0.0
      %5313 = vmatpush1.msra.mxu0 0.0
      %5314 = vmatprep.subr.mxu0 0.0
      %5315 = vmatpush1.msra.mxu0 0.0
      %5316 = vmatprep.subr.mxu0 0.0
      %5317 = vmatpush1.msra.mxu0 0.0
      %5318 = vmatprep.subr.mxu0 0.0
      %5319 = vmatpush1.msra.mxu0 0.0
      %5320 = vmatprep.subr.mxu0 0.0
      %5321 = vmatpush1.msra.mxu0 0.0
      %5322 = vmatprep.subr.mxu0 0.0
      %5323 = vmatpush1.msra.mxu0 0.0
      %5324 = vmatprep.subr.mxu0 0.0
      %5325 = vmatpush1.msra.mxu0 0.0
      %5326 = vmatprep.subr.mxu0 0.0
      %5327 = vmatpush1.msra.mxu0 0.0
      %5328 = vmatprep.subr.mxu0 0.0
      %5329 = vmatpush1.msra.mxu0 0.0
      %5330 = vmatprep.subr.mxu0 0.0
      %5331 = vmatpush1.msra.mxu0 0.0
      %5332 = vmatprep.subr.mxu0 0.0
      %5333 = vmatpush1.msra.mxu0 0.0
      %5334 = vmatprep.subr.mxu0 0.0
      %5335 = vmatpush1.msra.mxu0 0.0
      %5336 = vmatprep.subr.mxu0 0.0
      %5337 = vmatpush1.msra.mxu0 0.0
      %5338 = vmatprep.subr.mxu0 0.0
      %5339 = vmatpush1.msra.mxu0 0.0
      %5340 = vmatprep.subr.mxu0 0.0
      %5341 = vmatpush1.msra.mxu0 0.0
      %5342 = vmatprep.subr.mxu0 0.0
      %5343 = vmatpush1.msra.mxu0 0.0
      %5344 = vmatprep.subr.mxu0 0.0
      %5345 = vmatpush1.msra.mxu0 0.0
      %5346 = vmatprep.subr.mxu0 0.0
      %5347 = vmatpush1.msra.mxu0 0.0
      %5348 = vmatprep.subr.mxu0 0.0
      %5349 = vmatpush1.msra.mxu0 0.0
      %5350 = vmatprep.subr.mxu0 0.0
      %5351 = vmatpush1.msra.mxu0 0.0
      %5352 = vmatprep.subr.mxu0 0.0
      %5353 = vmatpush1.msra.mxu0 0.0
      %5354 = vmatprep.subr.mxu0 0.0
      %5355 = vmatpush1.msra.mxu0 0.0
      %5356 = vmatprep.subr.mxu0 0.0
      %5357 = vmatpush1.msra.mxu0 0.0
      %5358 = vmatprep.subr.mxu0 0.0
      %5359 = vmatpush1.msra.mxu0 0.0
      %5360 = vmatprep.subr.mxu0 0.0
      %5361 = vmatpush1.msra.mxu0 0.0
      %5362 = vmatprep.subr.mxu0 0.0
      %5363 = vmatpush1.msra.mxu0 0.0
      %5364 = vmatprep.subr.mxu0 0.0
      %5365 = vmatpush1.msra.mxu0 0.0
      %5366 = vmatprep.subr.mxu0 0.0
      %5367 = vmatpush1.msra.mxu0 0.0
      %5368 = vmatprep.subr.mxu0 0.0
      %5369 = vmatpush1.msra.mxu0 0.0
      %5370 = vmatprep.subr.mxu0 0.0
      %5371 = vmatpush1.msra.mxu0 0.0
      %5372 = vmatprep.subr.mxu0 0.0
      %5373 = vmatpush1.msra.mxu0 0.0
      %5374 = vmatprep.mubr.f32.mxu0 0.0
      %5375 = vmatmul.mubr.f32.gmra.mrb[0].mxu0 %v2918
      %v5376 = vpop.f32.mrb[0].mxu0
      %v5377 = vadd.f32 %v5237, %v5376
      %v5378 = vpop.f32.mrb[0].mxu0
      %v5379 = vadd.f32 %v5237, %v5378
      %5380 = vdwg.mxu0
      %v5381 = vadd.f32 %v5306, %v3066
      %v5382 = vadd.f32 %v5308, %v3066
      %v5383 = vadd.f32 %v5377, %v3066
      %v5384 = vadd.f32 %v5379, %v3066
      %s5385 = sadd.f32 %s2108, %s2121
      %v5386 = vmul.f32 %v2122, 2.8462753
      %v5387 = vmul.f32 %v2123, 2.8462753
      %v5388 = vmul.f32 %v3068, -10.757576
      %v5389 = vmul.f32 %v3069, -10.757576
      %v5390 = vmul.f32 %v3070, -10.757576
      %v5391 = vmul.f32 %v3071, -10.757576
      %v5396 = vcombine.low %v5388, %v5389
      %v5397 = vcombine.low %v5390, %v5391
      %v5400 = vadd.f32 %v5386, %v5396
      %v5401 = vadd.f32 %v5387, %v5397
      %v5402 = vmul.f32 %v3825, 8.906423
      %v5403 = vmul.f32 %v3826, 8.906423
      %v5404 = vmul.f32 %v3827, 8.906423
      %v5405 = vmul.f32 %v3828, 8.906423
      %v5410 = vcombine.low %v5402, %v5403
      %v5411 = vcombine.low %v5404, %v5405
      %v5414 = vadd.f32 %v5400, %v5410
      %v5415 = vadd.f32 %v5401, %v5411
      %v5416 = vmul.f32 %v4596, 0.2784091
      %v5417 = vmul.f32 %v4597, 0.2784091
      %v5418 = vmul.f32 %v4598, 0.2784091
      %v5419 = vmul.f32 %v4599, 0.2784091
      %v5424 = vcombine.low %v5416, %v5417
      %v5425 = vcombine.low %v5418, %v5419
      %v5428 = vadd.f32 %v5414, %v5424
      %v5429 = vadd.f32 %v5415, %v5425
      %v5430 = vmul.f32 %v5381, -0.27353132
      %v5431 = vmul.f32 %v5382, -0.27353132
      %v5432 = vmul.f32 %v5383, -0.27353132
      %v5433 = vmul.f32 %v5384, -0.27353132
      %v5438 = vcombine.low %v5430, %v5431
      %v5439 = vcombine.low %v5432, %v5433
      %v5442 = vadd.f32 %v5428, %v5438
      %v5443 = vadd.f32 %v5429, %v5439
      %v5444 = vmul.f32 %v2128, %v5442
      %v5445 = vmul.f32 %v2128, %v5443
      %v5446 = vadd.f32 %v2118, %v5444
      %v5447 = vadd.f32 %v2119, %v5445
      %v5448 = vstv %s5385
      %v5449 = vmul.f32 %v5448, %v2134
      %5451 = vset.pattern.permute.xlu0 0
      %5452 = vperm.xlu0 %5451, %v5449
      %v5453 = vpop.permute.xlu0 %5452
      %v5457 = vcombine.high %v5446, %v5446
      %v5458 = vcombine.high %v5447, %v5447
      %v5459 = vsel %vm61, %v5446, 0
      %v5461 = vsel %vm61, %v5457, 0
      %v5463 = vsel %vm61, %v5447, 0
      %v5465 = vsel %vm61, %v5458, 0
      %5467 = vmatprep.subr.mxu0 %v5461
      %5468 = vmatpush1.msra.mxu0 %v5459
      %5469 = vmatprep.subr.mxu0 0.0
      %5470 = vmatpush1.msra.mxu0 0.0
      %5471 = vmatprep.subr.mxu0 0.0
      %5472 = vmatpush1.msra.mxu0 0.0
      %5473 = vmatprep.subr.mxu0 0.0
      %5474 = vmatpush1.msra.mxu0 0.0
      %5475 = vmatprep.subr.mxu0 0.0
      %5476 = vmatpush1.msra.mxu0 0.0
      %5477 = vmatprep.subr.mxu0 0.0
      %5478 = vmatpush1.msra.mxu0 0.0
      %5479 = vmatprep.subr.mxu0 0.0
      %5480 = vmatpush1.msra.mxu0 0.0
      %5481 = vmatprep.subr.mxu0 0.0
      %5482 = vmatpush1.msra.mxu0 0.0
      %5483 = vmatprep.subr.mxu0 0.0
      %5484 = vmatpush1.msra.mxu0 0.0
      %5485 = vmatprep.subr.mxu0 0.0
      %5486 = vmatpush1.msra.mxu0 0.0
      %5487 = vmatprep.subr.mxu0 0.0
      %5488 = vmatpush1.msra.mxu0 0.0
      %5489 = vmatprep.subr.mxu0 0.0
      %5490 = vmatpush1.msra.mxu0 0.0
      %5491 = vmatprep.subr.mxu0 0.0
      %5492 = vmatpush1.msra.mxu0 0.0
      %5493 = vmatprep.subr.mxu0 0.0
      %5494 = vmatpush1.msra.mxu0 0.0
      %5495 = vmatprep.subr.mxu0 0.0
      %5496 = vmatpush1.msra.mxu0 0.0
      %5497 = vmatprep.subr.mxu0 0.0
      %5498 = vmatpush1.msra.mxu0 0.0
      %5499 = vmatprep.subr.mxu0 0.0
      %5500 = vmatpush1.msra.mxu0 0.0
      %5501 = vmatprep.subr.mxu0 0.0
      %5502 = vmatpush1.msra.mxu0 0.0
      %5503 = vmatprep.subr.mxu0 0.0
      %5504 = vmatpush1.msra.mxu0 0.0
      %5505 = vmatprep.subr.mxu0 0.0
      %5506 = vmatpush1.msra.mxu0 0.0
      %5507 = vmatprep.subr.mxu0 0.0
      %5508 = vmatpush1.msra.mxu0 0.0
      %5509 = vmatprep.subr.mxu0 0.0
      %5510 = vmatpush1.msra.mxu0 0.0
      %5511 = vmatprep.subr.mxu0 0.0
      %5512 = vmatpush1.msra.mxu0 0.0
      %5513 = vmatprep.subr.mxu0 0.0
      %5514 = vmatpush1.msra.mxu0 0.0
      %5515 = vmatprep.subr.mxu0 0.0
      %5516 = vmatpush1.msra.mxu0 0.0
      %5517 = vmatprep.subr.mxu0 0.0
      %5518 = vmatpush1.msra.mxu0 0.0
      %5519 = vmatprep.subr.mxu0 0.0
      %5520 = vmatpush1.msra.mxu0 0.0
      %5521 = vmatprep.subr.mxu0 0.0
      %5522 = vmatpush1.msra.mxu0 0.0
      %5523 = vmatprep.subr.mxu0 0.0
      %5524 = vmatpush1.msra.mxu0 0.0
      %5525 = vmatprep.subr.mxu0 0.0
      %5526 = vmatpush1.msra.mxu0 0.0
      %5527 = vmatprep.subr.mxu0 0.0
      %5528 = vmatpush1.msra.mxu0 0.0
      %5529 = vmatprep.subr.mxu0 0.0
      %5530 = vmatpush1.msra.mxu0 0.0
      %5531 = vmatprep.mubr.f32.mxu0 0.0
      %5532 = vmatmul.mubr.f32.gmra.mrb[0].mxu0 %v2147
      %v5533 = vpop.f32.mrb[0].mxu0
      %v5534 = vadd.f32 %v5453, %v5533
      %v5535 = vpop.f32.mrb[0].mxu0
      %v5536 = vadd.f32 %v5453, %v5535
      %5537 = vdwg.mxu0
      %5538 = vmatprep.subr.mxu0 %v5465
      %5539 = vmatpush1.msra.mxu0 %v5463
      %5540 = vmatprep.subr.mxu0 0.0
      %5541 = vmatpush1.msra.mxu0 0.0
      %5542 = vmatprep.subr.mxu0 0.0
      %5543 = vmatpush1.msra.mxu0 0.0
      %5544 = vmatprep.subr.mxu0 0.0
      %5545 = vmatpush1.msra.mxu0 0.0
      %5546 = vmatprep.subr.mxu0 0.0
      %5547 = vmatpush1.msra.mxu0 0.0
      %5548 = vmatprep.subr.mxu0 0.0
      %5549 = vmatpush1.msra.mxu0 0.0
      %5550 = vmatprep.subr.mxu0 0.0
      %5551 = vmatpush1.msra.mxu0 0.0
      %5552 = vmatprep.subr.mxu0 0.0
      %5553 = vmatpush1.msra.mxu0 0.0
      %5554 = vmatprep.subr.mxu0 0.0
      %5555 = vmatpush1.msra.mxu0 0.0
      %5556 = vmatprep.subr.mxu0 0.0
      %5557 = vmatpush1.msra.mxu0 0.0
      %5558 = vmatprep.subr.mxu0 0.0
      %5559 = vmatpush1.msra.mxu0 0.0
      %5560 = vmatprep.subr.mxu0 0.0
      %5561 = vmatpush1.msra.mxu0 0.0
      %5562 = vmatprep.subr.mxu0 0.0
      %5563 = vmatpush1.msra.mxu0 0.0
      %5564 = vmatprep.subr.mxu0 0.0
      %5565 = vmatpush1.msra.mxu0 0.0
      %5566 = vmatprep.subr.mxu0 0.0
      %5567 = vmatpush1.msra.mxu0 0.0
      %5568 = vmatprep.subr.mxu0 0.0
      %5569 = vmatpush1.msra.mxu0 0.0
      %5570 = vmatprep.subr.mxu0 0.0
      %5571 = vmatpush1.msra.mxu0 0.0
      %5572 = vmatprep.subr.mxu0 0.0
      %5573 = vmatpush1.msra.mxu0 0.0
      %5574 = vmatprep.subr.mxu0 0.0
      %5575 = vmatpush1.msra.mxu0 0.0
      %5576 = vmatprep.subr.mxu0 0.0
      %5577 = vmatpush1.msra.mxu0 0.0
      %5578 = vmatprep.subr.mxu0 0.0
      %5579 = vmatpush1.msra.mxu0 0.0
      %5580 = vmatprep.subr.mxu0 0.0
      %5581 = vmatpush1.msra.mxu0 0.0
      %5582 = vmatprep.subr.mxu0 0.0
      %5583 = vmatpush1.msra.mxu0 0.0
      %5584 = vmatprep.subr.mxu0 0.0
      %5585 = vmatpush1.msra.mxu0 0.0
      %5586 = vmatprep.subr.mxu0 0.0
      %5587 = vmatpush1.msra.mxu0 0.0
      %5588 = vmatprep.subr.mxu0 0.0
      %5589 = vmatpush1.msra.mxu0 0.0
      %5590 = vmatprep.subr.mxu0 0.0
      %5591 = vmatpush1.msra.mxu0 0.0
      %5592 = vmatprep.subr.mxu0 0.0
      %5593 = vmatpush1.msra.mxu0 0.0
      %5594 = vmatprep.subr.mxu0 0.0
      %5595 = vmatpush1.msra.mxu0 0.0
      %5596 = vmatprep.subr.mxu0 0.0
      %5597 = vmatpush1.msra.mxu0 0.0
      %5598 = vmatprep.subr.mxu0 0.0
      %5599 = vmatpush1.msra.mxu0 0.0
      %5600 = vmatprep.subr.mxu0 0.0
      %5601 = vmatpush1.msra.mxu0 0.0
      %5602 = vmatprep.mubr.f32.mxu0 0.0
      %5603 = vmatmul.mubr.f32.gmra.mrb[0].mxu0 %v2147
      %v5604 = vpop.f32.mrb[0].mxu0
      %v5605 = vadd.f32 %v5453, %v5604
      %v5606 = vpop.f32.mrb[0].mxu0
      %v5607 = vadd.f32 %v5453, %v5606
      %5608 = vdwg.mxu0
      %v5609 = vadd.f32 %v5534, %v2303
      %v5610 = vadd.f32 %v5536, %v2303
      %v5611 = vadd.f32 %v5605, %v2303
      %v5612 = vadd.f32 %v5607, %v2303
      %v5613 = vmax.f32 %v5609, 0.0
      %v5614 = vmax.f32 %v5610, 0.0
      %v5615 = vmax.f32 %v5611, 0.0
      %v5616 = vmax.f32 %v5612, 0.0
      %5617 = vmatprep.subr.mxu0 %v5614
      %5618 = vmatpush1.msra.mxu0 %v5613
      %5619 = vmatprep.subr.mxu0 0.0
      %5620 = vmatpush1.msra.mxu0 0.0
      %5621 = vmatprep.subr.mxu0 0.0
      %5622 = vmatpush1.msra.mxu0 0.0
      %5623 = vmatprep.subr.mxu0 0.0
      %5624 = vmatpush1.msra.mxu0 0.0
      %5625 = vmatprep.subr.mxu0 0.0
      %5626 = vmatpush1.msra.mxu0 0.0
      %5627 = vmatprep.subr.mxu0 0.0
      %5628 = vmatpush1.msra.mxu0 0.0
      %5629 = vmatprep.subr.mxu0 0.0
      %5630 = vmatpush1.msra.mxu0 0.0
      %5631 = vmatprep.subr.mxu0 0.0
      %5632 = vmatpush1.msra.mxu0 0.0
      %5633 = vmatprep.subr.mxu0 0.0
      %5634 = vmatpush1.msra.mxu0 0.0
      %5635 = vmatprep.subr.mxu0 0.0
      %5636 = vmatpush1.msra.mxu0 0.0
      %5637 = vmatprep.subr.mxu0 0.0
      %5638 = vmatpush1.msra.mxu0 0.0
      %5639 = vmatprep.subr.mxu0 0.0
      %5640 = vmatpush1.msra.mxu0 0.0
      %5641 = vmatprep.subr.mxu0 0.0
      %5642 = vmatpush1.msra.mxu0 0.0
      %5643 = vmatprep.subr.mxu0 0.0
      %5644 = vmatpush1.msra.mxu0 0.0
      %5645 = vmatprep.subr.mxu0 0.0
      %5646 = vmatpush1.msra.mxu0 0.0
      %5647 = vmatprep.subr.mxu0 0.0
      %5648 = vmatpush1.msra.mxu0 0.0
      %5649 = vmatprep.subr.mxu0 0.0
      %5650 = vmatpush1.msra.mxu0 0.0
      %5651 = vmatprep.subr.mxu0 0.0
      %5652 = vmatpush1.msra.mxu0 0.0
      %5653 = vmatprep.subr.mxu0 0.0
      %5654 = vmatpush1.msra.mxu0 0.0
      %5655 = vmatprep.subr.mxu0 0.0
      %5656 = vmatpush1.msra.mxu0 0.0
      %5657 = vmatprep.subr.mxu0 0.0
      %5658 = vmatpush1.msra.mxu0 0.0
      %5659 = vmatprep.subr.mxu0 0.0
      %5660 = vmatpush1.msra.mxu0 0.0
      %5661 = vmatprep.subr.mxu0 0.0
      %5662 = vmatpush1.msra.mxu0 0.0
      %5663 = vmatprep.subr.mxu0 0.0
      %5664 = vmatpush1.msra.mxu0 0.0
      %5665 = vmatprep.subr.mxu0 0.0
      %5666 = vmatpush1.msra.mxu0 0.0
      %5667 = vmatprep.subr.mxu0 0.0
      %5668 = vmatpush1.msra.mxu0 0.0
      %5669 = vmatprep.subr.mxu0 0.0
      %5670 = vmatpush1.msra.mxu0 0.0
      %5671 = vmatprep.subr.mxu0 0.0
      %5672 = vmatpush1.msra.mxu0 0.0
      %5673 = vmatprep.subr.mxu0 0.0
      %5674 = vmatpush1.msra.mxu0 0.0
      %5675 = vmatprep.subr.mxu0 0.0
      %5676 = vmatpush1.msra.mxu0 0.0
      %5677 = vmatprep.subr.mxu0 0.0
      %5678 = vmatpush1.msra.mxu0 0.0
      %5679 = vmatprep.subr.mxu0 0.0
      %5680 = vmatpush1.msra.mxu0 0.0
      %5681 = vmatprep.mubr.f32.mxu0 0.0
      %5682 = vmatmul.mubr.f32.gmra.mrb[0].mxu0 %v2323
      %v5683 = vpop.f32.mrb[0].mxu0
      %v5684 = vadd.f32 0.0, %v5683
      %v5685 = vpop.f32.mrb[0].mxu0
      %v5686 = vadd.f32 0.0, %v5685
      %5687 = vmatprep.mubr.f32.mxu0 0.0
      %5688 = vmatmul.mubr.f32.gmra.mrb[0].mxu0 %v2326
      %v5689 = vpop.f32.mrb[0].mxu0
      %v5690 = vadd.f32 0.0, %v5689
      %v5691 = vpop.f32.mrb[0].mxu0
      %v5692 = vadd.f32 0.0, %v5691
      %5693 = vmatprep.mubr.f32.mxu0 0.0
      %5694 = vmatmul.mubr.f32.gmra.mrb[0].mxu0 %v2329
      %v5695 = vpop.f32.mrb[0].mxu0
      %v5696 = vadd.f32 0.0, %v5695
      %v5697 = vpop.f32.mrb[0].mxu0
      %v5698 = vadd.f32 0.0, %v5697
      %5699 = vmatprep.mubr.f32.mxu0 0.0
      %5700 = vmatmul.mubr.f32.gmra.mrb[0].mxu0 %v2332
      %v5701 = vpop.f32.mrb[0].mxu0
      %v5702 = vadd.f32 0.0, %v5701
      %v5703 = vpop.f32.mrb[0].mxu0
      %v5704 = vadd.f32 0.0, %v5703
      %5705 = vmatprep.mubr.f32.mxu0 0.0
      %5706 = vmatmul.mubr.f32.gmra.mrb[0].mxu0 %v2335
      %v5707 = vpop.f32.mrb[0].mxu0
      %v5708 = vadd.f32 0.0, %v5707
      %v5709 = vpop.f32.mrb[0].mxu0
      %v5710 = vadd.f32 0.0, %v5709
      %5711 = vmatprep.mubr.f32.mxu0 0.0
      %5712 = vmatmul.mubr.f32.gmra.mrb[0].mxu0 %v2338
      %v5713 = vpop.f32.mrb[0].mxu0
      %v5714 = vadd.f32 0.0, %v5713
      %v5715 = vpop.f32.mrb[0].mxu0
      %v5716 = vadd.f32 0.0, %v5715
      %5717 = vmatprep.mubr.f32.mxu0 0.0
      %5718 = vmatmul.mubr.f32.gmra.mrb[0].mxu0 %v2341
      %v5719 = vpop.f32.mrb[0].mxu0
      %v5720 = vadd.f32 0.0, %v5719
      %v5721 = vpop.f32.mrb[0].mxu0
      %v5722 = vadd.f32 0.0, %v5721
      %5723 = vmatprep.mubr.f32.mxu0 0.0
      %5724 = vmatmul.mubr.f32.gmra.mrb[0].mxu0 %v2344
      %v5725 = vpop.f32.mrb[0].mxu0
      %v5726 = vadd.f32 0.0, %v5725
      %v5727 = vpop.f32.mrb[0].mxu0
      %v5728 = vadd.f32 0.0, %v5727
      %5729 = vmatprep.mubr.f32.mxu0 0.0
      %5730 = vmatmul.mubr.f32.gmra.mrb[0].mxu0 %v2347
      %v5731 = vpop.f32.mrb[0].mxu0
      %v5732 = vadd.f32 0.0, %v5731
      %v5733 = vpop.f32.mrb[0].mxu0
      %v5734 = vadd.f32 0.0, %v5733
      %5735 = vdwg.mxu0
      %5736 = vmatprep.subr.mxu0 %v5616
      %5737 = vmatpush1.msra.mxu0 %v5615
      %5738 = vmatprep.subr.mxu0 0.0
      %5739 = vmatpush1.msra.mxu0 0.0
      %5740 = vmatprep.subr.mxu0 0.0
      %5741 = vmatpush1.msra.mxu0 0.0
      %5742 = vmatprep.subr.mxu0 0.0
      %5743 = vmatpush1.msra.mxu0 0.0
      %5744 = vmatprep.subr.mxu0 0.0
      %5745 = vmatpush1.msra.mxu0 0.0
      %5746 = vmatprep.subr.mxu0 0.0
      %5747 = vmatpush1.msra.mxu0 0.0
      %5748 = vmatprep.subr.mxu0 0.0
      %5749 = vmatpush1.msra.mxu0 0.0
      %5750 = vmatprep.subr.mxu0 0.0
      %5751 = vmatpush1.msra.mxu0 0.0
      %5752 = vmatprep.subr.mxu0 0.0
      %5753 = vmatpush1.msra.mxu0 0.0
      %5754 = vmatprep.subr.mxu0 0.0
      %5755 = vmatpush1.msra.mxu0 0.0
      %5756 = vmatprep.subr.mxu0 0.0
      %5757 = vmatpush1.msra.mxu0 0.0
      %5758 = vmatprep.subr.mxu0 0.0
      %5759 = vmatpush1.msra.mxu0 0.0
      %5760 = vmatprep.subr.mxu0 0.0
      %5761 = vmatpush1.msra.mxu0 0.0
      %5762 = vmatprep.subr.mxu0 0.0
      %5763 = vmatpush1.msra.mxu0 0.0
      %5764 = vmatprep.subr.mxu0 0.0
      %5765 = vmatpush1.msra.mxu0 0.0
      %5766 = vmatprep.subr.mxu0 0.0
      %5767 = vmatpush1.msra.mxu0 0.0
      %5768 = vmatprep.subr.mxu0 0.0
      %5769 = vmatpush1.msra.mxu0 0.0
      %5770 = vmatprep.subr.mxu0 0.0
      %5771 = vmatpush1.msra.mxu0 0.0
      %5772 = vmatprep.subr.mxu0 0.0
      %5773 = vmatpush1.msra.mxu0 0.0
      %5774 = vmatprep.subr.mxu0 0.0
      %5775 = vmatpush1.msra.mxu0 0.0
      %5776 = vmatprep.subr.mxu0 0.0
      %5777 = vmatpush1.msra.mxu0 0.0
      %5778 = vmatprep.subr.mxu0 0.0
      %5779 = vmatpush1.msra.mxu0 0.0
      %5780 = vmatprep.subr.mxu0 0.0
      %5781 = vmatpush1.msra.mxu0 0.0
      %5782 = vmatprep.subr.mxu0 0.0
      %5783 = vmatpush1.msra.mxu0 0.0
      %5784 = vmatprep.subr.mxu0 0.0
      %5785 = vmatpush1.msra.mxu0 0.0
      %5786 = vmatprep.subr.mxu0 0.0
      %5787 = vmatpush1.msra.mxu0 0.0
      %5788 = vmatprep.subr.mxu0 0.0
      %5789 = vmatpush1.msra.mxu0 0.0
      %5790 = vmatprep.subr.mxu0 0.0
      %5791 = vmatpush1.msra.mxu0 0.0
      %5792 = vmatprep.subr.mxu0 0.0
      %5793 = vmatpush1.msra.mxu0 0.0
      %5794 = vmatprep.subr.mxu0 0.0
      %5795 = vmatpush1.msra.mxu0 0.0
      %5796 = vmatprep.subr.mxu0 0.0
      %5797 = vmatpush1.msra.mxu0 0.0
      %5798 = vmatprep.subr.mxu0 0.0
      %5799 = vmatpush1.msra.mxu0 0.0
      %5800 = vmatprep.mubr.f32.mxu0 0.0
      %5801 = vmatmul.mubr.f32.gmra.mrb[0].mxu0 %v2323
      %v5802 = vpop.f32.mrb[0].mxu0
      %v5803 = vadd.f32 0.0, %v5802
      %v5804 = vpop.f32.mrb[0].mxu0
      %v5805 = vadd.f32 0.0, %v5804
      %5806 = vmatprep.mubr.f32.mxu0 0.0
      %5807 = vmatmul.mubr.f32.gmra.mrb[0].mxu0 %v2326
      %v5808 = vpop.f32.mrb[0].mxu0
      %v5809 = vadd.f32 0.0, %v5808
      %v5810 = vpop.f32.mrb[0].mxu0
      %v5811 = vadd.f32 0.0, %v5810
      %5812 = vmatprep.mubr.f32.mxu0 0.0
      %5813 = vmatmul.mubr.f32.gmra.mrb[0].mxu0 %v2329
      %v5814 = vpop.f32.mrb[0].mxu0
      %v5815 = vadd.f32 0.0, %v5814
      %v5816 = vpop.f32.mrb[0].mxu0
      %v5817 = vadd.f32 0.0, %v5816
      %5818 = vmatprep.mubr.f32.mxu0 0.0
      %5819 = vmatmul.mubr.f32.gmra.mrb[0].mxu0 %v2332
      %v5820 = vpop.f32.mrb[0].mxu0
      %v5821 = vadd.f32 0.0, %v5820
      %v5822 = vpop.f32.mrb[0].mxu0
      %v5823 = vadd.f32 0.0, %v5822
      %5824 = vmatprep.mubr.f32.mxu0 0.0
      %5825 = vmatmul.mubr.f32.gmra.mrb[0].mxu0 %v2335
      %v5826 = vpop.f32.mrb[0].mxu0
      %v5827 = vadd.f32 0.0, %v5826
      %v5828 = vpop.f32.mrb[0].mxu0
      %v5829 = vadd.f32 0.0, %v5828
      %5830 = vmatprep.mubr.f32.mxu0 0.0
      %5831 = vmatmul.mubr.f32.gmra.mrb[0].mxu0 %v2338
      %v5832 = vpop.f32.mrb[0].mxu0
      %v5833 = vadd.f32 0.0, %v5832
      %v5834 = vpop.f32.mrb[0].mxu0
      %v5835 = vadd.f32 0.0, %v5834
      %5836 = vmatprep.mubr.f32.mxu0 0.0
      %5837 = vmatmul.mubr.f32.gmra.mrb[0].mxu0 %v2341
      %v5838 = vpop.f32.mrb[0].mxu0
      %v5839 = vadd.f32 0.0, %v5838
      %v5840 = vpop.f32.mrb[0].mxu0
      %v5841 = vadd.f32 0.0, %v5840
      %5842 = vmatprep.mubr.f32.mxu0 0.0
      %5843 = vmatmul.mubr.f32.gmra.mrb[0].mxu0 %v2344
      %v5844 = vpop.f32.mrb[0].mxu0
      %v5845 = vadd.f32 0.0, %v5844
      %v5846 = vpop.f32.mrb[0].mxu0
      %v5847 = vadd.f32 0.0, %v5846
      %5848 = vmatprep.mubr.f32.mxu0 0.0
      %5849 = vmatmul.mubr.f32.gmra.mrb[0].mxu0 %v2347
      %v5850 = vpop.f32.mrb[0].mxu0
      %v5851 = vadd.f32 0.0, %v5850
      %v5852 = vpop.f32.mrb[0].mxu0
      %v5853 = vadd.f32 0.0, %v5852
      %5854 = vdwg.mxu0
      %5855 = vrot.lane.b32.xlu0 %v5684, 17
      %v5856 = vpop.permute.xlu0 %5855
      %5857 = vrot.lane.b32.xlu0 %v5686, 17
      %v5858 = vpop.permute.xlu0 %5857
      %5859 = vrot.lane.b32.xlu0 %v5803, 17
      %v5860 = vpop.permute.xlu0 %5859
      %5861 = vrot.lane.b32.xlu0 %v5805, 17
      %v5862 = vpop.permute.xlu0 %5861
      %v5863 = vsel %vm519, %v5860, %v5862
      %v5864 = vsel %vm519, %v5858, %v5860
      %v5865 = vsel %vm519, %v5856, %v5858
      %v5866 = vsel %vm519, %v5862, %v5856
      %v5867 = vmul.f32 %v5866, %v2610
      %v5868 = vmul.f32 %v5865, %v2614
      %v5869 = vmul.f32 %v5864, %v2618
      %v5870 = vmul.f32 %v5863, %v2622
      %v5871 = vadd.f32 %v5708, %v5867
      %v5872 = vadd.f32 %v5710, %v5868
      %v5873 = vadd.f32 %v5827, %v5869
      %v5874 = vadd.f32 %v5829, %v5870
      %5875 = vrot.lane.b32.xlu0 %v5690, 16
      %v5876 = vpop.permute.xlu0 %5875
      %5877 = vrot.lane.b32.xlu0 %v5692, 16
      %v5878 = vpop.permute.xlu0 %5877
      %5879 = vrot.lane.b32.xlu0 %v5809, 16
      %v5880 = vpop.permute.xlu0 %5879
      %5881 = vrot.lane.b32.xlu0 %v5811, 16
      %v5882 = vpop.permute.xlu0 %5881
      %v5883 = vsel %vm556, %v5880, %v5882
      %v5884 = vsel %vm556, %v5878, %v5880
      %v5885 = vsel %vm556, %v5876, %v5878
      %v5886 = vsel %vm556, %v5882, %v5876
      %v5887 = vmul.f32 %v5886, %v2646
      %v5888 = vmul.f32 %v5885, %v2650
      %v5889 = vmul.f32 %v5884, %v2654
      %v5890 = vmul.f32 %v5883, %v2658
      %v5891 = vadd.f32 %v5871, %v5887
      %v5892 = vadd.f32 %v5872, %v5888
      %v5893 = vadd.f32 %v5873, %v5889
      %v5894 = vadd.f32 %v5874, %v5890
      %5895 = vrot.lane.b32.xlu0 %v5696, 15
      %v5896 = vpop.permute.xlu0 %5895
      %5897 = vrot.lane.b32.xlu0 %v5698, 15
      %v5898 = vpop.permute.xlu0 %5897
      %5899 = vrot.lane.b32.xlu0 %v5815, 15
      %v5900 = vpop.permute.xlu0 %5899
      %5901 = vrot.lane.b32.xlu0 %v5817, 15
      %v5902 = vpop.permute.xlu0 %5901
      %v5903 = vsel %vm593, %v5900, %v5902
      %v5904 = vsel %vm593, %v5898, %v5900
      %v5905 = vsel %vm593, %v5896, %v5898
      %v5906 = vsel %vm593, %v5902, %v5896
      %v5907 = vmul.f32 %v5906, %v2682
      %v5908 = vmul.f32 %v5905, %v2686
      %v5909 = vmul.f32 %v5904, %v2690
      %v5910 = vmul.f32 %v5903, %v2694
      %v5911 = vadd.f32 %v5891, %v5907
      %v5912 = vadd.f32 %v5892, %v5908
      %v5913 = vadd.f32 %v5893, %v5909
      %v5914 = vadd.f32 %v5894, %v5910
      %5915 = vrot.lane.b32.xlu0 %v5702, 1
      %v5916 = vpop.permute.xlu0 %5915
      %5917 = vrot.lane.b32.xlu0 %v5704, 1
      %v5918 = vpop.permute.xlu0 %5917
      %5919 = vrot.lane.b32.xlu0 %v5821, 1
      %v5920 = vpop.permute.xlu0 %5919
      %5921 = vrot.lane.b32.xlu0 %v5823, 1
      %v5922 = vpop.permute.xlu0 %5921
      %v5923 = vsel %vm630, %v5920, %v5922
      %v5924 = vsel %vm630, %v5918, %v5920
      %v5925 = vsel %vm630, %v5916, %v5918
      %v5926 = vsel %vm630, %v5922, %v5916
      %v5927 = vmul.f32 %v5926, %v2718
      %v5928 = vmul.f32 %v5925, %v2722
      %v5929 = vmul.f32 %v5924, %v2726
      %v5930 = vmul.f32 %v5923, %v2730
      %v5931 = vadd.f32 %v5911, %v5927
      %v5932 = vadd.f32 %v5912, %v5928
      %v5933 = vadd.f32 %v5913, %v5929
      %v5934 = vadd.f32 %v5914, %v5930
      %5935 = vrot.lane.b32.xlu0 %v5714, 127
      %v5936 = vpop.permute.xlu0 %5935
      %5937 = vrot.lane.b32.xlu0 %v5716, 127
      %v5938 = vpop.permute.xlu0 %5937
      %5939 = vrot.lane.b32.xlu0 %v5833, 127
      %v5940 = vpop.permute.xlu0 %5939
      %5941 = vrot.lane.b32.xlu0 %v5835, 127
      %v5942 = vpop.permute.xlu0 %5941
      %v5943 = vsel %vm667, %v5940, %v5942
      %v5944 = vsel %vm667, %v5938, %v5940
      %v5945 = vsel %vm667, %v5936, %v5938
      %v5946 = vsel %vm667, %v5942, %v5936
      %v5947 = vmul.f32 %v5945, %v2754
      %v5948 = vmul.f32 %v5944, %v2758
      %v5949 = vmul.f32 %v5943, %v2762
      %v5950 = vmul.f32 %v5946, %v2766
      %v5951 = vadd.f32 %v5931, %v5947
      %v5952 = vadd.f32 %v5932, %v5948
      %v5953 = vadd.f32 %v5933, %v5949
      %v5954 = vadd.f32 %v5934, %v5950
      %5955 = vrot.lane.b32.xlu0 %v5720, 113
      %v5956 = vpop.permute.xlu0 %5955
      %5957 = vrot.lane.b32.xlu0 %v5722, 113
      %v5958 = vpop.permute.xlu0 %5957
      %5959 = vrot.lane.b32.xlu0 %v5839, 113
      %v5960 = vpop.permute.xlu0 %5959
      %5961 = vrot.lane.b32.xlu0 %v5841, 113
      %v5962 = vpop.permute.xlu0 %5961
      %v5963 = vsel %vm704, %v5960, %v5962
      %v5964 = vsel %vm704, %v5958, %v5960
      %v5965 = vsel %vm704, %v5956, %v5958
      %v5966 = vsel %vm704, %v5962, %v5956
      %v5967 = vmul.f32 %v5965, %v2790
      %v5968 = vmul.f32 %v5964, %v2794
      %v5969 = vmul.f32 %v5963, %v2798
      %v5970 = vmul.f32 %v5966, %v2802
      %v5971 = vadd.f32 %v5951, %v5967
      %v5972 = vadd.f32 %v5952, %v5968
      %v5973 = vadd.f32 %v5953, %v5969
      %v5974 = vadd.f32 %v5954, %v5970
      %5975 = vrot.lane.b32.xlu0 %v5726, 112
      %v5976 = vpop.permute.xlu0 %5975
      %5977 = vrot.lane.b32.xlu0 %v5728, 112
      %v5978 = vpop.permute.xlu0 %5977
      %5979 = vrot.lane.b32.xlu0 %v5845, 112
      %v5980 = vpop.permute.xlu0 %5979
      %5981 = vrot.lane.b32.xlu0 %v5847, 112
      %v5982 = vpop.permute.xlu0 %5981
      %v5983 = vsel %vm741, %v5980, %v5982
      %v5984 = vsel %vm741, %v5978, %v5980
      %v5985 = vsel %vm741, %v5976, %v5978
      %v5986 = vsel %vm741, %v5982, %v5976
      %v5987 = vmul.f32 %v5985, %v2826
      %v5988 = vmul.f32 %v5984, %v2830
      %v5989 = vmul.f32 %v5983, %v2834
      %v5990 = vmul.f32 %v5986, %v2838
      %v5991 = vadd.f32 %v5971, %v5987
      %v5992 = vadd.f32 %v5972, %v5988
      %v5993 = vadd.f32 %v5973, %v5989
      %v5994 = vadd.f32 %v5974, %v5990
      %5995 = vrot.lane.b32.xlu0 %v5732, 111
      %v5996 = vpop.permute.xlu0 %5995
      %5997 = vrot.lane.b32.xlu0 %v5734, 111
      %v5998 = vpop.permute.xlu0 %5997
      %5999 = vrot.lane.b32.xlu0 %v5851, 111
      %v6000 = vpop.permute.xlu0 %5999
      %6001 = vrot.lane.b32.xlu0 %v5853, 111
      %v6002 = vpop.permute.xlu0 %6001
      %v6003 = vsel %vm778, %v6000, %v6002
      %v6004 = vsel %vm778, %v5998, %v6000
      %v6005 = vsel %vm778, %v5996, %v5998
      %v6006 = vsel %vm778, %v6002, %v5996
      %v6007 = vmul.f32 %v6005, %v2862
      %v6008 = vmul.f32 %v6004, %v2866
      %v6009 = vmul.f32 %v6003, %v2870
      %v6010 = vmul.f32 %v6006, %v2874
      %v6011 = vadd.f32 %v5991, %v6007
      %v6012 = vadd.f32 %v5992, %v6008
      %v6013 = vadd.f32 %v5993, %v6009
      %v6014 = vadd.f32 %v5994, %v6010
      %v6015 = vmul.f32 %v5448, %v2883
      %v6016 = vmul.f32 %v5448, %v2884
      %v6017 = vmul.f32 %v5448, %v2885
      %v6018 = vmul.f32 %v5448, %v2886
      %v6019 = vadd.f32 %v6011, %v6015
      %v6020 = vadd.f32 %v6012, %v6016
      %v6021 = vadd.f32 %v6013, %v6017
      %v6022 = vadd.f32 %v6014, %v6018
      %v6023 = vadd.f32 %v6019, %v2899
      %v6024 = vadd.f32 %v6020, %v2899
      %v6025 = vadd.f32 %v6021, %v2899
      %v6026 = vadd.f32 %v6022, %v2899
      %v6027 = vmax.f32 %v6023, 0.0
      %v6028 = vmax.f32 %v6024, 0.0
      %v6029 = vmax.f32 %v6025, 0.0
      %v6030 = vmax.f32 %v6026, 0.0
      %v6031 = vmul.f32 %v5448, %v2910
      %6033 = vset.pattern.permute.xlu0 0
      %6034 = vperm.xlu0 %6033, %v6031
      %v6035 = vpop.permute.xlu0 %6034
      %6037 = vmatprep.subr.mxu0 %v6028
      %6038 = vmatpush1.msra.mxu0 %v6027
      %6039 = vmatprep.subr.mxu0 0.0
      %6040 = vmatpush1.msra.mxu0 0.0
      %6041 = vmatprep.subr.mxu0 0.0
      %6042 = vmatpush1.msra.mxu0 0.0
      %6043 = vmatprep.subr.mxu0 0.0
      %6044 = vmatpush1.msra.mxu0 0.0
      %6045 = vmatprep.subr.mxu0 0.0
      %6046 = vmatpush1.msra.mxu0 0.0
      %6047 = vmatprep.subr.mxu0 0.0
      %6048 = vmatpush1.msra.mxu0 0.0
      %6049 = vmatprep.subr.mxu0 0.0
      %6050 = vmatpush1.msra.mxu0 0.0
      %6051 = vmatprep.subr.mxu0 0.0
      %6052 = vmatpush1.msra.mxu0 0.0
      %6053 = vmatprep.subr.mxu0 0.0
      %6054 = vmatpush1.msra.mxu0 0.0
      %6055 = vmatprep.subr.mxu0 0.0
      %6056 = vmatpush1.msra.mxu0 0.0
      %6057 = vmatprep.subr.mxu0 0.0
      %6058 = vmatpush1.msra.mxu0 0.0
      %6059 = vmatprep.subr.mxu0 0.0
      %6060 = vmatpush1.msra.mxu0 0.0
      %6061 = vmatprep.subr.mxu0 0.0
      %6062 = vmatpush1.msra.mxu0 0.0
      %6063 = vmatprep.subr.mxu0 0.0
      %6064 = vmatpush1.msra.mxu0 0.0
      %6065 = vmatprep.subr.mxu0 0.0
      %6066 = vmatpush1.msra.mxu0 0.0
      %6067 = vmatprep.subr.mxu0 0.0
      %6068 = vmatpush1.msra.mxu0 0.0
      %6069 = vmatprep.subr.mxu0 0.0
      %6070 = vmatpush1.msra.mxu0 0.0
      %6071 = vmatprep.subr.mxu0 0.0
      %6072 = vmatpush1.msra.mxu0 0.0
      %6073 = vmatprep.subr.mxu0 0.0
      %6074 = vmatpush1.msra.mxu0 0.0
      %6075 = vmatprep.subr.mxu0 0.0
      %6076 = vmatpush1.msra.mxu0 0.0
      %6077 = vmatprep.subr.mxu0 0.0
      %6078 = vmatpush1.msra.mxu0 0.0
      %6079 = vmatprep.subr.mxu0 0.0
      %6080 = vmatpush1.msra.mxu0 0.0
      %6081 = vmatprep.subr.mxu0 0.0
      %6082 = vmatpush1.msra.mxu0 0.0
      %6083 = vmatprep.subr.mxu0 0.0
      %6084 = vmatpush1.msra.mxu0 0.0
      %6085 = vmatprep.subr.mxu0 0.0
      %6086 = vmatpush1.msra.mxu0 0.0
      %6087 = vmatprep.subr.mxu0 0.0
      %6088 = vmatpush1.msra.mxu0 0.0
      %6089 = vmatprep.subr.mxu0 0.0
      %6090 = vmatpush1.msra.mxu0 0.0
      %6091 = vmatprep.subr.mxu0 0.0
      %6092 = vmatpush1.msra.mxu0 0.0
      %6093 = vmatprep.subr.mxu0 0.0
      %6094 = vmatpush1.msra.mxu0 0.0
      %6095 = vmatprep.subr.mxu0 0.0
      %6096 = vmatpush1.msra.mxu0 0.0
      %6097 = vmatprep.subr.mxu0 0.0
      %6098 = vmatpush1.msra.mxu0 0.0
      %6099 = vmatprep.subr.mxu0 0.0
      %6100 = vmatpush1.msra.mxu0 0.0
      %6101 = vmatprep.mubr.f32.mxu0 0.0
      %6102 = vmatmul.mubr.f32.gmra.mrb[0].mxu0 %v2918
      %v6103 = vpop.f32.mrb[0].mxu0
      %v6104 = vadd.f32 %v6035, %v6103
      %v6105 = vpop.f32.mrb[0].mxu0
      %v6106 = vadd.f32 %v6035, %v6105
      %6107 = vdwg.mxu0
      %6108 = vmatprep.subr.mxu0 %v6030
      %6109 = vmatpush1.msra.mxu0 %v6029
      %6110 = vmatprep.subr.mxu0 0.0
      %6111 = vmatpush1.msra.mxu0 0.0
      %6112 = vmatprep.subr.mxu0 0.0
      %6113 = vmatpush1.msra.mxu0 0.0
      %6114 = vmatprep.subr.mxu0 0.0
      %6115 = vmatpush1.msra.mxu0 0.0
      %6116 = vmatprep.subr.mxu0 0.0
      %6117 = vmatpush1.msra.mxu0 0.0
      %6118 = vmatprep.subr.mxu0 0.0
      %6119 = vmatpush1.msra.mxu0 0.0
      %6120 = vmatprep.subr.mxu0 0.0
      %6121 = vmatpush1.msra.mxu0 0.0
      %6122 = vmatprep.subr.mxu0 0.0
      %6123 = vmatpush1.msra.mxu0 0.0
      %6124 = vmatprep.subr.mxu0 0.0
      %6125 = vmatpush1.msra.mxu0 0.0
      %6126 = vmatprep.subr.mxu0 0.0
      %6127 = vmatpush1.msra.mxu0 0.0
      %6128 = vmatprep.subr.mxu0 0.0
      %6129 = vmatpush1.msra.mxu0 0.0
      %6130 = vmatprep.subr.mxu0 0.0
      %6131 = vmatpush1.msra.mxu0 0.0
      %6132 = vmatprep.subr.mxu0 0.0
      %6133 = vmatpush1.msra.mxu0 0.0
      %6134 = vmatprep.subr.mxu0 0.0
      %6135 = vmatpush1.msra.mxu0 0.0
      %6136 = vmatprep.subr.mxu0 0.0
      %6137 = vmatpush1.msra.mxu0 0.0
      %6138 = vmatprep.subr.mxu0 0.0
      %6139 = vmatpush1.msra.mxu0 0.0
      %6140 = vmatprep.subr.mxu0 0.0
      %6141 = vmatpush1.msra.mxu0 0.0
      %6142 = vmatprep.subr.mxu0 0.0
      %6143 = vmatpush1.msra.mxu0 0.0
      %6144 = vmatprep.subr.mxu0 0.0
      %6145 = vmatpush1.msra.mxu0 0.0
      %6146 = vmatprep.subr.mxu0 0.0
      %6147 = vmatpush1.msra.mxu0 0.0
      %6148 = vmatprep.subr.mxu0 0.0
      %6149 = vmatpush1.msra.mxu0 0.0
      %6150 = vmatprep.subr.mxu0 0.0
      %6151 = vmatpush1.msra.mxu0 0.0
      %6152 = vmatprep.subr.mxu0 0.0
      %6153 = vmatpush1.msra.mxu0 0.0
      %6154 = vmatprep.subr.mxu0 0.0
      %6155 = vmatpush1.msra.mxu0 0.0
      %6156 = vmatprep.subr.mxu0 0.0
      %6157 = vmatpush1.msra.mxu0 0.0
      %6158 = vmatprep.subr.mxu0 0.0
      %6159 = vmatpush1.msra.mxu0 0.0
      %6160 = vmatprep.subr.mxu0 0.0
      %6161 = vmatpush1.msra.mxu0 0.0
      %6162 = vmatprep.subr.mxu0 0.0
      %6163 = vmatpush1.msra.mxu0 0.0
      %6164 = vmatprep.subr.mxu0 0.0
      %6165 = vmatpush1.msra.mxu0 0.0
      %6166 = vmatprep.subr.mxu0 0.0
      %6167 = vmatpush1.msra.mxu0 0.0
      %6168 = vmatprep.subr.mxu0 0.0
      %6169 = vmatpush1.msra.mxu0 0.0
      %6170 = vmatprep.subr.mxu0 0.0
      %6171 = vmatpush1.msra.mxu0 0.0
      %6172 = vmatprep.mubr.f32.mxu0 0.0
      %6173 = vmatmul.mubr.f32.gmra.mrb[0].mxu0 %v2918
      %v6174 = vpop.f32.mrb[0].mxu0
      %v6175 = vadd.f32 %v6035, %v6174
      %v6176 = vpop.f32.mrb[0].mxu0
      %v6177 = vadd.f32 %v6035, %v6176
      %6178 = vdwg.mxu0
      %v6179 = vadd.f32 %v6104, %v3066
      %v6180 = vadd.f32 %v6106, %v3066
      %v6181 = vadd.f32 %v6175, %v3066
      %v6182 = vadd.f32 %v6177, %v3066
      %v6183 = vmul.f32 %v2122, 0.091145836
      %v6184 = vmul.f32 %v2123, 0.091145836
      %v6185 = vmul.f32 %v3825, 0.4492363
      %v6186 = vmul.f32 %v3826, 0.4492363
      %v6187 = vmul.f32 %v3827, 0.4492363
      %v6188 = vmul.f32 %v3828, 0.4492363
      %v6193 = vcombine.low %v6185, %v6186
      %v6194 = vcombine.low %v6187, %v6188
      %v6197 = vadd.f32 %v6183, %v6193
      %v6198 = vadd.f32 %v6184, %v6194
      %v6199 = vmul.f32 %v4596, 0.6510417
      %v6200 = vmul.f32 %v4597, 0.6510417
      %v6201 = vmul.f32 %v4598, 0.6510417
      %v6202 = vmul.f32 %v4599, 0.6510417
      %v6207 = vcombine.low %v6199, %v6200
      %v6208 = vcombine.low %v6201, %v6202
      %v6211 = vadd.f32 %v6197, %v6207
      %v6212 = vadd.f32 %v6198, %v6208
      %v6213 = vmul.f32 %v5381, -0.3223762
      %v6214 = vmul.f32 %v5382, -0.3223762
      %v6215 = vmul.f32 %v5383, -0.3223762
      %v6216 = vmul.f32 %v5384, -0.3223762
      %v6221 = vcombine.low %v6213, %v6214
      %v6222 = vcombine.low %v6215, %v6216
      %v6225 = vadd.f32 %v6211, %v6221
      %v6226 = vadd.f32 %v6212, %v6222
      %v6227 = vmul.f32 %v6179, 0.13095239
      %v6228 = vmul.f32 %v6180, 0.13095239
      %v6229 = vmul.f32 %v6181, 0.13095239
      %v6230 = vmul.f32 %v6182, 0.13095239
      %v6235 = vcombine.low %v6227, %v6228
      %v6236 = vcombine.low %v6229, %v6230
      %v6239 = vadd.f32 %v6225, %v6235
      %v6240 = vadd.f32 %v6226, %v6236
      %v6241 = vmul.f32 %v2128, %v6239
      %v6242 = vmul.f32 %v2128, %v6240
      %v6243 = vadd.f32 %v2118, %v6241
      %v6244 = vadd.f32 %v2119, %v6242
      %v6247 = vcombine.high %v6243, %v6243
      %v6248 = vcombine.high %v6244, %v6244
      %v6249 = vsel %vm61, %v6243, 0
      %v6251 = vsel %vm61, %v6247, 0
      %v6253 = vsel %vm61, %v6244, 0
      %v6255 = vsel %vm61, %v6248, 0
      %6257 = vmatprep.subr.mxu0 %v6251
      %6258 = vmatpush1.msra.mxu0 %v6249
      %6259 = vmatprep.subr.mxu0 0.0
      %6260 = vmatpush1.msra.mxu0 0.0
      %6261 = vmatprep.subr.mxu0 0.0
      %6262 = vmatpush1.msra.mxu0 0.0
      %6263 = vmatprep.subr.mxu0 0.0
      %6264 = vmatpush1.msra.mxu0 0.0
      %6265 = vmatprep.subr.mxu0 0.0
      %6266 = vmatpush1.msra.mxu0 0.0
      %6267 = vmatprep.subr.mxu0 0.0
      %6268 = vmatpush1.msra.mxu0 0.0
      %6269 = vmatprep.subr.mxu0 0.0
      %6270 = vmatpush1.msra.mxu0 0.0
      %6271 = vmatprep.subr.mxu0 0.0
      %6272 = vmatpush1.msra.mxu0 0.0
      %6273 = vmatprep.subr.mxu0 0.0
      %6274 = vmatpush1.msra.mxu0 0.0
      %6275 = vmatprep.subr.mxu0 0.0
      %6276 = vmatpush1.msra.mxu0 0.0
      %6277 = vmatprep.subr.mxu0 0.0
      %6278 = vmatpush1.msra.mxu0 0.0
      %6279 = vmatprep.subr.mxu0 0.0
      %6280 = vmatpush1.msra.mxu0 0.0
      %6281 = vmatprep.subr.mxu0 0.0
      %6282 = vmatpush1.msra.mxu0 0.0
      %6283 = vmatprep.subr.mxu0 0.0
      %6284 = vmatpush1.msra.mxu0 0.0
      %6285 = vmatprep.subr.mxu0 0.0
      %6286 = vmatpush1.msra.mxu0 0.0
      %6287 = vmatprep.subr.mxu0 0.0
      %6288 = vmatpush1.msra.mxu0 0.0
      %6289 = vmatprep.subr.mxu0 0.0
      %6290 = vmatpush1.msra.mxu0 0.0
      %6291 = vmatprep.subr.mxu0 0.0
      %6292 = vmatpush1.msra.mxu0 0.0
      %6293 = vmatprep.subr.mxu0 0.0
      %6294 = vmatpush1.msra.mxu0 0.0
      %6295 = vmatprep.subr.mxu0 0.0
      %6296 = vmatpush1.msra.mxu0 0.0
      %6297 = vmatprep.subr.mxu0 0.0
      %6298 = vmatpush1.msra.mxu0 0.0
      %6299 = vmatprep.subr.mxu0 0.0
      %6300 = vmatpush1.msra.mxu0 0.0
      %6301 = vmatprep.subr.mxu0 0.0
      %6302 = vmatpush1.msra.mxu0 0.0
      %6303 = vmatprep.subr.mxu0 0.0
      %6304 = vmatpush1.msra.mxu0 0.0
      %6305 = vmatprep.subr.mxu0 0.0
      %6306 = vmatpush1.msra.mxu0 0.0
      %6307 = vmatprep.subr.mxu0 0.0
      %6308 = vmatpush1.msra.mxu0 0.0
      %6309 = vmatprep.subr.mxu0 0.0
      %6310 = vmatpush1.msra.mxu0 0.0
      %6311 = vmatprep.subr.mxu0 0.0
      %6312 = vmatpush1.msra.mxu0 0.0
      %6313 = vmatprep.subr.mxu0 0.0
      %6314 = vmatpush1.msra.mxu0 0.0
      %6315 = vmatprep.subr.mxu0 0.0
      %6316 = vmatpush1.msra.mxu0 0.0
      %6317 = vmatprep.subr.mxu0 0.0
      %6318 = vmatpush1.msra.mxu0 0.0
      %6319 = vmatprep.subr.mxu0 0.0
      %6320 = vmatpush1.msra.mxu0 0.0
      %6321 = vmatprep.mubr.f32.mxu0 0.0
      %6322 = vmatmul.mubr.f32.gmra.mrb[0].mxu0 %v2147
      %v6323 = vpop.f32.mrb[0].mxu0
      %v6324 = vadd.f32 %v5453, %v6323
      %v6325 = vpop.f32.mrb[0].mxu0
      %v6326 = vadd.f32 %v5453, %v6325
      %6327 = vdwg.mxu0
      %6328 = vmatprep.subr.mxu0 %v6255
      %6329 = vmatpush1.msra.mxu0 %v6253
      %6330 = vmatprep.subr.mxu0 0.0
      %6331 = vmatpush1.msra.mxu0 0.0
      %6332 = vmatprep.subr.mxu0 0.0
      %6333 = vmatpush1.msra.mxu0 0.0
      %6334 = vmatprep.subr.mxu0 0.0
      %6335 = vmatpush1.msra.mxu0 0.0
      %6336 = vmatprep.subr.mxu0 0.0
      %6337 = vmatpush1.msra.mxu0 0.0
      %6338 = vmatprep.subr.mxu0 0.0
      %6339 = vmatpush1.msra.mxu0 0.0
      %6340 = vmatprep.subr.mxu0 0.0
      %6341 = vmatpush1.msra.mxu0 0.0
      %6342 = vmatprep.subr.mxu0 0.0
      %6343 = vmatpush1.msra.mxu0 0.0
      %6344 = vmatprep.subr.mxu0 0.0
      %6345 = vmatpush1.msra.mxu0 0.0
      %6346 = vmatprep.subr.mxu0 0.0
      %6347 = vmatpush1.msra.mxu0 0.0
      %6348 = vmatprep.subr.mxu0 0.0
      %6349 = vmatpush1.msra.mxu0 0.0
      %6350 = vmatprep.subr.mxu0 0.0
      %6351 = vmatpush1.msra.mxu0 0.0
      %6352 = vmatprep.subr.mxu0 0.0
      %6353 = vmatpush1.msra.mxu0 0.0
      %6354 = vmatprep.subr.mxu0 0.0
      %6355 = vmatpush1.msra.mxu0 0.0
      %6356 = vmatprep.subr.mxu0 0.0
      %6357 = vmatpush1.msra.mxu0 0.0
      %6358 = vmatprep.subr.mxu0 0.0
      %6359 = vmatpush1.msra.mxu0 0.0
      %6360 = vmatprep.subr.mxu0 0.0
      %6361 = vmatpush1.msra.mxu0 0.0
      %6362 = vmatprep.subr.mxu0 0.0
      %6363 = vmatpush1.msra.mxu0 0.0
      %6364 = vmatprep.subr.mxu0 0.0
      %6365 = vmatpush1.msra.mxu0 0.0
      %6366 = vmatprep.subr.mxu0 0.0
      %6367 = vmatpush1.msra.mxu0 0.0
      %6368 = vmatprep.subr.mxu0 0.0
      %6369 = vmatpush1.msra.mxu0 0.0
      %6370 = vmatprep.subr.mxu0 0.0
      %6371 = vmatpush1.msra.mxu0 0.0
      %6372 = vmatprep.subr.mxu0 0.0
      %6373 = vmatpush1.msra.mxu0 0.0
      %6374 = vmatprep.subr.mxu0 0.0
      %6375 = vmatpush1.msra.mxu0 0.0
      %6376 = vmatprep.subr.mxu0 0.0
      %6377 = vmatpush1.msra.mxu0 0.0
      %6378 = vmatprep.subr.mxu0 0.0
      %6379 = vmatpush1.msra.mxu0 0.0
      %6380 = vmatprep.subr.mxu0 0.0
      %6381 = vmatpush1.msra.mxu0 0.0
      %6382 = vmatprep.subr.mxu0 0.0
      %6383 = vmatpush1.msra.mxu0 0.0
      %6384 = vmatprep.subr.mxu0 0.0
      %6385 = vmatpush1.msra.mxu0 0.0
      %6386 = vmatprep.subr.mxu0 0.0
      %6387 = vmatpush1.msra.mxu0 0.0
      %6388 = vmatprep.subr.mxu0 0.0
      %6389 = vmatpush1.msra.mxu0 0.0
      %6390 = vmatprep.subr.mxu0 0.0
      %6391 = vmatpush1.msra.mxu0 0.0
      %6392 = vmatprep.mubr.f32.mxu0 0.0
      %6393 = vmatmul.mubr.f32.gmra.mrb[0].mxu0 %v2147
      %v6394 = vpop.f32.mrb[0].mxu0
      %v6395 = vadd.f32 %v5453, %v6394
      %v6396 = vpop.f32.mrb[0].mxu0
      %v6397 = vadd.f32 %v5453, %v6396
      %6398 = vdwg.mxu0
      %v6399 = vadd.f32 %v6324, %v2303
      %v6400 = vadd.f32 %v6326, %v2303
      %v6401 = vadd.f32 %v6395, %v2303
      %v6402 = vadd.f32 %v6397, %v2303
      %v6403 = vmax.f32 %v6399, 0.0
      %v6404 = vmax.f32 %v6400, 0.0
      %v6405 = vmax.f32 %v6401, 0.0
      %v6406 = vmax.f32 %v6402, 0.0
      %6407 = vmatprep.subr.mxu0 %v6404
      %6408 = vmatpush1.msra.mxu0 %v6403
      %6409 = vmatprep.subr.mxu0 0.0
      %6410 = vmatpush1.msra.mxu0 0.0
      %6411 = vmatprep.subr.mxu0 0.0
      %6412 = vmatpush1.msra.mxu0 0.0
      %6413 = vmatprep.subr.mxu0 0.0
      %6414 = vmatpush1.msra.mxu0 0.0
      %6415 = vmatprep.subr.mxu0 0.0
      %6416 = vmatpush1.msra.mxu0 0.0
      %6417 = vmatprep.subr.mxu0 0.0
      %6418 = vmatpush1.msra.mxu0 0.0
      %6419 = vmatprep.subr.mxu0 0.0
      %6420 = vmatpush1.msra.mxu0 0.0
      %6421 = vmatprep.subr.mxu0 0.0
      %6422 = vmatpush1.msra.mxu0 0.0
      %6423 = vmatprep.subr.mxu0 0.0
      %6424 = vmatpush1.msra.mxu0 0.0
      %6425 = vmatprep.subr.mxu0 0.0
      %6426 = vmatpush1.msra.mxu0 0.0
      %6427 = vmatprep.subr.mxu0 0.0
      %6428 = vmatpush1.msra.mxu0 0.0
      %6429 = vmatprep.subr.mxu0 0.0
      %6430 = vmatpush1.msra.mxu0 0.0
      %6431 = vmatprep.subr.mxu0 0.0
      %6432 = vmatpush1.msra.mxu0 0.0
      %6433 = vmatprep.subr.mxu0 0.0
      %6434 = vmatpush1.msra.mxu0 0.0
      %6435 = vmatprep.subr.mxu0 0.0
      %6436 = vmatpush1.msra.mxu0 0.0
      %6437 = vmatprep.subr.mxu0 0.0
      %6438 = vmatpush1.msra.mxu0 0.0
      %6439 = vmatprep.subr.mxu0 0.0
      %6440 = vmatpush1.msra.mxu0 0.0
      %6441 = vmatprep.subr.mxu0 0.0
      %6442 = vmatpush1.msra.mxu0 0.0
      %6443 = vmatprep.subr.mxu0 0.0
      %6444 = vmatpush1.msra.mxu0 0.0
      %6445 = vmatprep.subr.mxu0 0.0
      %6446 = vmatpush1.msra.mxu0 0.0
      %6447 = vmatprep.subr.mxu0 0.0
      %6448 = vmatpush1.msra.mxu0 0.0
      %6449 = vmatprep.subr.mxu0 0.0
      %6450 = vmatpush1.msra.mxu0 0.0
      %6451 = vmatprep.subr.mxu0 0.0
      %6452 = vmatpush1.msra.mxu0 0.0
      %6453 = vmatprep.subr.mxu0 0.0
      %6454 = vmatpush1.msra.mxu0 0.0
      %6455 = vmatprep.subr.mxu0 0.0
      %6456 = vmatpush1.msra.mxu0 0.0
      %6457 = vmatprep.subr.mxu0 0.0
      %6458 = vmatpush1.msra.mxu0 0.0
      %6459 = vmatprep.subr.mxu0 0.0
      %6460 = vmatpush1.msra.mxu0 0.0
      %6461 = vmatprep.subr.mxu0 0.0
      %6462 = vmatpush1.msra.mxu0 0.0
      %6463 = vmatprep.subr.mxu0 0.0
      %6464 = vmatpush1.msra.mxu0 0.0
      %6465 = vmatprep.subr.mxu0 0.0
      %6466 = vmatpush1.msra.mxu0 0.0
      %6467 = vmatprep.subr.mxu0 0.0
      %6468 = vmatpush1.msra.mxu0 0.0
      %6469 = vmatprep.subr.mxu0 0.0
      %6470 = vmatpush1.msra.mxu0 0.0
      %6471 = vmatprep.mubr.f32.mxu0 0.0
      %6472 = vmatmul.mubr.f32.gmra.mrb[0].mxu0 %v2323
      %v6473 = vpop.f32.mrb[0].mxu0
      %v6474 = vadd.f32 0.0, %v6473
      %v6475 = vpop.f32.mrb[0].mxu0
      %v6476 = vadd.f32 0.0, %v6475
      %6477 = vmatprep.mubr.f32.mxu0 0.0
      %6478 = vmatmul.mubr.f32.gmra.mrb[0].mxu0 %v2326
      %v6479 = vpop.f32.mrb[0].mxu0
      %v6480 = vadd.f32 0.0, %v6479
      %v6481 = vpop.f32.mrb[0].mxu0
      %v6482 = vadd.f32 0.0, %v6481
      %6483 = vmatprep.mubr.f32.mxu0 0.0
      %6484 = vmatmul.mubr.f32.gmra.mrb[0].mxu0 %v2329
      %v6485 = vpop.f32.mrb[0].mxu0
      %v6486 = vadd.f32 0.0, %v6485
      %v6487 = vpop.f32.mrb[0].mxu0
      %v6488 = vadd.f32 0.0, %v6487
      %6489 = vmatprep.mubr.f32.mxu0 0.0
      %6490 = vmatmul.mubr.f32.gmra.mrb[0].mxu0 %v2332
      %v6491 = vpop.f32.mrb[0].mxu0
      %v6492 = vadd.f32 0.0, %v6491
      %v6493 = vpop.f32.mrb[0].mxu0
      %v6494 = vadd.f32 0.0, %v6493
      %6495 = vmatprep.mubr.f32.mxu0 0.0
      %6496 = vmatmul.mubr.f32.gmra.mrb[0].mxu0 %v2335
      %v6497 = vpop.f32.mrb[0].mxu0
      %v6498 = vadd.f32 0.0, %v6497
      %v6499 = vpop.f32.mrb[0].mxu0
      %v6500 = vadd.f32 0.0, %v6499
      %6501 = vmatprep.mubr.f32.mxu0 0.0
      %6502 = vmatmul.mubr.f32.gmra.mrb[0].mxu0 %v2338
      %v6503 = vpop.f32.mrb[0].mxu0
      %v6504 = vadd.f32 0.0, %v6503
      %v6505 = vpop.f32.mrb[0].mxu0
      %v6506 = vadd.f32 0.0, %v6505
      %6507 = vmatprep.mubr.f32.mxu0 0.0
      %6508 = vmatmul.mubr.f32.gmra.mrb[0].mxu0 %v2341
      %v6509 = vpop.f32.mrb[0].mxu0
      %v6510 = vadd.f32 0.0, %v6509
      %v6511 = vpop.f32.mrb[0].mxu0
      %v6512 = vadd.f32 0.0, %v6511
      %6513 = vmatprep.mubr.f32.mxu0 0.0
      %6514 = vmatmul.mubr.f32.gmra.mrb[0].mxu0 %v2344
      %v6515 = vpop.f32.mrb[0].mxu0
      %v6516 = vadd.f32 0.0, %v6515
      %v6517 = vpop.f32.mrb[0].mxu0
      %v6518 = vadd.f32 0.0, %v6517
      %6519 = vmatprep.mubr.f32.mxu0 0.0
      %6520 = vmatmul.mubr.f32.gmra.mrb[0].mxu0 %v2347
      %v6521 = vpop.f32.mrb[0].mxu0
      %v6522 = vadd.f32 0.0, %v6521
      %v6523 = vpop.f32.mrb[0].mxu0
      %v6524 = vadd.f32 0.0, %v6523
      %6525 = vdwg.mxu0
      %6526 = vmatprep.subr.mxu0 %v6406
      %6527 = vmatpush1.msra.mxu0 %v6405
      %6528 = vmatprep.subr.mxu0 0.0
      %6529 = vmatpush1.msra.mxu0 0.0
      %6530 = vmatprep.subr.mxu0 0.0
      %6531 = vmatpush1.msra.mxu0 0.0
      %6532 = vmatprep.subr.mxu0 0.0
      %6533 = vmatpush1.msra.mxu0 0.0
      %6534 = vmatprep.subr.mxu0 0.0
      %6535 = vmatpush1.msra.mxu0 0.0
      %6536 = vmatprep.subr.mxu0 0.0
      %6537 = vmatpush1.msra.mxu0 0.0
      %6538 = vmatprep.subr.mxu0 0.0
      %6539 = vmatpush1.msra.mxu0 0.0
      %6540 = vmatprep.subr.mxu0 0.0
      %6541 = vmatpush1.msra.mxu0 0.0
      %6542 = vmatprep.subr.mxu0 0.0
      %6543 = vmatpush1.msra.mxu0 0.0
      %6544 = vmatprep.subr.mxu0 0.0
      %6545 = vmatpush1.msra.mxu0 0.0
      %6546 = vmatprep.subr.mxu0 0.0
      %6547 = vmatpush1.msra.mxu0 0.0
      %6548 = vmatprep.subr.mxu0 0.0
      %6549 = vmatpush1.msra.mxu0 0.0
      %6550 = vmatprep.subr.mxu0 0.0
      %6551 = vmatpush1.msra.mxu0 0.0
      %6552 = vmatprep.subr.mxu0 0.0
      %6553 = vmatpush1.msra.mxu0 0.0
      %6554 = vmatprep.subr.mxu0 0.0
      %6555 = vmatpush1.msra.mxu0 0.0
      %6556 = vmatprep.subr.mxu0 0.0
      %6557 = vmatpush1.msra.mxu0 0.0
      %6558 = vmatprep.subr.mxu0 0.0
      %6559 = vmatpush1.msra.mxu0 0.0
      %6560 = vmatprep.subr.mxu0 0.0
      %6561 = vmatpush1.msra.mxu0 0.0
      %6562 = vmatprep.subr.mxu0 0.0
      %6563 = vmatpush1.msra.mxu0 0.0
      %6564 = vmatprep.subr.mxu0 0.0
      %6565 = vmatpush1.msra.mxu0 0.0
      %6566 = vmatprep.subr.mxu0 0.0
      %6567 = vmatpush1.msra.mxu0 0.0
      %6568 = vmatprep.subr.mxu0 0.0
      %6569 = vmatpush1.msra.mxu0 0.0
      %6570 = vmatprep.subr.mxu0 0.0
      %6571 = vmatpush1.msra.mxu0 0.0
      %6572 = vmatprep.subr.mxu0 0.0
      %6573 = vmatpush1.msra.mxu0 0.0
      %6574 = vmatprep.subr.mxu0 0.0
      %6575 = vmatpush1.msra.mxu0 0.0
      %6576 = vmatprep.subr.mxu0 0.0
      %6577 = vmatpush1.msra.mxu0 0.0
      %6578 = vmatprep.subr.mxu0 0.0
      %6579 = vmatpush1.msra.mxu0 0.0
      %6580 = vmatprep.subr.mxu0 0.0
      %6581 = vmatpush1.msra.mxu0 0.0
      %6582 = vmatprep.subr.mxu0 0.0
      %6583 = vmatpush1.msra.mxu0 0.0
      %6584 = vmatprep.subr.mxu0 0.0
      %6585 = vmatpush1.msra.mxu0 0.0
      %6586 = vmatprep.subr.mxu0 0.0
      %6587 = vmatpush1.msra.mxu0 0.0
      %6588 = vmatprep.subr.mxu0 0.0
      %6589 = vmatpush1.msra.mxu0 0.0
      %6590 = vmatprep.mubr.f32.mxu0 0.0
      %6591 = vmatmul.mubr.f32.gmra.mrb[0].mxu0 %v2323
      %v6592 = vpop.f32.mrb[0].mxu0
      %v6593 = vadd.f32 0.0, %v6592
      %v6594 = vpop.f32.mrb[0].mxu0
      %v6595 = vadd.f32 0.0, %v6594
      %6596 = vmatprep.mubr.f32.mxu0 0.0
      %6597 = vmatmul.mubr.f32.gmra.mrb[0].mxu0 %v2326
      %v6598 = vpop.f32.mrb[0].mxu0
      %v6599 = vadd.f32 0.0, %v6598
      %v6600 = vpop.f32.mrb[0].mxu0
      %v6601 = vadd.f32 0.0, %v6600
      %6602 = vmatprep.mubr.f32.mxu0 0.0
      %6603 = vmatmul.mubr.f32.gmra.mrb[0].mxu0 %v2329
      %v6604 = vpop.f32.mrb[0].mxu0
      %v6605 = vadd.f32 0.0, %v6604
      %v6606 = vpop.f32.mrb[0].mxu0
      %v6607 = vadd.f32 0.0, %v6606
      %6608 = vmatprep.mubr.f32.mxu0 0.0
      %6609 = vmatmul.mubr.f32.gmra.mrb[0].mxu0 %v2332
      %v6610 = vpop.f32.mrb[0].mxu0
      %v6611 = vadd.f32 0.0, %v6610
      %v6612 = vpop.f32.mrb[0].mxu0
      %v6613 = vadd.f32 0.0, %v6612
      %6614 = vmatprep.mubr.f32.mxu0 0.0
      %6615 = vmatmul.mubr.f32.gmra.mrb[0].mxu0 %v2335
      %v6616 = vpop.f32.mrb[0].mxu0
      %v6617 = vadd.f32 0.0, %v6616
      %v6618 = vpop.f32.mrb[0].mxu0
      %v6619 = vadd.f32 0.0, %v6618
      %6620 = vmatprep.mubr.f32.mxu0 0.0
      %6621 = vmatmul.mubr.f32.gmra.mrb[0].mxu0 %v2338
      %v6622 = vpop.f32.mrb[0].mxu0
      %v6623 = vadd.f32 0.0, %v6622
      %v6624 = vpop.f32.mrb[0].mxu0
      %v6625 = vadd.f32 0.0, %v6624
      %6626 = vmatprep.mubr.f32.mxu0 0.0
      %6627 = vmatmul.mubr.f32.gmra.mrb[0].mxu0 %v2341
      %v6628 = vpop.f32.mrb[0].mxu0
      %v6629 = vadd.f32 0.0, %v6628
      %v6630 = vpop.f32.mrb[0].mxu0
      %v6631 = vadd.f32 0.0, %v6630
      %6632 = vmatprep.mubr.f32.mxu0 0.0
      %6633 = vmatmul.mubr.f32.gmra.mrb[0].mxu0 %v2344
      %v6634 = vpop.f32.mrb[0].mxu0
      %v6635 = vadd.f32 0.0, %v6634
      %v6636 = vpop.f32.mrb[0].mxu0
      %v6637 = vadd.f32 0.0, %v6636
      %6638 = vmatprep.mubr.f32.mxu0 0.0
      %6639 = vmatmul.mubr.f32.gmra.mrb[0].mxu0 %v2347
      %v6640 = vpop.f32.mrb[0].mxu0
      %v6641 = vadd.f32 0.0, %v6640
      %v6642 = vpop.f32.mrb[0].mxu0
      %v6643 = vadd.f32 0.0, %v6642
      %6644 = vdwg.mxu0
      %6645 = vrot.lane.b32.xlu0 %v6474, 17
      %v6646 = vpop.permute.xlu0 %6645
      %6647 = vrot.lane.b32.xlu0 %v6476, 17
      %v6648 = vpop.permute.xlu0 %6647
      %6649 = vrot.lane.b32.xlu0 %v6593, 17
      %v6650 = vpop.permute.xlu0 %6649
      %6651 = vrot.lane.b32.xlu0 %v6595, 17
      %v6652 = vpop.permute.xlu0 %6651
      %v6653 = vsel %vm519, %v6650, %v6652
      %v6654 = vsel %vm519, %v6648, %v6650
      %v6655 = vsel %vm519, %v6646, %v6648
      %v6656 = vsel %vm519, %v6652, %v6646
      %v6657 = vmul.f32 %v6656, %v2610
      %v6658 = vmul.f32 %v6655, %v2614
      %v6659 = vmul.f32 %v6654, %v2618
      %v6660 = vmul.f32 %v6653, %v2622
      %v6661 = vadd.f32 %v6498, %v6657
      %v6662 = vadd.f32 %v6500, %v6658
      %v6663 = vadd.f32 %v6617, %v6659
      %v6664 = vadd.f32 %v6619, %v6660
      %6665 = vrot.lane.b32.xlu0 %v6480, 16
      %v6666 = vpop.permute.xlu0 %6665
      %6667 = vrot.lane.b32.xlu0 %v6482, 16
      %v6668 = vpop.permute.xlu0 %6667
      %6669 = vrot.lane.b32.xlu0 %v6599, 16
      %v6670 = vpop.permute.xlu0 %6669
      %6671 = vrot.lane.b32.xlu0 %v6601, 16
      %v6672 = vpop.permute.xlu0 %6671
      %v6673 = vsel %vm556, %v6670, %v6672
      %v6674 = vsel %vm556, %v6668, %v6670
      %v6675 = vsel %vm556, %v6666, %v6668
      %v6676 = vsel %vm556, %v6672, %v6666
      %v6677 = vmul.f32 %v6676, %v2646
      %v6678 = vmul.f32 %v6675, %v2650
      %v6679 = vmul.f32 %v6674, %v2654
      %v6680 = vmul.f32 %v6673, %v2658
      %v6681 = vadd.f32 %v6661, %v6677
      %v6682 = vadd.f32 %v6662, %v6678
      %v6683 = vadd.f32 %v6663, %v6679
      %v6684 = vadd.f32 %v6664, %v6680
      %6685 = vrot.lane.b32.xlu0 %v6486, 15
      %v6686 = vpop.permute.xlu0 %6685
      %6687 = vrot.lane.b32.xlu0 %v6488, 15
      %v6688 = vpop.permute.xlu0 %6687
      %6689 = vrot.lane.b32.xlu0 %v6605, 15
      %v6690 = vpop.permute.xlu0 %6689
      %6691 = vrot.lane.b32.xlu0 %v6607, 15
      %v6692 = vpop.permute.xlu0 %6691
      %v6693 = vsel %vm593, %v6690, %v6692
      %v6694 = vsel %vm593, %v6688, %v6690
      %v6695 = vsel %vm593, %v6686, %v6688
      %v6696 = vsel %vm593, %v6692, %v6686
      %v6697 = vmul.f32 %v6696, %v2682
      %v6698 = vmul.f32 %v6695, %v2686
      %v6699 = vmul.f32 %v6694, %v2690
      %v6700 = vmul.f32 %v6693, %v2694
      %v6701 = vadd.f32 %v6681, %v6697
      %v6702 = vadd.f32 %v6682, %v6698
      %v6703 = vadd.f32 %v6683, %v6699
      %v6704 = vadd.f32 %v6684, %v6700
      %6705 = vrot.lane.b32.xlu0 %v6492, 1
      %v6706 = vpop.permute.xlu0 %6705
      %6707 = vrot.lane.b32.xlu0 %v6494, 1
      %v6708 = vpop.permute.xlu0 %6707
      %6709 = vrot.lane.b32.xlu0 %v6611, 1
      %v6710 = vpop.permute.xlu0 %6709
      %6711 = vrot.lane.b32.xlu0 %v6613, 1
      %v6712 = vpop.permute.xlu0 %6711
      %v6713 = vsel %vm630, %v6710, %v6712
      %v6714 = vsel %vm630, %v6708, %v6710
      %v6715 = vsel %vm630, %v6706, %v6708
      %v6716 = vsel %vm630, %v6712, %v6706
      %v6717 = vmul.f32 %v6716, %v2718
      %v6718 = vmul.f32 %v6715, %v2722
      %v6719 = vmul.f32 %v6714, %v2726
      %v6720 = vmul.f32 %v6713, %v2730
      %v6721 = vadd.f32 %v6701, %v6717
      %v6722 = vadd.f32 %v6702, %v6718
      %v6723 = vadd.f32 %v6703, %v6719
      %v6724 = vadd.f32 %v6704, %v6720
      %6725 = vrot.lane.b32.xlu0 %v6504, 127
      %v6726 = vpop.permute.xlu0 %6725
      %6727 = vrot.lane.b32.xlu0 %v6506, 127
      %v6728 = vpop.permute.xlu0 %6727
      %6729 = vrot.lane.b32.xlu0 %v6623, 127
      %v6730 = vpop.permute.xlu0 %6729
      %6731 = vrot.lane.b32.xlu0 %v6625, 127
      %v6732 = vpop.permute.xlu0 %6731
      %v6733 = vsel %vm667, %v6730, %v6732
      %v6734 = vsel %vm667, %v6728, %v6730
      %v6735 = vsel %vm667, %v6726, %v6728
      %v6736 = vsel %vm667, %v6732, %v6726
      %v6737 = vmul.f32 %v6735, %v2754
      %v6738 = vmul.f32 %v6734, %v2758
      %v6739 = vmul.f32 %v6733, %v2762
      %v6740 = vmul.f32 %v6736, %v2766
      %v6741 = vadd.f32 %v6721, %v6737
      %v6742 = vadd.f32 %v6722, %v6738
      %v6743 = vadd.f32 %v6723, %v6739
      %v6744 = vadd.f32 %v6724, %v6740
      %6745 = vrot.lane.b32.xlu0 %v6510, 113
      %v6746 = vpop.permute.xlu0 %6745
      %6747 = vrot.lane.b32.xlu0 %v6512, 113
      %v6748 = vpop.permute.xlu0 %6747
      %6749 = vrot.lane.b32.xlu0 %v6629, 113
      %v6750 = vpop.permute.xlu0 %6749
      %6751 = vrot.lane.b32.xlu0 %v6631, 113
      %v6752 = vpop.permute.xlu0 %6751
      %v6753 = vsel %vm704, %v6750, %v6752
      %v6754 = vsel %vm704, %v6748, %v6750
      %v6755 = vsel %vm704, %v6746, %v6748
      %v6756 = vsel %vm704, %v6752, %v6746
      %v6757 = vmul.f32 %v6755, %v2790
      %v6758 = vmul.f32 %v6754, %v2794
      %v6759 = vmul.f32 %v6753, %v2798
      %v6760 = vmul.f32 %v6756, %v2802
      %v6761 = vadd.f32 %v6741, %v6757
      %v6762 = vadd.f32 %v6742, %v6758
      %v6763 = vadd.f32 %v6743, %v6759
      %v6764 = vadd.f32 %v6744, %v6760
      %6765 = vrot.lane.b32.xlu0 %v6516, 112
      %v6766 = vpop.permute.xlu0 %6765
      %6767 = vrot.lane.b32.xlu0 %v6518, 112
      %v6768 = vpop.permute.xlu0 %6767
      %6769 = vrot.lane.b32.xlu0 %v6635, 112
      %v6770 = vpop.permute.xlu0 %6769
      %6771 = vrot.lane.b32.xlu0 %v6637, 112
      %v6772 = vpop.permute.xlu0 %6771
      %v6773 = vsel %vm741, %v6770, %v6772
      %v6774 = vsel %vm741, %v6768, %v6770
      %v6775 = vsel %vm741, %v6766, %v6768
      %v6776 = vsel %vm741, %v6772, %v6766
      %v6777 = vmul.f32 %v6775, %v2826
      %v6778 = vmul.f32 %v6774, %v2830
      %v6779 = vmul.f32 %v6773, %v2834
      %v6780 = vmul.f32 %v6776, %v2838
      %v6781 = vadd.f32 %v6761, %v6777
      %v6782 = vadd.f32 %v6762, %v6778
      %v6783 = vadd.f32 %v6763, %v6779
      %v6784 = vadd.f32 %v6764, %v6780
      %6785 = vrot.lane.b32.xlu0 %v6522, 111
      %v6786 = vpop.permute.xlu0 %6785
      %6787 = vrot.lane.b32.xlu0 %v6524, 111
      %v6788 = vpop.permute.xlu0 %6787
      %6789 = vrot.lane.b32.xlu0 %v6641, 111
      %v6790 = vpop.permute.xlu0 %6789
      %6791 = vrot.lane.b32.xlu0 %v6643, 111
      %v6792 = vpop.permute.xlu0 %6791
      %v6793 = vsel %vm778, %v6790, %v6792
      %v6794 = vsel %vm778, %v6788, %v6790
      %v6795 = vsel %vm778, %v6786, %v6788
      %v6796 = vsel %vm778, %v6792, %v6786
      %v6797 = vmul.f32 %v6795, %v2862
      %v6798 = vmul.f32 %v6794, %v2866
      %v6799 = vmul.f32 %v6793, %v2870
      %v6800 = vmul.f32 %v6796, %v2874
      %v6801 = vadd.f32 %v6781, %v6797
      %v6802 = vadd.f32 %v6782, %v6798
      %v6803 = vadd.f32 %v6783, %v6799
      %v6804 = vadd.f32 %v6784, %v6800
      %v6805 = vadd.f32 %v6801, %v6015
      %v6806 = vadd.f32 %v6802, %v6016
      %v6807 = vadd.f32 %v6803, %v6017
      %v6808 = vadd.f32 %v6804, %v6018
      %v6809 = vadd.f32 %v6805, %v2899
      %v6810 = vadd.f32 %v6806, %v2899
      %v6811 = vadd.f32 %v6807, %v2899
      %v6812 = vadd.f32 %v6808, %v2899
      %v6813 = vmax.f32 %v6809, 0.0
      %v6814 = vmax.f32 %v6810, 0.0
      %v6815 = vmax.f32 %v6811, 0.0
      %v6816 = vmax.f32 %v6812, 0.0
      %6817 = vmatprep.subr.mxu0 %v6814
      %6818 = vmatpush1.msra.mxu0 %v6813
      %6819 = vmatprep.subr.mxu0 0.0
      %6820 = vmatpush1.msra.mxu0 0.0
      %6821 = vmatprep.subr.mxu0 0.0
      %6822 = vmatpush1.msra.mxu0 0.0
      %6823 = vmatprep.subr.mxu0 0.0
      %6824 = vmatpush1.msra.mxu0 0.0
      %6825 = vmatprep.subr.mxu0 0.0
      %6826 = vmatpush1.msra.mxu0 0.0
      %6827 = vmatprep.subr.mxu0 0.0
      %6828 = vmatpush1.msra.mxu0 0.0
      %6829 = vmatprep.subr.mxu0 0.0
      %6830 = vmatpush1.msra.mxu0 0.0
      %6831 = vmatprep.subr.mxu0 0.0
      %6832 = vmatpush1.msra.mxu0 0.0
      %6833 = vmatprep.subr.mxu0 0.0
      %6834 = vmatpush1.msra.mxu0 0.0
      %6835 = vmatprep.subr.mxu0 0.0
      %6836 = vmatpush1.msra.mxu0 0.0
      %6837 = vmatprep.subr.mxu0 0.0
      %6838 = vmatpush1.msra.mxu0 0.0
      %6839 = vmatprep.subr.mxu0 0.0
      %6840 = vmatpush1.msra.mxu0 0.0
      %6841 = vmatprep.subr.mxu0 0.0
      %6842 = vmatpush1.msra.mxu0 0.0
      %6843 = vmatprep.subr.mxu0 0.0
      %6844 = vmatpush1.msra.mxu0 0.0
      %6845 = vmatprep.subr.mxu0 0.0
      %6846 = vmatpush1.msra.mxu0 0.0
      %6847 = vmatprep.subr.mxu0 0.0
      %6848 = vmatpush1.msra.mxu0 0.0
      %6849 = vmatprep.subr.mxu0 0.0
      %6850 = vmatpush1.msra.mxu0 0.0
      %6851 = vmatprep.subr.mxu0 0.0
      %6852 = vmatpush1.msra.mxu0 0.0
      %6853 = vmatprep.subr.mxu0 0.0
      %6854 = vmatpush1.msra.mxu0 0.0
      %6855 = vmatprep.subr.mxu0 0.0
      %6856 = vmatpush1.msra.mxu0 0.0
      %6857 = vmatprep.subr.mxu0 0.0
      %6858 = vmatpush1.msra.mxu0 0.0
      %6859 = vmatprep.subr.mxu0 0.0
      %6860 = vmatpush1.msra.mxu0 0.0
      %6861 = vmatprep.subr.mxu0 0.0
      %6862 = vmatpush1.msra.mxu0 0.0
      %6863 = vmatprep.subr.mxu0 0.0
      %6864 = vmatpush1.msra.mxu0 0.0
      %6865 = vmatprep.subr.mxu0 0.0
      %6866 = vmatpush1.msra.mxu0 0.0
      %6867 = vmatprep.subr.mxu0 0.0
      %6868 = vmatpush1.msra.mxu0 0.0
      %6869 = vmatprep.subr.mxu0 0.0
      %6870 = vmatpush1.msra.mxu0 0.0
      %6871 = vmatprep.subr.mxu0 0.0
      %6872 = vmatpush1.msra.mxu0 0.0
      %6873 = vmatprep.subr.mxu0 0.0
      %6874 = vmatpush1.msra.mxu0 0.0
      %6875 = vmatprep.subr.mxu0 0.0
      %6876 = vmatpush1.msra.mxu0 0.0
      %6877 = vmatprep.subr.mxu0 0.0
      %6878 = vmatpush1.msra.mxu0 0.0
      %6879 = vmatprep.subr.mxu0 0.0
      %6880 = vmatpush1.msra.mxu0 0.0
      %6881 = vmatprep.mubr.f32.mxu0 0.0
      %6882 = vmatmul.mubr.f32.gmra.mrb[0].mxu0 %v2918
      %v6883 = vpop.f32.mrb[0].mxu0
      %v6884 = vadd.f32 %v6035, %v6883
      %v6885 = vpop.f32.mrb[0].mxu0
      %v6886 = vadd.f32 %v6035, %v6885
      %6887 = vdwg.mxu0
      %6888 = vmatprep.subr.mxu0 %v6816
      %6889 = vmatpush1.msra.mxu0 %v6815
      %6890 = vmatprep.subr.mxu0 0.0
      %6891 = vmatpush1.msra.mxu0 0.0
      %6892 = vmatprep.subr.mxu0 0.0
      %6893 = vmatpush1.msra.mxu0 0.0
      %6894 = vmatprep.subr.mxu0 0.0
      %6895 = vmatpush1.msra.mxu0 0.0
      %6896 = vmatprep.subr.mxu0 0.0
      %6897 = vmatpush1.msra.mxu0 0.0
      %6898 = vmatprep.subr.mxu0 0.0
      %6899 = vmatpush1.msra.mxu0 0.0
      %6900 = vmatprep.subr.mxu0 0.0
      %6901 = vmatpush1.msra.mxu0 0.0
      %6902 = vmatprep.subr.mxu0 0.0
      %6903 = vmatpush1.msra.mxu0 0.0
      %6904 = vmatprep.subr.mxu0 0.0
      %6905 = vmatpush1.msra.mxu0 0.0
      %6906 = vmatprep.subr.mxu0 0.0
      %6907 = vmatpush1.msra.mxu0 0.0
      %6908 = vmatprep.subr.mxu0 0.0
      %6909 = vmatpush1.msra.mxu0 0.0
      %6910 = vmatprep.subr.mxu0 0.0
      %6911 = vmatpush1.msra.mxu0 0.0
      %6912 = vmatprep.subr.mxu0 0.0
      %6913 = vmatpush1.msra.mxu0 0.0
      %6914 = vmatprep.subr.mxu0 0.0
      %6915 = vmatpush1.msra.mxu0 0.0
      %6916 = vmatprep.subr.mxu0 0.0
      %6917 = vmatpush1.msra.mxu0 0.0
      %6918 = vmatprep.subr.mxu0 0.0
      %6919 = vmatpush1.msra.mxu0 0.0
      %6920 = vmatprep.subr.mxu0 0.0
      %6921 = vmatpush1.msra.mxu0 0.0
      %6922 = vmatprep.subr.mxu0 0.0
      %6923 = vmatpush1.msra.mxu0 0.0
      %6924 = vmatprep.subr.mxu0 0.0
      %6925 = vmatpush1.msra.mxu0 0.0
      %6926 = vmatprep.subr.mxu0 0.0
      %6927 = vmatpush1.msra.mxu0 0.0
      %6928 = vmatprep.subr.mxu0 0.0
      %6929 = vmatpush1.msra.mxu0 0.0
      %6930 = vmatprep.subr.mxu0 0.0
      %6931 = vmatpush1.msra.mxu0 0.0
      %6932 = vmatprep.subr.mxu0 0.0
      %6933 = vmatpush1.msra.mxu0 0.0
      %6934 = vmatprep.subr.mxu0 0.0
      %6935 = vmatpush1.msra.mxu0 0.0
      %6936 = vmatprep.subr.mxu0 0.0
      %6937 = vmatpush1.msra.mxu0 0.0
      %6938 = vmatprep.subr.mxu0 0.0
      %6939 = vmatpush1.msra.mxu0 0.0
      %6940 = vmatprep.subr.mxu0 0.0
      %6941 = vmatpush1.msra.mxu0 0.0
      %6942 = vmatprep.subr.mxu0 0.0
      %6943 = vmatpush1.msra.mxu0 0.0
      %6944 = vmatprep.subr.mxu0 0.0
      %6945 = vmatpush1.msra.mxu0 0.0
      %6946 = vmatprep.subr.mxu0 0.0
      %6947 = vmatpush1.msra.mxu0 0.0
      %6948 = vmatprep.subr.mxu0 0.0
      %6949 = vmatpush1.msra.mxu0 0.0
      %6950 = vmatprep.subr.mxu0 0.0
      %6951 = vmatpush1.msra.mxu0 0.0
      %6952 = vmatprep.mubr.f32.mxu0 0.0
      %6953 = vmatmul.mubr.f32.gmra.mrb[0].mxu0 %v2918
      %v6954 = vpop.f32.mrb[0].mxu0
      %v6955 = vadd.f32 %v6035, %v6954
      %v6956 = vpop.f32.mrb[0].mxu0
      %v6957 = vadd.f32 %v6035, %v6956
      %6958 = vdwg.mxu0
      %v6959 = vadd.f32 %v6884, %v3066
      %v6960 = vadd.f32 %v6886, %v3066
      %v6961 = vadd.f32 %v6955, %v3066
      %v6962 = vadd.f32 %v6957, %v3066
      %v6963 = vmul.f32 %v2122, 0.0012326388
      %v6964 = vmul.f32 %v2123, 0.0012326388
      %v6965 = vmul.f32 %v3825, -0.0042527704
      %v6966 = vmul.f32 %v3826, -0.0042527704
      %v6967 = vmul.f32 %v3827, -0.0042527704
      %v6968 = vmul.f32 %v3828, -0.0042527704
      %v6973 = vcombine.low %v6965, %v6966
      %v6974 = vcombine.low %v6967, %v6968
      %v6977 = vadd.f32 %v6963, %v6973
      %v6978 = vadd.f32 %v6964, %v6974
      %v6979 = vmul.f32 %v4596, 0.036979165
      %v6980 = vmul.f32 %v4597, 0.036979165
      %v6981 = vmul.f32 %v4598, 0.036979165
      %v6982 = vmul.f32 %v4599, 0.036979165
      %v6987 = vcombine.low %v6979, %v6980
      %v6988 = vcombine.low %v6981, %v6982
      %v6991 = vadd.f32 %v6977, %v6987
      %v6992 = vadd.f32 %v6978, %v6988
      %v6993 = vmul.f32 %v5381, -0.0508638
      %v6994 = vmul.f32 %v5382, -0.0508638
      %v6995 = vmul.f32 %v5383, -0.0508638
      %v6996 = vmul.f32 %v5384, -0.0508638
      %v7001 = vcombine.low %v6993, %v6994
      %v7002 = vcombine.low %v6995, %v6996
      %v7005 = vadd.f32 %v6991, %v7001
      %v7006 = vadd.f32 %v6992, %v7002
      %v7007 = vmul.f32 %v6179, 0.041904762
      %v7008 = vmul.f32 %v6180, 0.041904762
      %v7009 = vmul.f32 %v6181, 0.041904762
      %v7010 = vmul.f32 %v6182, 0.041904762
      %v7015 = vcombine.low %v7007, %v7008
      %v7016 = vcombine.low %v7009, %v7010
      %v7019 = vadd.f32 %v7005, %v7015
      %v7020 = vadd.f32 %v7006, %v7016
      %v7021 = vmul.f32 %v6959, -0.025
      %v7022 = vmul.f32 %v6960, -0.025
      %v7023 = vmul.f32 %v6961, -0.025
      %v7024 = vmul.f32 %v6962, -0.025
      %v7029 = vcombine.low %v7021, %v7022
      %v7030 = vcombine.low %v7023, %v7024
      %v7033 = vadd.f32 %v7019, %v7029
      %v7034 = vadd.f32 %v7020, %v7030
      %v7035 = vmul.f32 %v2128, %v7033
      %v7036 = vmul.f32 %v2128, %v7034
      %v7037 = vand.u32 2147483647, %v2118
      %v7038 = vand.u32 2147483647, %v2119
      %v7039 = vand.u32 2147483647, %v6243
      %v7040 = vand.u32 2147483647, %v6244
      %v7041 = vmax.f32 %v7037, %v7039
      %v7042 = vmax.f32 %v7038, %v7040
      %v7043 = vmul.f32 %v7041, 0.001
      %v7044 = vmul.f32 %v7042, 0.001
      %v7045 = vadd.f32 %v7043, 0.001
      %v7046 = vadd.f32 %v7044, 0.001
      %v7047 = vrcp.pop %v7045
      %v7048 = vmul.f32 %v7035, %v7047
      %v7049 = vrcp.pop %v7046
      %v7050 = vmul.f32 %v7036, %v7049
      %v7051 = vmul.f32 %v7048, %v7048
      %v7052 = vmul.f32 %v7050, %v7050
      %v7055 = vcombine.high %v7051, %v7051
      %v7056 = vcombine.high %v7052, %v7052
      %v7059 = vsel %vm61, %v7051, 0.0
      %v7060 = vsel %vm61, %v7055, 0.0
      %v7061 = vadd.f32 %v7059, %v7060
      %v7062 = vsel %vm61, %v7052, 0.0
      %v7063 = vadd.f32 %v7061, %v7062
      %v7064 = vsel %vm61, %v7056, 0.0
      %v7065 = vadd.f32 %v7063, %v7064
      %7066 = vadd.xlane.f32.xlu0 %v7065
      %v7067 = vpop.xlane.xlu0 %7066
      %v7068 = vsel %vm61, %v7067, 0.0
      %v7069 = vrot.slane %v7068, 4
      %v7070 = vadd.f32 %v7068, %v7069
      %v7071 = vrot.slane %v7070, 2
      %v7072 = vadd.f32 %v7070, %v7071
      %v7073 = vrot.slane %v7072, 1
      %v7074 = vadd.f32 %v7072, %v7073
      %v7075 = vmul.f32 %v7074, %v1040
      %v7076 = vrsqrt.pop %v7075
      %v7077 = vmul.f32 %v7075, %v7076
      %vm7078 = vcmp.eq.f32.partialorder %v7075, inf
      %v7079 = vsel %vm7078, %v7075, %v7077
      %vm7080 = vcmp.eq.f32.partialorder %v7075, 0.0
      %v7081 = vand.u32 %v7075, 2147483648
      %v7082 = vsel %vm7080, %v7081, %v7079
      %v7083 = vmax.f32 %v7082, 1e-10
      %v7084 = vlog2.pop %v7083
      %v7085 = vmul.f32 %v7084, 0.6931472
      %v7086 = vmul.f32 %v7085, -0.2
      %v7087 = vmul.f32 %v7086, 1.442695
      %v7088 = vpow.pop %v7087
      %v7089 = vmul.f32 %v7088, 0.9
      %v7090 = vmax.f32 %v7089, 0.2
      %v7091 = vmin.f32 %v7090, 10.0
      %7092 = vst.msk [vmem:[#allocation4] sm:$0x1] %vm2103, %v7091
      %vm7093 = vcmp.le.f32.partialorder %v7082, 1.0
      %v7094 = vsel %vm7093, 1.0, 0.0
      %7095 = vst.msk [vmem:[#allocation3] sm:$0x1] %vm2103, %v7094
      %v7096 = vld [vmem:[#allocation3] sm:$0x1]
      %s7097 = vtos %v7096
      %p7098 = scmp.gt.f32.partialorder %s7097, 0.5
      %v7099 = vld [vmem:[#allocation4] sm:$0x1]
      %s7100 = vtos %v7099
      // Predicated region
      $region53: #{neural_ode_forward.1} parent=49 // pred_check
        %p7101 = pneg %p7098
      $region54: #{neural_ode_forward.1} parent=49 // pred_check_branch
        %7103 = sbr.rel (%p7101) target = $region56
      $region55: #{neural_ode_forward.1} parent=49 // pred_region
        %7104 = vst [vmem:[%s11] sm:$0xff] %v6243
        %7105 = vst [vmem:[%s11 + $0x8] sm:$0xff] %v6244
        %v7110 = vcombine.low %v6959, %v6960
        %v7111 = vcombine.low %v6961, %v6962
        %7114 = vst [vmem:[#allocation2] sm:$0xff] %v7110
        %7115 = vst [vmem:[#allocation2 + $0x8] sm:$0xff] %v7111
      $region56: #{neural_ode_forward.1} parent=49 // pred_fallthru
        _
      %s7116 = scalar_select %p7098, %s5385, %s2108
      %s7117 = smul.f32 %s2121, %s7100
      %s7118 = sadd.f32 %s2110, 1.0
    $region50: #{neural_ode_forward.1} parent=1 // loop_footer
      _
    $region51: #{neural_ode_forward.1} parent=1 // loop_footer_branch
      %2107 = sbr.rel target = $region47
    $region52: #{neural_ode_forward.1} parent=1 // loop_exit
      _
    %s7119 = scalar_lea.smem [#allocation5], 0
    %7120 = sst [smem:[%s7119]] %s2108
    %s7121 = scalar_lea.smem [#allocation5], 1
    %7122 = sst [smem:[%s7121]] %s2109
    %s7123 = scalar_lea.smem [#allocation5], 2
    %7124 = sst [smem:[%s7123]] %s2110
    %s7125 = ssub.f32 1.0, %s2108
    %p7126 = scmp.le.f32.partialorder %s7125, 1e-07
    %s7127 = scalar_select %p7126, 1, 0
    %s7128 = scvt.s32.f32 %s7127
    %s7129 = scalar_lea.smem [#allocation5], 3
    %7130 = sst [smem:[%s7129]] %s7128
    // Predicated region
    $region57: #{neural_ode_forward.1} parent=1 // pred_check
      _
    $region58: #{neural_ode_forward.1} parent=1 // pred_check_branch
      %7132 = sbr.rel (0) target = $region60
    $region59: #{neural_ode_forward.1} parent=1 // pred_region
      _
    $region60: #{neural_ode_forward.1} parent=1 // pred_fallthru
      _
    // Predicated region
    $region61: #{neural_ode_forward.1} parent=1 // pred_check
      _
    $region62: #{neural_ode_forward.1} parent=1 // pred_check_branch
      %7134 = sbr.rel (0) target = $region64
    $region63: #{neural_ode_forward.1} parent=1 // pred_region
      %s7136 = ssub.s32 16, 16
      %7137 = vsyncadd [#allocation6], %s7136
      %7140 = dma.smem_to_hbm [#allocation5], 16, %s12, [#allocation6]
    $region64: #{neural_ode_forward.1} parent=1 // pred_fallthru
      _
    // Predicated region
    $region65: #{neural_ode_forward.1} parent=1 // pred_check
      _
    $region66: #{neural_ode_forward.1} parent=1 // pred_check_branch
      %7142 = sbr.rel (0) target = $region68
    $region67: #{neural_ode_forward.1} parent=1 // pred_region
      _
    $region68: #{neural_ode_forward.1} parent=1 // pred_fallthru
      _
    // Predicated region
    $region69: #{neural_ode_forward.1} parent=1 // pred_check
      _
    $region70: #{neural_ode_forward.1} parent=1 // pred_check_branch
      %7144 = sbr.rel (0) target = $region72
    $region71: #{neural_ode_forward.1} parent=1 // pred_region
      %7145 = dma.done [#allocation6], 16
    $region72: #{neural_ode_forward.1} parent=1 // pred_fallthru
      _
    %7146 = sfence
    %7147 = vsyncpa [#allocation6], 1

</llo_original>
